<compile_context>
chip_gen: v7x
topology: tpu7x:2x2x1
jax: 0.10.0
libtpu: 0.0.40
codegen_flags: <defaults>
</compile_context>

<pallas_src>
import jax
import jax.numpy as jnp
from jax.experimental import pallas as pl
from jax.experimental.pallas import tpu as pltpu

# ------------------------- configuration -------------------------------------
H = 32            # args.hidden_size
HQ = H // 4       # 8
ENC_STEPS = 4     # args.enc_steps
DEC_STEPS = 4     # args.dec_steps
PRED_DIM = 2      # ETH/UCY datasets
IN_DIM = 6        # ETHUCYFeatureExtractor input features
B = 8             # batch

PARAM_NAMES = [
    "embed_w", "embed_b",
    "reg_w", "reg_b",
    "ea_w", "ea_b",          # enc_goal_attn   (weight stored as (1, HQ) row)
    "da_w", "da_b",          # dec_goal_attn
    "e2g_w", "e2g_b",        # enc_to_goal_hidden
    "e2d_w", "e2d_b",        # enc_to_dec_hidden
    "gh2i_w", "gh2i_b",      # goal_hidden_to_input
    "dh2i_w", "dh2i_b",      # dec_hidden_to_input
    "gh2t_w", "gh2t_b",      # goal_hidden_to_traj
    "g2e_w", "g2e_b",        # goal_to_enc
    "g2d_w", "g2d_b",        # goal_to_dec
    "tec_wih", "tec_whh", "tec_bih", "tec_bhh",   # traj_enc_cell GRU
    "gc_wih", "gc_whh", "gc_bih", "gc_bhh",       # goal_cell GRU
    "dc_wih", "dc_whh", "dc_bih", "dc_bhh",       # dec_cell GRU
]


# ------------------------- parameter init (torch-like layout) ----------------
def init_params(key):
    p = {}

    def uniform(k, shape, fan_in):
        bound = 1.0 / (fan_in ** 0.5)
        return jax.random.uniform(k, shape, jnp.float32, -bound, bound)

    specs = {
        "embed_w": ((IN_DIM, H), IN_DIM), "embed_b": ((1, H), IN_DIM),
        "reg_w": ((H, PRED_DIM), H), "reg_b": ((1, PRED_DIM), H),
        "ea_w": ((1, HQ), HQ), "ea_b": ((1, 1), HQ),
        "da_w": ((1, HQ), HQ), "da_b": ((1, 1), HQ),
        "e2g_w": ((H, HQ), H), "e2g_b": ((1, HQ), H),
        "e2d_w": ((H, H), H), "e2d_b": ((1, H), H),
        "gh2i_w": ((HQ, HQ), HQ), "gh2i_b": ((1, HQ), HQ),
        "dh2i_w": ((H, H), H), "dh2i_b": ((1, H), H),
        "gh2t_w": ((HQ, H), HQ), "gh2t_b": ((1, H), HQ),
        "g2e_w": ((HQ, HQ), HQ), "g2e_b": ((1, HQ), HQ),
        "g2d_w": ((HQ, HQ), HQ), "g2d_b": ((1, HQ), HQ),
        "tec_wih": ((H + HQ, 3 * H), H), "tec_whh": ((H, 3 * H), H),
        "tec_bih": ((1, 3 * H), H), "tec_bhh": ((1, 3 * H), H),
        "gc_wih": ((HQ, 3 * HQ), HQ), "gc_whh": ((HQ, 3 * HQ), HQ),
        "gc_bih": ((1, 3 * HQ), HQ), "gc_bhh": ((1, 3 * HQ), HQ),
        "dc_wih": ((H + HQ, 3 * H), H), "dc_whh": ((H, 3 * H), H),
        "dc_bih": ((1, 3 * H), H), "dc_bhh": ((1, 3 * H), H),
    }
    keys = jax.random.split(key, len(PARAM_NAMES))
    for k, name in zip(keys, PARAM_NAMES):
        shape, fan_in = specs[name]
        p[name] = uniform(k, shape, fan_in)
    return p


# ------------------------- independent pure-JAX reference --------------------
_HI = jax.lax.Precision.HIGHEST


def _rdot(a, b):
    return jnp.dot(a, b, precision=_HI)


def sgnet_reference(x, p):
    """Mirrors the PyTorch module structure (concats / stacks / softmax / bmm)."""
    bv = x.shape[0]

    def lin(v, w, b):
        return _rdot(v, w) + b

    def lin_relu(v, w, b):
        return jnp.maximum(lin(v, w, b), 0.0)

    def gru(v, h, wih, whh, bih, bhh, hid):
        gi = _rdot(v, wih) + bih
        gh = _rdot(h, whh) + bhh
        r = jax.nn.sigmoid(gi[:, :hid] + gh[:, :hid])
        z = jax.nn.sigmoid(gi[:, hid:2 * hid] + gh[:, hid:2 * hid])
        n = jnp.tanh(gi[:, 2 * hid:] + r * gh[:, 2 * hid:])
        return (1.0 - z) * n + z * h

    emb = jnp.maximum(
        jnp.einsum("bef,fh->beh", x, p["embed_w"], precision=_HI) + p["embed_b"], 0.0)
    goal_for_enc = jnp.zeros((bv, HQ), jnp.float32)
    h_enc = jnp.zeros((bv, H), jnp.float32)
    all_goal, all_dec = [], []

    for e in range(ENC_STEPS):
        enc_in = jnp.concatenate([emb[:, e, :], goal_for_enc], axis=1)
        h_enc = gru(enc_in, h_enc, p["tec_wih"], p["tec_whh"],
                    p["tec_bih"], p["tec_bhh"], H)
        goal_hidden = lin_relu(h_enc, p["e2g_w"], p["e2g_b"])
        dec_hidden = lin_relu(h_enc, p["e2d_w"], p["e2d_b"])

        # ----- SGE -----
        goal_input = jnp.zeros((bv, HQ), jnp.float32)
        gh = goal_hidden
        goal_list, goal_traj = [], []
        for _ in range(DEC_STEPS):
            gh = gru(goal_input, gh, p["gc_wih"], p["gc_whh"],
                     p["gc_bih"], p["gc_bhh"], HQ)
            goal_input = lin_relu(gh, p["gh2i_w"], p["gh2i_b"])
            goal_list.append(gh)
            gth = lin_relu(gh, p["gh2t_w"], p["gh2t_b"])
            goal_traj.append(lin(gth, p["reg_w"], p["reg_b"]))

        goal_for_dec = [lin_relu(g, p["g2d_w"], p["g2d_b"]) for g in goal_list]
        gfe = jnp.stack([lin_relu(g, p["g2e_w"], p["g2e_b"]) for g in goal_list], axis=1)
        enc_attn = jnp.maximum(
            jnp.einsum("bth,h->bt", jnp.tanh(gfe), p["ea_w"][0], precision=_HI)
            + p["ea_b"][0, 0], 0.0)
        enc_attn = jax.nn.softmax(enc_attn, axis=1)
        goal_for_enc = jnp.einsum("bt,bth->bh", enc_attn, gfe, precision=_HI)

        # ----- decoder -----
        dh = dec_hidden
        dec_traj = []
        for d in range(DEC_STEPS):
            gdi_full = jnp.zeros((bv, DEC_STEPS, HQ), jnp.float32)
            gdi_full = gdi_full.at[:, d:, :].set(jnp.stack(goal_for_dec[d:], axis=1))
            dec_attn = jnp.maximum(
                jnp.einsum("bth,h->bt", jnp.tanh(gdi_full), p["da_w"][0], precision=_HI)
                + p["da_b"][0, 0], 0.0)
            dec_attn = jax.nn.softmax(dec_attn, axis=1)
            gdi = jnp.einsum("bt,bth->bh", dec_attn, gdi_full, precision=_HI)
            ddi = lin_relu(dh, p["dh2i_w"], p["dh2i_b"])
            dec_in = jnp.concatenate([gdi, ddi], axis=1)
            dh = gru(dec_in, dh, p["dc_wih"], p["dc_whh"],
                     p["dc_bih"], p["dc_bhh"], H)
            dec_traj.append(lin(dh, p["reg_w"], p["reg_b"]))

        all_goal.append(jnp.stack(goal_traj, axis=1))
        all_dec.append(jnp.stack(dec_traj, axis=1))

    return jnp.stack(all_goal, axis=1), jnp.stack(all_dec, axis=1)


# ------------------------- host-side fuse + pack into one slab ---------------
def pack_kernel_params(p):
    """Fuse weights that share inputs / split GRU wih by input block, then pack
    everything into a single (R, 128) f32 slab (one HBM->VMEM DMA)."""
    attn_w = jnp.zeros((2 * HQ, 2), jnp.float32)
    attn_w = attn_w.at[:HQ, 0].set(p["ea_w"][0])
    attn_w = attn_w.at[HQ:, 1].set(p["da_w"][0])

    fused = {
        "embed_w": p["embed_w"], "embed_b": p["embed_b"],
        "tec_wih_x": p["tec_wih"][:H, :],        # x part of encoder GRU
        "tec_wih_g": p["tec_wih"][H:, :],        # goal_for_enc part
        "tec_whh": p["tec_whh"], "tec_bih": p["tec_bih"], "tec_bhh": p["tec_bhh"],
        "e2gd_w": jnp.concatenate([p["e2g_w"], p["e2d_w"]], axis=1),   # (H, HQ+H)
        "e2gd_b": jnp.concatenate([p["e2g_b"], p["e2d_b"]], axis=1),
        "gc_wih": p["gc_wih"], "gc_bih": p["gc_bih"],
        "gc_whh": p["gc_whh"], "gc_bhh": p["gc_bhh"],
        # SGE fused: gh @ [gh2i_w | gc_whh]   -> (B, HQ + 3HQ)
        "sge_fuse_w": jnp.concatenate([p["gh2i_w"], p["gc_whh"]], axis=1),
        "sge_fuse_b": jnp.concatenate([p["gh2i_b"], p["gc_bhh"]], axis=1),
        "gproj_w": jnp.concatenate([p["gh2t_w"], p["g2e_w"], p["g2d_w"]], axis=1),
        "gproj_b": jnp.concatenate([p["gh2t_b"], p["g2e_b"], p["g2d_b"]], axis=1),
        "attn_w": attn_w,                                     # (2HQ, 2): [ea | da]
        "attn_b": jnp.concatenate([p["ea_b"], p["da_b"]], axis=1),
        "reg_w": p["reg_w"], "reg_b": p["reg_b"],
        # decoder fused: dh @ [dh2i_w | dc_whh]  -> (M, H + 3H) = (M, 128)
        "dec_fuse_w": jnp.concatenate([p["dh2i_w"], p["dc_whh"]], axis=1),
        "dec_fuse_b": jnp.concatenate([p["dh2i_b"], p["dc_bhh"]], axis=1),
        "dc_wih_g": p["dc_wih"][:HQ, :],         # goal_dec_input part
        "dc_wih_d": p["dc_wih"][HQ:, :],         # dec_dec_input part
        "dc_bih": p["dc_bih"],
    }

    layout = {}
    row = 0
    for name, arr in fused.items():
        r, c = arr.shape
        layout[name] = (row, r, c)
        row += -(-r // 8) * 8            # 8-row (sublane) aligned starts
    slab = jnp.zeros((row, 128), jnp.float32)
    for name, arr in fused.items():
        r0, r, c = layout[name]
        slab = slab.at[r0:r0 + r, :c].set(arr)
    return slab, layout


# ------------------------------- Pallas kernel -------------------------------
def _make_kernel(layout, bv):
    eb = ENC_STEPS * bv          # rows per decoder batch (all enc steps)
    db = DEC_STEPS * bv          # rows of the stacked goal hiddens per enc step

    def kernel(x_ref, slab_ref, out_goal_ref, out_dec_ref,
               gth_scr, gfd_scr, sd_scr, dh0_scr):

        def W(name):
            # load at the use site -> short live ranges (slices are 8-row aligned)
            r0, r, c = layout[name]
            return slab_ref[r0:r0 + r, 0:c]

        def mm(a, w):
            return jnp.dot(a, w, preferred_element_type=jnp.float32)

        def gru_combine(gi, gh, h, hid):
            # merged r/z sigmoid: one EUP push per GRU step
            rz = jax.nn.sigmoid(gi[:, :2 * hid] + gh[:, :2 * hid])
            r = rz[:, :hid]
            z = rz[:, hid:2 * hid]
            n = jnp.tanh(gi[:, 2 * hid:3 * hid] + r * gh[:, 2 * hid:3 * hid])
            out = (1.0 - z) * n
            return out if h is None else out + z * h

        # ---------------- phase 0: batched precompute over ALL enc steps --------
        x_all = x_ref[...]                                            # (E*B, 6)
        emb_all = jnp.maximum(mm(x_all, W("embed_w")) + W("embed_b"), 0.0)
        gi_x_all = mm(emb_all, W("tec_wih_x")) + W("tec_bih")         # (E*B, 3H)

        # ---------------- phase 1: encoder + SGE (the true serial chain) --------
        h_enc = None
        goal_term = None          # softmax-weighted sum of (gfe @ tec_wih_g)
        for e in range(ENC_STEPS):
            # ---- encoder GRU (concat-free, goal term pre-projected) ----
            gi = gi_x_all[e * bv:(e + 1) * bv, :]
            if e == 0:
                gh_e = W("tec_bhh")                   # h_enc == 0
            else:
                gi = gi + goal_term
                gh_e = mm(h_enc, W("tec_whh")) + W("tec_bhh")
            h_enc = gru_combine(gi, gh_e, h_enc, H)

            # fused enc_to_goal_hidden + enc_to_dec_hidden
            y = jnp.maximum(mm(h_enc, W("e2gd_w")) + W("e2gd_b"), 0.0)  # (B, HQ+H)
            gh = y[:, :HQ]
            dh0_scr[e * bv:(e + 1) * bv, :] = y[:, HQ:HQ + H]

            # ---- SGE recurrence (fused gh @ [gh2i_w|gc_whh] carried forward) ----
            ggh = mm(gh, W("gc_whh")) + W("gc_bhh")
            goal_input = None
            goal_list = []
            for t in range(DEC_STEPS):
                if t == 0:
                    ggi = W("gc_bih")                 # goal_input == 0
                else:
                    ggi = mm(goal_input, W("gc_wih")) + W("gc_bih")
                gh = gru_combine(ggi, ggh, gh, HQ)
                goal_list.append(gh)
                if t < DEC_STEPS - 1:
                    fused = mm(gh, W("sge_fuse_w")) + W("sge_fuse_b")   # (B, 4HQ)
                    goal_input = jnp.maximum(fused[:, :HQ], 0.0)
                    ggh = fused[:, HQ:4 * HQ]

            # ---- batched projections of the 4 goal hidden states ----
            G = jnp.concatenate(goal_list, axis=0)                       # (4B, HQ)
            P = jnp.maximum(mm(G, W("gproj_w")) + W("gproj_b"), 0.0)     # (4B, H+2HQ)
            # enc + dec attention scores in one matmul
            sc = jnp.maximum(
                mm(jnp.tanh(P[:, H:H + 2 * HQ]), W("attn_w")) + W("attn_b"), 0.0)

            # buffer everything the (post-loop) batched decoder / regressor needs
            gth_scr[e * db:(e + 1) * db, :] = P[:, :H]
            for t in range(DEC_STEPS):
                r0 = t * eb + e * bv
                gfd_scr[r0:r0 + bv, :] = P[t * bv:(t + 1) * bv, H + HQ:H + 2 * HQ]
                sd_scr[r0:r0 + bv, :] = sc[t * bv:(t + 1) * bv, 1:2]

            # ---- enc-goal attention (feeds the NEXT encoder step only) ----
            if e < ENC_STEPS - 1:
                # project gfe through the encoder GRU input weights batched; the
                # weighted sum is applied to the projections (exact, linearity)
                gfe_proj = mm(P[:, H:H + HQ], W("tec_wih_g"))            # (4B, 3H)
                s_e = [sc[t * bv:(t + 1) * bv, 0:1] for t in range(DEC_STEPS)]
                mx = s_e[0]
                for t in range(1, DEC_STEPS):
                    mx = jnp.maximum(mx, s_e[t])
                ee = [jnp.exp(s_e[t] - mx) for t in range(DEC_STEPS)]
                den = ee[0]
                num = ee[0] * gfe_proj[0:bv, :]
                for t in range(1, DEC_STEPS):
                    den = den + ee[t]
                    num = num + ee[t] * gfe_proj[t * bv:(t + 1) * bv, :]
                goal_term = num / den

        # ---------------- phase 2: everything else, batched over enc steps ------
        # goal trajectories: one M = E*D*B regressor matmul + one store
        out_goal_ref[...] = mm(gth_scr[...], W("reg_w")) + W("reg_b")

        # dec-goal attention for all (enc_step, dec_step) pairs at once.
        # Rows t < d of the torch goal_dec_input are zero -> score relu(da_b);
        # they dilute the softmax denominator but add nothing to the sum.
        z_dec = jnp.maximum(W("attn_b")[0:1, 1:2], 0.0)                  # (1, 1)
        gfd = [gfd_scr[t * eb:(t + 1) * eb, :] for t in range(DEC_STEPS)]
        s_d = [sd_scr[t * eb:(t + 1) * eb, :] for t in range(DEC_STEPS)]
        gdi_list = []
        for d in range(DEC_STEPS):
            mx = s_d[d]
            for t in range(d + 1, DEC_STEPS):
                mx = jnp.maximum(mx, s_d[t])
            if d > 0:
                mx = jnp.maximum(mx, z_dec)
            ed = [jnp.exp(s_d[t] - mx) for t in range(d, DEC_STEPS)]
            den = ed[0]
            num = ed[0] * gfd[d]
            for t in range(d + 1, DEC_STEPS):
                den = den + ed[t - d]
                num = num + ed[t - d] * gfd[t]
            if d > 0:
                den = den + float(d) * jnp.exp(z_dec - mx)
            gdi_list.append(num / den)

        GDI = jnp.concatenate(gdi_list, axis=0)                          # (D*E*B, HQ)
        gi_g_all = mm(GDI, W("dc_wih_g")) + W("dc_bih")                  # (D*E*B, 3H)

        # decoder GRU recurrence, batched over enc steps (M = E*B rows)
        dh = dh0_scr[...]                                                # (E*B, H)
        dh_list = []
        for d in range(DEC_STEPS):
            fused = mm(dh, W("dec_fuse_w")) + W("dec_fuse_b")            # (E*B, 4H)
            ddi = jnp.maximum(fused[:, :H], 0.0)
            dgi = gi_g_all[d * eb:(d + 1) * eb, :] + mm(ddi, W("dc_wih_d"))
            dh = gru_combine(dgi, fused[:, H:4 * H], dh, H)
            dh_list.append(dh)

        DHs = jnp.concatenate(dh_list, axis=0)                           # (D*E*B, H)
        out_dec_ref[...] = mm(DHs, W("reg_w")) + W("reg_b")

    return kernel


# ------------------------------- wrapper --------------------------------------
def sgnet_forward(x, params):
    bv = x.shape[0]
    slab, layout = pack_kernel_params(params)
    kernel = _make_kernel(layout, bv)

    # (B, E, 6) -> (E*B, 6) so per-step rows are sublane-aligned slices in-kernel
    x2 = jnp.transpose(x, (1, 0, 2)).reshape(ENC_STEPS * bv, IN_DIM)

    out_shape = (
        jax.ShapeDtypeStruct((ENC_STEPS * DEC_STEPS * bv, PRED_DIM), jnp.float32),
        jax.ShapeDtypeStruct((DEC_STEPS * ENC_STEPS * bv, PRED_DIM), jnp.float32),
    )
    goal_k, dec_k = pl.pallas_call(
        kernel,
        out_shape=out_shape,
        in_specs=[pl.BlockSpec(memory_space=pltpu.MemorySpace.VMEM)] * 2,
        out_specs=(pl.BlockSpec(memory_space=pltpu.MemorySpace.VMEM),
                   pl.BlockSpec(memory_space=pltpu.MemorySpace.VMEM)),
        scratch_shapes=[
            pltpu.VMEM((ENC_STEPS * DEC_STEPS * bv, H), jnp.float32),    # gth
            pltpu.VMEM((DEC_STEPS * ENC_STEPS * bv, HQ), jnp.float32),   # gfd (t-major)
            pltpu.VMEM((DEC_STEPS * ENC_STEPS * bv, 1), jnp.float32),    # dec scores
            pltpu.VMEM((ENC_STEPS * bv, H), jnp.float32),                # dec_hidden(e)
        ],
    )(x2, slab)

    # goal rows: e*D*B + t*B + b ; dec rows: d*E*B + e*B + b
    goal = jnp.transpose(
        goal_k.reshape(ENC_STEPS, DEC_STEPS, bv, PRED_DIM), (2, 0, 1, 3))
    dec = jnp.transpose(
        dec_k.reshape(DEC_STEPS, ENC_STEPS, bv, PRED_DIM), (2, 1, 0, 3))
    return goal, dec


# ------------------------------------ main ------------------------------------
if __name__ == "__main__":
    key = jax.random.PRNGKey(0)
    k_x, k_p = jax.random.split(key)
    x = jax.random.normal(k_x, (B, ENC_STEPS, IN_DIM), jnp.float32)
    params = init_params(k_p)

    goal_traj, dec_traj = jax.jit(sgnet_forward)(x, params)
    goal_traj, dec_traj = jax.block_until_ready((goal_traj, dec_traj))

    # Independent pure-JAX reference that mirrors the torch code structure.
    ref_goal, ref_dec = sgnet_reference(x, params)

    assert goal_traj.shape == (B, ENC_STEPS, DEC_STEPS, PRED_DIM)
    assert dec_traj.shape == (B, ENC_STEPS, DEC_STEPS, PRED_DIM)
    assert jnp.allclose(goal_traj, ref_goal, atol=1e-4, rtol=1e-4), \
        float(jnp.max(jnp.abs(goal_traj - ref_goal)))
    assert jnp.allclose(dec_traj, ref_dec, atol=1e-4, rtol=1e-4), \
        float(jnp.max(jnp.abs(dec_traj - ref_dec)))

    print("KERNEL_OK")
</pallas_src>

<mosaic_0001>
module attributes {stable_mosaic.version = 11 : i64} {
  func.func @kernel(%arg0: memref<32x6xf32, #tpu.memory_space<vmem>>, %arg1: memref<360x128xf32, #tpu.memory_space<vmem>>, %arg2: memref<128x2xf32, #tpu.memory_space<vmem>>, %arg3: memref<128x2xf32, #tpu.memory_space<vmem>>, %arg4: memref<128x32xf32, #tpu.memory_space<vmem>>, %arg5: memref<128x8xf32, #tpu.memory_space<vmem>>, %arg6: memref<128x1xf32, #tpu.memory_space<vmem>>, %arg7: memref<32x32xf32, #tpu.memory_space<vmem>>) attributes {dimension_semantics = [], scalar_prefetch = 0 : i64, scratch_operands = 4 : i64, tpu.core_type = #tpu.core_type<tc>} {
    %c0 = arith.constant 0 : index
    %c0_0 = arith.constant 0 : index
    %0 = vector.load %arg0[%c0, %c0_0] : memref<32x6xf32, #tpu.memory_space<vmem>>, vector<32x6xf32>
    %c0_1 = arith.constant 0 : index
    %c0_2 = arith.constant 0 : index
    %1 = vector.load %arg1[%c0_1, %c0_2] : memref<360x128xf32, #tpu.memory_space<vmem>>, vector<6x32xf32>
    %cst = arith.constant dense<0.000000e+00> : vector<32x32xf32>
    %2 = tpu.matmul %0, %1, %cst {dimension_numbers = #tpu.dot_dimension_numbers<[1], [0], [0], [1], [0, 0, 1, 1], [], []>} : vector<32x6xf32>, vector<6x32xf32>, vector<32x32xf32> -> vector<32x32xf32>
    %c8 = arith.constant 8 : index
    %c0_3 = arith.constant 0 : index
    %3 = vector.load %arg1[%c8, %c0_3] : memref<360x128xf32, #tpu.memory_space<vmem>>, vector<1x32xf32>
    %4 = vector.broadcast %3 : vector<1x32xf32> to vector<32x32xf32>
    %5 = arith.addf %2, %4 : vector<32x32xf32>
    %cst_4 = arith.constant 0.000000e+00 : f32
    %6 = vector.broadcast %cst_4 : f32 to vector<32x32xf32>
    %7 = arith.maximumf %5, %6 : vector<32x32xf32>
    %c16 = arith.constant 16 : index
    %c0_5 = arith.constant 0 : index
    %8 = vector.load %arg1[%c16, %c0_5] : memref<360x128xf32, #tpu.memory_space<vmem>>, vector<32x96xf32>
    %cst_6 = arith.constant dense<0.000000e+00> : vector<32x96xf32>
    %9 = tpu.matmul %7, %8, %cst_6 {dimension_numbers = #tpu.dot_dimension_numbers<[1], [0], [0], [1], [0, 0, 1, 1], [], []>} : vector<32x32xf32>, vector<32x96xf32>, vector<32x96xf32> -> vector<32x96xf32>
    %c88 = arith.constant 88 : index
    %c0_7 = arith.constant 0 : index
    %10 = vector.load %arg1[%c88, %c0_7] : memref<360x128xf32, #tpu.memory_space<vmem>>, vector<1x96xf32>
    %11 = vector.broadcast %10 : vector<1x96xf32> to vector<32x96xf32>
    %12 = arith.addf %9, %11 : vector<32x96xf32>
    %13 = vector.extract_strided_slice %12 {offsets = [0, 0], sizes = [8, 96], strides = [1, 1]} : vector<32x96xf32> to vector<8x96xf32>
    %c96 = arith.constant 96 : index
    %c0_8 = arith.constant 0 : index
    %14 = vector.load %arg1[%c96, %c0_8] : memref<360x128xf32, #tpu.memory_space<vmem>>, vector<1x96xf32>
    %15 = vector.extract_strided_slice %13 {offsets = [0, 0], sizes = [8, 64], strides = [1, 1]} : vector<8x96xf32> to vector<8x64xf32>
    %16 = vector.extract_strided_slice %14 {offsets = [0, 0], sizes = [1, 64], strides = [1, 1]} : vector<1x96xf32> to vector<1x64xf32>
    %17 = vector.broadcast %16 : vector<1x64xf32> to vector<8x64xf32>
    %18 = arith.addf %15, %17 : vector<8x64xf32>
    %19 = arith.negf %18 : vector<8x64xf32>
    %20 = math.exp %19 : vector<8x64xf32>
    %cst_9 = arith.constant 1.000000e+00 : f32
    %21 = vector.broadcast %cst_9 : f32 to vector<8x64xf32>
    %22 = arith.addf %21, %20 : vector<8x64xf32>
    %23 = arith.divf %21, %22 : vector<8x64xf32>
    %24 = vector.extract_strided_slice %23 {offsets = [0, 0], sizes = [8, 32], strides = [1, 1]} : vector<8x64xf32> to vector<8x32xf32>
    %25 = vector.extract_strided_slice %23 {offsets = [0, 32], sizes = [8, 32], strides = [1, 1]} : vector<8x64xf32> to vector<8x32xf32>
    %26 = vector.extract_strided_slice %13 {offsets = [0, 64], sizes = [8, 32], strides = [1, 1]} : vector<8x96xf32> to vector<8x32xf32>
    %27 = vector.extract_strided_slice %14 {offsets = [0, 64], sizes = [1, 32], strides = [1, 1]} : vector<1x96xf32> to vector<1x32xf32>
    %28 = vector.broadcast %27 : vector<1x32xf32> to vector<8x32xf32>
    %29 = arith.mulf %24, %28 : vector<8x32xf32>
    %30 = arith.addf %26, %29 : vector<8x32xf32>
    %31 = math.tanh %30 : vector<8x32xf32>
    %cst_10 = arith.constant 1.000000e+00 : f32
    %32 = vector.broadcast %cst_10 : f32 to vector<8x32xf32>
    %33 = arith.subf %32, %25 : vector<8x32xf32>
    %34 = arith.mulf %33, %31 : vector<8x32xf32>
    %c104 = arith.constant 104 : index
    %c0_11 = arith.constant 0 : index
    %35 = vector.load %arg1[%c104, %c0_11] : memref<360x128xf32, #tpu.memory_space<vmem>>, vector<32x40xf32>
    %cst_12 = arith.constant dense<0.000000e+00> : vector<8x40xf32>
    %36 = tpu.matmul %34, %35, %cst_12 {dimension_numbers = #tpu.dot_dimension_numbers<[1], [0], [0], [1], [0, 0, 1, 1], [], []>} : vector<8x32xf32>, vector<32x40xf32>, vector<8x40xf32> -> vector<8x40xf32>
    %c136 = arith.constant 136 : index
    %c0_13 = arith.constant 0 : index
    %37 = vector.load %arg1[%c136, %c0_13] : memref<360x128xf32, #tpu.memory_space<vmem>>, vector<1x40xf32>
    %38 = vector.broadcast %37 : vector<1x40xf32> to vector<8x40xf32>
    %39 = arith.addf %36, %38 : vector<8x40xf32>
    %cst_14 = arith.constant 0.000000e+00 : f32
    %40 = vector.broadcast %cst_14 : f32 to vector<8x40xf32>
    %41 = arith.maximumf %39, %40 : vector<8x40xf32>
    %42 = vector.extract_strided_slice %41 {offsets = [0, 0], sizes = [8, 8], strides = [1, 1]} : vector<8x40xf32> to vector<8x8xf32>
    %43 = vector.extract_strided_slice %41 {offsets = [0, 8], sizes = [8, 32], strides = [1, 1]} : vector<8x40xf32> to vector<8x32xf32>
    %c0_15 = arith.constant 0 : index
    %c0_16 = arith.constant 0 : index
    %44 = vector.load %arg7[%c0_15, %c0_16] : memref<32x32xf32, #tpu.memory_space<vmem>>, vector<8x32xf32>
    tpu.vector_store %arg7[%c0_15, %c0_16], %43 {strides = array<i32>} : memref<32x32xf32, #tpu.memory_space<vmem>>, vector<8x32xf32>,
    %c160 = arith.constant 160 : index
    %c0_17 = arith.constant 0 : index
    %45 = vector.load %arg1[%c160, %c0_17] : memref<360x128xf32, #tpu.memory_space<vmem>>, vector<8x24xf32>
    %cst_18 = arith.constant dense<0.000000e+00> : vector<8x24xf32>
    %46 = tpu.matmul %42, %45, %cst_18 {dimension_numbers = #tpu.dot_dimension_numbers<[1], [0], [0], [1], [0, 0, 1, 1], [], []>} : vector<8x8xf32>, vector<8x24xf32>, vector<8x24xf32> -> vector<8x24xf32>
    %c168 = arith.constant 168 : index
    %c0_19 = arith.constant 0 : index
    %47 = vector.load %arg1[%c168, %c0_19] : memref<360x128xf32, #tpu.memory_space<vmem>>, vector<1x24xf32>
    %48 = vector.broadcast %47 : vector<1x24xf32> to vector<8x24xf32>
    %49 = arith.addf %46, %48 : vector<8x24xf32>
    %c152 = arith.constant 152 : index
    %c0_20 = arith.constant 0 : index
    %50 = vector.load %arg1[%c152, %c0_20] : memref<360x128xf32, #tpu.memory_space<vmem>>, vector<1x24xf32>
    %51 = vector.extract_strided_slice %50 {offsets = [0, 0], sizes = [1, 16], strides = [1, 1]} : vector<1x24xf32> to vector<1x16xf32>
    %52 = vector.extract_strided_slice %49 {offsets = [0, 0], sizes = [8, 16], strides = [1, 1]} : vector<8x24xf32> to vector<8x16xf32>
    %53 = vector.broadcast %51 : vector<1x16xf32> to vector<8x16xf32>
    %54 = arith.addf %53, %52 : vector<8x16xf32>
    %55 = arith.negf %54 : vector<8x16xf32>
    %56 = math.exp %55 : vector<8x16xf32>
    %cst_21 = arith.constant 1.000000e+00 : f32
    %57 = vector.broadcast %cst_21 : f32 to vector<8x16xf32>
    %58 = arith.addf %57, %56 : vector<8x16xf32>
    %59 = arith.divf %57, %58 : vector<8x16xf32>
    %60 = vector.extract_strided_slice %59 {offsets = [0, 0], sizes = [8, 8], strides = [1, 1]} : vector<8x16xf32> to vector<8x8xf32>
    %61 = vector.extract_strided_slice %59 {offsets = [0, 8], sizes = [8, 8], strides = [1, 1]} : vector<8x16xf32> to vector<8x8xf32>
    %62 = vector.extract_strided_slice %50 {offsets = [0, 16], sizes = [1, 8], strides = [1, 1]} : vector<1x24xf32> to vector<1x8xf32>
    %63 = vector.extract_strided_slice %49 {offsets = [0, 16], sizes = [8, 8], strides = [1, 1]} : vector<8x24xf32> to vector<8x8xf32>
    %64 = arith.mulf %60, %63 : vector<8x8xf32>
    %65 = vector.broadcast %62 : vector<1x8xf32> to vector<8x8xf32>
    %66 = arith.addf %65, %64 : vector<8x8xf32>
    %67 = math.tanh %66 : vector<8x8xf32>
    %cst_22 = arith.constant 1.000000e+00 : f32
    %68 = vector.broadcast %cst_22 : f32 to vector<8x8xf32>
    %69 = arith.subf %68, %61 : vector<8x8xf32>
    %70 = arith.mulf %69, %67 : vector<8x8xf32>
    %71 = arith.mulf %61, %42 : vector<8x8xf32>
    %72 = arith.addf %70, %71 : vector<8x8xf32>
    %c176 = arith.constant 176 : index
    %c0_23 = arith.constant 0 : index
    %73 = vector.load %arg1[%c176, %c0_23] : memref<360x128xf32, #tpu.memory_space<vmem>>, vector<8x32xf32>
    %cst_24 = arith.constant dense<0.000000e+00> : vector<8x32xf32>
    %74 = tpu.matmul %72, %73, %cst_24 {dimension_numbers = #tpu.dot_dimension_numbers<[1], [0], [0], [1], [0, 0, 1, 1], [], []>} : vector<8x8xf32>, vector<8x32xf32>, vector<8x32xf32> -> vector<8x32xf32>
    %c184 = arith.constant 184 : index
    %c0_25 = arith.constant 0 : index
    %75 = vector.load %arg1[%c184, %c0_25] : memref<360x128xf32, #tpu.memory_space<vmem>>, vector<1x32xf32>
    %76 = vector.broadcast %75 : vector<1x32xf32> to vector<8x32xf32>
    %77 = arith.addf %74, %76 : vector<8x32xf32>
    %78 = vector.extract_strided_slice %77 {offsets = [0, 0], sizes = [8, 8], strides = [1, 1]} : vector<8x32xf32> to vector<8x8xf32>
    %cst_26 = arith.constant 0.000000e+00 : f32
    %79 = vector.broadcast %cst_26 : f32 to vector<8x8xf32>
    %80 = arith.maximumf %78, %79 : vector<8x8xf32>
    %81 = vector.extract_strided_slice %77 {offsets = [0, 8], sizes = [8, 24], strides = [1, 1]} : vector<8x32xf32> to vector<8x24xf32>
    %c144 = arith.constant 144 : index
    %c0_27 = arith.constant 0 : index
    %82 = vector.load %arg1[%c144, %c0_27] : memref<360x128xf32, #tpu.memory_space<vmem>>, vector<8x24xf32>
    %cst_28 = arith.constant dense<0.000000e+00> : vector<8x24xf32>
    %83 = tpu.matmul %80, %82, %cst_28 {dimension_numbers = #tpu.dot_dimension_numbers<[1], [0], [0], [1], [0, 0, 1, 1], [], []>} : vector<8x8xf32>, vector<8x24xf32>, vector<8x24xf32> -> vector<8x24xf32>
    %c152_29 = arith.constant 152 : index
    %c0_30 = arith.constant 0 : index
    %84 = vector.load %arg1[%c152_29, %c0_30] : memref<360x128xf32, #tpu.memory_space<vmem>>, vector<1x24xf32>
    %85 = vector.broadcast %84 : vector<1x24xf32> to vector<8x24xf32>
    %86 = arith.addf %83, %85 : vector<8x24xf32>
    %87 = vector.extract_strided_slice %86 {offsets = [0, 0], sizes = [8, 16], strides = [1, 1]} : vector<8x24xf32> to vector<8x16xf32>
    %88 = vector.extract_strided_slice %81 {offsets = [0, 0], sizes = [8, 16], strides = [1, 1]} : vector<8x24xf32> to vector<8x16xf32>
    %89 = arith.addf %87, %88 : vector<8x16xf32>
    %90 = arith.negf %89 : vector<8x16xf32>
    %91 = math.exp %90 : vector<8x16xf32>
    %cst_31 = arith.constant 1.000000e+00 : f32
    %92 = vector.broadcast %cst_31 : f32 to vector<8x16xf32>
    %93 = arith.addf %92, %91 : vector<8x16xf32>
    %94 = arith.divf %92, %93 : vector<8x16xf32>
    %95 = vector.extract_strided_slice %94 {offsets = [0, 0], sizes = [8, 8], strides = [1, 1]} : vector<8x16xf32> to vector<8x8xf32>
    %96 = vector.extract_strided_slice %94 {offsets = [0, 8], sizes = [8, 8], strides = [1, 1]} : vector<8x16xf32> to vector<8x8xf32>
    %97 = vector.extract_strided_slice %86 {offsets = [0, 16], sizes = [8, 8], strides = [1, 1]} : vector<8x24xf32> to vector<8x8xf32>
    %98 = vector.extract_strided_slice %81 {offsets = [0, 16], sizes = [8, 8], strides = [1, 1]} : vector<8x24xf32> to vector<8x8xf32>
    %99 = arith.mulf %95, %98 : vector<8x8xf32>
    %100 = arith.addf %97, %99 : vector<8x8xf32>
    %101 = math.tanh %100 : vector<8x8xf32>
    %cst_32 = arith.constant 1.000000e+00 : f32
    %102 = vector.broadcast %cst_32 : f32 to vector<8x8xf32>
    %103 = arith.subf %102, %96 : vector<8x8xf32>
    %104 = arith.mulf %103, %101 : vector<8x8xf32>
    %105 = arith.mulf %96, %72 : vector<8x8xf32>
    %106 = arith.addf %104, %105 : vector<8x8xf32>
    %c176_33 = arith.constant 176 : index
    %c0_34 = arith.constant 0 : index
    %107 = vector.load %arg1[%c176_33, %c0_34] : memref<360x128xf32, #tpu.memory_space<vmem>>, vector<8x32xf32>
    %cst_35 = arith.constant dense<0.000000e+00> : vector<8x32xf32>
    %108 = tpu.matmul %106, %107, %cst_35 {dimension_numbers = #tpu.dot_dimension_numbers<[1], [0], [0], [1], [0, 0, 1, 1], [], []>} : vector<8x8xf32>, vector<8x32xf32>, vector<8x32xf32> -> vector<8x32xf32>
    %c184_36 = arith.constant 184 : index
    %c0_37 = arith.constant 0 : index
    %109 = vector.load %arg1[%c184_36, %c0_37] : memref<360x128xf32, #tpu.memory_space<vmem>>, vector<1x32xf32>
    %110 = vector.broadcast %109 : vector<1x32xf32> to vector<8x32xf32>
    %111 = arith.addf %108, %110 : vector<8x32xf32>
    %112 = vector.extract_strided_slice %111 {offsets = [0, 0], sizes = [8, 8], strides = [1, 1]} : vector<8x32xf32> to vector<8x8xf32>
    %cst_38 = arith.constant 0.000000e+00 : f32
    %113 = vector.broadcast %cst_38 : f32 to vector<8x8xf32>
    %114 = arith.maximumf %112, %113 : vector<8x8xf32>
    %115 = vector.extract_strided_slice %111 {offsets = [0, 8], sizes = [8, 24], strides = [1, 1]} : vector<8x32xf32> to vector<8x24xf32>
    %c144_39 = arith.constant 144 : index
    %c0_40 = arith.constant 0 : index
    %116 = vector.load %arg1[%c144_39, %c0_40] : memref<360x128xf32, #tpu.memory_space<vmem>>, vector<8x24xf32>
    %cst_41 = arith.constant dense<0.000000e+00> : vector<8x24xf32>
    %117 = tpu.matmul %114, %116, %cst_41 {dimension_numbers = #tpu.dot_dimension_numbers<[1], [0], [0], [1], [0, 0, 1, 1], [], []>} : vector<8x8xf32>, vector<8x24xf32>, vector<8x24xf32> -> vector<8x24xf32>
    %c152_42 = arith.constant 152 : index
    %c0_43 = arith.constant 0 : index
    %118 = vector.load %arg1[%c152_42, %c0_43] : memref<360x128xf32, #tpu.memory_space<vmem>>, vector<1x24xf32>
    %119 = vector.broadcast %118 : vector<1x24xf32> to vector<8x24xf32>
    %120 = arith.addf %117, %119 : vector<8x24xf32>
    %121 = vector.extract_strided_slice %120 {offsets = [0, 0], sizes = [8, 16], strides = [1, 1]} : vector<8x24xf32> to vector<8x16xf32>
    %122 = vector.extract_strided_slice %115 {offsets = [0, 0], sizes = [8, 16], strides = [1, 1]} : vector<8x24xf32> to vector<8x16xf32>
    %123 = arith.addf %121, %122 : vector<8x16xf32>
    %124 = arith.negf %123 : vector<8x16xf32>
    %125 = math.exp %124 : vector<8x16xf32>
    %cst_44 = arith.constant 1.000000e+00 : f32
    %126 = vector.broadcast %cst_44 : f32 to vector<8x16xf32>
    %127 = arith.addf %126, %125 : vector<8x16xf32>
    %128 = arith.divf %126, %127 : vector<8x16xf32>
    %129 = vector.extract_strided_slice %128 {offsets = [0, 0], sizes = [8, 8], strides = [1, 1]} : vector<8x16xf32> to vector<8x8xf32>
    %130 = vector.extract_strided_slice %128 {offsets = [0, 8], sizes = [8, 8], strides = [1, 1]} : vector<8x16xf32> to vector<8x8xf32>
    %131 = vector.extract_strided_slice %120 {offsets = [0, 16], sizes = [8, 8], strides = [1, 1]} : vector<8x24xf32> to vector<8x8xf32>
    %132 = vector.extract_strided_slice %115 {offsets = [0, 16], sizes = [8, 8], strides = [1, 1]} : vector<8x24xf32> to vector<8x8xf32>
    %133 = arith.mulf %129, %132 : vector<8x8xf32>
    %134 = arith.addf %131, %133 : vector<8x8xf32>
    %135 = math.tanh %134 : vector<8x8xf32>
    %cst_45 = arith.constant 1.000000e+00 : f32
    %136 = vector.broadcast %cst_45 : f32 to vector<8x8xf32>
    %137 = arith.subf %136, %130 : vector<8x8xf32>
    %138 = arith.mulf %137, %135 : vector<8x8xf32>
    %139 = arith.mulf %130, %106 : vector<8x8xf32>
    %140 = arith.addf %138, %139 : vector<8x8xf32>
    %c176_46 = arith.constant 176 : index
    %c0_47 = arith.constant 0 : index
    %141 = vector.load %arg1[%c176_46, %c0_47] : memref<360x128xf32, #tpu.memory_space<vmem>>, vector<8x32xf32>
    %cst_48 = arith.constant dense<0.000000e+00> : vector<8x32xf32>
    %142 = tpu.matmul %140, %141, %cst_48 {dimension_numbers = #tpu.dot_dimension_numbers<[1], [0], [0], [1], [0, 0, 1, 1], [], []>} : vector<8x8xf32>, vector<8x32xf32>, vector<8x32xf32> -> vector<8x32xf32>
    %c184_49 = arith.constant 184 : index
    %c0_50 = arith.constant 0 : index
    %143 = vector.load %arg1[%c184_49, %c0_50] : memref<360x128xf32, #tpu.memory_space<vmem>>, vector<1x32xf32>
    %144 = vector.broadcast %143 : vector<1x32xf32> to vector<8x32xf32>
    %145 = arith.addf %142, %144 : vector<8x32xf32>
    %146 = vector.extract_strided_slice %145 {offsets = [0, 0], sizes = [8, 8], strides = [1, 1]} : vector<8x32xf32> to vector<8x8xf32>
    %cst_51 = arith.constant 0.000000e+00 : f32
    %147 = vector.broadcast %cst_51 : f32 to vector<8x8xf32>
    %148 = arith.maximumf %146, %147 : vector<8x8xf32>
    %149 = vector.extract_strided_slice %145 {offsets = [0, 8], sizes = [8, 24], strides = [1, 1]} : vector<8x32xf32> to vector<8x24xf32>
    %c144_52 = arith.constant 144 : index
    %c0_53 = arith.constant 0 : index
    %150 = vector.load %arg1[%c144_52, %c0_53] : memref<360x128xf32, #tpu.memory_space<vmem>>, vector<8x24xf32>
    %cst_54 = arith.constant dense<0.000000e+00> : vector<8x24xf32>
    %151 = tpu.matmul %148, %150, %cst_54 {dimension_numbers = #tpu.dot_dimension_numbers<[1], [0], [0], [1], [0, 0, 1, 1], [], []>} : vector<8x8xf32>, vector<8x24xf32>, vector<8x24xf32> -> vector<8x24xf32>
    %c152_55 = arith.constant 152 : index
    %c0_56 = arith.constant 0 : index
    %152 = vector.load %arg1[%c152_55, %c0_56] : memref<360x128xf32, #tpu.memory_space<vmem>>, vector<1x24xf32>
    %153 = vector.broadcast %152 : vector<1x24xf32> to vector<8x24xf32>
    %154 = arith.addf %151, %153 : vector<8x24xf32>
    %155 = vector.extract_strided_slice %154 {offsets = [0, 0], sizes = [8, 16], strides = [1, 1]} : vector<8x24xf32> to vector<8x16xf32>
    %156 = vector.extract_strided_slice %149 {offsets = [0, 0], sizes = [8, 16], strides = [1, 1]} : vector<8x24xf32> to vector<8x16xf32>
    %157 = arith.addf %155, %156 : vector<8x16xf32>
    %158 = arith.negf %157 : vector<8x16xf32>
    %159 = math.exp %158 : vector<8x16xf32>
    %cst_57 = arith.constant 1.000000e+00 : f32
    %160 = vector.broadcast %cst_57 : f32 to vector<8x16xf32>
    %161 = arith.addf %160, %159 : vector<8x16xf32>
    %162 = arith.divf %160, %161 : vector<8x16xf32>
    %163 = vector.extract_strided_slice %162 {offsets = [0, 0], sizes = [8, 8], strides = [1, 1]} : vector<8x16xf32> to vector<8x8xf32>
    %164 = vector.extract_strided_slice %162 {offsets = [0, 8], sizes = [8, 8], strides = [1, 1]} : vector<8x16xf32> to vector<8x8xf32>
    %165 = vector.extract_strided_slice %154 {offsets = [0, 16], sizes = [8, 8], strides = [1, 1]} : vector<8x24xf32> to vector<8x8xf32>
    %166 = vector.extract_strided_slice %149 {offsets = [0, 16], sizes = [8, 8], strides = [1, 1]} : vector<8x24xf32> to vector<8x8xf32>
    %167 = arith.mulf %163, %166 : vector<8x8xf32>
    %168 = arith.addf %165, %167 : vector<8x8xf32>
    %169 = math.tanh %168 : vector<8x8xf32>
    %cst_58 = arith.constant 1.000000e+00 : f32
    %170 = vector.broadcast %cst_58 : f32 to vector<8x8xf32>
    %171 = arith.subf %170, %164 : vector<8x8xf32>
    %172 = arith.mulf %171, %169 : vector<8x8xf32>
    %173 = arith.mulf %164, %140 : vector<8x8xf32>
    %174 = arith.addf %172, %173 : vector<8x8xf32>
    %175 = tpu.concatenate %72, %106, %140, %174 in 0 : vector<8x8xf32>, vector<8x8xf32>, vector<8x8xf32>, vector<8x8xf32> -> vector<32x8xf32>
    %c192 = arith.constant 192 : index
    %c0_59 = arith.constant 0 : index
    %176 = vector.load %arg1[%c192, %c0_59] : memref<360x128xf32, #tpu.memory_space<vmem>>, vector<8x48xf32>
    %cst_60 = arith.constant dense<0.000000e+00> : vector<32x48xf32>
    %177 = tpu.matmul %175, %176, %cst_60 {dimension_numbers = #tpu.dot_dimension_numbers<[1], [0], [0], [1], [0, 0, 1, 1], [], []>} : vector<32x8xf32>, vector<8x48xf32>, vector<32x48xf32> -> vector<32x48xf32>
    %c200 = arith.constant 200 : index
    %c0_61 = arith.constant 0 : index
    %178 = vector.load %arg1[%c200, %c0_61] : memref<360x128xf32, #tpu.memory_space<vmem>>, vector<1x48xf32>
    %179 = vector.broadcast %178 : vector<1x48xf32> to vector<32x48xf32>
    %180 = arith.addf %177, %179 : vector<32x48xf32>
    %cst_62 = arith.constant 0.000000e+00 : f32
    %181 = vector.broadcast %cst_62 : f32 to vector<32x48xf32>
    %182 = arith.maximumf %180, %181 : vector<32x48xf32>
    %183 = vector.extract_strided_slice %182 {offsets = [0, 32], sizes = [32, 16], strides = [1, 1]} : vector<32x48xf32> to vector<32x16xf32>
    %184 = math.tanh %183 : vector<32x16xf32>
    %c208 = arith.constant 208 : index
    %c0_63 = arith.constant 0 : index
    %185 = vector.load %arg1[%c208, %c0_63] : memref<360x128xf32, #tpu.memory_space<vmem>>, vector<16x2xf32>
    %cst_64 = arith.constant dense<0.000000e+00> : vector<32x2xf32>
    %186 = tpu.matmul %184, %185, %cst_64 {dimension_numbers = #tpu.dot_dimension_numbers<[1], [0], [0], [1], [0, 0, 1, 1], [], []>} : vector<32x16xf32>, vector<16x2xf32>, vector<32x2xf32> -> vector<32x2xf32>
    %c224 = arith.constant 224 : index
    %c0_65 = arith.constant 0 : index
    %187 = vector.load %arg1[%c224, %c0_65] : memref<360x128xf32, #tpu.memory_space<vmem>>, vector<1x2xf32>
    %188 = vector.broadcast %187 : vector<1x2xf32> to vector<32x2xf32>
    %189 = arith.addf %186, %188 : vector<32x2xf32>
    %cst_66 = arith.constant 0.000000e+00 : f32
    %190 = vector.broadcast %cst_66 : f32 to vector<32x2xf32>
    %191 = arith.maximumf %189, %190 : vector<32x2xf32>
    %192 = vector.extract_strided_slice %182 {offsets = [0, 0], sizes = [32, 32], strides = [1, 1]} : vector<32x48xf32> to vector<32x32xf32>
    %c0_67 = arith.constant 0 : index
    %c0_68 = arith.constant 0 : index
    %193 = vector.load %arg4[%c0_67, %c0_68] : memref<128x32xf32, #tpu.memory_space<vmem>>, vector<32x32xf32>
    tpu.vector_store %arg4[%c0_67, %c0_68], %192 {strides = array<i32>} : memref<128x32xf32, #tpu.memory_space<vmem>>, vector<32x32xf32>,
    %194 = vector.extract_strided_slice %182 {offsets = [0, 40], sizes = [8, 8], strides = [1, 1]} : vector<32x48xf32> to vector<8x8xf32>
    %c0_69 = arith.constant 0 : index
    %c0_70 = arith.constant 0 : index
    %195 = vector.load %arg5[%c0_69, %c0_70] : memref<128x8xf32, #tpu.memory_space<vmem>>, vector<8x8xf32>
    tpu.vector_store %arg5[%c0_69, %c0_70], %194 {strides = array<i32>} : memref<128x8xf32, #tpu.memory_space<vmem>>, vector<8x8xf32>,
    %196 = vector.extract_strided_slice %191 {offsets = [0, 1], sizes = [8, 1], strides = [1, 1]} : vector<32x2xf32> to vector<8x1xf32>
    %c0_71 = arith.constant 0 : index
    %c0_72 = arith.constant 0 : index
    %197 = vector.load %arg6[%c0_71, %c0_72] : memref<128x1xf32, #tpu.memory_space<vmem>>, vector<8x1xf32>
    tpu.vector_store %arg6[%c0_71, %c0_72], %196 {strides = array<i32>} : memref<128x1xf32, #tpu.memory_space<vmem>>, vector<8x1xf32>,
    %198 = vector.extract_strided_slice %182 {offsets = [8, 40], sizes = [8, 8], strides = [1, 1]} : vector<32x48xf32> to vector<8x8xf32>
    %c32 = arith.constant 32 : index
    %c0_73 = arith.constant 0 : index
    %199 = vector.load %arg5[%c32, %c0_73] : memref<128x8xf32, #tpu.memory_space<vmem>>, vector<8x8xf32>
    tpu.vector_store %arg5[%c32, %c0_73], %198 {strides = array<i32>} : memref<128x8xf32, #tpu.memory_space<vmem>>, vector<8x8xf32>,
    %200 = vector.extract_strided_slice %191 {offsets = [8, 1], sizes = [8, 1], strides = [1, 1]} : vector<32x2xf32> to vector<8x1xf32>
    %c32_74 = arith.constant 32 : index
    %c0_75 = arith.constant 0 : index
    %201 = vector.load %arg6[%c32_74, %c0_75] : memref<128x1xf32, #tpu.memory_space<vmem>>, vector<8x1xf32>
    tpu.vector_store %arg6[%c32_74, %c0_75], %200 {strides = array<i32>} : memref<128x1xf32, #tpu.memory_space<vmem>>, vector<8x1xf32>,
    %202 = vector.extract_strided_slice %182 {offsets = [16, 40], sizes = [8, 8], strides = [1, 1]} : vector<32x48xf32> to vector<8x8xf32>
    %c64 = arith.constant 64 : index
    %c0_76 = arith.constant 0 : index
    %203 = vector.load %arg5[%c64, %c0_76] : memref<128x8xf32, #tpu.memory_space<vmem>>, vector<8x8xf32>
    tpu.vector_store %arg5[%c64, %c0_76], %202 {strides = array<i32>} : memref<128x8xf32, #tpu.memory_space<vmem>>, vector<8x8xf32>,
    %204 = vector.extract_strided_slice %191 {offsets = [16, 1], sizes = [8, 1], strides = [1, 1]} : vector<32x2xf32> to vector<8x1xf32>
    %c64_77 = arith.constant 64 : index
    %c0_78 = arith.constant 0 : index
    %205 = vector.load %arg6[%c64_77, %c0_78] : memref<128x1xf32, #tpu.memory_space<vmem>>, vector<8x1xf32>
    tpu.vector_store %arg6[%c64_77, %c0_78], %204 {strides = array<i32>} : memref<128x1xf32, #tpu.memory_space<vmem>>, vector<8x1xf32>,
    %206 = vector.extract_strided_slice %182 {offsets = [24, 40], sizes = [8, 8], strides = [1, 1]} : vector<32x48xf32> to vector<8x8xf32>
    %c96_79 = arith.constant 96 : index
    %c0_80 = arith.constant 0 : index
    %207 = vector.load %arg5[%c96_79, %c0_80] : memref<128x8xf32, #tpu.memory_space<vmem>>, vector<8x8xf32>
    tpu.vector_store %arg5[%c96_79, %c0_80], %206 {strides = array<i32>} : memref<128x8xf32, #tpu.memory_space<vmem>>, vector<8x8xf32>,
    %208 = vector.extract_strided_slice %191 {offsets = [24, 1], sizes = [8, 1], strides = [1, 1]} : vector<32x2xf32> to vector<8x1xf32>
    %c96_81 = arith.constant 96 : index
    %c0_82 = arith.constant 0 : index
    %209 = vector.load %arg6[%c96_81, %c0_82] : memref<128x1xf32, #tpu.memory_space<vmem>>, vector<8x1xf32>
    tpu.vector_store %arg6[%c96_81, %c0_82], %208 {strides = array<i32>} : memref<128x1xf32, #tpu.memory_space<vmem>>, vector<8x1xf32>,
    %210 = vector.extract_strided_slice %182 {offsets = [0, 32], sizes = [32, 8], strides = [1, 1]} : vector<32x48xf32> to vector<32x8xf32>
    %c48 = arith.constant 48 : index
    %c0_83 = arith.constant 0 : index
    %211 = vector.load %arg1[%c48, %c0_83] : memref<360x128xf32, #tpu.memory_space<vmem>>, vector<8x96xf32>
    %cst_84 = arith.constant dense<0.000000e+00> : vector<32x96xf32>
    %212 = tpu.matmul %210, %211, %cst_84 {dimension_numbers = #tpu.dot_dimension_numbers<[1], [0], [0], [1], [0, 0, 1, 1], [], []>} : vector<32x8xf32>, vector<8x96xf32>, vector<32x96xf32> -> vector<32x96xf32>
    %213 = vector.extract_strided_slice %191 {offsets = [0, 0], sizes = [8, 1], strides = [1, 1]} : vector<32x2xf32> to vector<8x1xf32>
    %214 = vector.extract_strided_slice %191 {offsets = [8, 0], sizes = [8, 1], strides = [1, 1]} : vector<32x2xf32> to vector<8x1xf32>
    %215 = vector.extract_strided_slice %191 {offsets = [16, 0], sizes = [8, 1], strides = [1, 1]} : vector<32x2xf32> to vector<8x1xf32>
    %216 = vector.extract_strided_slice %191 {offsets = [24, 0], sizes = [8, 1], strides = [1, 1]} : vector<32x2xf32> to vector<8x1xf32>
    %217 = arith.maximumf %213, %214 : vector<8x1xf32>
    %218 = arith.maximumf %217, %215 : vector<8x1xf32>
    %219 = arith.maximumf %218, %216 : vector<8x1xf32>
    %220 = arith.subf %213, %219 : vector<8x1xf32>
    %221 = math.exp %220 : vector<8x1xf32>
    %222 = arith.subf %214, %219 : vector<8x1xf32>
    %223 = math.exp %222 : vector<8x1xf32>
    %224 = arith.subf %215, %219 : vector<8x1xf32>
    %225 = math.exp %224 : vector<8x1xf32>
    %226 = arith.subf %216, %219 : vector<8x1xf32>
    %227 = math.exp %226 : vector<8x1xf32>
    %228 = vector.extract_strided_slice %212 {offsets = [0, 0], sizes = [8, 96], strides = [1, 1]} : vector<32x96xf32> to vector<8x96xf32>
    %229 = vector.broadcast %221 : vector<8x1xf32> to vector<8x96xf32>
    %230 = arith.mulf %229, %228 : vector<8x96xf32>
    %231 = arith.addf %221, %223 : vector<8x1xf32>
    %232 = vector.extract_strided_slice %212 {offsets = [8, 0], sizes = [8, 96], strides = [1, 1]} : vector<32x96xf32> to vector<8x96xf32>
    %233 = vector.broadcast %223 : vector<8x1xf32> to vector<8x96xf32>
    %234 = arith.mulf %233, %232 : vector<8x96xf32>
    %235 = arith.addf %230, %234 : vector<8x96xf32>
    %236 = arith.addf %231, %225 : vector<8x1xf32>
    %237 = vector.extract_strided_slice %212 {offsets = [16, 0], sizes = [8, 96], strides = [1, 1]} : vector<32x96xf32> to vector<8x96xf32>
    %238 = vector.broadcast %225 : vector<8x1xf32> to vector<8x96xf32>
    %239 = arith.mulf %238, %237 : vector<8x96xf32>
    %240 = arith.addf %235, %239 : vector<8x96xf32>
    %241 = arith.addf %236, %227 : vector<8x1xf32>
    %242 = vector.extract_strided_slice %212 {offsets = [24, 0], sizes = [8, 96], strides = [1, 1]} : vector<32x96xf32> to vector<8x96xf32>
    %243 = vector.broadcast %227 : vector<8x1xf32> to vector<8x96xf32>
    %244 = arith.mulf %243, %242 : vector<8x96xf32>
    %245 = arith.addf %240, %244 : vector<8x96xf32>
    %246 = vector.broadcast %241 : vector<8x1xf32> to vector<8x96xf32>
    %247 = arith.divf %245, %246 : vector<8x96xf32>
    %248 = vector.extract_strided_slice %12 {offsets = [8, 0], sizes = [8, 96], strides = [1, 1]} : vector<32x96xf32> to vector<8x96xf32>
    %249 = arith.addf %248, %247 : vector<8x96xf32>
    %c56 = arith.constant 56 : index
    %c0_85 = arith.constant 0 : index
    %250 = vector.load %arg1[%c56, %c0_85] : memref<360x128xf32, #tpu.memory_space<vmem>>, vector<32x96xf32>
    %cst_86 = arith.constant dense<0.000000e+00> : vector<8x96xf32>
    %251 = tpu.matmul %34, %250, %cst_86 {dimension_numbers = #tpu.dot_dimension_numbers<[1], [0], [0], [1], [0, 0, 1, 1], [], []>} : vector<8x32xf32>, vector<32x96xf32>, vector<8x96xf32> -> vector<8x96xf32>
    %c96_87 = arith.constant 96 : index
    %c0_88 = arith.constant 0 : index
    %252 = vector.load %arg1[%c96_87, %c0_88] : memref<360x128xf32, #tpu.memory_space<vmem>>, vector<1x96xf32>
    %253 = vector.broadcast %252 : vector<1x96xf32> to vector<8x96xf32>
    %254 = arith.addf %251, %253 : vector<8x96xf32>
    %255 = vector.extract_strided_slice %249 {offsets = [0, 0], sizes = [8, 64], strides = [1, 1]} : vector<8x96xf32> to vector<8x64xf32>
    %256 = vector.extract_strided_slice %254 {offsets = [0, 0], sizes = [8, 64], strides = [1, 1]} : vector<8x96xf32> to vector<8x64xf32>
    %257 = arith.addf %255, %256 : vector<8x64xf32>
    %258 = arith.negf %257 : vector<8x64xf32>
    %259 = math.exp %258 : vector<8x64xf32>
    %cst_89 = arith.constant 1.000000e+00 : f32
    %260 = vector.broadcast %cst_89 : f32 to vector<8x64xf32>
    %261 = arith.addf %260, %259 : vector<8x64xf32>
    %262 = arith.divf %260, %261 : vector<8x64xf32>
    %263 = vector.extract_strided_slice %262 {offsets = [0, 0], sizes = [8, 32], strides = [1, 1]} : vector<8x64xf32> to vector<8x32xf32>
    %264 = vector.extract_strided_slice %262 {offsets = [0, 32], sizes = [8, 32], strides = [1, 1]} : vector<8x64xf32> to vector<8x32xf32>
    %265 = vector.extract_strided_slice %249 {offsets = [0, 64], sizes = [8, 32], strides = [1, 1]} : vector<8x96xf32> to vector<8x32xf32>
    %266 = vector.extract_strided_slice %254 {offsets = [0, 64], sizes = [8, 32], strides = [1, 1]} : vector<8x96xf32> to vector<8x32xf32>
    %267 = arith.mulf %263, %266 : vector<8x32xf32>
    %268 = arith.addf %265, %267 : vector<8x32xf32>
    %269 = math.tanh %268 : vector<8x32xf32>
    %cst_90 = arith.constant 1.000000e+00 : f32
    %270 = vector.broadcast %cst_90 : f32 to vector<8x32xf32>
    %271 = arith.subf %270, %264 : vector<8x32xf32>
    %272 = arith.mulf %271, %269 : vector<8x32xf32>
    %273 = arith.mulf %264, %34 : vector<8x32xf32>
    %274 = arith.addf %272, %273 : vector<8x32xf32>
    %c104_91 = arith.constant 104 : index
    %c0_92 = arith.constant 0 : index
    %275 = vector.load %arg1[%c104_91, %c0_92] : memref<360x128xf32, #tpu.memory_space<vmem>>, vector<32x40xf32>
    %cst_93 = arith.constant dense<0.000000e+00> : vector<8x40xf32>
    %276 = tpu.matmul %274, %275, %cst_93 {dimension_numbers = #tpu.dot_dimension_numbers<[1], [0], [0], [1], [0, 0, 1, 1], [], []>} : vector<8x32xf32>, vector<32x40xf32>, vector<8x40xf32> -> vector<8x40xf32>
    %c136_94 = arith.constant 136 : index
    %c0_95 = arith.constant 0 : index
    %277 = vector.load %arg1[%c136_94, %c0_95] : memref<360x128xf32, #tpu.memory_space<vmem>>, vector<1x40xf32>
    %278 = vector.broadcast %277 : vector<1x40xf32> to vector<8x40xf32>
    %279 = arith.addf %276, %278 : vector<8x40xf32>
    %cst_96 = arith.constant 0.000000e+00 : f32
    %280 = vector.broadcast %cst_96 : f32 to vector<8x40xf32>
    %281 = arith.maximumf %279, %280 : vector<8x40xf32>
    %282 = vector.extract_strided_slice %281 {offsets = [0, 0], sizes = [8, 8], strides = [1, 1]} : vector<8x40xf32> to vector<8x8xf32>
    %283 = vector.extract_strided_slice %281 {offsets = [0, 8], sizes = [8, 32], strides = [1, 1]} : vector<8x40xf32> to vector<8x32xf32>
    %c8_97 = arith.constant 8 : index
    %c0_98 = arith.constant 0 : index
    %284 = vector.load %arg7[%c8_97, %c0_98] : memref<32x32xf32, #tpu.memory_space<vmem>>, vector<8x32xf32>
    tpu.vector_store %arg7[%c8_97, %c0_98], %283 {strides = array<i32>} : memref<32x32xf32, #tpu.memory_space<vmem>>, vector<8x32xf32>,
    %c160_99 = arith.constant 160 : index
    %c0_100 = arith.constant 0 : index
    %285 = vector.load %arg1[%c160_99, %c0_100] : memref<360x128xf32, #tpu.memory_space<vmem>>, vector<8x24xf32>
    %cst_101 = arith.constant dense<0.000000e+00> : vector<8x24xf32>
    %286 = tpu.matmul %282, %285, %cst_101 {dimension_numbers = #tpu.dot_dimension_numbers<[1], [0], [0], [1], [0, 0, 1, 1], [], []>} : vector<8x8xf32>, vector<8x24xf32>, vector<8x24xf32> -> vector<8x24xf32>
    %c168_102 = arith.constant 168 : index
    %c0_103 = arith.constant 0 : index
    %287 = vector.load %arg1[%c168_102, %c0_103] : memref<360x128xf32, #tpu.memory_space<vmem>>, vector<1x24xf32>
    %288 = vector.broadcast %287 : vector<1x24xf32> to vector<8x24xf32>
    %289 = arith.addf %286, %288 : vector<8x24xf32>
    %c152_104 = arith.constant 152 : index
    %c0_105 = arith.constant 0 : index
    %290 = vector.load %arg1[%c152_104, %c0_105] : memref<360x128xf32, #tpu.memory_space<vmem>>, vector<1x24xf32>
    %291 = vector.extract_strided_slice %290 {offsets = [0, 0], sizes = [1, 16], strides = [1, 1]} : vector<1x24xf32> to vector<1x16xf32>
    %292 = vector.extract_strided_slice %289 {offsets = [0, 0], sizes = [8, 16], strides = [1, 1]} : vector<8x24xf32> to vector<8x16xf32>
    %293 = vector.broadcast %291 : vector<1x16xf32> to vector<8x16xf32>
    %294 = arith.addf %293, %292 : vector<8x16xf32>
    %295 = arith.negf %294 : vector<8x16xf32>
    %296 = math.exp %295 : vector<8x16xf32>
    %cst_106 = arith.constant 1.000000e+00 : f32
    %297 = vector.broadcast %cst_106 : f32 to vector<8x16xf32>
    %298 = arith.addf %297, %296 : vector<8x16xf32>
    %299 = arith.divf %297, %298 : vector<8x16xf32>
    %300 = vector.extract_strided_slice %299 {offsets = [0, 0], sizes = [8, 8], strides = [1, 1]} : vector<8x16xf32> to vector<8x8xf32>
    %301 = vector.extract_strided_slice %299 {offsets = [0, 8], sizes = [8, 8], strides = [1, 1]} : vector<8x16xf32> to vector<8x8xf32>
    %302 = vector.extract_strided_slice %290 {offsets = [0, 16], sizes = [1, 8], strides = [1, 1]} : vector<1x24xf32> to vector<1x8xf32>
    %303 = vector.extract_strided_slice %289 {offsets = [0, 16], sizes = [8, 8], strides = [1, 1]} : vector<8x24xf32> to vector<8x8xf32>
    %304 = arith.mulf %300, %303 : vector<8x8xf32>
    %305 = vector.broadcast %302 : vector<1x8xf32> to vector<8x8xf32>
    %306 = arith.addf %305, %304 : vector<8x8xf32>
    %307 = math.tanh %306 : vector<8x8xf32>
    %cst_107 = arith.constant 1.000000e+00 : f32
    %308 = vector.broadcast %cst_107 : f32 to vector<8x8xf32>
    %309 = arith.subf %308, %301 : vector<8x8xf32>
    %310 = arith.mulf %309, %307 : vector<8x8xf32>
    %311 = arith.mulf %301, %282 : vector<8x8xf32>
    %312 = arith.addf %310, %311 : vector<8x8xf32>
    %c176_108 = arith.constant 176 : index
    %c0_109 = arith.constant 0 : index
    %313 = vector.load %arg1[%c176_108, %c0_109] : memref<360x128xf32, #tpu.memory_space<vmem>>, vector<8x32xf32>
    %cst_110 = arith.constant dense<0.000000e+00> : vector<8x32xf32>
    %314 = tpu.matmul %312, %313, %cst_110 {dimension_numbers = #tpu.dot_dimension_numbers<[1], [0], [0], [1], [0, 0, 1, 1], [], []>} : vector<8x8xf32>, vector<8x32xf32>, vector<8x32xf32> -> vector<8x32xf32>
    %c184_111 = arith.constant 184 : index
    %c0_112 = arith.constant 0 : index
    %315 = vector.load %arg1[%c184_111, %c0_112] : memref<360x128xf32, #tpu.memory_space<vmem>>, vector<1x32xf32>
    %316 = vector.broadcast %315 : vector<1x32xf32> to vector<8x32xf32>
    %317 = arith.addf %314, %316 : vector<8x32xf32>
    %318 = vector.extract_strided_slice %317 {offsets = [0, 0], sizes = [8, 8], strides = [1, 1]} : vector<8x32xf32> to vector<8x8xf32>
    %cst_113 = arith.constant 0.000000e+00 : f32
    %319 = vector.broadcast %cst_113 : f32 to vector<8x8xf32>
    %320 = arith.maximumf %318, %319 : vector<8x8xf32>
    %321 = vector.extract_strided_slice %317 {offsets = [0, 8], sizes = [8, 24], strides = [1, 1]} : vector<8x32xf32> to vector<8x24xf32>
    %c144_114 = arith.constant 144 : index
    %c0_115 = arith.constant 0 : index
    %322 = vector.load %arg1[%c144_114, %c0_115] : memref<360x128xf32, #tpu.memory_space<vmem>>, vector<8x24xf32>
    %cst_116 = arith.constant dense<0.000000e+00> : vector<8x24xf32>
    %323 = tpu.matmul %320, %322, %cst_116 {dimension_numbers = #tpu.dot_dimension_numbers<[1], [0], [0], [1], [0, 0, 1, 1], [], []>} : vector<8x8xf32>, vector<8x24xf32>, vector<8x24xf32> -> vector<8x24xf32>
    %c152_117 = arith.constant 152 : index
    %c0_118 = arith.constant 0 : index
    %324 = vector.load %arg1[%c152_117, %c0_118] : memref<360x128xf32, #tpu.memory_space<vmem>>, vector<1x24xf32>
    %325 = vector.broadcast %324 : vector<1x24xf32> to vector<8x24xf32>
    %326 = arith.addf %323, %325 : vector<8x24xf32>
    %327 = vector.extract_strided_slice %326 {offsets = [0, 0], sizes = [8, 16], strides = [1, 1]} : vector<8x24xf32> to vector<8x16xf32>
    %328 = vector.extract_strided_slice %321 {offsets = [0, 0], sizes = [8, 16], strides = [1, 1]} : vector<8x24xf32> to vector<8x16xf32>
    %329 = arith.addf %327, %328 : vector<8x16xf32>
    %330 = arith.negf %329 : vector<8x16xf32>
    %331 = math.exp %330 : vector<8x16xf32>
    %cst_119 = arith.constant 1.000000e+00 : f32
    %332 = vector.broadcast %cst_119 : f32 to vector<8x16xf32>
    %333 = arith.addf %332, %331 : vector<8x16xf32>
    %334 = arith.divf %332, %333 : vector<8x16xf32>
    %335 = vector.extract_strided_slice %334 {offsets = [0, 0], sizes = [8, 8], strides = [1, 1]} : vector<8x16xf32> to vector<8x8xf32>
    %336 = vector.extract_strided_slice %334 {offsets = [0, 8], sizes = [8, 8], strides = [1, 1]} : vector<8x16xf32> to vector<8x8xf32>
    %337 = vector.extract_strided_slice %326 {offsets = [0, 16], sizes = [8, 8], strides = [1, 1]} : vector<8x24xf32> to vector<8x8xf32>
    %338 = vector.extract_strided_slice %321 {offsets = [0, 16], sizes = [8, 8], strides = [1, 1]} : vector<8x24xf32> to vector<8x8xf32>
    %339 = arith.mulf %335, %338 : vector<8x8xf32>
    %340 = arith.addf %337, %339 : vector<8x8xf32>
    %341 = math.tanh %340 : vector<8x8xf32>
    %cst_120 = arith.constant 1.000000e+00 : f32
    %342 = vector.broadcast %cst_120 : f32 to vector<8x8xf32>
    %343 = arith.subf %342, %336 : vector<8x8xf32>
    %344 = arith.mulf %343, %341 : vector<8x8xf32>
    %345 = arith.mulf %336, %312 : vector<8x8xf32>
    %346 = arith.addf %344, %345 : vector<8x8xf32>
    %c176_121 = arith.constant 176 : index
    %c0_122 = arith.constant 0 : index
    %347 = vector.load %arg1[%c176_121, %c0_122] : memref<360x128xf32, #tpu.memory_space<vmem>>, vector<8x32xf32>
    %cst_123 = arith.constant dense<0.000000e+00> : vector<8x32xf32>
    %348 = tpu.matmul %346, %347, %cst_123 {dimension_numbers = #tpu.dot_dimension_numbers<[1], [0], [0], [1], [0, 0, 1, 1], [], []>} : vector<8x8xf32>, vector<8x32xf32>, vector<8x32xf32> -> vector<8x32xf32>
    %c184_124 = arith.constant 184 : index
    %c0_125 = arith.constant 0 : index
    %349 = vector.load %arg1[%c184_124, %c0_125] : memref<360x128xf32, #tpu.memory_space<vmem>>, vector<1x32xf32>
    %350 = vector.broadcast %349 : vector<1x32xf32> to vector<8x32xf32>
    %351 = arith.addf %348, %350 : vector<8x32xf32>
    %352 = vector.extract_strided_slice %351 {offsets = [0, 0], sizes = [8, 8], strides = [1, 1]} : vector<8x32xf32> to vector<8x8xf32>
    %cst_126 = arith.constant 0.000000e+00 : f32
    %353 = vector.broadcast %cst_126 : f32 to vector<8x8xf32>
    %354 = arith.maximumf %352, %353 : vector<8x8xf32>
    %355 = vector.extract_strided_slice %351 {offsets = [0, 8], sizes = [8, 24], strides = [1, 1]} : vector<8x32xf32> to vector<8x24xf32>
    %c144_127 = arith.constant 144 : index
    %c0_128 = arith.constant 0 : index
    %356 = vector.load %arg1[%c144_127, %c0_128] : memref<360x128xf32, #tpu.memory_space<vmem>>, vector<8x24xf32>
    %cst_129 = arith.constant dense<0.000000e+00> : vector<8x24xf32>
    %357 = tpu.matmul %354, %356, %cst_129 {dimension_numbers = #tpu.dot_dimension_numbers<[1], [0], [0], [1], [0, 0, 1, 1], [], []>} : vector<8x8xf32>, vector<8x24xf32>, vector<8x24xf32> -> vector<8x24xf32>
    %c152_130 = arith.constant 152 : index
    %c0_131 = arith.constant 0 : index
    %358 = vector.load %arg1[%c152_130, %c0_131] : memref<360x128xf32, #tpu.memory_space<vmem>>, vector<1x24xf32>
    %359 = vector.broadcast %358 : vector<1x24xf32> to vector<8x24xf32>
    %360 = arith.addf %357, %359 : vector<8x24xf32>
    %361 = vector.extract_strided_slice %360 {offsets = [0, 0], sizes = [8, 16], strides = [1, 1]} : vector<8x24xf32> to vector<8x16xf32>
    %362 = vector.extract_strided_slice %355 {offsets = [0, 0], sizes = [8, 16], strides = [1, 1]} : vector<8x24xf32> to vector<8x16xf32>
    %363 = arith.addf %361, %362 : vector<8x16xf32>
    %364 = arith.negf %363 : vector<8x16xf32>
    %365 = math.exp %364 : vector<8x16xf32>
    %cst_132 = arith.constant 1.000000e+00 : f32
    %366 = vector.broadcast %cst_132 : f32 to vector<8x16xf32>
    %367 = arith.addf %366, %365 : vector<8x16xf32>
    %368 = arith.divf %366, %367 : vector<8x16xf32>
    %369 = vector.extract_strided_slice %368 {offsets = [0, 0], sizes = [8, 8], strides = [1, 1]} : vector<8x16xf32> to vector<8x8xf32>
    %370 = vector.extract_strided_slice %368 {offsets = [0, 8], sizes = [8, 8], strides = [1, 1]} : vector<8x16xf32> to vector<8x8xf32>
    %371 = vector.extract_strided_slice %360 {offsets = [0, 16], sizes = [8, 8], strides = [1, 1]} : vector<8x24xf32> to vector<8x8xf32>
    %372 = vector.extract_strided_slice %355 {offsets = [0, 16], sizes = [8, 8], strides = [1, 1]} : vector<8x24xf32> to vector<8x8xf32>
    %373 = arith.mulf %369, %372 : vector<8x8xf32>
    %374 = arith.addf %371, %373 : vector<8x8xf32>
    %375 = math.tanh %374 : vector<8x8xf32>
    %cst_133 = arith.constant 1.000000e+00 : f32
    %376 = vector.broadcast %cst_133 : f32 to vector<8x8xf32>
    %377 = arith.subf %376, %370 : vector<8x8xf32>
    %378 = arith.mulf %377, %375 : vector<8x8xf32>
    %379 = arith.mulf %370, %346 : vector<8x8xf32>
    %380 = arith.addf %378, %379 : vector<8x8xf32>
    %c176_134 = arith.constant 176 : index
    %c0_135 = arith.constant 0 : index
    %381 = vector.load %arg1[%c176_134, %c0_135] : memref<360x128xf32, #tpu.memory_space<vmem>>, vector<8x32xf32>
    %cst_136 = arith.constant dense<0.000000e+00> : vector<8x32xf32>
    %382 = tpu.matmul %380, %381, %cst_136 {dimension_numbers = #tpu.dot_dimension_numbers<[1], [0], [0], [1], [0, 0, 1, 1], [], []>} : vector<8x8xf32>, vector<8x32xf32>, vector<8x32xf32> -> vector<8x32xf32>
    %c184_137 = arith.constant 184 : index
    %c0_138 = arith.constant 0 : index
    %383 = vector.load %arg1[%c184_137, %c0_138] : memref<360x128xf32, #tpu.memory_space<vmem>>, vector<1x32xf32>
    %384 = vector.broadcast %383 : vector<1x32xf32> to vector<8x32xf32>
    %385 = arith.addf %382, %384 : vector<8x32xf32>
    %386 = vector.extract_strided_slice %385 {offsets = [0, 0], sizes = [8, 8], strides = [1, 1]} : vector<8x32xf32> to vector<8x8xf32>
    %cst_139 = arith.constant 0.000000e+00 : f32
    %387 = vector.broadcast %cst_139 : f32 to vector<8x8xf32>
    %388 = arith.maximumf %386, %387 : vector<8x8xf32>
    %389 = vector.extract_strided_slice %385 {offsets = [0, 8], sizes = [8, 24], strides = [1, 1]} : vector<8x32xf32> to vector<8x24xf32>
    %c144_140 = arith.constant 144 : index
    %c0_141 = arith.constant 0 : index
    %390 = vector.load %arg1[%c144_140, %c0_141] : memref<360x128xf32, #tpu.memory_space<vmem>>, vector<8x24xf32>
    %cst_142 = arith.constant dense<0.000000e+00> : vector<8x24xf32>
    %391 = tpu.matmul %388, %390, %cst_142 {dimension_numbers = #tpu.dot_dimension_numbers<[1], [0], [0], [1], [0, 0, 1, 1], [], []>} : vector<8x8xf32>, vector<8x24xf32>, vector<8x24xf32> -> vector<8x24xf32>
    %c152_143 = arith.constant 152 : index
    %c0_144 = arith.constant 0 : index
    %392 = vector.load %arg1[%c152_143, %c0_144] : memref<360x128xf32, #tpu.memory_space<vmem>>, vector<1x24xf32>
    %393 = vector.broadcast %392 : vector<1x24xf32> to vector<8x24xf32>
    %394 = arith.addf %391, %393 : vector<8x24xf32>
    %395 = vector.extract_strided_slice %394 {offsets = [0, 0], sizes = [8, 16], strides = [1, 1]} : vector<8x24xf32> to vector<8x16xf32>
    %396 = vector.extract_strided_slice %389 {offsets = [0, 0], sizes = [8, 16], strides = [1, 1]} : vector<8x24xf32> to vector<8x16xf32>
    %397 = arith.addf %395, %396 : vector<8x16xf32>
    %398 = arith.negf %397 : vector<8x16xf32>
    %399 = math.exp %398 : vector<8x16xf32>
    %cst_145 = arith.constant 1.000000e+00 : f32
    %400 = vector.broadcast %cst_145 : f32 to vector<8x16xf32>
    %401 = arith.addf %400, %399 : vector<8x16xf32>
    %402 = arith.divf %400, %401 : vector<8x16xf32>
    %403 = vector.extract_strided_slice %402 {offsets = [0, 0], sizes = [8, 8], strides = [1, 1]} : vector<8x16xf32> to vector<8x8xf32>
    %404 = vector.extract_strided_slice %402 {offsets = [0, 8], sizes = [8, 8], strides = [1, 1]} : vector<8x16xf32> to vector<8x8xf32>
    %405 = vector.extract_strided_slice %394 {offsets = [0, 16], sizes = [8, 8], strides = [1, 1]} : vector<8x24xf32> to vector<8x8xf32>
    %406 = vector.extract_strided_slice %389 {offsets = [0, 16], sizes = [8, 8], strides = [1, 1]} : vector<8x24xf32> to vector<8x8xf32>
    %407 = arith.mulf %403, %406 : vector<8x8xf32>
    %408 = arith.addf %405, %407 : vector<8x8xf32>
    %409 = math.tanh %408 : vector<8x8xf32>
    %cst_146 = arith.constant 1.000000e+00 : f32
    %410 = vector.broadcast %cst_146 : f32 to vector<8x8xf32>
    %411 = arith.subf %410, %404 : vector<8x8xf32>
    %412 = arith.mulf %411, %409 : vector<8x8xf32>
    %413 = arith.mulf %404, %380 : vector<8x8xf32>
    %414 = arith.addf %412, %413 : vector<8x8xf32>
    %415 = tpu.concatenate %312, %346, %380, %414 in 0 : vector<8x8xf32>, vector<8x8xf32>, vector<8x8xf32>, vector<8x8xf32> -> vector<32x8xf32>
    %c192_147 = arith.constant 192 : index
    %c0_148 = arith.constant 0 : index
    %416 = vector.load %arg1[%c192_147, %c0_148] : memref<360x128xf32, #tpu.memory_space<vmem>>, vector<8x48xf32>
    %cst_149 = arith.constant dense<0.000000e+00> : vector<32x48xf32>
    %417 = tpu.matmul %415, %416, %cst_149 {dimension_numbers = #tpu.dot_dimension_numbers<[1], [0], [0], [1], [0, 0, 1, 1], [], []>} : vector<32x8xf32>, vector<8x48xf32>, vector<32x48xf32> -> vector<32x48xf32>
    %c200_150 = arith.constant 200 : index
    %c0_151 = arith.constant 0 : index
    %418 = vector.load %arg1[%c200_150, %c0_151] : memref<360x128xf32, #tpu.memory_space<vmem>>, vector<1x48xf32>
    %419 = vector.broadcast %418 : vector<1x48xf32> to vector<32x48xf32>
    %420 = arith.addf %417, %419 : vector<32x48xf32>
    %cst_152 = arith.constant 0.000000e+00 : f32
    %421 = vector.broadcast %cst_152 : f32 to vector<32x48xf32>
    %422 = arith.maximumf %420, %421 : vector<32x48xf32>
    %423 = vector.extract_strided_slice %422 {offsets = [0, 32], sizes = [32, 16], strides = [1, 1]} : vector<32x48xf32> to vector<32x16xf32>
    %424 = math.tanh %423 : vector<32x16xf32>
    %c208_153 = arith.constant 208 : index
    %c0_154 = arith.constant 0 : index
    %425 = vector.load %arg1[%c208_153, %c0_154] : memref<360x128xf32, #tpu.memory_space<vmem>>, vector<16x2xf32>
    %cst_155 = arith.constant dense<0.000000e+00> : vector<32x2xf32>
    %426 = tpu.matmul %424, %425, %cst_155 {dimension_numbers = #tpu.dot_dimension_numbers<[1], [0], [0], [1], [0, 0, 1, 1], [], []>} : vector<32x16xf32>, vector<16x2xf32>, vector<32x2xf32> -> vector<32x2xf32>
    %c224_156 = arith.constant 224 : index
    %c0_157 = arith.constant 0 : index
    %427 = vector.load %arg1[%c224_156, %c0_157] : memref<360x128xf32, #tpu.memory_space<vmem>>, vector<1x2xf32>
    %428 = vector.broadcast %427 : vector<1x2xf32> to vector<32x2xf32>
    %429 = arith.addf %426, %428 : vector<32x2xf32>
    %cst_158 = arith.constant 0.000000e+00 : f32
    %430 = vector.broadcast %cst_158 : f32 to vector<32x2xf32>
    %431 = arith.maximumf %429, %430 : vector<32x2xf32>
    %432 = vector.extract_strided_slice %422 {offsets = [0, 0], sizes = [32, 32], strides = [1, 1]} : vector<32x48xf32> to vector<32x32xf32>
    %c32_159 = arith.constant 32 : index
    %c0_160 = arith.constant 0 : index
    %433 = vector.load %arg4[%c32_159, %c0_160] : memref<128x32xf32, #tpu.memory_space<vmem>>, vector<32x32xf32>
    tpu.vector_store %arg4[%c32_159, %c0_160], %432 {strides = array<i32>} : memref<128x32xf32, #tpu.memory_space<vmem>>, vector<32x32xf32>,
    %434 = vector.extract_strided_slice %422 {offsets = [0, 40], sizes = [8, 8], strides = [1, 1]} : vector<32x48xf32> to vector<8x8xf32>
    %c8_161 = arith.constant 8 : index
    %c0_162 = arith.constant 0 : index
    %435 = vector.load %arg5[%c8_161, %c0_162] : memref<128x8xf32, #tpu.memory_space<vmem>>, vector<8x8xf32>
    tpu.vector_store %arg5[%c8_161, %c0_162], %434 {strides = array<i32>} : memref<128x8xf32, #tpu.memory_space<vmem>>, vector<8x8xf32>,
    %436 = vector.extract_strided_slice %431 {offsets = [0, 1], sizes = [8, 1], strides = [1, 1]} : vector<32x2xf32> to vector<8x1xf32>
    %c8_163 = arith.constant 8 : index
    %c0_164 = arith.constant 0 : index
    %437 = vector.load %arg6[%c8_163, %c0_164] : memref<128x1xf32, #tpu.memory_space<vmem>>, vector<8x1xf32>
    tpu.vector_store %arg6[%c8_163, %c0_164], %436 {strides = array<i32>} : memref<128x1xf32, #tpu.memory_space<vmem>>, vector<8x1xf32>,
    %438 = vector.extract_strided_slice %422 {offsets = [8, 40], sizes = [8, 8], strides = [1, 1]} : vector<32x48xf32> to vector<8x8xf32>
    %c40 = arith.constant 40 : index
    %c0_165 = arith.constant 0 : index
    %439 = vector.load %arg5[%c40, %c0_165] : memref<128x8xf32, #tpu.memory_space<vmem>>, vector<8x8xf32>
    tpu.vector_store %arg5[%c40, %c0_165], %438 {strides = array<i32>} : memref<128x8xf32, #tpu.memory_space<vmem>>, vector<8x8xf32>,
    %440 = vector.extract_strided_slice %431 {offsets = [8, 1], sizes = [8, 1], strides = [1, 1]} : vector<32x2xf32> to vector<8x1xf32>
    %c40_166 = arith.constant 40 : index
    %c0_167 = arith.constant 0 : index
    %441 = vector.load %arg6[%c40_166, %c0_167] : memref<128x1xf32, #tpu.memory_space<vmem>>, vector<8x1xf32>
    tpu.vector_store %arg6[%c40_166, %c0_167], %440 {strides = array<i32>} : memref<128x1xf32, #tpu.memory_space<vmem>>, vector<8x1xf32>,
    %442 = vector.extract_strided_slice %422 {offsets = [16, 40], sizes = [8, 8], strides = [1, 1]} : vector<32x48xf32> to vector<8x8xf32>
    %c72 = arith.constant 72 : index
    %c0_168 = arith.constant 0 : index
    %443 = vector.load %arg5[%c72, %c0_168] : memref<128x8xf32, #tpu.memory_space<vmem>>, vector<8x8xf32>
    tpu.vector_store %arg5[%c72, %c0_168], %442 {strides = array<i32>} : memref<128x8xf32, #tpu.memory_space<vmem>>, vector<8x8xf32>,
    %444 = vector.extract_strided_slice %431 {offsets = [16, 1], sizes = [8, 1], strides = [1, 1]} : vector<32x2xf32> to vector<8x1xf32>
    %c72_169 = arith.constant 72 : index
    %c0_170 = arith.constant 0 : index
    %445 = vector.load %arg6[%c72_169, %c0_170] : memref<128x1xf32, #tpu.memory_space<vmem>>, vector<8x1xf32>
    tpu.vector_store %arg6[%c72_169, %c0_170], %444 {strides = array<i32>} : memref<128x1xf32, #tpu.memory_space<vmem>>, vector<8x1xf32>,
    %446 = vector.extract_strided_slice %422 {offsets = [24, 40], sizes = [8, 8], strides = [1, 1]} : vector<32x48xf32> to vector<8x8xf32>
    %c104_171 = arith.constant 104 : index
    %c0_172 = arith.constant 0 : index
    %447 = vector.load %arg5[%c104_171, %c0_172] : memref<128x8xf32, #tpu.memory_space<vmem>>, vector<8x8xf32>
    tpu.vector_store %arg5[%c104_171, %c0_172], %446 {strides = array<i32>} : memref<128x8xf32, #tpu.memory_space<vmem>>, vector<8x8xf32>,
    %448 = vector.extract_strided_slice %431 {offsets = [24, 1], sizes = [8, 1], strides = [1, 1]} : vector<32x2xf32> to vector<8x1xf32>
    %c104_173 = arith.constant 104 : index
    %c0_174 = arith.constant 0 : index
    %449 = vector.load %arg6[%c104_173, %c0_174] : memref<128x1xf32, #tpu.memory_space<vmem>>, vector<8x1xf32>
    tpu.vector_store %arg6[%c104_173, %c0_174], %448 {strides = array<i32>} : memref<128x1xf32, #tpu.memory_space<vmem>>, vector<8x1xf32>,
    %450 = vector.extract_strided_slice %422 {offsets = [0, 32], sizes = [32, 8], strides = [1, 1]} : vector<32x48xf32> to vector<32x8xf32>
    %c48_175 = arith.constant 48 : index
    %c0_176 = arith.constant 0 : index
    %451 = vector.load %arg1[%c48_175, %c0_176] : memref<360x128xf32, #tpu.memory_space<vmem>>, vector<8x96xf32>
    %cst_177 = arith.constant dense<0.000000e+00> : vector<32x96xf32>
    %452 = tpu.matmul %450, %451, %cst_177 {dimension_numbers = #tpu.dot_dimension_numbers<[1], [0], [0], [1], [0, 0, 1, 1], [], []>} : vector<32x8xf32>, vector<8x96xf32>, vector<32x96xf32> -> vector<32x96xf32>
    %453 = vector.extract_strided_slice %431 {offsets = [0, 0], sizes = [8, 1], strides = [1, 1]} : vector<32x2xf32> to vector<8x1xf32>
    %454 = vector.extract_strided_slice %431 {offsets = [8, 0], sizes = [8, 1], strides = [1, 1]} : vector<32x2xf32> to vector<8x1xf32>
    %455 = vector.extract_strided_slice %431 {offsets = [16, 0], sizes = [8, 1], strides = [1, 1]} : vector<32x2xf32> to vector<8x1xf32>
    %456 = vector.extract_strided_slice %431 {offsets = [24, 0], sizes = [8, 1], strides = [1, 1]} : vector<32x2xf32> to vector<8x1xf32>
    %457 = arith.maximumf %453, %454 : vector<8x1xf32>
    %458 = arith.maximumf %457, %455 : vector<8x1xf32>
    %459 = arith.maximumf %458, %456 : vector<8x1xf32>
    %460 = arith.subf %453, %459 : vector<8x1xf32>
    %461 = math.exp %460 : vector<8x1xf32>
    %462 = arith.subf %454, %459 : vector<8x1xf32>
    %463 = math.exp %462 : vector<8x1xf32>
    %464 = arith.subf %455, %459 : vector<8x1xf32>
    %465 = math.exp %464 : vector<8x1xf32>
    %466 = arith.subf %456, %459 : vector<8x1xf32>
    %467 = math.exp %466 : vector<8x1xf32>
    %468 = vector.extract_strided_slice %452 {offsets = [0, 0], sizes = [8, 96], strides = [1, 1]} : vector<32x96xf32> to vector<8x96xf32>
    %469 = vector.broadcast %461 : vector<8x1xf32> to vector<8x96xf32>
    %470 = arith.mulf %469, %468 : vector<8x96xf32>
    %471 = arith.addf %461, %463 : vector<8x1xf32>
    %472 = vector.extract_strided_slice %452 {offsets = [8, 0], sizes = [8, 96], strides = [1, 1]} : vector<32x96xf32> to vector<8x96xf32>
    %473 = vector.broadcast %463 : vector<8x1xf32> to vector<8x96xf32>
    %474 = arith.mulf %473, %472 : vector<8x96xf32>
    %475 = arith.addf %470, %474 : vector<8x96xf32>
    %476 = arith.addf %471, %465 : vector<8x1xf32>
    %477 = vector.extract_strided_slice %452 {offsets = [16, 0], sizes = [8, 96], strides = [1, 1]} : vector<32x96xf32> to vector<8x96xf32>
    %478 = vector.broadcast %465 : vector<8x1xf32> to vector<8x96xf32>
    %479 = arith.mulf %478, %477 : vector<8x96xf32>
    %480 = arith.addf %475, %479 : vector<8x96xf32>
    %481 = arith.addf %476, %467 : vector<8x1xf32>
    %482 = vector.extract_strided_slice %452 {offsets = [24, 0], sizes = [8, 96], strides = [1, 1]} : vector<32x96xf32> to vector<8x96xf32>
    %483 = vector.broadcast %467 : vector<8x1xf32> to vector<8x96xf32>
    %484 = arith.mulf %483, %482 : vector<8x96xf32>
    %485 = arith.addf %480, %484 : vector<8x96xf32>
    %486 = vector.broadcast %481 : vector<8x1xf32> to vector<8x96xf32>
    %487 = arith.divf %485, %486 : vector<8x96xf32>
    %488 = vector.extract_strided_slice %12 {offsets = [16, 0], sizes = [8, 96], strides = [1, 1]} : vector<32x96xf32> to vector<8x96xf32>
    %489 = arith.addf %488, %487 : vector<8x96xf32>
    %c56_178 = arith.constant 56 : index
    %c0_179 = arith.constant 0 : index
    %490 = vector.load %arg1[%c56_178, %c0_179] : memref<360x128xf32, #tpu.memory_space<vmem>>, vector<32x96xf32>
    %cst_180 = arith.constant dense<0.000000e+00> : vector<8x96xf32>
    %491 = tpu.matmul %274, %490, %cst_180 {dimension_numbers = #tpu.dot_dimension_numbers<[1], [0], [0], [1], [0, 0, 1, 1], [], []>} : vector<8x32xf32>, vector<32x96xf32>, vector<8x96xf32> -> vector<8x96xf32>
    %c96_181 = arith.constant 96 : index
    %c0_182 = arith.constant 0 : index
    %492 = vector.load %arg1[%c96_181, %c0_182] : memref<360x128xf32, #tpu.memory_space<vmem>>, vector<1x96xf32>
    %493 = vector.broadcast %492 : vector<1x96xf32> to vector<8x96xf32>
    %494 = arith.addf %491, %493 : vector<8x96xf32>
    %495 = vector.extract_strided_slice %489 {offsets = [0, 0], sizes = [8, 64], strides = [1, 1]} : vector<8x96xf32> to vector<8x64xf32>
    %496 = vector.extract_strided_slice %494 {offsets = [0, 0], sizes = [8, 64], strides = [1, 1]} : vector<8x96xf32> to vector<8x64xf32>
    %497 = arith.addf %495, %496 : vector<8x64xf32>
    %498 = arith.negf %497 : vector<8x64xf32>
    %499 = math.exp %498 : vector<8x64xf32>
    %cst_183 = arith.constant 1.000000e+00 : f32
    %500 = vector.broadcast %cst_183 : f32 to vector<8x64xf32>
    %501 = arith.addf %500, %499 : vector<8x64xf32>
    %502 = arith.divf %500, %501 : vector<8x64xf32>
    %503 = vector.extract_strided_slice %502 {offsets = [0, 0], sizes = [8, 32], strides = [1, 1]} : vector<8x64xf32> to vector<8x32xf32>
    %504 = vector.extract_strided_slice %502 {offsets = [0, 32], sizes = [8, 32], strides = [1, 1]} : vector<8x64xf32> to vector<8x32xf32>
    %505 = vector.extract_strided_slice %489 {offsets = [0, 64], sizes = [8, 32], strides = [1, 1]} : vector<8x96xf32> to vector<8x32xf32>
    %506 = vector.extract_strided_slice %494 {offsets = [0, 64], sizes = [8, 32], strides = [1, 1]} : vector<8x96xf32> to vector<8x32xf32>
    %507 = arith.mulf %503, %506 : vector<8x32xf32>
    %508 = arith.addf %505, %507 : vector<8x32xf32>
    %509 = math.tanh %508 : vector<8x32xf32>
    %cst_184 = arith.constant 1.000000e+00 : f32
    %510 = vector.broadcast %cst_184 : f32 to vector<8x32xf32>
    %511 = arith.subf %510, %504 : vector<8x32xf32>
    %512 = arith.mulf %511, %509 : vector<8x32xf32>
    %513 = arith.mulf %504, %274 : vector<8x32xf32>
    %514 = arith.addf %512, %513 : vector<8x32xf32>
    %c104_185 = arith.constant 104 : index
    %c0_186 = arith.constant 0 : index
    %515 = vector.load %arg1[%c104_185, %c0_186] : memref<360x128xf32, #tpu.memory_space<vmem>>, vector<32x40xf32>
    %cst_187 = arith.constant dense<0.000000e+00> : vector<8x40xf32>
    %516 = tpu.matmul %514, %515, %cst_187 {dimension_numbers = #tpu.dot_dimension_numbers<[1], [0], [0], [1], [0, 0, 1, 1], [], []>} : vector<8x32xf32>, vector<32x40xf32>, vector<8x40xf32> -> vector<8x40xf32>
    %c136_188 = arith.constant 136 : index
    %c0_189 = arith.constant 0 : index
    %517 = vector.load %arg1[%c136_188, %c0_189] : memref<360x128xf32, #tpu.memory_space<vmem>>, vector<1x40xf32>
    %518 = vector.broadcast %517 : vector<1x40xf32> to vector<8x40xf32>
    %519 = arith.addf %516, %518 : vector<8x40xf32>
    %cst_190 = arith.constant 0.000000e+00 : f32
    %520 = vector.broadcast %cst_190 : f32 to vector<8x40xf32>
    %521 = arith.maximumf %519, %520 : vector<8x40xf32>
    %522 = vector.extract_strided_slice %521 {offsets = [0, 0], sizes = [8, 8], strides = [1, 1]} : vector<8x40xf32> to vector<8x8xf32>
    %523 = vector.extract_strided_slice %521 {offsets = [0, 8], sizes = [8, 32], strides = [1, 1]} : vector<8x40xf32> to vector<8x32xf32>
    %c16_191 = arith.constant 16 : index
    %c0_192 = arith.constant 0 : index
    %524 = vector.load %arg7[%c16_191, %c0_192] : memref<32x32xf32, #tpu.memory_space<vmem>>, vector<8x32xf32>
    tpu.vector_store %arg7[%c16_191, %c0_192], %523 {strides = array<i32>} : memref<32x32xf32, #tpu.memory_space<vmem>>, vector<8x32xf32>,
    %c160_193 = arith.constant 160 : index
    %c0_194 = arith.constant 0 : index
    %525 = vector.load %arg1[%c160_193, %c0_194] : memref<360x128xf32, #tpu.memory_space<vmem>>, vector<8x24xf32>
    %cst_195 = arith.constant dense<0.000000e+00> : vector<8x24xf32>
    %526 = tpu.matmul %522, %525, %cst_195 {dimension_numbers = #tpu.dot_dimension_numbers<[1], [0], [0], [1], [0, 0, 1, 1], [], []>} : vector<8x8xf32>, vector<8x24xf32>, vector<8x24xf32> -> vector<8x24xf32>
    %c168_196 = arith.constant 168 : index
    %c0_197 = arith.constant 0 : index
    %527 = vector.load %arg1[%c168_196, %c0_197] : memref<360x128xf32, #tpu.memory_space<vmem>>, vector<1x24xf32>
    %528 = vector.broadcast %527 : vector<1x24xf32> to vector<8x24xf32>
    %529 = arith.addf %526, %528 : vector<8x24xf32>
    %c152_198 = arith.constant 152 : index
    %c0_199 = arith.constant 0 : index
    %530 = vector.load %arg1[%c152_198, %c0_199] : memref<360x128xf32, #tpu.memory_space<vmem>>, vector<1x24xf32>
    %531 = vector.extract_strided_slice %530 {offsets = [0, 0], sizes = [1, 16], strides = [1, 1]} : vector<1x24xf32> to vector<1x16xf32>
    %532 = vector.extract_strided_slice %529 {offsets = [0, 0], sizes = [8, 16], strides = [1, 1]} : vector<8x24xf32> to vector<8x16xf32>
    %533 = vector.broadcast %531 : vector<1x16xf32> to vector<8x16xf32>
    %534 = arith.addf %533, %532 : vector<8x16xf32>
    %535 = arith.negf %534 : vector<8x16xf32>
    %536 = math.exp %535 : vector<8x16xf32>
    %cst_200 = arith.constant 1.000000e+00 : f32
    %537 = vector.broadcast %cst_200 : f32 to vector<8x16xf32>
    %538 = arith.addf %537, %536 : vector<8x16xf32>
    %539 = arith.divf %537, %538 : vector<8x16xf32>
    %540 = vector.extract_strided_slice %539 {offsets = [0, 0], sizes = [8, 8], strides = [1, 1]} : vector<8x16xf32> to vector<8x8xf32>
    %541 = vector.extract_strided_slice %539 {offsets = [0, 8], sizes = [8, 8], strides = [1, 1]} : vector<8x16xf32> to vector<8x8xf32>
    %542 = vector.extract_strided_slice %530 {offsets = [0, 16], sizes = [1, 8], strides = [1, 1]} : vector<1x24xf32> to vector<1x8xf32>
    %543 = vector.extract_strided_slice %529 {offsets = [0, 16], sizes = [8, 8], strides = [1, 1]} : vector<8x24xf32> to vector<8x8xf32>
    %544 = arith.mulf %540, %543 : vector<8x8xf32>
    %545 = vector.broadcast %542 : vector<1x8xf32> to vector<8x8xf32>
    %546 = arith.addf %545, %544 : vector<8x8xf32>
    %547 = math.tanh %546 : vector<8x8xf32>
    %cst_201 = arith.constant 1.000000e+00 : f32
    %548 = vector.broadcast %cst_201 : f32 to vector<8x8xf32>
    %549 = arith.subf %548, %541 : vector<8x8xf32>
    %550 = arith.mulf %549, %547 : vector<8x8xf32>
    %551 = arith.mulf %541, %522 : vector<8x8xf32>
    %552 = arith.addf %550, %551 : vector<8x8xf32>
    %c176_202 = arith.constant 176 : index
    %c0_203 = arith.constant 0 : index
    %553 = vector.load %arg1[%c176_202, %c0_203] : memref<360x128xf32, #tpu.memory_space<vmem>>, vector<8x32xf32>
    %cst_204 = arith.constant dense<0.000000e+00> : vector<8x32xf32>
    %554 = tpu.matmul %552, %553, %cst_204 {dimension_numbers = #tpu.dot_dimension_numbers<[1], [0], [0], [1], [0, 0, 1, 1], [], []>} : vector<8x8xf32>, vector<8x32xf32>, vector<8x32xf32> -> vector<8x32xf32>
    %c184_205 = arith.constant 184 : index
    %c0_206 = arith.constant 0 : index
    %555 = vector.load %arg1[%c184_205, %c0_206] : memref<360x128xf32, #tpu.memory_space<vmem>>, vector<1x32xf32>
    %556 = vector.broadcast %555 : vector<1x32xf32> to vector<8x32xf32>
    %557 = arith.addf %554, %556 : vector<8x32xf32>
    %558 = vector.extract_strided_slice %557 {offsets = [0, 0], sizes = [8, 8], strides = [1, 1]} : vector<8x32xf32> to vector<8x8xf32>
    %cst_207 = arith.constant 0.000000e+00 : f32
    %559 = vector.broadcast %cst_207 : f32 to vector<8x8xf32>
    %560 = arith.maximumf %558, %559 : vector<8x8xf32>
    %561 = vector.extract_strided_slice %557 {offsets = [0, 8], sizes = [8, 24], strides = [1, 1]} : vector<8x32xf32> to vector<8x24xf32>
    %c144_208 = arith.constant 144 : index
    %c0_209 = arith.constant 0 : index
    %562 = vector.load %arg1[%c144_208, %c0_209] : memref<360x128xf32, #tpu.memory_space<vmem>>, vector<8x24xf32>
    %cst_210 = arith.constant dense<0.000000e+00> : vector<8x24xf32>
    %563 = tpu.matmul %560, %562, %cst_210 {dimension_numbers = #tpu.dot_dimension_numbers<[1], [0], [0], [1], [0, 0, 1, 1], [], []>} : vector<8x8xf32>, vector<8x24xf32>, vector<8x24xf32> -> vector<8x24xf32>
    %c152_211 = arith.constant 152 : index
    %c0_212 = arith.constant 0 : index
    %564 = vector.load %arg1[%c152_211, %c0_212] : memref<360x128xf32, #tpu.memory_space<vmem>>, vector<1x24xf32>
    %565 = vector.broadcast %564 : vector<1x24xf32> to vector<8x24xf32>
    %566 = arith.addf %563, %565 : vector<8x24xf32>
    %567 = vector.extract_strided_slice %566 {offsets = [0, 0], sizes = [8, 16], strides = [1, 1]} : vector<8x24xf32> to vector<8x16xf32>
    %568 = vector.extract_strided_slice %561 {offsets = [0, 0], sizes = [8, 16], strides = [1, 1]} : vector<8x24xf32> to vector<8x16xf32>
    %569 = arith.addf %567, %568 : vector<8x16xf32>
    %570 = arith.negf %569 : vector<8x16xf32>
    %571 = math.exp %570 : vector<8x16xf32>
    %cst_213 = arith.constant 1.000000e+00 : f32
    %572 = vector.broadcast %cst_213 : f32 to vector<8x16xf32>
    %573 = arith.addf %572, %571 : vector<8x16xf32>
    %574 = arith.divf %572, %573 : vector<8x16xf32>
    %575 = vector.extract_strided_slice %574 {offsets = [0, 0], sizes = [8, 8], strides = [1, 1]} : vector<8x16xf32> to vector<8x8xf32>
    %576 = vector.extract_strided_slice %574 {offsets = [0, 8], sizes = [8, 8], strides = [1, 1]} : vector<8x16xf32> to vector<8x8xf32>
    %577 = vector.extract_strided_slice %566 {offsets = [0, 16], sizes = [8, 8], strides = [1, 1]} : vector<8x24xf32> to vector<8x8xf32>
    %578 = vector.extract_strided_slice %561 {offsets = [0, 16], sizes = [8, 8], strides = [1, 1]} : vector<8x24xf32> to vector<8x8xf32>
    %579 = arith.mulf %575, %578 : vector<8x8xf32>
    %580 = arith.addf %577, %579 : vector<8x8xf32>
    %581 = math.tanh %580 : vector<8x8xf32>
    %cst_214 = arith.constant 1.000000e+00 : f32
    %582 = vector.broadcast %cst_214 : f32 to vector<8x8xf32>
    %583 = arith.subf %582, %576 : vector<8x8xf32>
    %584 = arith.mulf %583, %581 : vector<8x8xf32>
    %585 = arith.mulf %576, %552 : vector<8x8xf32>
    %586 = arith.addf %584, %585 : vector<8x8xf32>
    %c176_215 = arith.constant 176 : index
    %c0_216 = arith.constant 0 : index
    %587 = vector.load %arg1[%c176_215, %c0_216] : memref<360x128xf32, #tpu.memory_space<vmem>>, vector<8x32xf32>
    %cst_217 = arith.constant dense<0.000000e+00> : vector<8x32xf32>
    %588 = tpu.matmul %586, %587, %cst_217 {dimension_numbers = #tpu.dot_dimension_numbers<[1], [0], [0], [1], [0, 0, 1, 1], [], []>} : vector<8x8xf32>, vector<8x32xf32>, vector<8x32xf32> -> vector<8x32xf32>
    %c184_218 = arith.constant 184 : index
    %c0_219 = arith.constant 0 : index
    %589 = vector.load %arg1[%c184_218, %c0_219] : memref<360x128xf32, #tpu.memory_space<vmem>>, vector<1x32xf32>
    %590 = vector.broadcast %589 : vector<1x32xf32> to vector<8x32xf32>
    %591 = arith.addf %588, %590 : vector<8x32xf32>
    %592 = vector.extract_strided_slice %591 {offsets = [0, 0], sizes = [8, 8], strides = [1, 1]} : vector<8x32xf32> to vector<8x8xf32>
    %cst_220 = arith.constant 0.000000e+00 : f32
    %593 = vector.broadcast %cst_220 : f32 to vector<8x8xf32>
    %594 = arith.maximumf %592, %593 : vector<8x8xf32>
    %595 = vector.extract_strided_slice %591 {offsets = [0, 8], sizes = [8, 24], strides = [1, 1]} : vector<8x32xf32> to vector<8x24xf32>
    %c144_221 = arith.constant 144 : index
    %c0_222 = arith.constant 0 : index
    %596 = vector.load %arg1[%c144_221, %c0_222] : memref<360x128xf32, #tpu.memory_space<vmem>>, vector<8x24xf32>
    %cst_223 = arith.constant dense<0.000000e+00> : vector<8x24xf32>
    %597 = tpu.matmul %594, %596, %cst_223 {dimension_numbers = #tpu.dot_dimension_numbers<[1], [0], [0], [1], [0, 0, 1, 1], [], []>} : vector<8x8xf32>, vector<8x24xf32>, vector<8x24xf32> -> vector<8x24xf32>
    %c152_224 = arith.constant 152 : index
    %c0_225 = arith.constant 0 : index
    %598 = vector.load %arg1[%c152_224, %c0_225] : memref<360x128xf32, #tpu.memory_space<vmem>>, vector<1x24xf32>
    %599 = vector.broadcast %598 : vector<1x24xf32> to vector<8x24xf32>
    %600 = arith.addf %597, %599 : vector<8x24xf32>
    %601 = vector.extract_strided_slice %600 {offsets = [0, 0], sizes = [8, 16], strides = [1, 1]} : vector<8x24xf32> to vector<8x16xf32>
    %602 = vector.extract_strided_slice %595 {offsets = [0, 0], sizes = [8, 16], strides = [1, 1]} : vector<8x24xf32> to vector<8x16xf32>
    %603 = arith.addf %601, %602 : vector<8x16xf32>
    %604 = arith.negf %603 : vector<8x16xf32>
    %605 = math.exp %604 : vector<8x16xf32>
    %cst_226 = arith.constant 1.000000e+00 : f32
    %606 = vector.broadcast %cst_226 : f32 to vector<8x16xf32>
    %607 = arith.addf %606, %605 : vector<8x16xf32>
    %608 = arith.divf %606, %607 : vector<8x16xf32>
    %609 = vector.extract_strided_slice %608 {offsets = [0, 0], sizes = [8, 8], strides = [1, 1]} : vector<8x16xf32> to vector<8x8xf32>
    %610 = vector.extract_strided_slice %608 {offsets = [0, 8], sizes = [8, 8], strides = [1, 1]} : vector<8x16xf32> to vector<8x8xf32>
    %611 = vector.extract_strided_slice %600 {offsets = [0, 16], sizes = [8, 8], strides = [1, 1]} : vector<8x24xf32> to vector<8x8xf32>
    %612 = vector.extract_strided_slice %595 {offsets = [0, 16], sizes = [8, 8], strides = [1, 1]} : vector<8x24xf32> to vector<8x8xf32>
    %613 = arith.mulf %609, %612 : vector<8x8xf32>
    %614 = arith.addf %611, %613 : vector<8x8xf32>
    %615 = math.tanh %614 : vector<8x8xf32>
    %cst_227 = arith.constant 1.000000e+00 : f32
    %616 = vector.broadcast %cst_227 : f32 to vector<8x8xf32>
    %617 = arith.subf %616, %610 : vector<8x8xf32>
    %618 = arith.mulf %617, %615 : vector<8x8xf32>
    %619 = arith.mulf %610, %586 : vector<8x8xf32>
    %620 = arith.addf %618, %619 : vector<8x8xf32>
    %c176_228 = arith.constant 176 : index
    %c0_229 = arith.constant 0 : index
    %621 = vector.load %arg1[%c176_228, %c0_229] : memref<360x128xf32, #tpu.memory_space<vmem>>, vector<8x32xf32>
    %cst_230 = arith.constant dense<0.000000e+00> : vector<8x32xf32>
    %622 = tpu.matmul %620, %621, %cst_230 {dimension_numbers = #tpu.dot_dimension_numbers<[1], [0], [0], [1], [0, 0, 1, 1], [], []>} : vector<8x8xf32>, vector<8x32xf32>, vector<8x32xf32> -> vector<8x32xf32>
    %c184_231 = arith.constant 184 : index
    %c0_232 = arith.constant 0 : index
    %623 = vector.load %arg1[%c184_231, %c0_232] : memref<360x128xf32, #tpu.memory_space<vmem>>, vector<1x32xf32>
    %624 = vector.broadcast %623 : vector<1x32xf32> to vector<8x32xf32>
    %625 = arith.addf %622, %624 : vector<8x32xf32>
    %626 = vector.extract_strided_slice %625 {offsets = [0, 0], sizes = [8, 8], strides = [1, 1]} : vector<8x32xf32> to vector<8x8xf32>
    %cst_233 = arith.constant 0.000000e+00 : f32
    %627 = vector.broadcast %cst_233 : f32 to vector<8x8xf32>
    %628 = arith.maximumf %626, %627 : vector<8x8xf32>
    %629 = vector.extract_strided_slice %625 {offsets = [0, 8], sizes = [8, 24], strides = [1, 1]} : vector<8x32xf32> to vector<8x24xf32>
    %c144_234 = arith.constant 144 : index
    %c0_235 = arith.constant 0 : index
    %630 = vector.load %arg1[%c144_234, %c0_235] : memref<360x128xf32, #tpu.memory_space<vmem>>, vector<8x24xf32>
    %cst_236 = arith.constant dense<0.000000e+00> : vector<8x24xf32>
    %631 = tpu.matmul %628, %630, %cst_236 {dimension_numbers = #tpu.dot_dimension_numbers<[1], [0], [0], [1], [0, 0, 1, 1], [], []>} : vector<8x8xf32>, vector<8x24xf32>, vector<8x24xf32> -> vector<8x24xf32>
    %c152_237 = arith.constant 152 : index
    %c0_238 = arith.constant 0 : index
    %632 = vector.load %arg1[%c152_237, %c0_238] : memref<360x128xf32, #tpu.memory_space<vmem>>, vector<1x24xf32>
    %633 = vector.broadcast %632 : vector<1x24xf32> to vector<8x24xf32>
    %634 = arith.addf %631, %633 : vector<8x24xf32>
    %635 = vector.extract_strided_slice %634 {offsets = [0, 0], sizes = [8, 16], strides = [1, 1]} : vector<8x24xf32> to vector<8x16xf32>
    %636 = vector.extract_strided_slice %629 {offsets = [0, 0], sizes = [8, 16], strides = [1, 1]} : vector<8x24xf32> to vector<8x16xf32>
    %637 = arith.addf %635, %636 : vector<8x16xf32>
    %638 = arith.negf %637 : vector<8x16xf32>
    %639 = math.exp %638 : vector<8x16xf32>
    %cst_239 = arith.constant 1.000000e+00 : f32
    %640 = vector.broadcast %cst_239 : f32 to vector<8x16xf32>
    %641 = arith.addf %640, %639 : vector<8x16xf32>
    %642 = arith.divf %640, %641 : vector<8x16xf32>
    %643 = vector.extract_strided_slice %642 {offsets = [0, 0], sizes = [8, 8], strides = [1, 1]} : vector<8x16xf32> to vector<8x8xf32>
    %644 = vector.extract_strided_slice %642 {offsets = [0, 8], sizes = [8, 8], strides = [1, 1]} : vector<8x16xf32> to vector<8x8xf32>
    %645 = vector.extract_strided_slice %634 {offsets = [0, 16], sizes = [8, 8], strides = [1, 1]} : vector<8x24xf32> to vector<8x8xf32>
    %646 = vector.extract_strided_slice %629 {offsets = [0, 16], sizes = [8, 8], strides = [1, 1]} : vector<8x24xf32> to vector<8x8xf32>
    %647 = arith.mulf %643, %646 : vector<8x8xf32>
    %648 = arith.addf %645, %647 : vector<8x8xf32>
    %649 = math.tanh %648 : vector<8x8xf32>
    %cst_240 = arith.constant 1.000000e+00 : f32
    %650 = vector.broadcast %cst_240 : f32 to vector<8x8xf32>
    %651 = arith.subf %650, %644 : vector<8x8xf32>
    %652 = arith.mulf %651, %649 : vector<8x8xf32>
    %653 = arith.mulf %644, %620 : vector<8x8xf32>
    %654 = arith.addf %652, %653 : vector<8x8xf32>
    %655 = tpu.concatenate %552, %586, %620, %654 in 0 : vector<8x8xf32>, vector<8x8xf32>, vector<8x8xf32>, vector<8x8xf32> -> vector<32x8xf32>
    %c192_241 = arith.constant 192 : index
    %c0_242 = arith.constant 0 : index
    %656 = vector.load %arg1[%c192_241, %c0_242] : memref<360x128xf32, #tpu.memory_space<vmem>>, vector<8x48xf32>
    %cst_243 = arith.constant dense<0.000000e+00> : vector<32x48xf32>
    %657 = tpu.matmul %655, %656, %cst_243 {dimension_numbers = #tpu.dot_dimension_numbers<[1], [0], [0], [1], [0, 0, 1, 1], [], []>} : vector<32x8xf32>, vector<8x48xf32>, vector<32x48xf32> -> vector<32x48xf32>
    %c200_244 = arith.constant 200 : index
    %c0_245 = arith.constant 0 : index
    %658 = vector.load %arg1[%c200_244, %c0_245] : memref<360x128xf32, #tpu.memory_space<vmem>>, vector<1x48xf32>
    %659 = vector.broadcast %658 : vector<1x48xf32> to vector<32x48xf32>
    %660 = arith.addf %657, %659 : vector<32x48xf32>
    %cst_246 = arith.constant 0.000000e+00 : f32
    %661 = vector.broadcast %cst_246 : f32 to vector<32x48xf32>
    %662 = arith.maximumf %660, %661 : vector<32x48xf32>
    %663 = vector.extract_strided_slice %662 {offsets = [0, 32], sizes = [32, 16], strides = [1, 1]} : vector<32x48xf32> to vector<32x16xf32>
    %664 = math.tanh %663 : vector<32x16xf32>
    %c208_247 = arith.constant 208 : index
    %c0_248 = arith.constant 0 : index
    %665 = vector.load %arg1[%c208_247, %c0_248] : memref<360x128xf32, #tpu.memory_space<vmem>>, vector<16x2xf32>
    %cst_249 = arith.constant dense<0.000000e+00> : vector<32x2xf32>
    %666 = tpu.matmul %664, %665, %cst_249 {dimension_numbers = #tpu.dot_dimension_numbers<[1], [0], [0], [1], [0, 0, 1, 1], [], []>} : vector<32x16xf32>, vector<16x2xf32>, vector<32x2xf32> -> vector<32x2xf32>
    %c224_250 = arith.constant 224 : index
    %c0_251 = arith.constant 0 : index
    %667 = vector.load %arg1[%c224_250, %c0_251] : memref<360x128xf32, #tpu.memory_space<vmem>>, vector<1x2xf32>
    %668 = vector.broadcast %667 : vector<1x2xf32> to vector<32x2xf32>
    %669 = arith.addf %666, %668 : vector<32x2xf32>
    %cst_252 = arith.constant 0.000000e+00 : f32
    %670 = vector.broadcast %cst_252 : f32 to vector<32x2xf32>
    %671 = arith.maximumf %669, %670 : vector<32x2xf32>
    %672 = vector.extract_strided_slice %662 {offsets = [0, 0], sizes = [32, 32], strides = [1, 1]} : vector<32x48xf32> to vector<32x32xf32>
    %c64_253 = arith.constant 64 : index
    %c0_254 = arith.constant 0 : index
    %673 = vector.load %arg4[%c64_253, %c0_254] : memref<128x32xf32, #tpu.memory_space<vmem>>, vector<32x32xf32>
    tpu.vector_store %arg4[%c64_253, %c0_254], %672 {strides = array<i32>} : memref<128x32xf32, #tpu.memory_space<vmem>>, vector<32x32xf32>,
    %674 = vector.extract_strided_slice %662 {offsets = [0, 40], sizes = [8, 8], strides = [1, 1]} : vector<32x48xf32> to vector<8x8xf32>
    %c16_255 = arith.constant 16 : index
    %c0_256 = arith.constant 0 : index
    %675 = vector.load %arg5[%c16_255, %c0_256] : memref<128x8xf32, #tpu.memory_space<vmem>>, vector<8x8xf32>
    tpu.vector_store %arg5[%c16_255, %c0_256], %674 {strides = array<i32>} : memref<128x8xf32, #tpu.memory_space<vmem>>, vector<8x8xf32>,
    %676 = vector.extract_strided_slice %671 {offsets = [0, 1], sizes = [8, 1], strides = [1, 1]} : vector<32x2xf32> to vector<8x1xf32>
    %c16_257 = arith.constant 16 : index
    %c0_258 = arith.constant 0 : index
    %677 = vector.load %arg6[%c16_257, %c0_258] : memref<128x1xf32, #tpu.memory_space<vmem>>, vector<8x1xf32>
    tpu.vector_store %arg6[%c16_257, %c0_258], %676 {strides = array<i32>} : memref<128x1xf32, #tpu.memory_space<vmem>>, vector<8x1xf32>,
    %678 = vector.extract_strided_slice %662 {offsets = [8, 40], sizes = [8, 8], strides = [1, 1]} : vector<32x48xf32> to vector<8x8xf32>
    %c48_259 = arith.constant 48 : index
    %c0_260 = arith.constant 0 : index
    %679 = vector.load %arg5[%c48_259, %c0_260] : memref<128x8xf32, #tpu.memory_space<vmem>>, vector<8x8xf32>
    tpu.vector_store %arg5[%c48_259, %c0_260], %678 {strides = array<i32>} : memref<128x8xf32, #tpu.memory_space<vmem>>, vector<8x8xf32>,
    %680 = vector.extract_strided_slice %671 {offsets = [8, 1], sizes = [8, 1], strides = [1, 1]} : vector<32x2xf32> to vector<8x1xf32>
    %c48_261 = arith.constant 48 : index
    %c0_262 = arith.constant 0 : index
    %681 = vector.load %arg6[%c48_261, %c0_262] : memref<128x1xf32, #tpu.memory_space<vmem>>, vector<8x1xf32>
    tpu.vector_store %arg6[%c48_261, %c0_262], %680 {strides = array<i32>} : memref<128x1xf32, #tpu.memory_space<vmem>>, vector<8x1xf32>,
    %682 = vector.extract_strided_slice %662 {offsets = [16, 40], sizes = [8, 8], strides = [1, 1]} : vector<32x48xf32> to vector<8x8xf32>
    %c80 = arith.constant 80 : index
    %c0_263 = arith.constant 0 : index
    %683 = vector.load %arg5[%c80, %c0_263] : memref<128x8xf32, #tpu.memory_space<vmem>>, vector<8x8xf32>
    tpu.vector_store %arg5[%c80, %c0_263], %682 {strides = array<i32>} : memref<128x8xf32, #tpu.memory_space<vmem>>, vector<8x8xf32>,
    %684 = vector.extract_strided_slice %671 {offsets = [16, 1], sizes = [8, 1], strides = [1, 1]} : vector<32x2xf32> to vector<8x1xf32>
    %c80_264 = arith.constant 80 : index
    %c0_265 = arith.constant 0 : index
    %685 = vector.load %arg6[%c80_264, %c0_265] : memref<128x1xf32, #tpu.memory_space<vmem>>, vector<8x1xf32>
    tpu.vector_store %arg6[%c80_264, %c0_265], %684 {strides = array<i32>} : memref<128x1xf32, #tpu.memory_space<vmem>>, vector<8x1xf32>,
    %686 = vector.extract_strided_slice %662 {offsets = [24, 40], sizes = [8, 8], strides = [1, 1]} : vector<32x48xf32> to vector<8x8xf32>
    %c112 = arith.constant 112 : index
    %c0_266 = arith.constant 0 : index
    %687 = vector.load %arg5[%c112, %c0_266] : memref<128x8xf32, #tpu.memory_space<vmem>>, vector<8x8xf32>
    tpu.vector_store %arg5[%c112, %c0_266], %686 {strides = array<i32>} : memref<128x8xf32, #tpu.memory_space<vmem>>, vector<8x8xf32>,
    %688 = vector.extract_strided_slice %671 {offsets = [24, 1], sizes = [8, 1], strides = [1, 1]} : vector<32x2xf32> to vector<8x1xf32>
    %c112_267 = arith.constant 112 : index
    %c0_268 = arith.constant 0 : index
    %689 = vector.load %arg6[%c112_267, %c0_268] : memref<128x1xf32, #tpu.memory_space<vmem>>, vector<8x1xf32>
    tpu.vector_store %arg6[%c112_267, %c0_268], %688 {strides = array<i32>} : memref<128x1xf32, #tpu.memory_space<vmem>>, vector<8x1xf32>,
    %690 = vector.extract_strided_slice %662 {offsets = [0, 32], sizes = [32, 8], strides = [1, 1]} : vector<32x48xf32> to vector<32x8xf32>
    %c48_269 = arith.constant 48 : index
    %c0_270 = arith.constant 0 : index
    %691 = vector.load %arg1[%c48_269, %c0_270] : memref<360x128xf32, #tpu.memory_space<vmem>>, vector<8x96xf32>
    %cst_271 = arith.constant dense<0.000000e+00> : vector<32x96xf32>
    %692 = tpu.matmul %690, %691, %cst_271 {dimension_numbers = #tpu.dot_dimension_numbers<[1], [0], [0], [1], [0, 0, 1, 1], [], []>} : vector<32x8xf32>, vector<8x96xf32>, vector<32x96xf32> -> vector<32x96xf32>
    %693 = vector.extract_strided_slice %671 {offsets = [0, 0], sizes = [8, 1], strides = [1, 1]} : vector<32x2xf32> to vector<8x1xf32>
    %694 = vector.extract_strided_slice %671 {offsets = [8, 0], sizes = [8, 1], strides = [1, 1]} : vector<32x2xf32> to vector<8x1xf32>
    %695 = vector.extract_strided_slice %671 {offsets = [16, 0], sizes = [8, 1], strides = [1, 1]} : vector<32x2xf32> to vector<8x1xf32>
    %696 = vector.extract_strided_slice %671 {offsets = [24, 0], sizes = [8, 1], strides = [1, 1]} : vector<32x2xf32> to vector<8x1xf32>
    %697 = arith.maximumf %693, %694 : vector<8x1xf32>
    %698 = arith.maximumf %697, %695 : vector<8x1xf32>
    %699 = arith.maximumf %698, %696 : vector<8x1xf32>
    %700 = arith.subf %693, %699 : vector<8x1xf32>
    %701 = math.exp %700 : vector<8x1xf32>
    %702 = arith.subf %694, %699 : vector<8x1xf32>
    %703 = math.exp %702 : vector<8x1xf32>
    %704 = arith.subf %695, %699 : vector<8x1xf32>
    %705 = math.exp %704 : vector<8x1xf32>
    %706 = arith.subf %696, %699 : vector<8x1xf32>
    %707 = math.exp %706 : vector<8x1xf32>
    %708 = vector.extract_strided_slice %692 {offsets = [0, 0], sizes = [8, 96], strides = [1, 1]} : vector<32x96xf32> to vector<8x96xf32>
    %709 = vector.broadcast %701 : vector<8x1xf32> to vector<8x96xf32>
    %710 = arith.mulf %709, %708 : vector<8x96xf32>
    %711 = arith.addf %701, %703 : vector<8x1xf32>
    %712 = vector.extract_strided_slice %692 {offsets = [8, 0], sizes = [8, 96], strides = [1, 1]} : vector<32x96xf32> to vector<8x96xf32>
    %713 = vector.broadcast %703 : vector<8x1xf32> to vector<8x96xf32>
    %714 = arith.mulf %713, %712 : vector<8x96xf32>
    %715 = arith.addf %710, %714 : vector<8x96xf32>
    %716 = arith.addf %711, %705 : vector<8x1xf32>
    %717 = vector.extract_strided_slice %692 {offsets = [16, 0], sizes = [8, 96], strides = [1, 1]} : vector<32x96xf32> to vector<8x96xf32>
    %718 = vector.broadcast %705 : vector<8x1xf32> to vector<8x96xf32>
    %719 = arith.mulf %718, %717 : vector<8x96xf32>
    %720 = arith.addf %715, %719 : vector<8x96xf32>
    %721 = arith.addf %716, %707 : vector<8x1xf32>
    %722 = vector.extract_strided_slice %692 {offsets = [24, 0], sizes = [8, 96], strides = [1, 1]} : vector<32x96xf32> to vector<8x96xf32>
    %723 = vector.broadcast %707 : vector<8x1xf32> to vector<8x96xf32>
    %724 = arith.mulf %723, %722 : vector<8x96xf32>
    %725 = arith.addf %720, %724 : vector<8x96xf32>
    %726 = vector.broadcast %721 : vector<8x1xf32> to vector<8x96xf32>
    %727 = arith.divf %725, %726 : vector<8x96xf32>
    %728 = vector.extract_strided_slice %12 {offsets = [24, 0], sizes = [8, 96], strides = [1, 1]} : vector<32x96xf32> to vector<8x96xf32>
    %729 = arith.addf %728, %727 : vector<8x96xf32>
    %c56_272 = arith.constant 56 : index
    %c0_273 = arith.constant 0 : index
    %730 = vector.load %arg1[%c56_272, %c0_273] : memref<360x128xf32, #tpu.memory_space<vmem>>, vector<32x96xf32>
    %cst_274 = arith.constant dense<0.000000e+00> : vector<8x96xf32>
    %731 = tpu.matmul %514, %730, %cst_274 {dimension_numbers = #tpu.dot_dimension_numbers<[1], [0], [0], [1], [0, 0, 1, 1], [], []>} : vector<8x32xf32>, vector<32x96xf32>, vector<8x96xf32> -> vector<8x96xf32>
    %c96_275 = arith.constant 96 : index
    %c0_276 = arith.constant 0 : index
    %732 = vector.load %arg1[%c96_275, %c0_276] : memref<360x128xf32, #tpu.memory_space<vmem>>, vector<1x96xf32>
    %733 = vector.broadcast %732 : vector<1x96xf32> to vector<8x96xf32>
    %734 = arith.addf %731, %733 : vector<8x96xf32>
    %735 = vector.extract_strided_slice %729 {offsets = [0, 0], sizes = [8, 64], strides = [1, 1]} : vector<8x96xf32> to vector<8x64xf32>
    %736 = vector.extract_strided_slice %734 {offsets = [0, 0], sizes = [8, 64], strides = [1, 1]} : vector<8x96xf32> to vector<8x64xf32>
    %737 = arith.addf %735, %736 : vector<8x64xf32>
    %738 = arith.negf %737 : vector<8x64xf32>
    %739 = math.exp %738 : vector<8x64xf32>
    %cst_277 = arith.constant 1.000000e+00 : f32
    %740 = vector.broadcast %cst_277 : f32 to vector<8x64xf32>
    %741 = arith.addf %740, %739 : vector<8x64xf32>
    %742 = arith.divf %740, %741 : vector<8x64xf32>
    %743 = vector.extract_strided_slice %742 {offsets = [0, 0], sizes = [8, 32], strides = [1, 1]} : vector<8x64xf32> to vector<8x32xf32>
    %744 = vector.extract_strided_slice %742 {offsets = [0, 32], sizes = [8, 32], strides = [1, 1]} : vector<8x64xf32> to vector<8x32xf32>
    %745 = vector.extract_strided_slice %729 {offsets = [0, 64], sizes = [8, 32], strides = [1, 1]} : vector<8x96xf32> to vector<8x32xf32>
    %746 = vector.extract_strided_slice %734 {offsets = [0, 64], sizes = [8, 32], strides = [1, 1]} : vector<8x96xf32> to vector<8x32xf32>
    %747 = arith.mulf %743, %746 : vector<8x32xf32>
    %748 = arith.addf %745, %747 : vector<8x32xf32>
    %749 = math.tanh %748 : vector<8x32xf32>
    %cst_278 = arith.constant 1.000000e+00 : f32
    %750 = vector.broadcast %cst_278 : f32 to vector<8x32xf32>
    %751 = arith.subf %750, %744 : vector<8x32xf32>
    %752 = arith.mulf %751, %749 : vector<8x32xf32>
    %753 = arith.mulf %744, %514 : vector<8x32xf32>
    %754 = arith.addf %752, %753 : vector<8x32xf32>
    %c104_279 = arith.constant 104 : index
    %c0_280 = arith.constant 0 : index
    %755 = vector.load %arg1[%c104_279, %c0_280] : memref<360x128xf32, #tpu.memory_space<vmem>>, vector<32x40xf32>
    %cst_281 = arith.constant dense<0.000000e+00> : vector<8x40xf32>
    %756 = tpu.matmul %754, %755, %cst_281 {dimension_numbers = #tpu.dot_dimension_numbers<[1], [0], [0], [1], [0, 0, 1, 1], [], []>} : vector<8x32xf32>, vector<32x40xf32>, vector<8x40xf32> -> vector<8x40xf32>
    %c136_282 = arith.constant 136 : index
    %c0_283 = arith.constant 0 : index
    %757 = vector.load %arg1[%c136_282, %c0_283] : memref<360x128xf32, #tpu.memory_space<vmem>>, vector<1x40xf32>
    %758 = vector.broadcast %757 : vector<1x40xf32> to vector<8x40xf32>
    %759 = arith.addf %756, %758 : vector<8x40xf32>
    %cst_284 = arith.constant 0.000000e+00 : f32
    %760 = vector.broadcast %cst_284 : f32 to vector<8x40xf32>
    %761 = arith.maximumf %759, %760 : vector<8x40xf32>
    %762 = vector.extract_strided_slice %761 {offsets = [0, 0], sizes = [8, 8], strides = [1, 1]} : vector<8x40xf32> to vector<8x8xf32>
    %763 = vector.extract_strided_slice %761 {offsets = [0, 8], sizes = [8, 32], strides = [1, 1]} : vector<8x40xf32> to vector<8x32xf32>
    %c24 = arith.constant 24 : index
    %c0_285 = arith.constant 0 : index
    %764 = vector.load %arg7[%c24, %c0_285] : memref<32x32xf32, #tpu.memory_space<vmem>>, vector<8x32xf32>
    tpu.vector_store %arg7[%c24, %c0_285], %763 {strides = array<i32>} : memref<32x32xf32, #tpu.memory_space<vmem>>, vector<8x32xf32>,
    %c160_286 = arith.constant 160 : index
    %c0_287 = arith.constant 0 : index
    %765 = vector.load %arg1[%c160_286, %c0_287] : memref<360x128xf32, #tpu.memory_space<vmem>>, vector<8x24xf32>
    %cst_288 = arith.constant dense<0.000000e+00> : vector<8x24xf32>
    %766 = tpu.matmul %762, %765, %cst_288 {dimension_numbers = #tpu.dot_dimension_numbers<[1], [0], [0], [1], [0, 0, 1, 1], [], []>} : vector<8x8xf32>, vector<8x24xf32>, vector<8x24xf32> -> vector<8x24xf32>
    %c168_289 = arith.constant 168 : index
    %c0_290 = arith.constant 0 : index
    %767 = vector.load %arg1[%c168_289, %c0_290] : memref<360x128xf32, #tpu.memory_space<vmem>>, vector<1x24xf32>
    %768 = vector.broadcast %767 : vector<1x24xf32> to vector<8x24xf32>
    %769 = arith.addf %766, %768 : vector<8x24xf32>
    %c152_291 = arith.constant 152 : index
    %c0_292 = arith.constant 0 : index
    %770 = vector.load %arg1[%c152_291, %c0_292] : memref<360x128xf32, #tpu.memory_space<vmem>>, vector<1x24xf32>
    %771 = vector.extract_strided_slice %770 {offsets = [0, 0], sizes = [1, 16], strides = [1, 1]} : vector<1x24xf32> to vector<1x16xf32>
    %772 = vector.extract_strided_slice %769 {offsets = [0, 0], sizes = [8, 16], strides = [1, 1]} : vector<8x24xf32> to vector<8x16xf32>
    %773 = vector.broadcast %771 : vector<1x16xf32> to vector<8x16xf32>
    %774 = arith.addf %773, %772 : vector<8x16xf32>
    %775 = arith.negf %774 : vector<8x16xf32>
    %776 = math.exp %775 : vector<8x16xf32>
    %cst_293 = arith.constant 1.000000e+00 : f32
    %777 = vector.broadcast %cst_293 : f32 to vector<8x16xf32>
    %778 = arith.addf %777, %776 : vector<8x16xf32>
    %779 = arith.divf %777, %778 : vector<8x16xf32>
    %780 = vector.extract_strided_slice %779 {offsets = [0, 0], sizes = [8, 8], strides = [1, 1]} : vector<8x16xf32> to vector<8x8xf32>
    %781 = vector.extract_strided_slice %779 {offsets = [0, 8], sizes = [8, 8], strides = [1, 1]} : vector<8x16xf32> to vector<8x8xf32>
    %782 = vector.extract_strided_slice %770 {offsets = [0, 16], sizes = [1, 8], strides = [1, 1]} : vector<1x24xf32> to vector<1x8xf32>
    %783 = vector.extract_strided_slice %769 {offsets = [0, 16], sizes = [8, 8], strides = [1, 1]} : vector<8x24xf32> to vector<8x8xf32>
    %784 = arith.mulf %780, %783 : vector<8x8xf32>
    %785 = vector.broadcast %782 : vector<1x8xf32> to vector<8x8xf32>
    %786 = arith.addf %785, %784 : vector<8x8xf32>
    %787 = math.tanh %786 : vector<8x8xf32>
    %cst_294 = arith.constant 1.000000e+00 : f32
    %788 = vector.broadcast %cst_294 : f32 to vector<8x8xf32>
    %789 = arith.subf %788, %781 : vector<8x8xf32>
    %790 = arith.mulf %789, %787 : vector<8x8xf32>
    %791 = arith.mulf %781, %762 : vector<8x8xf32>
    %792 = arith.addf %790, %791 : vector<8x8xf32>
    %c176_295 = arith.constant 176 : index
    %c0_296 = arith.constant 0 : index
    %793 = vector.load %arg1[%c176_295, %c0_296] : memref<360x128xf32, #tpu.memory_space<vmem>>, vector<8x32xf32>
    %cst_297 = arith.constant dense<0.000000e+00> : vector<8x32xf32>
    %794 = tpu.matmul %792, %793, %cst_297 {dimension_numbers = #tpu.dot_dimension_numbers<[1], [0], [0], [1], [0, 0, 1, 1], [], []>} : vector<8x8xf32>, vector<8x32xf32>, vector<8x32xf32> -> vector<8x32xf32>
    %c184_298 = arith.constant 184 : index
    %c0_299 = arith.constant 0 : index
    %795 = vector.load %arg1[%c184_298, %c0_299] : memref<360x128xf32, #tpu.memory_space<vmem>>, vector<1x32xf32>
    %796 = vector.broadcast %795 : vector<1x32xf32> to vector<8x32xf32>
    %797 = arith.addf %794, %796 : vector<8x32xf32>
    %798 = vector.extract_strided_slice %797 {offsets = [0, 0], sizes = [8, 8], strides = [1, 1]} : vector<8x32xf32> to vector<8x8xf32>
    %cst_300 = arith.constant 0.000000e+00 : f32
    %799 = vector.broadcast %cst_300 : f32 to vector<8x8xf32>
    %800 = arith.maximumf %798, %799 : vector<8x8xf32>
    %801 = vector.extract_strided_slice %797 {offsets = [0, 8], sizes = [8, 24], strides = [1, 1]} : vector<8x32xf32> to vector<8x24xf32>
    %c144_301 = arith.constant 144 : index
    %c0_302 = arith.constant 0 : index
    %802 = vector.load %arg1[%c144_301, %c0_302] : memref<360x128xf32, #tpu.memory_space<vmem>>, vector<8x24xf32>
    %cst_303 = arith.constant dense<0.000000e+00> : vector<8x24xf32>
    %803 = tpu.matmul %800, %802, %cst_303 {dimension_numbers = #tpu.dot_dimension_numbers<[1], [0], [0], [1], [0, 0, 1, 1], [], []>} : vector<8x8xf32>, vector<8x24xf32>, vector<8x24xf32> -> vector<8x24xf32>
    %c152_304 = arith.constant 152 : index
    %c0_305 = arith.constant 0 : index
    %804 = vector.load %arg1[%c152_304, %c0_305] : memref<360x128xf32, #tpu.memory_space<vmem>>, vector<1x24xf32>
    %805 = vector.broadcast %804 : vector<1x24xf32> to vector<8x24xf32>
    %806 = arith.addf %803, %805 : vector<8x24xf32>
    %807 = vector.extract_strided_slice %806 {offsets = [0, 0], sizes = [8, 16], strides = [1, 1]} : vector<8x24xf32> to vector<8x16xf32>
    %808 = vector.extract_strided_slice %801 {offsets = [0, 0], sizes = [8, 16], strides = [1, 1]} : vector<8x24xf32> to vector<8x16xf32>
    %809 = arith.addf %807, %808 : vector<8x16xf32>
    %810 = arith.negf %809 : vector<8x16xf32>
    %811 = math.exp %810 : vector<8x16xf32>
    %cst_306 = arith.constant 1.000000e+00 : f32
    %812 = vector.broadcast %cst_306 : f32 to vector<8x16xf32>
    %813 = arith.addf %812, %811 : vector<8x16xf32>
    %814 = arith.divf %812, %813 : vector<8x16xf32>
    %815 = vector.extract_strided_slice %814 {offsets = [0, 0], sizes = [8, 8], strides = [1, 1]} : vector<8x16xf32> to vector<8x8xf32>
    %816 = vector.extract_strided_slice %814 {offsets = [0, 8], sizes = [8, 8], strides = [1, 1]} : vector<8x16xf32> to vector<8x8xf32>
    %817 = vector.extract_strided_slice %806 {offsets = [0, 16], sizes = [8, 8], strides = [1, 1]} : vector<8x24xf32> to vector<8x8xf32>
    %818 = vector.extract_strided_slice %801 {offsets = [0, 16], sizes = [8, 8], strides = [1, 1]} : vector<8x24xf32> to vector<8x8xf32>
    %819 = arith.mulf %815, %818 : vector<8x8xf32>
    %820 = arith.addf %817, %819 : vector<8x8xf32>
    %821 = math.tanh %820 : vector<8x8xf32>
    %cst_307 = arith.constant 1.000000e+00 : f32
    %822 = vector.broadcast %cst_307 : f32 to vector<8x8xf32>
    %823 = arith.subf %822, %816 : vector<8x8xf32>
    %824 = arith.mulf %823, %821 : vector<8x8xf32>
    %825 = arith.mulf %816, %792 : vector<8x8xf32>
    %826 = arith.addf %824, %825 : vector<8x8xf32>
    %c176_308 = arith.constant 176 : index
    %c0_309 = arith.constant 0 : index
    %827 = vector.load %arg1[%c176_308, %c0_309] : memref<360x128xf32, #tpu.memory_space<vmem>>, vector<8x32xf32>
    %cst_310 = arith.constant dense<0.000000e+00> : vector<8x32xf32>
    %828 = tpu.matmul %826, %827, %cst_310 {dimension_numbers = #tpu.dot_dimension_numbers<[1], [0], [0], [1], [0, 0, 1, 1], [], []>} : vector<8x8xf32>, vector<8x32xf32>, vector<8x32xf32> -> vector<8x32xf32>
    %c184_311 = arith.constant 184 : index
    %c0_312 = arith.constant 0 : index
    %829 = vector.load %arg1[%c184_311, %c0_312] : memref<360x128xf32, #tpu.memory_space<vmem>>, vector<1x32xf32>
    %830 = vector.broadcast %829 : vector<1x32xf32> to vector<8x32xf32>
    %831 = arith.addf %828, %830 : vector<8x32xf32>
    %832 = vector.extract_strided_slice %831 {offsets = [0, 0], sizes = [8, 8], strides = [1, 1]} : vector<8x32xf32> to vector<8x8xf32>
    %cst_313 = arith.constant 0.000000e+00 : f32
    %833 = vector.broadcast %cst_313 : f32 to vector<8x8xf32>
    %834 = arith.maximumf %832, %833 : vector<8x8xf32>
    %835 = vector.extract_strided_slice %831 {offsets = [0, 8], sizes = [8, 24], strides = [1, 1]} : vector<8x32xf32> to vector<8x24xf32>
    %c144_314 = arith.constant 144 : index
    %c0_315 = arith.constant 0 : index
    %836 = vector.load %arg1[%c144_314, %c0_315] : memref<360x128xf32, #tpu.memory_space<vmem>>, vector<8x24xf32>
    %cst_316 = arith.constant dense<0.000000e+00> : vector<8x24xf32>
    %837 = tpu.matmul %834, %836, %cst_316 {dimension_numbers = #tpu.dot_dimension_numbers<[1], [0], [0], [1], [0, 0, 1, 1], [], []>} : vector<8x8xf32>, vector<8x24xf32>, vector<8x24xf32> -> vector<8x24xf32>
    %c152_317 = arith.constant 152 : index
    %c0_318 = arith.constant 0 : index
    %838 = vector.load %arg1[%c152_317, %c0_318] : memref<360x128xf32, #tpu.memory_space<vmem>>, vector<1x24xf32>
    %839 = vector.broadcast %838 : vector<1x24xf32> to vector<8x24xf32>
    %840 = arith.addf %837, %839 : vector<8x24xf32>
    %841 = vector.extract_strided_slice %840 {offsets = [0, 0], sizes = [8, 16], strides = [1, 1]} : vector<8x24xf32> to vector<8x16xf32>
    %842 = vector.extract_strided_slice %835 {offsets = [0, 0], sizes = [8, 16], strides = [1, 1]} : vector<8x24xf32> to vector<8x16xf32>
    %843 = arith.addf %841, %842 : vector<8x16xf32>
    %844 = arith.negf %843 : vector<8x16xf32>
    %845 = math.exp %844 : vector<8x16xf32>
    %cst_319 = arith.constant 1.000000e+00 : f32
    %846 = vector.broadcast %cst_319 : f32 to vector<8x16xf32>
    %847 = arith.addf %846, %845 : vector<8x16xf32>
    %848 = arith.divf %846, %847 : vector<8x16xf32>
    %849 = vector.extract_strided_slice %848 {offsets = [0, 0], sizes = [8, 8], strides = [1, 1]} : vector<8x16xf32> to vector<8x8xf32>
    %850 = vector.extract_strided_slice %848 {offsets = [0, 8], sizes = [8, 8], strides = [1, 1]} : vector<8x16xf32> to vector<8x8xf32>
    %851 = vector.extract_strided_slice %840 {offsets = [0, 16], sizes = [8, 8], strides = [1, 1]} : vector<8x24xf32> to vector<8x8xf32>
    %852 = vector.extract_strided_slice %835 {offsets = [0, 16], sizes = [8, 8], strides = [1, 1]} : vector<8x24xf32> to vector<8x8xf32>
    %853 = arith.mulf %849, %852 : vector<8x8xf32>
    %854 = arith.addf %851, %853 : vector<8x8xf32>
    %855 = math.tanh %854 : vector<8x8xf32>
    %cst_320 = arith.constant 1.000000e+00 : f32
    %856 = vector.broadcast %cst_320 : f32 to vector<8x8xf32>
    %857 = arith.subf %856, %850 : vector<8x8xf32>
    %858 = arith.mulf %857, %855 : vector<8x8xf32>
    %859 = arith.mulf %850, %826 : vector<8x8xf32>
    %860 = arith.addf %858, %859 : vector<8x8xf32>
    %c176_321 = arith.constant 176 : index
    %c0_322 = arith.constant 0 : index
    %861 = vector.load %arg1[%c176_321, %c0_322] : memref<360x128xf32, #tpu.memory_space<vmem>>, vector<8x32xf32>
    %cst_323 = arith.constant dense<0.000000e+00> : vector<8x32xf32>
    %862 = tpu.matmul %860, %861, %cst_323 {dimension_numbers = #tpu.dot_dimension_numbers<[1], [0], [0], [1], [0, 0, 1, 1], [], []>} : vector<8x8xf32>, vector<8x32xf32>, vector<8x32xf32> -> vector<8x32xf32>
    %c184_324 = arith.constant 184 : index
    %c0_325 = arith.constant 0 : index
    %863 = vector.load %arg1[%c184_324, %c0_325] : memref<360x128xf32, #tpu.memory_space<vmem>>, vector<1x32xf32>
    %864 = vector.broadcast %863 : vector<1x32xf32> to vector<8x32xf32>
    %865 = arith.addf %862, %864 : vector<8x32xf32>
    %866 = vector.extract_strided_slice %865 {offsets = [0, 0], sizes = [8, 8], strides = [1, 1]} : vector<8x32xf32> to vector<8x8xf32>
    %cst_326 = arith.constant 0.000000e+00 : f32
    %867 = vector.broadcast %cst_326 : f32 to vector<8x8xf32>
    %868 = arith.maximumf %866, %867 : vector<8x8xf32>
    %869 = vector.extract_strided_slice %865 {offsets = [0, 8], sizes = [8, 24], strides = [1, 1]} : vector<8x32xf32> to vector<8x24xf32>
    %c144_327 = arith.constant 144 : index
    %c0_328 = arith.constant 0 : index
    %870 = vector.load %arg1[%c144_327, %c0_328] : memref<360x128xf32, #tpu.memory_space<vmem>>, vector<8x24xf32>
    %cst_329 = arith.constant dense<0.000000e+00> : vector<8x24xf32>
    %871 = tpu.matmul %868, %870, %cst_329 {dimension_numbers = #tpu.dot_dimension_numbers<[1], [0], [0], [1], [0, 0, 1, 1], [], []>} : vector<8x8xf32>, vector<8x24xf32>, vector<8x24xf32> -> vector<8x24xf32>
    %c152_330 = arith.constant 152 : index
    %c0_331 = arith.constant 0 : index
    %872 = vector.load %arg1[%c152_330, %c0_331] : memref<360x128xf32, #tpu.memory_space<vmem>>, vector<1x24xf32>
    %873 = vector.broadcast %872 : vector<1x24xf32> to vector<8x24xf32>
    %874 = arith.addf %871, %873 : vector<8x24xf32>
    %875 = vector.extract_strided_slice %874 {offsets = [0, 0], sizes = [8, 16], strides = [1, 1]} : vector<8x24xf32> to vector<8x16xf32>
    %876 = vector.extract_strided_slice %869 {offsets = [0, 0], sizes = [8, 16], strides = [1, 1]} : vector<8x24xf32> to vector<8x16xf32>
    %877 = arith.addf %875, %876 : vector<8x16xf32>
    %878 = arith.negf %877 : vector<8x16xf32>
    %879 = math.exp %878 : vector<8x16xf32>
    %cst_332 = arith.constant 1.000000e+00 : f32
    %880 = vector.broadcast %cst_332 : f32 to vector<8x16xf32>
    %881 = arith.addf %880, %879 : vector<8x16xf32>
    %882 = arith.divf %880, %881 : vector<8x16xf32>
    %883 = vector.extract_strided_slice %882 {offsets = [0, 0], sizes = [8, 8], strides = [1, 1]} : vector<8x16xf32> to vector<8x8xf32>
    %884 = vector.extract_strided_slice %882 {offsets = [0, 8], sizes = [8, 8], strides = [1, 1]} : vector<8x16xf32> to vector<8x8xf32>
    %885 = vector.extract_strided_slice %874 {offsets = [0, 16], sizes = [8, 8], strides = [1, 1]} : vector<8x24xf32> to vector<8x8xf32>
    %886 = vector.extract_strided_slice %869 {offsets = [0, 16], sizes = [8, 8], strides = [1, 1]} : vector<8x24xf32> to vector<8x8xf32>
    %887 = arith.mulf %883, %886 : vector<8x8xf32>
    %888 = arith.addf %885, %887 : vector<8x8xf32>
    %889 = math.tanh %888 : vector<8x8xf32>
    %cst_333 = arith.constant 1.000000e+00 : f32
    %890 = vector.broadcast %cst_333 : f32 to vector<8x8xf32>
    %891 = arith.subf %890, %884 : vector<8x8xf32>
    %892 = arith.mulf %891, %889 : vector<8x8xf32>
    %893 = arith.mulf %884, %860 : vector<8x8xf32>
    %894 = arith.addf %892, %893 : vector<8x8xf32>
    %895 = tpu.concatenate %792, %826, %860, %894 in 0 : vector<8x8xf32>, vector<8x8xf32>, vector<8x8xf32>, vector<8x8xf32> -> vector<32x8xf32>
    %c192_334 = arith.constant 192 : index
    %c0_335 = arith.constant 0 : index
    %896 = vector.load %arg1[%c192_334, %c0_335] : memref<360x128xf32, #tpu.memory_space<vmem>>, vector<8x48xf32>
    %cst_336 = arith.constant dense<0.000000e+00> : vector<32x48xf32>
    %897 = tpu.matmul %895, %896, %cst_336 {dimension_numbers = #tpu.dot_dimension_numbers<[1], [0], [0], [1], [0, 0, 1, 1], [], []>} : vector<32x8xf32>, vector<8x48xf32>, vector<32x48xf32> -> vector<32x48xf32>
    %c200_337 = arith.constant 200 : index
    %c0_338 = arith.constant 0 : index
    %898 = vector.load %arg1[%c200_337, %c0_338] : memref<360x128xf32, #tpu.memory_space<vmem>>, vector<1x48xf32>
    %899 = vector.broadcast %898 : vector<1x48xf32> to vector<32x48xf32>
    %900 = arith.addf %897, %899 : vector<32x48xf32>
    %cst_339 = arith.constant 0.000000e+00 : f32
    %901 = vector.broadcast %cst_339 : f32 to vector<32x48xf32>
    %902 = arith.maximumf %900, %901 : vector<32x48xf32>
    %903 = vector.extract_strided_slice %902 {offsets = [0, 32], sizes = [32, 16], strides = [1, 1]} : vector<32x48xf32> to vector<32x16xf32>
    %904 = math.tanh %903 : vector<32x16xf32>
    %c208_340 = arith.constant 208 : index
    %c0_341 = arith.constant 0 : index
    %905 = vector.load %arg1[%c208_340, %c0_341] : memref<360x128xf32, #tpu.memory_space<vmem>>, vector<16x2xf32>
    %cst_342 = arith.constant dense<0.000000e+00> : vector<32x2xf32>
    %906 = tpu.matmul %904, %905, %cst_342 {dimension_numbers = #tpu.dot_dimension_numbers<[1], [0], [0], [1], [0, 0, 1, 1], [], []>} : vector<32x16xf32>, vector<16x2xf32>, vector<32x2xf32> -> vector<32x2xf32>
    %c224_343 = arith.constant 224 : index
    %c0_344 = arith.constant 0 : index
    %907 = vector.load %arg1[%c224_343, %c0_344] : memref<360x128xf32, #tpu.memory_space<vmem>>, vector<1x2xf32>
    %908 = vector.broadcast %907 : vector<1x2xf32> to vector<32x2xf32>
    %909 = arith.addf %906, %908 : vector<32x2xf32>
    %cst_345 = arith.constant 0.000000e+00 : f32
    %910 = vector.broadcast %cst_345 : f32 to vector<32x2xf32>
    %911 = arith.maximumf %909, %910 : vector<32x2xf32>
    %912 = vector.extract_strided_slice %902 {offsets = [0, 0], sizes = [32, 32], strides = [1, 1]} : vector<32x48xf32> to vector<32x32xf32>
    %c96_346 = arith.constant 96 : index
    %c0_347 = arith.constant 0 : index
    %913 = vector.load %arg4[%c96_346, %c0_347] : memref<128x32xf32, #tpu.memory_space<vmem>>, vector<32x32xf32>
    tpu.vector_store %arg4[%c96_346, %c0_347], %912 {strides = array<i32>} : memref<128x32xf32, #tpu.memory_space<vmem>>, vector<32x32xf32>,
    %914 = vector.extract_strided_slice %902 {offsets = [0, 40], sizes = [8, 8], strides = [1, 1]} : vector<32x48xf32> to vector<8x8xf32>
    %c24_348 = arith.constant 24 : index
    %c0_349 = arith.constant 0 : index
    %915 = vector.load %arg5[%c24_348, %c0_349] : memref<128x8xf32, #tpu.memory_space<vmem>>, vector<8x8xf32>
    tpu.vector_store %arg5[%c24_348, %c0_349], %914 {strides = array<i32>} : memref<128x8xf32, #tpu.memory_space<vmem>>, vector<8x8xf32>,
    %916 = vector.extract_strided_slice %911 {offsets = [0, 1], sizes = [8, 1], strides = [1, 1]} : vector<32x2xf32> to vector<8x1xf32>
    %c24_350 = arith.constant 24 : index
    %c0_351 = arith.constant 0 : index
    %917 = vector.load %arg6[%c24_350, %c0_351] : memref<128x1xf32, #tpu.memory_space<vmem>>, vector<8x1xf32>
    tpu.vector_store %arg6[%c24_350, %c0_351], %916 {strides = array<i32>} : memref<128x1xf32, #tpu.memory_space<vmem>>, vector<8x1xf32>,
    %918 = vector.extract_strided_slice %902 {offsets = [8, 40], sizes = [8, 8], strides = [1, 1]} : vector<32x48xf32> to vector<8x8xf32>
    %c56_352 = arith.constant 56 : index
    %c0_353 = arith.constant 0 : index
    %919 = vector.load %arg5[%c56_352, %c0_353] : memref<128x8xf32, #tpu.memory_space<vmem>>, vector<8x8xf32>
    tpu.vector_store %arg5[%c56_352, %c0_353], %918 {strides = array<i32>} : memref<128x8xf32, #tpu.memory_space<vmem>>, vector<8x8xf32>,
    %920 = vector.extract_strided_slice %911 {offsets = [8, 1], sizes = [8, 1], strides = [1, 1]} : vector<32x2xf32> to vector<8x1xf32>
    %c56_354 = arith.constant 56 : index
    %c0_355 = arith.constant 0 : index
    %921 = vector.load %arg6[%c56_354, %c0_355] : memref<128x1xf32, #tpu.memory_space<vmem>>, vector<8x1xf32>
    tpu.vector_store %arg6[%c56_354, %c0_355], %920 {strides = array<i32>} : memref<128x1xf32, #tpu.memory_space<vmem>>, vector<8x1xf32>,
    %922 = vector.extract_strided_slice %902 {offsets = [16, 40], sizes = [8, 8], strides = [1, 1]} : vector<32x48xf32> to vector<8x8xf32>
    %c88_356 = arith.constant 88 : index
    %c0_357 = arith.constant 0 : index
    %923 = vector.load %arg5[%c88_356, %c0_357] : memref<128x8xf32, #tpu.memory_space<vmem>>, vector<8x8xf32>
    tpu.vector_store %arg5[%c88_356, %c0_357], %922 {strides = array<i32>} : memref<128x8xf32, #tpu.memory_space<vmem>>, vector<8x8xf32>,
    %924 = vector.extract_strided_slice %911 {offsets = [16, 1], sizes = [8, 1], strides = [1, 1]} : vector<32x2xf32> to vector<8x1xf32>
    %c88_358 = arith.constant 88 : index
    %c0_359 = arith.constant 0 : index
    %925 = vector.load %arg6[%c88_358, %c0_359] : memref<128x1xf32, #tpu.memory_space<vmem>>, vector<8x1xf32>
    tpu.vector_store %arg6[%c88_358, %c0_359], %924 {strides = array<i32>} : memref<128x1xf32, #tpu.memory_space<vmem>>, vector<8x1xf32>,
    %926 = vector.extract_strided_slice %902 {offsets = [24, 40], sizes = [8, 8], strides = [1, 1]} : vector<32x48xf32> to vector<8x8xf32>
    %c120 = arith.constant 120 : index
    %c0_360 = arith.constant 0 : index
    %927 = vector.load %arg5[%c120, %c0_360] : memref<128x8xf32, #tpu.memory_space<vmem>>, vector<8x8xf32>
    tpu.vector_store %arg5[%c120, %c0_360], %926 {strides = array<i32>} : memref<128x8xf32, #tpu.memory_space<vmem>>, vector<8x8xf32>,
    %928 = vector.extract_strided_slice %911 {offsets = [24, 1], sizes = [8, 1], strides = [1, 1]} : vector<32x2xf32> to vector<8x1xf32>
    %c120_361 = arith.constant 120 : index
    %c0_362 = arith.constant 0 : index
    %929 = vector.load %arg6[%c120_361, %c0_362] : memref<128x1xf32, #tpu.memory_space<vmem>>, vector<8x1xf32>
    tpu.vector_store %arg6[%c120_361, %c0_362], %928 {strides = array<i32>} : memref<128x1xf32, #tpu.memory_space<vmem>>, vector<8x1xf32>,
    %c0_363 = arith.constant 0 : index
    %c0_364 = arith.constant 0 : index
    %930 = vector.load %arg4[%c0_363, %c0_364] : memref<128x32xf32, #tpu.memory_space<vmem>>, vector<128x32xf32>
    %c232 = arith.constant 232 : index
    %c0_365 = arith.constant 0 : index
    %931 = vector.load %arg1[%c232, %c0_365] : memref<360x128xf32, #tpu.memory_space<vmem>>, vector<32x2xf32>
    %cst_366 = arith.constant dense<0.000000e+00> : vector<128x2xf32>
    %932 = tpu.matmul %930, %931, %cst_366 {dimension_numbers = #tpu.dot_dimension_numbers<[1], [0], [0], [1], [0, 0, 1, 1], [], []>} : vector<128x32xf32>, vector<32x2xf32>, vector<128x2xf32> -> vector<128x2xf32>
    %c264 = arith.constant 264 : index
    %c0_367 = arith.constant 0 : index
    %933 = vector.load %arg1[%c264, %c0_367] : memref<360x128xf32, #tpu.memory_space<vmem>>, vector<1x2xf32>
    %934 = vector.broadcast %933 : vector<1x2xf32> to vector<128x2xf32>
    %935 = arith.addf %932, %934 : vector<128x2xf32>
    %c0_368 = arith.constant 0 : index
    %c0_369 = arith.constant 0 : index
    %936 = vector.load %arg2[%c0_368, %c0_369] : memref<128x2xf32, #tpu.memory_space<vmem>>, vector<128x2xf32>
    tpu.vector_store %arg2[%c0_368, %c0_369], %935 {strides = array<i32>} : memref<128x2xf32, #tpu.memory_space<vmem>>, vector<128x2xf32>,
    %c224_370 = arith.constant 224 : index
    %c0_371 = arith.constant 0 : index
    %937 = vector.load %arg1[%c224_370, %c0_371] : memref<360x128xf32, #tpu.memory_space<vmem>>, vector<1x2xf32>
    %938 = vector.extract_strided_slice %937 {offsets = [0, 1], sizes = [1, 1], strides = [1, 1]} : vector<1x2xf32> to vector<1x1xf32>
    %cst_372 = arith.constant 0.000000e+00 : f32
    %939 = vector.broadcast %cst_372 : f32 to vector<1x1xf32>
    %940 = arith.maximumf %938, %939 : vector<1x1xf32>
    %c0_373 = arith.constant 0 : index
    %c0_374 = arith.constant 0 : index
    %941 = vector.load %arg5[%c0_373, %c0_374] : memref<128x8xf32, #tpu.memory_space<vmem>>, vector<32x8xf32>
    %c32_375 = arith.constant 32 : index
    %c0_376 = arith.constant 0 : index
    %942 = vector.load %arg5[%c32_375, %c0_376] : memref<128x8xf32, #tpu.memory_space<vmem>>, vector<32x8xf32>
    %c64_377 = arith.constant 64 : index
    %c0_378 = arith.constant 0 : index
    %943 = vector.load %arg5[%c64_377, %c0_378] : memref<128x8xf32, #tpu.memory_space<vmem>>, vector<32x8xf32>
    %c96_379 = arith.constant 96 : index
    %c0_380 = arith.constant 0 : index
    %944 = vector.load %arg5[%c96_379, %c0_380] : memref<128x8xf32, #tpu.memory_space<vmem>>, vector<32x8xf32>
    %c0_381 = arith.constant 0 : index
    %c0_382 = arith.constant 0 : index
    %945 = vector.load %arg6[%c0_381, %c0_382] : memref<128x1xf32, #tpu.memory_space<vmem>>, vector<32x1xf32>
    %c32_383 = arith.constant 32 : index
    %c0_384 = arith.constant 0 : index
    %946 = vector.load %arg6[%c32_383, %c0_384] : memref<128x1xf32, #tpu.memory_space<vmem>>, vector<32x1xf32>
    %c64_385 = arith.constant 64 : index
    %c0_386 = arith.constant 0 : index
    %947 = vector.load %arg6[%c64_385, %c0_386] : memref<128x1xf32, #tpu.memory_space<vmem>>, vector<32x1xf32>
    %c96_387 = arith.constant 96 : index
    %c0_388 = arith.constant 0 : index
    %948 = vector.load %arg6[%c96_387, %c0_388] : memref<128x1xf32, #tpu.memory_space<vmem>>, vector<32x1xf32>
    %949 = arith.maximumf %945, %946 : vector<32x1xf32>
    %950 = arith.maximumf %949, %947 : vector<32x1xf32>
    %951 = arith.maximumf %950, %948 : vector<32x1xf32>
    %952 = arith.subf %945, %951 : vector<32x1xf32>
    %953 = math.exp %952 : vector<32x1xf32>
    %954 = arith.subf %946, %951 : vector<32x1xf32>
    %955 = math.exp %954 : vector<32x1xf32>
    %956 = arith.subf %947, %951 : vector<32x1xf32>
    %957 = math.exp %956 : vector<32x1xf32>
    %958 = arith.subf %948, %951 : vector<32x1xf32>
    %959 = math.exp %958 : vector<32x1xf32>
    %960 = vector.broadcast %953 : vector<32x1xf32> to vector<32x8xf32>
    %961 = arith.mulf %960, %941 : vector<32x8xf32>
    %962 = arith.addf %953, %955 : vector<32x1xf32>
    %963 = vector.broadcast %955 : vector<32x1xf32> to vector<32x8xf32>
    %964 = arith.mulf %963, %942 : vector<32x8xf32>
    %965 = arith.addf %961, %964 : vector<32x8xf32>
    %966 = arith.addf %962, %957 : vector<32x1xf32>
    %967 = vector.broadcast %957 : vector<32x1xf32> to vector<32x8xf32>
    %968 = arith.mulf %967, %943 : vector<32x8xf32>
    %969 = arith.addf %965, %968 : vector<32x8xf32>
    %970 = arith.addf %966, %959 : vector<32x1xf32>
    %971 = vector.broadcast %959 : vector<32x1xf32> to vector<32x8xf32>
    %972 = arith.mulf %971, %944 : vector<32x8xf32>
    %973 = arith.addf %969, %972 : vector<32x8xf32>
    %974 = vector.broadcast %970 : vector<32x1xf32> to vector<32x8xf32>
    %975 = arith.divf %973, %974 : vector<32x8xf32>
    %976 = arith.maximumf %946, %947 : vector<32x1xf32>
    %977 = arith.maximumf %976, %948 : vector<32x1xf32>
    %978 = vector.broadcast %940 : vector<1x1xf32> to vector<32x1xf32>
    %979 = arith.maximumf %977, %978 : vector<32x1xf32>
    %980 = arith.subf %946, %979 : vector<32x1xf32>
    %981 = math.exp %980 : vector<32x1xf32>
    %982 = arith.subf %947, %979 : vector<32x1xf32>
    %983 = math.exp %982 : vector<32x1xf32>
    %984 = arith.subf %948, %979 : vector<32x1xf32>
    %985 = math.exp %984 : vector<32x1xf32>
    %986 = vector.broadcast %981 : vector<32x1xf32> to vector<32x8xf32>
    %987 = arith.mulf %986, %942 : vector<32x8xf32>
    %988 = arith.addf %981, %983 : vector<32x1xf32>
    %989 = vector.broadcast %983 : vector<32x1xf32> to vector<32x8xf32>
    %990 = arith.mulf %989, %943 : vector<32x8xf32>
    %991 = arith.addf %987, %990 : vector<32x8xf32>
    %992 = arith.addf %988, %985 : vector<32x1xf32>
    %993 = vector.broadcast %985 : vector<32x1xf32> to vector<32x8xf32>
    %994 = arith.mulf %993, %944 : vector<32x8xf32>
    %995 = arith.addf %991, %994 : vector<32x8xf32>
    %996 = vector.broadcast %940 : vector<1x1xf32> to vector<32x1xf32>
    %997 = arith.subf %996, %979 : vector<32x1xf32>
    %998 = math.exp %997 : vector<32x1xf32>
    %cst_389 = arith.constant 1.000000e+00 : f32
    %999 = vector.broadcast %cst_389 : f32 to vector<32x1xf32>
    %1000 = arith.mulf %999, %998 : vector<32x1xf32>
    %1001 = arith.addf %992, %1000 : vector<32x1xf32>
    %1002 = vector.broadcast %1001 : vector<32x1xf32> to vector<32x8xf32>
    %1003 = arith.divf %995, %1002 : vector<32x8xf32>
    %1004 = arith.maximumf %947, %948 : vector<32x1xf32>
    %1005 = vector.broadcast %940 : vector<1x1xf32> to vector<32x1xf32>
    %1006 = arith.maximumf %1004, %1005 : vector<32x1xf32>
    %1007 = arith.subf %947, %1006 : vector<32x1xf32>
    %1008 = math.exp %1007 : vector<32x1xf32>
    %1009 = arith.subf %948, %1006 : vector<32x1xf32>
    %1010 = math.exp %1009 : vector<32x1xf32>
    %1011 = vector.broadcast %1008 : vector<32x1xf32> to vector<32x8xf32>
    %1012 = arith.mulf %1011, %943 : vector<32x8xf32>
    %1013 = arith.addf %1008, %1010 : vector<32x1xf32>
    %1014 = vector.broadcast %1010 : vector<32x1xf32> to vector<32x8xf32>
    %1015 = arith.mulf %1014, %944 : vector<32x8xf32>
    %1016 = arith.addf %1012, %1015 : vector<32x8xf32>
    %1017 = vector.broadcast %940 : vector<1x1xf32> to vector<32x1xf32>
    %1018 = arith.subf %1017, %1006 : vector<32x1xf32>
    %1019 = math.exp %1018 : vector<32x1xf32>
    %cst_390 = arith.constant 2.000000e+00 : f32
    %1020 = vector.broadcast %cst_390 : f32 to vector<32x1xf32>
    %1021 = arith.mulf %1020, %1019 : vector<32x1xf32>
    %1022 = arith.addf %1013, %1021 : vector<32x1xf32>
    %1023 = vector.broadcast %1022 : vector<32x1xf32> to vector<32x8xf32>
    %1024 = arith.divf %1016, %1023 : vector<32x8xf32>
    %1025 = vector.broadcast %940 : vector<1x1xf32> to vector<32x1xf32>
    %1026 = arith.maximumf %948, %1025 : vector<32x1xf32>
    %1027 = arith.subf %948, %1026 : vector<32x1xf32>
    %1028 = math.exp %1027 : vector<32x1xf32>
    %1029 = vector.broadcast %1028 : vector<32x1xf32> to vector<32x8xf32>
    %1030 = arith.mulf %1029, %944 : vector<32x8xf32>
    %1031 = vector.broadcast %940 : vector<1x1xf32> to vector<32x1xf32>
    %1032 = arith.subf %1031, %1026 : vector<32x1xf32>
    %1033 = math.exp %1032 : vector<32x1xf32>
    %cst_391 = arith.constant 3.000000e+00 : f32
    %1034 = vector.broadcast %cst_391 : f32 to vector<32x1xf32>
    %1035 = arith.mulf %1034, %1033 : vector<32x1xf32>
    %1036 = arith.addf %1028, %1035 : vector<32x1xf32>
    %1037 = vector.broadcast %1036 : vector<32x1xf32> to vector<32x8xf32>
    %1038 = arith.divf %1030, %1037 : vector<32x8xf32>
    %1039 = tpu.concatenate %975, %1003, %1024, %1038 in 0 : vector<32x8xf32>, vector<32x8xf32>, vector<32x8xf32>, vector<32x8xf32> -> vector<128x8xf32>
    %c312 = arith.constant 312 : index
    %c0_392 = arith.constant 0 : index
    %1040 = vector.load %arg1[%c312, %c0_392] : memref<360x128xf32, #tpu.memory_space<vmem>>, vector<8x96xf32>
    %cst_393 = arith.constant dense<0.000000e+00> : vector<128x96xf32>
    %1041 = tpu.matmul %1039, %1040, %cst_393 {dimension_numbers = #tpu.dot_dimension_numbers<[1], [0], [0], [1], [0, 0, 1, 1], [], []>} : vector<128x8xf32>, vector<8x96xf32>, vector<128x96xf32> -> vector<128x96xf32>
    %c352 = arith.constant 352 : index
    %c0_394 = arith.constant 0 : index
    %1042 = vector.load %arg1[%c352, %c0_394] : memref<360x128xf32, #tpu.memory_space<vmem>>, vector<1x96xf32>
    %1043 = vector.broadcast %1042 : vector<1x96xf32> to vector<128x96xf32>
    %1044 = arith.addf %1041, %1043 : vector<128x96xf32>
    %c0_395 = arith.constant 0 : index
    %c0_396 = arith.constant 0 : index
    %1045 = vector.load %arg7[%c0_395, %c0_396] : memref<32x32xf32, #tpu.memory_space<vmem>>, vector<32x32xf32>
    %c272 = arith.constant 272 : index
    %c0_397 = arith.constant 0 : index
    %1046 = vector.load %arg1[%c272, %c0_397] : memref<360x128xf32, #tpu.memory_space<vmem>>, vector<32x128xf32>
    %cst_398 = arith.constant dense<0.000000e+00> : vector<32x128xf32>
    %1047 = tpu.matmul %1045, %1046, %cst_398 {dimension_numbers = #tpu.dot_dimension_numbers<[1], [0], [0], [1], [0, 0, 1, 1], [], []>} : vector<32x32xf32>, vector<32x128xf32>, vector<32x128xf32> -> vector<32x128xf32>
    %c304 = arith.constant 304 : index
    %c0_399 = arith.constant 0 : index
    %1048 = vector.load %arg1[%c304, %c0_399] : memref<360x128xf32, #tpu.memory_space<vmem>>, vector<1x128xf32>
    %1049 = vector.broadcast %1048 : vector<1x128xf32> to vector<32x128xf32>
    %1050 = arith.addf %1047, %1049 : vector<32x128xf32>
    %1051 = vector.extract_strided_slice %1050 {offsets = [0, 0], sizes = [32, 32], strides = [1, 1]} : vector<32x128xf32> to vector<32x32xf32>
    %cst_400 = arith.constant 0.000000e+00 : f32
    %1052 = vector.broadcast %cst_400 : f32 to vector<32x32xf32>
    %1053 = arith.maximumf %1051, %1052 : vector<32x32xf32>
    %1054 = vector.extract_strided_slice %1044 {offsets = [0, 0], sizes = [32, 96], strides = [1, 1]} : vector<128x96xf32> to vector<32x96xf32>
    %c320 = arith.constant 320 : index
    %c0_401 = arith.constant 0 : index
    %1055 = vector.load %arg1[%c320, %c0_401] : memref<360x128xf32, #tpu.memory_space<vmem>>, vector<32x96xf32>
    %cst_402 = arith.constant dense<0.000000e+00> : vector<32x96xf32>
    %1056 = tpu.matmul %1053, %1055, %cst_402 {dimension_numbers = #tpu.dot_dimension_numbers<[1], [0], [0], [1], [0, 0, 1, 1], [], []>} : vector<32x32xf32>, vector<32x96xf32>, vector<32x96xf32> -> vector<32x96xf32>
    %1057 = arith.addf %1054, %1056 : vector<32x96xf32>
    %1058 = vector.extract_strided_slice %1050 {offsets = [0, 32], sizes = [32, 96], strides = [1, 1]} : vector<32x128xf32> to vector<32x96xf32>
    %1059 = vector.extract_strided_slice %1057 {offsets = [0, 0], sizes = [32, 64], strides = [1, 1]} : vector<32x96xf32> to vector<32x64xf32>
    %1060 = vector.extract_strided_slice %1058 {offsets = [0, 0], sizes = [32, 64], strides = [1, 1]} : vector<32x96xf32> to vector<32x64xf32>
    %1061 = arith.addf %1059, %1060 : vector<32x64xf32>
    %1062 = arith.negf %1061 : vector<32x64xf32>
    %1063 = math.exp %1062 : vector<32x64xf32>
    %cst_403 = arith.constant 1.000000e+00 : f32
    %1064 = vector.broadcast %cst_403 : f32 to vector<32x64xf32>
    %1065 = arith.addf %1064, %1063 : vector<32x64xf32>
    %1066 = arith.divf %1064, %1065 : vector<32x64xf32>
    %1067 = vector.extract_strided_slice %1066 {offsets = [0, 0], sizes = [32, 32], strides = [1, 1]} : vector<32x64xf32> to vector<32x32xf32>
    %1068 = vector.extract_strided_slice %1066 {offsets = [0, 32], sizes = [32, 32], strides = [1, 1]} : vector<32x64xf32> to vector<32x32xf32>
    %1069 = vector.extract_strided_slice %1057 {offsets = [0, 64], sizes = [32, 32], strides = [1, 1]} : vector<32x96xf32> to vector<32x32xf32>
    %1070 = vector.extract_strided_slice %1058 {offsets = [0, 64], sizes = [32, 32], strides = [1, 1]} : vector<32x96xf32> to vector<32x32xf32>
    %1071 = arith.mulf %1067, %1070 : vector<32x32xf32>
    %1072 = arith.addf %1069, %1071 : vector<32x32xf32>
    %1073 = math.tanh %1072 : vector<32x32xf32>
    %cst_404 = arith.constant 1.000000e+00 : f32
    %1074 = vector.broadcast %cst_404 : f32 to vector<32x32xf32>
    %1075 = arith.subf %1074, %1068 : vector<32x32xf32>
    %1076 = arith.mulf %1075, %1073 : vector<32x32xf32>
    %1077 = arith.mulf %1068, %1045 : vector<32x32xf32>
    %1078 = arith.addf %1076, %1077 : vector<32x32xf32>
    %c272_405 = arith.constant 272 : index
    %c0_406 = arith.constant 0 : index
    %1079 = vector.load %arg1[%c272_405, %c0_406] : memref<360x128xf32, #tpu.memory_space<vmem>>, vector<32x128xf32>
    %cst_407 = arith.constant dense<0.000000e+00> : vector<32x128xf32>
    %1080 = tpu.matmul %1078, %1079, %cst_407 {dimension_numbers = #tpu.dot_dimension_numbers<[1], [0], [0], [1], [0, 0, 1, 1], [], []>} : vector<32x32xf32>, vector<32x128xf32>, vector<32x128xf32> -> vector<32x128xf32>
    %c304_408 = arith.constant 304 : index
    %c0_409 = arith.constant 0 : index
    %1081 = vector.load %arg1[%c304_408, %c0_409] : memref<360x128xf32, #tpu.memory_space<vmem>>, vector<1x128xf32>
    %1082 = vector.broadcast %1081 : vector<1x128xf32> to vector<32x128xf32>
    %1083 = arith.addf %1080, %1082 : vector<32x128xf32>
    %1084 = vector.extract_strided_slice %1083 {offsets = [0, 0], sizes = [32, 32], strides = [1, 1]} : vector<32x128xf32> to vector<32x32xf32>
    %cst_410 = arith.constant 0.000000e+00 : f32
    %1085 = vector.broadcast %cst_410 : f32 to vector<32x32xf32>
    %1086 = arith.maximumf %1084, %1085 : vector<32x32xf32>
    %1087 = vector.extract_strided_slice %1044 {offsets = [32, 0], sizes = [32, 96], strides = [1, 1]} : vector<128x96xf32> to vector<32x96xf32>
    %c320_411 = arith.constant 320 : index
    %c0_412 = arith.constant 0 : index
    %1088 = vector.load %arg1[%c320_411, %c0_412] : memref<360x128xf32, #tpu.memory_space<vmem>>, vector<32x96xf32>
    %cst_413 = arith.constant dense<0.000000e+00> : vector<32x96xf32>
    %1089 = tpu.matmul %1086, %1088, %cst_413 {dimension_numbers = #tpu.dot_dimension_numbers<[1], [0], [0], [1], [0, 0, 1, 1], [], []>} : vector<32x32xf32>, vector<32x96xf32>, vector<32x96xf32> -> vector<32x96xf32>
    %1090 = arith.addf %1087, %1089 : vector<32x96xf32>
    %1091 = vector.extract_strided_slice %1083 {offsets = [0, 32], sizes = [32, 96], strides = [1, 1]} : vector<32x128xf32> to vector<32x96xf32>
    %1092 = vector.extract_strided_slice %1090 {offsets = [0, 0], sizes = [32, 64], strides = [1, 1]} : vector<32x96xf32> to vector<32x64xf32>
    %1093 = vector.extract_strided_slice %1091 {offsets = [0, 0], sizes = [32, 64], strides = [1, 1]} : vector<32x96xf32> to vector<32x64xf32>
    %1094 = arith.addf %1092, %1093 : vector<32x64xf32>
    %1095 = arith.negf %1094 : vector<32x64xf32>
    %1096 = math.exp %1095 : vector<32x64xf32>
    %cst_414 = arith.constant 1.000000e+00 : f32
    %1097 = vector.broadcast %cst_414 : f32 to vector<32x64xf32>
    %1098 = arith.addf %1097, %1096 : vector<32x64xf32>
    %1099 = arith.divf %1097, %1098 : vector<32x64xf32>
    %1100 = vector.extract_strided_slice %1099 {offsets = [0, 0], sizes = [32, 32], strides = [1, 1]} : vector<32x64xf32> to vector<32x32xf32>
    %1101 = vector.extract_strided_slice %1099 {offsets = [0, 32], sizes = [32, 32], strides = [1, 1]} : vector<32x64xf32> to vector<32x32xf32>
    %1102 = vector.extract_strided_slice %1090 {offsets = [0, 64], sizes = [32, 32], strides = [1, 1]} : vector<32x96xf32> to vector<32x32xf32>
    %1103 = vector.extract_strided_slice %1091 {offsets = [0, 64], sizes = [32, 32], strides = [1, 1]} : vector<32x96xf32> to vector<32x32xf32>
    %1104 = arith.mulf %1100, %1103 : vector<32x32xf32>
    %1105 = arith.addf %1102, %1104 : vector<32x32xf32>
    %1106 = math.tanh %1105 : vector<32x32xf32>
    %cst_415 = arith.constant 1.000000e+00 : f32
    %1107 = vector.broadcast %cst_415 : f32 to vector<32x32xf32>
    %1108 = arith.subf %1107, %1101 : vector<32x32xf32>
    %1109 = arith.mulf %1108, %1106 : vector<32x32xf32>
    %1110 = arith.mulf %1101, %1078 : vector<32x32xf32>
    %1111 = arith.addf %1109, %1110 : vector<32x32xf32>
    %c272_416 = arith.constant 272 : index
    %c0_417 = arith.constant 0 : index
    %1112 = vector.load %arg1[%c272_416, %c0_417] : memref<360x128xf32, #tpu.memory_space<vmem>>, vector<32x128xf32>
    %cst_418 = arith.constant dense<0.000000e+00> : vector<32x128xf32>
    %1113 = tpu.matmul %1111, %1112, %cst_418 {dimension_numbers = #tpu.dot_dimension_numbers<[1], [0], [0], [1], [0, 0, 1, 1], [], []>} : vector<32x32xf32>, vector<32x128xf32>, vector<32x128xf32> -> vector<32x128xf32>
    %c304_419 = arith.constant 304 : index
    %c0_420 = arith.constant 0 : index
    %1114 = vector.load %arg1[%c304_419, %c0_420] : memref<360x128xf32, #tpu.memory_space<vmem>>, vector<1x128xf32>
    %1115 = vector.broadcast %1114 : vector<1x128xf32> to vector<32x128xf32>
    %1116 = arith.addf %1113, %1115 : vector<32x128xf32>
    %1117 = vector.extract_strided_slice %1116 {offsets = [0, 0], sizes = [32, 32], strides = [1, 1]} : vector<32x128xf32> to vector<32x32xf32>
    %cst_421 = arith.constant 0.000000e+00 : f32
    %1118 = vector.broadcast %cst_421 : f32 to vector<32x32xf32>
    %1119 = arith.maximumf %1117, %1118 : vector<32x32xf32>
    %1120 = vector.extract_strided_slice %1044 {offsets = [64, 0], sizes = [32, 96], strides = [1, 1]} : vector<128x96xf32> to vector<32x96xf32>
    %c320_422 = arith.constant 320 : index
    %c0_423 = arith.constant 0 : index
    %1121 = vector.load %arg1[%c320_422, %c0_423] : memref<360x128xf32, #tpu.memory_space<vmem>>, vector<32x96xf32>
    %cst_424 = arith.constant dense<0.000000e+00> : vector<32x96xf32>
    %1122 = tpu.matmul %1119, %1121, %cst_424 {dimension_numbers = #tpu.dot_dimension_numbers<[1], [0], [0], [1], [0, 0, 1, 1], [], []>} : vector<32x32xf32>, vector<32x96xf32>, vector<32x96xf32> -> vector<32x96xf32>
    %1123 = arith.addf %1120, %1122 : vector<32x96xf32>
    %1124 = vector.extract_strided_slice %1116 {offsets = [0, 32], sizes = [32, 96], strides = [1, 1]} : vector<32x128xf32> to vector<32x96xf32>
    %1125 = vector.extract_strided_slice %1123 {offsets = [0, 0], sizes = [32, 64], strides = [1, 1]} : vector<32x96xf32> to vector<32x64xf32>
    %1126 = vector.extract_strided_slice %1124 {offsets = [0, 0], sizes = [32, 64], strides = [1, 1]} : vector<32x96xf32> to vector<32x64xf32>
    %1127 = arith.addf %1125, %1126 : vector<32x64xf32>
    %1128 = arith.negf %1127 : vector<32x64xf32>
    %1129 = math.exp %1128 : vector<32x64xf32>
    %cst_425 = arith.constant 1.000000e+00 : f32
    %1130 = vector.broadcast %cst_425 : f32 to vector<32x64xf32>
    %1131 = arith.addf %1130, %1129 : vector<32x64xf32>
    %1132 = arith.divf %1130, %1131 : vector<32x64xf32>
    %1133 = vector.extract_strided_slice %1132 {offsets = [0, 0], sizes = [32, 32], strides = [1, 1]} : vector<32x64xf32> to vector<32x32xf32>
    %1134 = vector.extract_strided_slice %1132 {offsets = [0, 32], sizes = [32, 32], strides = [1, 1]} : vector<32x64xf32> to vector<32x32xf32>
    %1135 = vector.extract_strided_slice %1123 {offsets = [0, 64], sizes = [32, 32], strides = [1, 1]} : vector<32x96xf32> to vector<32x32xf32>
    %1136 = vector.extract_strided_slice %1124 {offsets = [0, 64], sizes = [32, 32], strides = [1, 1]} : vector<32x96xf32> to vector<32x32xf32>
    %1137 = arith.mulf %1133, %1136 : vector<32x32xf32>
    %1138 = arith.addf %1135, %1137 : vector<32x32xf32>
    %1139 = math.tanh %1138 : vector<32x32xf32>
    %cst_426 = arith.constant 1.000000e+00 : f32
    %1140 = vector.broadcast %cst_426 : f32 to vector<32x32xf32>
    %1141 = arith.subf %1140, %1134 : vector<32x32xf32>
    %1142 = arith.mulf %1141, %1139 : vector<32x32xf32>
    %1143 = arith.mulf %1134, %1111 : vector<32x32xf32>
    %1144 = arith.addf %1142, %1143 : vector<32x32xf32>
    %c272_427 = arith.constant 272 : index
    %c0_428 = arith.constant 0 : index
    %1145 = vector.load %arg1[%c272_427, %c0_428] : memref<360x128xf32, #tpu.memory_space<vmem>>, vector<32x128xf32>
    %cst_429 = arith.constant dense<0.000000e+00> : vector<32x128xf32>
    %1146 = tpu.matmul %1144, %1145, %cst_429 {dimension_numbers = #tpu.dot_dimension_numbers<[1], [0], [0], [1], [0, 0, 1, 1], [], []>} : vector<32x32xf32>, vector<32x128xf32>, vector<32x128xf32> -> vector<32x128xf32>
    %c304_430 = arith.constant 304 : index
    %c0_431 = arith.constant 0 : index
    %1147 = vector.load %arg1[%c304_430, %c0_431] : memref<360x128xf32, #tpu.memory_space<vmem>>, vector<1x128xf32>
    %1148 = vector.broadcast %1147 : vector<1x128xf32> to vector<32x128xf32>
    %1149 = arith.addf %1146, %1148 : vector<32x128xf32>
    %1150 = vector.extract_strided_slice %1149 {offsets = [0, 0], sizes = [32, 32], strides = [1, 1]} : vector<32x128xf32> to vector<32x32xf32>
    %cst_432 = arith.constant 0.000000e+00 : f32
    %1151 = vector.broadcast %cst_432 : f32 to vector<32x32xf32>
    %1152 = arith.maximumf %1150, %1151 : vector<32x32xf32>
    %1153 = vector.extract_strided_slice %1044 {offsets = [96, 0], sizes = [32, 96], strides = [1, 1]} : vector<128x96xf32> to vector<32x96xf32>
    %c320_433 = arith.constant 320 : index
    %c0_434 = arith.constant 0 : index
    %1154 = vector.load %arg1[%c320_433, %c0_434] : memref<360x128xf32, #tpu.memory_space<vmem>>, vector<32x96xf32>
    %cst_435 = arith.constant dense<0.000000e+00> : vector<32x96xf32>
    %1155 = tpu.matmul %1152, %1154, %cst_435 {dimension_numbers = #tpu.dot_dimension_numbers<[1], [0], [0], [1], [0, 0, 1, 1], [], []>} : vector<32x32xf32>, vector<32x96xf32>, vector<32x96xf32> -> vector<32x96xf32>
    %1156 = arith.addf %1153, %1155 : vector<32x96xf32>
    %1157 = vector.extract_strided_slice %1149 {offsets = [0, 32], sizes = [32, 96], strides = [1, 1]} : vector<32x128xf32> to vector<32x96xf32>
    %1158 = vector.extract_strided_slice %1156 {offsets = [0, 0], sizes = [32, 64], strides = [1, 1]} : vector<32x96xf32> to vector<32x64xf32>
    %1159 = vector.extract_strided_slice %1157 {offsets = [0, 0], sizes = [32, 64], strides = [1, 1]} : vector<32x96xf32> to vector<32x64xf32>
    %1160 = arith.addf %1158, %1159 : vector<32x64xf32>
    %1161 = arith.negf %1160 : vector<32x64xf32>
    %1162 = math.exp %1161 : vector<32x64xf32>
    %cst_436 = arith.constant 1.000000e+00 : f32
    %1163 = vector.broadcast %cst_436 : f32 to vector<32x64xf32>
    %1164 = arith.addf %1163, %1162 : vector<32x64xf32>
    %1165 = arith.divf %1163, %1164 : vector<32x64xf32>
    %1166 = vector.extract_strided_slice %1165 {offsets = [0, 0], sizes = [32, 32], strides = [1, 1]} : vector<32x64xf32> to vector<32x32xf32>
    %1167 = vector.extract_strided_slice %1165 {offsets = [0, 32], sizes = [32, 32], strides = [1, 1]} : vector<32x64xf32> to vector<32x32xf32>
    %1168 = vector.extract_strided_slice %1156 {offsets = [0, 64], sizes = [32, 32], strides = [1, 1]} : vector<32x96xf32> to vector<32x32xf32>
    %1169 = vector.extract_strided_slice %1157 {offsets = [0, 64], sizes = [32, 32], strides = [1, 1]} : vector<32x96xf32> to vector<32x32xf32>
    %1170 = arith.mulf %1166, %1169 : vector<32x32xf32>
    %1171 = arith.addf %1168, %1170 : vector<32x32xf32>
    %1172 = math.tanh %1171 : vector<32x32xf32>
    %cst_437 = arith.constant 1.000000e+00 : f32
    %1173 = vector.broadcast %cst_437 : f32 to vector<32x32xf32>
    %1174 = arith.subf %1173, %1167 : vector<32x32xf32>
    %1175 = arith.mulf %1174, %1172 : vector<32x32xf32>
    %1176 = arith.mulf %1167, %1144 : vector<32x32xf32>
    %1177 = arith.addf %1175, %1176 : vector<32x32xf32>
    %1178 = tpu.concatenate %1078, %1111, %1144, %1177 in 0 : vector<32x32xf32>, vector<32x32xf32>, vector<32x32xf32>, vector<32x32xf32> -> vector<128x32xf32>
    %c232_438 = arith.constant 232 : index
    %c0_439 = arith.constant 0 : index
    %1179 = vector.load %arg1[%c232_438, %c0_439] : memref<360x128xf32, #tpu.memory_space<vmem>>, vector<32x2xf32>
    %cst_440 = arith.constant dense<0.000000e+00> : vector<128x2xf32>
    %1180 = tpu.matmul %1178, %1179, %cst_440 {dimension_numbers = #tpu.dot_dimension_numbers<[1], [0], [0], [1], [0, 0, 1, 1], [], []>} : vector<128x32xf32>, vector<32x2xf32>, vector<128x2xf32> -> vector<128x2xf32>
    %c264_441 = arith.constant 264 : index
    %c0_442 = arith.constant 0 : index
    %1181 = vector.load %arg1[%c264_441, %c0_442] : memref<360x128xf32, #tpu.memory_space<vmem>>, vector<1x2xf32>
    %1182 = vector.broadcast %1181 : vector<1x2xf32> to vector<128x2xf32>
    %1183 = arith.addf %1180, %1182 : vector<128x2xf32>
    %c0_443 = arith.constant 0 : index
    %c0_444 = arith.constant 0 : index
    %1184 = vector.load %arg3[%c0_443, %c0_444] : memref<128x2xf32, #tpu.memory_space<vmem>>, vector<128x2xf32>
    tpu.vector_store %arg3[%c0_443, %c0_444], %1183 {strides = array<i32>} : memref<128x2xf32, #tpu.memory_space<vmem>>, vector<128x2xf32>,
    return
  }
}

</mosaic_0001>

<llo_original>
// kernel: sgnet_forward.1
$region0: #{sgnet_forward.1}
  #allocation0 [shape = 'u32[]', space=smem, size = 0x4, offset = 0x4, fixed_abs, tag = 'smem constant byte address 0x4 - core index']
  #allocation1 [shape = 'u32[144,128]{1,0:T(1,128)}', space=vmem, size = 0x12000, scoped, tag = 'internal scratch']
  #allocation2 [shape = 'f32[128,32]{1,0:T(8,128)}', space=vmem, size = 0x10000, scoped, tag = 'scratch operand']
  #allocation3 [shape = 'f32[128,8]{1,0:T(8,128)}', space=vmem, size = 0x10000, scoped, tag = 'scratch operand']
  #allocation4 [shape = 'f32[128,1]{1,0:T(8,128)}', space=vmem, size = 0x10000, scoped, tag = 'scratch operand']
  #allocation5 [shape = 'f32[32,32]{1,0:T(8,128)}', space=vmem, size = 0x4000, scoped, tag = 'scratch operand']
  %s0 = inlined_call_operand.vmem [shape: f32[32,6], index: 0, kind: input, shape index: {}]
  %s1 = inlined_call_operand.vmem [shape: f32[360,128], index: 1, kind: input, shape index: {}]
  %s2 = inlined_call_operand.vmem [shape: f32[128,2], index: 2, kind: output, shape index: {0}]
  %s3 = inlined_call_operand.vmem [shape: f32[128,2], index: 3, kind: output, shape index: {1}]
  %4 = xla_tuple %s2, %s3
  %s5 = sld [smem:[#allocation0]]
  $region26: #{sgnet_forward.1} parent=0
    _
  %s7 = ssub.s32 1, %s5
  %s8 = scalar_select 0, %s7, %s5
  // Predicated region
  $region2: #{sgnet_forward.1} parent=0 // pred_check
    _
  $region3: #{sgnet_forward.1} parent=0 // pred_check_branch
    %10 = sbr.rel (0) target = $region5
  $region4: #{sgnet_forward.1} parent=0 // pred_region
    _
  $region5: #{sgnet_forward.1} parent=0 // pred_fallthru
    _
  // Predicated region
  $region6: #{sgnet_forward.1} parent=0 // pred_check
    _
  $region7: #{sgnet_forward.1} parent=0 // pred_check_branch
    %12 = sbr.rel (0) target = $region9
  $region8: #{sgnet_forward.1} parent=0 // pred_region
    _
  $region9: #{sgnet_forward.1} parent=0 // pred_fallthru
    _
  %v13 = vld [vmem:[%s0] sm:$0xff]
  %v14 = vld [vmem:[%s0 + $0x8] sm:$0xff]
  %v15 = vld [vmem:[%s0 + $0x10] sm:$0xff]
  %v16 = vld [vmem:[%s0 + $0x18] sm:$0xff]
  %v17 = vld [vmem:[%s1] sm:$0x3f]
  %v18 = vld [vmem:[%s1 + $0x8] sm:$0x1]
  %v19 = vlaneseq
  %v20 = vshrl.u32 %v19, 7
  %v21 = vsub.s32 0, %v20
  %v22 = vrot.slane %v18, %v21
  %vm23 = vcmask 48128
  %v25 = vsel %vm23, %v13, 0
  %v28 = vsel %vm23, %v14, 0
  %v31 = vsel %vm23, %v15, 0
  %v34 = vsel %vm23, %v16, 0
  %vm36 = vcmask 1045504
  %v38 = vsel %vm36, %v17, 0
  %40 = vmatprep.subr.mxu0 0.0
  %41 = vmatpush1.msra.mxu0 %v38
  %42 = vmatprep.subr.mxu0 0.0
  %43 = vmatpush1.msra.mxu0 0.0
  %44 = vmatprep.subr.mxu0 0.0
  %45 = vmatpush1.msra.mxu0 0.0
  %46 = vmatprep.subr.mxu0 0.0
  %47 = vmatpush1.msra.mxu0 0.0
  %48 = vmatprep.subr.mxu0 0.0
  %49 = vmatpush1.msra.mxu0 0.0
  %50 = vmatprep.subr.mxu0 0.0
  %51 = vmatpush1.msra.mxu0 0.0
  %52 = vmatprep.subr.mxu0 0.0
  %53 = vmatpush1.msra.mxu0 0.0
  %54 = vmatprep.subr.mxu0 0.0
  %55 = vmatpush1.msra.mxu0 0.0
  %56 = vmatprep.subr.mxu0 0.0
  %57 = vmatpush1.msra.mxu0 0.0
  %58 = vmatprep.subr.mxu0 0.0
  %59 = vmatpush1.msra.mxu0 0.0
  %60 = vmatprep.subr.mxu0 0.0
  %61 = vmatpush1.msra.mxu0 0.0
  %62 = vmatprep.subr.mxu0 0.0
  %63 = vmatpush1.msra.mxu0 0.0
  %64 = vmatprep.subr.mxu0 0.0
  %65 = vmatpush1.msra.mxu0 0.0
  %66 = vmatprep.subr.mxu0 0.0
  %67 = vmatpush1.msra.mxu0 0.0
  %68 = vmatprep.subr.mxu0 0.0
  %69 = vmatpush1.msra.mxu0 0.0
  %70 = vmatprep.subr.mxu0 0.0
  %71 = vmatpush1.msra.mxu0 0.0
  %72 = vmatprep.subr.mxu0 0.0
  %73 = vmatpush1.msra.mxu0 0.0
  %74 = vmatprep.subr.mxu0 0.0
  %75 = vmatpush1.msra.mxu0 0.0
  %76 = vmatprep.subr.mxu0 0.0
  %77 = vmatpush1.msra.mxu0 0.0
  %78 = vmatprep.subr.mxu0 0.0
  %79 = vmatpush1.msra.mxu0 0.0
  %80 = vmatprep.subr.mxu0 0.0
  %81 = vmatpush1.msra.mxu0 0.0
  %82 = vmatprep.subr.mxu0 0.0
  %83 = vmatpush1.msra.mxu0 0.0
  %84 = vmatprep.subr.mxu0 0.0
  %85 = vmatpush1.msra.mxu0 0.0
  %86 = vmatprep.subr.mxu0 0.0
  %87 = vmatpush1.msra.mxu0 0.0
  %88 = vmatprep.subr.mxu0 0.0
  %89 = vmatpush1.msra.mxu0 0.0
  %90 = vmatprep.subr.mxu0 0.0
  %91 = vmatpush1.msra.mxu0 0.0
  %92 = vmatprep.subr.mxu0 0.0
  %93 = vmatpush1.msra.mxu0 0.0
  %94 = vmatprep.subr.mxu0 0.0
  %95 = vmatpush1.msra.mxu0 0.0
  %96 = vmatprep.subr.mxu0 0.0
  %97 = vmatpush1.msra.mxu0 0.0
  %98 = vmatprep.subr.mxu0 0.0
  %99 = vmatpush1.msra.mxu0 0.0
  %100 = vmatprep.subr.mxu0 0.0
  %101 = vmatpush1.msra.mxu0 0.0
  %102 = vmatprep.subr.mxu0 0.0
  %103 = vmatpush1.msra.mxu0 0.0
  %104 = vmatprep.mubr.f32.mxu0 0.0
  %105 = vmatmul.mubr.f32.gmra.mrb[0].mxu0 %v25
  %v106 = vpop.f32.mrb[0].mxu0
  %v107 = vadd.f32 %v22, %v106
  %v108 = vpop.f32.mrb[0].mxu0
  %109 = vmatprep.mubr.f32.mxu0 0.0
  %110 = vmatmul.mubr.f32.gmra.mrb[0].mxu0 %v28
  %v111 = vpop.f32.mrb[0].mxu0
  %v112 = vadd.f32 %v22, %v111
  %v113 = vpop.f32.mrb[0].mxu0
  %114 = vmatprep.mubr.f32.mxu0 0.0
  %115 = vmatmul.mubr.f32.gmra.mrb[0].mxu0 %v31
  %v116 = vpop.f32.mrb[0].mxu0
  %v117 = vadd.f32 %v22, %v116
  %v118 = vpop.f32.mrb[0].mxu0
  %119 = vmatprep.mubr.f32.mxu0 0.0
  %120 = vmatmul.mubr.f32.gmra.mrb[0].mxu0 %v34
  %v121 = vpop.f32.mrb[0].mxu0
  %v122 = vadd.f32 %v22, %v121
  %v123 = vpop.f32.mrb[0].mxu0
  %124 = vdwg.mxu0
  %v125 = vmax.f32 %v107, 0.0
  %v126 = vmax.f32 %v112, 0.0
  %v127 = vmax.f32 %v117, 0.0
  %v128 = vmax.f32 %v122, 0.0
  %v129 = vld [vmem:[%s1 + $0x10] sm:$0xff]
  %v130 = vld [vmem:[%s1 + $0x18] sm:$0xff]
  %v131 = vld [vmem:[%s1 + $0x20] sm:$0xff]
  %v132 = vld [vmem:[%s1 + $0x28] sm:$0xff]
  %v133 = vld [vmem:[%s1 + $0x58] sm:$0x1]
  %v134 = vlaneseq
  %v135 = vshrl.u32 %v134, 7
  %v136 = vsub.s32 0, %v135
  %v137 = vrot.slane %v133, %v136
  %vm138 = vcmask 261120
  %v140 = vsel %vm138, %v125, 0
  %v143 = vsel %vm138, %v126, 0
  %v146 = vsel %vm138, %v127, 0
  %v149 = vsel %vm138, %v128, 0
  %151 = vmatprep.subr.mxu0 0.0
  %152 = vmatpush1.msra.mxu0 %v129
  %153 = vmatprep.subr.mxu0 0.0
  %154 = vmatpush1.msra.mxu0 %v130
  %155 = vmatprep.subr.mxu0 0.0
  %156 = vmatpush1.msra.mxu0 %v131
  %157 = vmatprep.subr.mxu0 0.0
  %158 = vmatpush1.msra.mxu0 %v132
  %159 = vmatprep.subr.mxu0 0.0
  %160 = vmatpush1.msra.mxu0 0.0
  %161 = vmatprep.subr.mxu0 0.0
  %162 = vmatpush1.msra.mxu0 0.0
  %163 = vmatprep.subr.mxu0 0.0
  %164 = vmatpush1.msra.mxu0 0.0
  %165 = vmatprep.subr.mxu0 0.0
  %166 = vmatpush1.msra.mxu0 0.0
  %167 = vmatprep.subr.mxu0 0.0
  %168 = vmatpush1.msra.mxu0 0.0
  %169 = vmatprep.subr.mxu0 0.0
  %170 = vmatpush1.msra.mxu0 0.0
  %171 = vmatprep.subr.mxu0 0.0
  %172 = vmatpush1.msra.mxu0 0.0
  %173 = vmatprep.subr.mxu0 0.0
  %174 = vmatpush1.msra.mxu0 0.0
  %175 = vmatprep.subr.mxu0 0.0
  %176 = vmatpush1.msra.mxu0 0.0
  %177 = vmatprep.subr.mxu0 0.0
  %178 = vmatpush1.msra.mxu0 0.0
  %179 = vmatprep.subr.mxu0 0.0
  %180 = vmatpush1.msra.mxu0 0.0
  %181 = vmatprep.subr.mxu0 0.0
  %182 = vmatpush1.msra.mxu0 0.0
  %183 = vmatprep.subr.mxu0 0.0
  %184 = vmatpush1.msra.mxu0 0.0
  %185 = vmatprep.subr.mxu0 0.0
  %186 = vmatpush1.msra.mxu0 0.0
  %187 = vmatprep.subr.mxu0 0.0
  %188 = vmatpush1.msra.mxu0 0.0
  %189 = vmatprep.subr.mxu0 0.0
  %190 = vmatpush1.msra.mxu0 0.0
  %191 = vmatprep.subr.mxu0 0.0
  %192 = vmatpush1.msra.mxu0 0.0
  %193 = vmatprep.subr.mxu0 0.0
  %194 = vmatpush1.msra.mxu0 0.0
  %195 = vmatprep.subr.mxu0 0.0
  %196 = vmatpush1.msra.mxu0 0.0
  %197 = vmatprep.subr.mxu0 0.0
  %198 = vmatpush1.msra.mxu0 0.0
  %199 = vmatprep.subr.mxu0 0.0
  %200 = vmatpush1.msra.mxu0 0.0
  %201 = vmatprep.subr.mxu0 0.0
  %202 = vmatpush1.msra.mxu0 0.0
  %203 = vmatprep.subr.mxu0 0.0
  %204 = vmatpush1.msra.mxu0 0.0
  %205 = vmatprep.subr.mxu0 0.0
  %206 = vmatpush1.msra.mxu0 0.0
  %207 = vmatprep.subr.mxu0 0.0
  %208 = vmatpush1.msra.mxu0 0.0
  %209 = vmatprep.subr.mxu0 0.0
  %210 = vmatpush1.msra.mxu0 0.0
  %211 = vmatprep.subr.mxu0 0.0
  %212 = vmatpush1.msra.mxu0 0.0
  %213 = vmatprep.subr.mxu0 0.0
  %214 = vmatpush1.msra.mxu0 0.0
  %215 = vmatprep.mubr.f32.mxu0 0.0
  %216 = vmatmul.mubr.f32.gmra.mrb[0].mxu0 %v140
  %v217 = vpop.f32.mrb[0].mxu0
  %v218 = vadd.f32 %v137, %v217
  %v219 = vpop.f32.mrb[0].mxu0
  %220 = vmatprep.mubr.f32.mxu0 0.0
  %221 = vmatmul.mubr.f32.gmra.mrb[0].mxu0 %v143
  %v222 = vpop.f32.mrb[0].mxu0
  %v223 = vadd.f32 %v137, %v222
  %v224 = vpop.f32.mrb[0].mxu0
  %225 = vmatprep.mubr.f32.mxu0 0.0
  %226 = vmatmul.mubr.f32.gmra.mrb[0].mxu0 %v146
  %v227 = vpop.f32.mrb[0].mxu0
  %v228 = vadd.f32 %v137, %v227
  %v229 = vpop.f32.mrb[0].mxu0
  %230 = vmatprep.mubr.f32.mxu0 0.0
  %231 = vmatmul.mubr.f32.gmra.mrb[0].mxu0 %v149
  %v232 = vpop.f32.mrb[0].mxu0
  %v233 = vadd.f32 %v137, %v232
  %v234 = vpop.f32.mrb[0].mxu0
  %235 = vdwg.mxu0
  %v236 = vld [vmem:[%s1 + $0x60] sm:$0x1]
  %v237 = vlaneseq
  %v238 = vshrl.u32 %v237, 7
  %v239 = vsub.s32 0, %v238
  %v240 = vrot.slane %v236, %v239
  %v241 = vadd.f32 %v218, %v240
  %v242 = vxor.u32 %v241, 2147483648
  %v243 = vmul.f32 %v242, 1.442695
  %v244 = vpow.pop %v243
  %v245 = vadd.f32 %v244, 1.0
  %v246 = vrcp.pop %v245
  %v247 = vmul.f32 1.0, %v246
  %249 = vrot.lane.b32.xlu0 %v240, 64
  %v250 = vpop.permute.xlu0 %249
  %v252 = vmul.f32 %v247, %v250
  %254 = vrot.lane.b32.xlu0 %v252, 64
  %v255 = vpop.permute.xlu0 %254
  %v257 = vadd.f32 %v218, %v255
  %v258 = vtanh.pop %v257
  %v259 = vsub.f32 1.0, %v247
  %261 = vrot.lane.b32.xlu0 %v258, 96
  %v262 = vpop.permute.xlu0 %261
  %v264 = vmul.f32 %v259, %v262
  %v265 = vld [vmem:[%s1 + $0x68] sm:$0xff]
  %v266 = vld [vmem:[%s1 + $0x70] sm:$0xff]
  %v267 = vld [vmem:[%s1 + $0x78] sm:$0xff]
  %v268 = vld [vmem:[%s1 + $0x80] sm:$0xff]
  %v269 = vld [vmem:[%s1 + $0x88] sm:$0x1]
  %v270 = vlaneseq
  %v271 = vshrl.u32 %v270, 7
  %v272 = vsub.s32 0, %v271
  %v273 = vrot.slane %v269, %v272
  %275 = vrot.lane.b32.xlu0 %v264, 96
  %v276 = vpop.permute.xlu0 %275
  %v277 = vsel %vm138, %v276, 0
  %279 = vmatprep.subr.mxu0 0.0
  %280 = vmatpush1.msra.mxu0 %v265
  %281 = vmatprep.subr.mxu0 0.0
  %282 = vmatpush1.msra.mxu0 %v266
  %283 = vmatprep.subr.mxu0 0.0
  %284 = vmatpush1.msra.mxu0 %v267
  %285 = vmatprep.subr.mxu0 0.0
  %286 = vmatpush1.msra.mxu0 %v268
  %287 = vmatprep.subr.mxu0 0.0
  %288 = vmatpush1.msra.mxu0 0.0
  %289 = vmatprep.subr.mxu0 0.0
  %290 = vmatpush1.msra.mxu0 0.0
  %291 = vmatprep.subr.mxu0 0.0
  %292 = vmatpush1.msra.mxu0 0.0
  %293 = vmatprep.subr.mxu0 0.0
  %294 = vmatpush1.msra.mxu0 0.0
  %295 = vmatprep.subr.mxu0 0.0
  %296 = vmatpush1.msra.mxu0 0.0
  %297 = vmatprep.subr.mxu0 0.0
  %298 = vmatpush1.msra.mxu0 0.0
  %299 = vmatprep.subr.mxu0 0.0
  %300 = vmatpush1.msra.mxu0 0.0
  %301 = vmatprep.subr.mxu0 0.0
  %302 = vmatpush1.msra.mxu0 0.0
  %303 = vmatprep.subr.mxu0 0.0
  %304 = vmatpush1.msra.mxu0 0.0
  %305 = vmatprep.subr.mxu0 0.0
  %306 = vmatpush1.msra.mxu0 0.0
  %307 = vmatprep.subr.mxu0 0.0
  %308 = vmatpush1.msra.mxu0 0.0
  %309 = vmatprep.subr.mxu0 0.0
  %310 = vmatpush1.msra.mxu0 0.0
  %311 = vmatprep.subr.mxu0 0.0
  %312 = vmatpush1.msra.mxu0 0.0
  %313 = vmatprep.subr.mxu0 0.0
  %314 = vmatpush1.msra.mxu0 0.0
  %315 = vmatprep.subr.mxu0 0.0
  %316 = vmatpush1.msra.mxu0 0.0
  %317 = vmatprep.subr.mxu0 0.0
  %318 = vmatpush1.msra.mxu0 0.0
  %319 = vmatprep.subr.mxu0 0.0
  %320 = vmatpush1.msra.mxu0 0.0
  %321 = vmatprep.subr.mxu0 0.0
  %322 = vmatpush1.msra.mxu0 0.0
  %323 = vmatprep.subr.mxu0 0.0
  %324 = vmatpush1.msra.mxu0 0.0
  %325 = vmatprep.subr.mxu0 0.0
  %326 = vmatpush1.msra.mxu0 0.0
  %327 = vmatprep.subr.mxu0 0.0
  %328 = vmatpush1.msra.mxu0 0.0
  %329 = vmatprep.subr.mxu0 0.0
  %330 = vmatpush1.msra.mxu0 0.0
  %331 = vmatprep.subr.mxu0 0.0
  %332 = vmatpush1.msra.mxu0 0.0
  %333 = vmatprep.subr.mxu0 0.0
  %334 = vmatpush1.msra.mxu0 0.0
  %335 = vmatprep.subr.mxu0 0.0
  %336 = vmatpush1.msra.mxu0 0.0
  %337 = vmatprep.subr.mxu0 0.0
  %338 = vmatpush1.msra.mxu0 0.0
  %339 = vmatprep.subr.mxu0 0.0
  %340 = vmatpush1.msra.mxu0 0.0
  %341 = vmatprep.subr.mxu0 0.0
  %342 = vmatpush1.msra.mxu0 0.0
  %343 = vmatprep.mubr.f32.mxu0 0.0
  %344 = vmatmul.mubr.f32.gmra.mrb[0].mxu0 %v277
  %v345 = vpop.f32.mrb[0].mxu0
  %v346 = vadd.f32 %v273, %v345
  %v347 = vpop.f32.mrb[0].mxu0
  %348 = vdwg.mxu0
  %v349 = vmax.f32 %v346, 0.0
  %351 = vrot.lane.b32.xlu0 %v349, 120
  %v352 = vpop.permute.xlu0 %351
  %354 = vst.msk [vmem:[#allocation5] sm:$0xff] %vm138, %v352
  %v355 = vld [vmem:[%s1 + $0xa0] sm:$0xff]
  %v356 = vld [vmem:[%s1 + $0xa8] sm:$0x1]
  %v357 = vlaneseq
  %v358 = vshrl.u32 %v357, 7
  %v359 = vsub.s32 0, %v358
  %v360 = vrot.slane %v356, %v359
  %vm361 = vcmask 64512
  %v362 = vsel %vm361, %v349, 0
  %364 = vmatprep.subr.mxu0 0.0
  %365 = vmatpush1.msra.mxu0 %v355
  %366 = vmatprep.subr.mxu0 0.0
  %367 = vmatpush1.msra.mxu0 0.0
  %368 = vmatprep.subr.mxu0 0.0
  %369 = vmatpush1.msra.mxu0 0.0
  %370 = vmatprep.subr.mxu0 0.0
  %371 = vmatpush1.msra.mxu0 0.0
  %372 = vmatprep.subr.mxu0 0.0
  %373 = vmatpush1.msra.mxu0 0.0
  %374 = vmatprep.subr.mxu0 0.0
  %375 = vmatpush1.msra.mxu0 0.0
  %376 = vmatprep.subr.mxu0 0.0
  %377 = vmatpush1.msra.mxu0 0.0
  %378 = vmatprep.subr.mxu0 0.0
  %379 = vmatpush1.msra.mxu0 0.0
  %380 = vmatprep.subr.mxu0 0.0
  %381 = vmatpush1.msra.mxu0 0.0
  %382 = vmatprep.subr.mxu0 0.0
  %383 = vmatpush1.msra.mxu0 0.0
  %384 = vmatprep.subr.mxu0 0.0
  %385 = vmatpush1.msra.mxu0 0.0
  %386 = vmatprep.subr.mxu0 0.0
  %387 = vmatpush1.msra.mxu0 0.0
  %388 = vmatprep.subr.mxu0 0.0
  %389 = vmatpush1.msra.mxu0 0.0
  %390 = vmatprep.subr.mxu0 0.0
  %391 = vmatpush1.msra.mxu0 0.0
  %392 = vmatprep.subr.mxu0 0.0
  %393 = vmatpush1.msra.mxu0 0.0
  %394 = vmatprep.subr.mxu0 0.0
  %395 = vmatpush1.msra.mxu0 0.0
  %396 = vmatprep.subr.mxu0 0.0
  %397 = vmatpush1.msra.mxu0 0.0
  %398 = vmatprep.subr.mxu0 0.0
  %399 = vmatpush1.msra.mxu0 0.0
  %400 = vmatprep.subr.mxu0 0.0
  %401 = vmatpush1.msra.mxu0 0.0
  %402 = vmatprep.subr.mxu0 0.0
  %403 = vmatpush1.msra.mxu0 0.0
  %404 = vmatprep.subr.mxu0 0.0
  %405 = vmatpush1.msra.mxu0 0.0
  %406 = vmatprep.subr.mxu0 0.0
  %407 = vmatpush1.msra.mxu0 0.0
  %408 = vmatprep.subr.mxu0 0.0
  %409 = vmatpush1.msra.mxu0 0.0
  %410 = vmatprep.subr.mxu0 0.0
  %411 = vmatpush1.msra.mxu0 0.0
  %412 = vmatprep.subr.mxu0 0.0
  %413 = vmatpush1.msra.mxu0 0.0
  %414 = vmatprep.subr.mxu0 0.0
  %415 = vmatpush1.msra.mxu0 0.0
  %416 = vmatprep.subr.mxu0 0.0
  %417 = vmatpush1.msra.mxu0 0.0
  %418 = vmatprep.subr.mxu0 0.0
  %419 = vmatpush1.msra.mxu0 0.0
  %420 = vmatprep.subr.mxu0 0.0
  %421 = vmatpush1.msra.mxu0 0.0
  %422 = vmatprep.subr.mxu0 0.0
  %423 = vmatpush1.msra.mxu0 0.0
  %424 = vmatprep.subr.mxu0 0.0
  %425 = vmatpush1.msra.mxu0 0.0
  %426 = vmatprep.subr.mxu0 0.0
  %427 = vmatpush1.msra.mxu0 0.0
  %428 = vmatprep.mubr.f32.mxu0 0.0
  %429 = vmatmul.mubr.f32.gmra.mrb[0].mxu0 %v362
  %v430 = vpop.f32.mrb[0].mxu0
  %v431 = vadd.f32 %v360, %v430
  %v432 = vpop.f32.mrb[0].mxu0
  %433 = vdwg.mxu0
  %v434 = vld [vmem:[%s1 + $0x98] sm:$0x1]
  %v435 = vlaneseq
  %v436 = vshrl.u32 %v435, 7
  %v437 = vsub.s32 0, %v436
  %v438 = vrot.slane %v434, %v437
  %v439 = vadd.f32 %v438, %v431
  %v440 = vxor.u32 %v439, 2147483648
  %v441 = vmul.f32 %v440, 1.442695
  %v442 = vpow.pop %v441
  %v443 = vadd.f32 %v442, 1.0
  %v444 = vrcp.pop %v443
  %v445 = vmul.f32 1.0, %v444
  %447 = vrot.lane.b32.xlu0 %v431, 112
  %v448 = vpop.permute.xlu0 %447
  %v450 = vmul.f32 %v445, %v448
  %452 = vrot.lane.b32.xlu0 %v450, 16
  %v453 = vpop.permute.xlu0 %452
  %v455 = vadd.f32 %v438, %v453
  %v456 = vtanh.pop %v455
  %v457 = vsub.f32 1.0, %v445
  %459 = vrot.lane.b32.xlu0 %v456, 120
  %v460 = vpop.permute.xlu0 %459
  %v462 = vmul.f32 %v457, %v460
  %463 = vrot.lane.b32.xlu0 %v349, 8
  %v464 = vpop.permute.xlu0 %463
  %v466 = vmul.f32 %v445, %v464
  %v467 = vadd.f32 %v462, %v466
  %v468 = vld [vmem:[%s1 + $0xb0] sm:$0xff]
  %v469 = vld [vmem:[%s1 + $0xb8] sm:$0x1]
  %v470 = vlaneseq
  %v471 = vshrl.u32 %v470, 7
  %v472 = vsub.s32 0, %v471
  %v473 = vrot.slane %v469, %v472
  %475 = vrot.lane.b32.xlu0 %v467, 120
  %v476 = vpop.permute.xlu0 %475
  %v477 = vsel %vm361, %v476, 0
  %479 = vmatprep.subr.mxu0 0.0
  %480 = vmatpush1.msra.mxu0 %v468
  %481 = vmatprep.subr.mxu0 0.0
  %482 = vmatpush1.msra.mxu0 0.0
  %483 = vmatprep.subr.mxu0 0.0
  %484 = vmatpush1.msra.mxu0 0.0
  %485 = vmatprep.subr.mxu0 0.0
  %486 = vmatpush1.msra.mxu0 0.0
  %487 = vmatprep.subr.mxu0 0.0
  %488 = vmatpush1.msra.mxu0 0.0
  %489 = vmatprep.subr.mxu0 0.0
  %490 = vmatpush1.msra.mxu0 0.0
  %491 = vmatprep.subr.mxu0 0.0
  %492 = vmatpush1.msra.mxu0 0.0
  %493 = vmatprep.subr.mxu0 0.0
  %494 = vmatpush1.msra.mxu0 0.0
  %495 = vmatprep.subr.mxu0 0.0
  %496 = vmatpush1.msra.mxu0 0.0
  %497 = vmatprep.subr.mxu0 0.0
  %498 = vmatpush1.msra.mxu0 0.0
  %499 = vmatprep.subr.mxu0 0.0
  %500 = vmatpush1.msra.mxu0 0.0
  %501 = vmatprep.subr.mxu0 0.0
  %502 = vmatpush1.msra.mxu0 0.0
  %503 = vmatprep.subr.mxu0 0.0
  %504 = vmatpush1.msra.mxu0 0.0
  %505 = vmatprep.subr.mxu0 0.0
  %506 = vmatpush1.msra.mxu0 0.0
  %507 = vmatprep.subr.mxu0 0.0
  %508 = vmatpush1.msra.mxu0 0.0
  %509 = vmatprep.subr.mxu0 0.0
  %510 = vmatpush1.msra.mxu0 0.0
  %511 = vmatprep.subr.mxu0 0.0
  %512 = vmatpush1.msra.mxu0 0.0
  %513 = vmatprep.subr.mxu0 0.0
  %514 = vmatpush1.msra.mxu0 0.0
  %515 = vmatprep.subr.mxu0 0.0
  %516 = vmatpush1.msra.mxu0 0.0
  %517 = vmatprep.subr.mxu0 0.0
  %518 = vmatpush1.msra.mxu0 0.0
  %519 = vmatprep.subr.mxu0 0.0
  %520 = vmatpush1.msra.mxu0 0.0
  %521 = vmatprep.subr.mxu0 0.0
  %522 = vmatpush1.msra.mxu0 0.0
  %523 = vmatprep.subr.mxu0 0.0
  %524 = vmatpush1.msra.mxu0 0.0
  %525 = vmatprep.subr.mxu0 0.0
  %526 = vmatpush1.msra.mxu0 0.0
  %527 = vmatprep.subr.mxu0 0.0
  %528 = vmatpush1.msra.mxu0 0.0
  %529 = vmatprep.subr.mxu0 0.0
  %530 = vmatpush1.msra.mxu0 0.0
  %531 = vmatprep.subr.mxu0 0.0
  %532 = vmatpush1.msra.mxu0 0.0
  %533 = vmatprep.subr.mxu0 0.0
  %534 = vmatpush1.msra.mxu0 0.0
  %535 = vmatprep.subr.mxu0 0.0
  %536 = vmatpush1.msra.mxu0 0.0
  %537 = vmatprep.subr.mxu0 0.0
  %538 = vmatpush1.msra.mxu0 0.0
  %539 = vmatprep.subr.mxu0 0.0
  %540 = vmatpush1.msra.mxu0 0.0
  %541 = vmatprep.subr.mxu0 0.0
  %542 = vmatpush1.msra.mxu0 0.0
  %543 = vmatprep.mubr.f32.mxu0 0.0
  %544 = vmatmul.mubr.f32.gmra.mrb[0].mxu0 %v477
  %v545 = vpop.f32.mrb[0].mxu0
  %v546 = vadd.f32 %v473, %v545
  %v547 = vpop.f32.mrb[0].mxu0
  %548 = vdwg.mxu0
  %v549 = vmax.f32 %v546, 0.0
  %v550 = vld [vmem:[%s1 + $0x90] sm:$0xff]
  %v552 = vsel %vm361, %v549, 0
  %554 = vmatprep.subr.mxu0 0.0
  %555 = vmatpush1.msra.mxu0 %v550
  %556 = vmatprep.subr.mxu0 0.0
  %557 = vmatpush1.msra.mxu0 0.0
  %558 = vmatprep.subr.mxu0 0.0
  %559 = vmatpush1.msra.mxu0 0.0
  %560 = vmatprep.subr.mxu0 0.0
  %561 = vmatpush1.msra.mxu0 0.0
  %562 = vmatprep.subr.mxu0 0.0
  %563 = vmatpush1.msra.mxu0 0.0
  %564 = vmatprep.subr.mxu0 0.0
  %565 = vmatpush1.msra.mxu0 0.0
  %566 = vmatprep.subr.mxu0 0.0
  %567 = vmatpush1.msra.mxu0 0.0
  %568 = vmatprep.subr.mxu0 0.0
  %569 = vmatpush1.msra.mxu0 0.0
  %570 = vmatprep.subr.mxu0 0.0
  %571 = vmatpush1.msra.mxu0 0.0
  %572 = vmatprep.subr.mxu0 0.0
  %573 = vmatpush1.msra.mxu0 0.0
  %574 = vmatprep.subr.mxu0 0.0
  %575 = vmatpush1.msra.mxu0 0.0
  %576 = vmatprep.subr.mxu0 0.0
  %577 = vmatpush1.msra.mxu0 0.0
  %578 = vmatprep.subr.mxu0 0.0
  %579 = vmatpush1.msra.mxu0 0.0
  %580 = vmatprep.subr.mxu0 0.0
  %581 = vmatpush1.msra.mxu0 0.0
  %582 = vmatprep.subr.mxu0 0.0
  %583 = vmatpush1.msra.mxu0 0.0
  %584 = vmatprep.subr.mxu0 0.0
  %585 = vmatpush1.msra.mxu0 0.0
  %586 = vmatprep.subr.mxu0 0.0
  %587 = vmatpush1.msra.mxu0 0.0
  %588 = vmatprep.subr.mxu0 0.0
  %589 = vmatpush1.msra.mxu0 0.0
  %590 = vmatprep.subr.mxu0 0.0
  %591 = vmatpush1.msra.mxu0 0.0
  %592 = vmatprep.subr.mxu0 0.0
  %593 = vmatpush1.msra.mxu0 0.0
  %594 = vmatprep.subr.mxu0 0.0
  %595 = vmatpush1.msra.mxu0 0.0
  %596 = vmatprep.subr.mxu0 0.0
  %597 = vmatpush1.msra.mxu0 0.0
  %598 = vmatprep.subr.mxu0 0.0
  %599 = vmatpush1.msra.mxu0 0.0
  %600 = vmatprep.subr.mxu0 0.0
  %601 = vmatpush1.msra.mxu0 0.0
  %602 = vmatprep.subr.mxu0 0.0
  %603 = vmatpush1.msra.mxu0 0.0
  %604 = vmatprep.subr.mxu0 0.0
  %605 = vmatpush1.msra.mxu0 0.0
  %606 = vmatprep.subr.mxu0 0.0
  %607 = vmatpush1.msra.mxu0 0.0
  %608 = vmatprep.subr.mxu0 0.0
  %609 = vmatpush1.msra.mxu0 0.0
  %610 = vmatprep.subr.mxu0 0.0
  %611 = vmatpush1.msra.mxu0 0.0
  %612 = vmatprep.subr.mxu0 0.0
  %613 = vmatpush1.msra.mxu0 0.0
  %614 = vmatprep.subr.mxu0 0.0
  %615 = vmatpush1.msra.mxu0 0.0
  %616 = vmatprep.subr.mxu0 0.0
  %617 = vmatpush1.msra.mxu0 0.0
  %618 = vmatprep.mubr.f32.mxu0 0.0
  %619 = vmatmul.mubr.f32.gmra.mrb[0].mxu0 %v552
  %v620 = vpop.f32.mrb[0].mxu0
  %v621 = vadd.f32 %v438, %v620
  %v622 = vpop.f32.mrb[0].mxu0
  %623 = vdwg.mxu0
  %625 = vrot.lane.b32.xlu0 %v546, 120
  %v626 = vpop.permute.xlu0 %625
  %v628 = vadd.f32 %v621, %v626
  %v629 = vxor.u32 %v628, 2147483648
  %v630 = vmul.f32 %v629, 1.442695
  %v631 = vpow.pop %v630
  %v632 = vadd.f32 %v631, 1.0
  %v633 = vrcp.pop %v632
  %v634 = vmul.f32 1.0, %v633
  %635 = vrot.lane.b32.xlu0 %v546, 104
  %v636 = vpop.permute.xlu0 %635
  %v638 = vmul.f32 %v634, %v636
  %640 = vrot.lane.b32.xlu0 %v638, 16
  %v641 = vpop.permute.xlu0 %640
  %v643 = vadd.f32 %v621, %v641
  %v644 = vtanh.pop %v643
  %v645 = vsub.f32 1.0, %v634
  %647 = vrot.lane.b32.xlu0 %v644, 120
  %v648 = vpop.permute.xlu0 %647
  %v650 = vmul.f32 %v645, %v648
  %v651 = vmul.f32 %v634, %v467
  %v652 = vadd.f32 %v650, %v651
  %654 = vrot.lane.b32.xlu0 %v652, 120
  %v655 = vpop.permute.xlu0 %654
  %v656 = vsel %vm361, %v655, 0
  %658 = vmatprep.subr.mxu0 0.0
  %659 = vmatpush1.msra.mxu0 %v468
  %660 = vmatprep.subr.mxu0 0.0
  %661 = vmatpush1.msra.mxu0 0.0
  %662 = vmatprep.subr.mxu0 0.0
  %663 = vmatpush1.msra.mxu0 0.0
  %664 = vmatprep.subr.mxu0 0.0
  %665 = vmatpush1.msra.mxu0 0.0
  %666 = vmatprep.subr.mxu0 0.0
  %667 = vmatpush1.msra.mxu0 0.0
  %668 = vmatprep.subr.mxu0 0.0
  %669 = vmatpush1.msra.mxu0 0.0
  %670 = vmatprep.subr.mxu0 0.0
  %671 = vmatpush1.msra.mxu0 0.0
  %672 = vmatprep.subr.mxu0 0.0
  %673 = vmatpush1.msra.mxu0 0.0
  %674 = vmatprep.subr.mxu0 0.0
  %675 = vmatpush1.msra.mxu0 0.0
  %676 = vmatprep.subr.mxu0 0.0
  %677 = vmatpush1.msra.mxu0 0.0
  %678 = vmatprep.subr.mxu0 0.0
  %679 = vmatpush1.msra.mxu0 0.0
  %680 = vmatprep.subr.mxu0 0.0
  %681 = vmatpush1.msra.mxu0 0.0
  %682 = vmatprep.subr.mxu0 0.0
  %683 = vmatpush1.msra.mxu0 0.0
  %684 = vmatprep.subr.mxu0 0.0
  %685 = vmatpush1.msra.mxu0 0.0
  %686 = vmatprep.subr.mxu0 0.0
  %687 = vmatpush1.msra.mxu0 0.0
  %688 = vmatprep.subr.mxu0 0.0
  %689 = vmatpush1.msra.mxu0 0.0
  %690 = vmatprep.subr.mxu0 0.0
  %691 = vmatpush1.msra.mxu0 0.0
  %692 = vmatprep.subr.mxu0 0.0
  %693 = vmatpush1.msra.mxu0 0.0
  %694 = vmatprep.subr.mxu0 0.0
  %695 = vmatpush1.msra.mxu0 0.0
  %696 = vmatprep.subr.mxu0 0.0
  %697 = vmatpush1.msra.mxu0 0.0
  %698 = vmatprep.subr.mxu0 0.0
  %699 = vmatpush1.msra.mxu0 0.0
  %700 = vmatprep.subr.mxu0 0.0
  %701 = vmatpush1.msra.mxu0 0.0
  %702 = vmatprep.subr.mxu0 0.0
  %703 = vmatpush1.msra.mxu0 0.0
  %704 = vmatprep.subr.mxu0 0.0
  %705 = vmatpush1.msra.mxu0 0.0
  %706 = vmatprep.subr.mxu0 0.0
  %707 = vmatpush1.msra.mxu0 0.0
  %708 = vmatprep.subr.mxu0 0.0
  %709 = vmatpush1.msra.mxu0 0.0
  %710 = vmatprep.subr.mxu0 0.0
  %711 = vmatpush1.msra.mxu0 0.0
  %712 = vmatprep.subr.mxu0 0.0
  %713 = vmatpush1.msra.mxu0 0.0
  %714 = vmatprep.subr.mxu0 0.0
  %715 = vmatpush1.msra.mxu0 0.0
  %716 = vmatprep.subr.mxu0 0.0
  %717 = vmatpush1.msra.mxu0 0.0
  %718 = vmatprep.subr.mxu0 0.0
  %719 = vmatpush1.msra.mxu0 0.0
  %720 = vmatprep.subr.mxu0 0.0
  %721 = vmatpush1.msra.mxu0 0.0
  %722 = vmatprep.mubr.f32.mxu0 0.0
  %723 = vmatmul.mubr.f32.gmra.mrb[0].mxu0 %v656
  %v724 = vpop.f32.mrb[0].mxu0
  %v725 = vadd.f32 %v473, %v724
  %v726 = vpop.f32.mrb[0].mxu0
  %727 = vdwg.mxu0
  %v728 = vmax.f32 %v725, 0.0
  %v730 = vsel %vm361, %v728, 0
  %732 = vmatprep.subr.mxu0 0.0
  %733 = vmatpush1.msra.mxu0 %v550
  %734 = vmatprep.subr.mxu0 0.0
  %735 = vmatpush1.msra.mxu0 0.0
  %736 = vmatprep.subr.mxu0 0.0
  %737 = vmatpush1.msra.mxu0 0.0
  %738 = vmatprep.subr.mxu0 0.0
  %739 = vmatpush1.msra.mxu0 0.0
  %740 = vmatprep.subr.mxu0 0.0
  %741 = vmatpush1.msra.mxu0 0.0
  %742 = vmatprep.subr.mxu0 0.0
  %743 = vmatpush1.msra.mxu0 0.0
  %744 = vmatprep.subr.mxu0 0.0
  %745 = vmatpush1.msra.mxu0 0.0
  %746 = vmatprep.subr.mxu0 0.0
  %747 = vmatpush1.msra.mxu0 0.0
  %748 = vmatprep.subr.mxu0 0.0
  %749 = vmatpush1.msra.mxu0 0.0
  %750 = vmatprep.subr.mxu0 0.0
  %751 = vmatpush1.msra.mxu0 0.0
  %752 = vmatprep.subr.mxu0 0.0
  %753 = vmatpush1.msra.mxu0 0.0
  %754 = vmatprep.subr.mxu0 0.0
  %755 = vmatpush1.msra.mxu0 0.0
  %756 = vmatprep.subr.mxu0 0.0
  %757 = vmatpush1.msra.mxu0 0.0
  %758 = vmatprep.subr.mxu0 0.0
  %759 = vmatpush1.msra.mxu0 0.0
  %760 = vmatprep.subr.mxu0 0.0
  %761 = vmatpush1.msra.mxu0 0.0
  %762 = vmatprep.subr.mxu0 0.0
  %763 = vmatpush1.msra.mxu0 0.0
  %764 = vmatprep.subr.mxu0 0.0
  %765 = vmatpush1.msra.mxu0 0.0
  %766 = vmatprep.subr.mxu0 0.0
  %767 = vmatpush1.msra.mxu0 0.0
  %768 = vmatprep.subr.mxu0 0.0
  %769 = vmatpush1.msra.mxu0 0.0
  %770 = vmatprep.subr.mxu0 0.0
  %771 = vmatpush1.msra.mxu0 0.0
  %772 = vmatprep.subr.mxu0 0.0
  %773 = vmatpush1.msra.mxu0 0.0
  %774 = vmatprep.subr.mxu0 0.0
  %775 = vmatpush1.msra.mxu0 0.0
  %776 = vmatprep.subr.mxu0 0.0
  %777 = vmatpush1.msra.mxu0 0.0
  %778 = vmatprep.subr.mxu0 0.0
  %779 = vmatpush1.msra.mxu0 0.0
  %780 = vmatprep.subr.mxu0 0.0
  %781 = vmatpush1.msra.mxu0 0.0
  %782 = vmatprep.subr.mxu0 0.0
  %783 = vmatpush1.msra.mxu0 0.0
  %784 = vmatprep.subr.mxu0 0.0
  %785 = vmatpush1.msra.mxu0 0.0
  %786 = vmatprep.subr.mxu0 0.0
  %787 = vmatpush1.msra.mxu0 0.0
  %788 = vmatprep.subr.mxu0 0.0
  %789 = vmatpush1.msra.mxu0 0.0
  %790 = vmatprep.subr.mxu0 0.0
  %791 = vmatpush1.msra.mxu0 0.0
  %792 = vmatprep.subr.mxu0 0.0
  %793 = vmatpush1.msra.mxu0 0.0
  %794 = vmatprep.subr.mxu0 0.0
  %795 = vmatpush1.msra.mxu0 0.0
  %796 = vmatprep.mubr.f32.mxu0 0.0
  %797 = vmatmul.mubr.f32.gmra.mrb[0].mxu0 %v730
  %v798 = vpop.f32.mrb[0].mxu0
  %v799 = vadd.f32 %v438, %v798
  %v800 = vpop.f32.mrb[0].mxu0
  %801 = vdwg.mxu0
  %803 = vrot.lane.b32.xlu0 %v725, 120
  %v804 = vpop.permute.xlu0 %803
  %v806 = vadd.f32 %v799, %v804
  %v807 = vxor.u32 %v806, 2147483648
  %v808 = vmul.f32 %v807, 1.442695
  %v809 = vpow.pop %v808
  %v810 = vadd.f32 %v809, 1.0
  %v811 = vrcp.pop %v810
  %v812 = vmul.f32 1.0, %v811
  %813 = vrot.lane.b32.xlu0 %v725, 104
  %v814 = vpop.permute.xlu0 %813
  %v816 = vmul.f32 %v812, %v814
  %818 = vrot.lane.b32.xlu0 %v816, 16
  %v819 = vpop.permute.xlu0 %818
  %v821 = vadd.f32 %v799, %v819
  %v822 = vtanh.pop %v821
  %v823 = vsub.f32 1.0, %v812
  %825 = vrot.lane.b32.xlu0 %v822, 120
  %v826 = vpop.permute.xlu0 %825
  %v828 = vmul.f32 %v823, %v826
  %v829 = vmul.f32 %v812, %v652
  %v830 = vadd.f32 %v828, %v829
  %832 = vrot.lane.b32.xlu0 %v830, 120
  %v833 = vpop.permute.xlu0 %832
  %v834 = vsel %vm361, %v833, 0
  %836 = vmatprep.subr.mxu0 0.0
  %837 = vmatpush1.msra.mxu0 %v468
  %838 = vmatprep.subr.mxu0 0.0
  %839 = vmatpush1.msra.mxu0 0.0
  %840 = vmatprep.subr.mxu0 0.0
  %841 = vmatpush1.msra.mxu0 0.0
  %842 = vmatprep.subr.mxu0 0.0
  %843 = vmatpush1.msra.mxu0 0.0
  %844 = vmatprep.subr.mxu0 0.0
  %845 = vmatpush1.msra.mxu0 0.0
  %846 = vmatprep.subr.mxu0 0.0
  %847 = vmatpush1.msra.mxu0 0.0
  %848 = vmatprep.subr.mxu0 0.0
  %849 = vmatpush1.msra.mxu0 0.0
  %850 = vmatprep.subr.mxu0 0.0
  %851 = vmatpush1.msra.mxu0 0.0
  %852 = vmatprep.subr.mxu0 0.0
  %853 = vmatpush1.msra.mxu0 0.0
  %854 = vmatprep.subr.mxu0 0.0
  %855 = vmatpush1.msra.mxu0 0.0
  %856 = vmatprep.subr.mxu0 0.0
  %857 = vmatpush1.msra.mxu0 0.0
  %858 = vmatprep.subr.mxu0 0.0
  %859 = vmatpush1.msra.mxu0 0.0
  %860 = vmatprep.subr.mxu0 0.0
  %861 = vmatpush1.msra.mxu0 0.0
  %862 = vmatprep.subr.mxu0 0.0
  %863 = vmatpush1.msra.mxu0 0.0
  %864 = vmatprep.subr.mxu0 0.0
  %865 = vmatpush1.msra.mxu0 0.0
  %866 = vmatprep.subr.mxu0 0.0
  %867 = vmatpush1.msra.mxu0 0.0
  %868 = vmatprep.subr.mxu0 0.0
  %869 = vmatpush1.msra.mxu0 0.0
  %870 = vmatprep.subr.mxu0 0.0
  %871 = vmatpush1.msra.mxu0 0.0
  %872 = vmatprep.subr.mxu0 0.0
  %873 = vmatpush1.msra.mxu0 0.0
  %874 = vmatprep.subr.mxu0 0.0
  %875 = vmatpush1.msra.mxu0 0.0
  %876 = vmatprep.subr.mxu0 0.0
  %877 = vmatpush1.msra.mxu0 0.0
  %878 = vmatprep.subr.mxu0 0.0
  %879 = vmatpush1.msra.mxu0 0.0
  %880 = vmatprep.subr.mxu0 0.0
  %881 = vmatpush1.msra.mxu0 0.0
  %882 = vmatprep.subr.mxu0 0.0
  %883 = vmatpush1.msra.mxu0 0.0
  %884 = vmatprep.subr.mxu0 0.0
  %885 = vmatpush1.msra.mxu0 0.0
  %886 = vmatprep.subr.mxu0 0.0
  %887 = vmatpush1.msra.mxu0 0.0
  %888 = vmatprep.subr.mxu0 0.0
  %889 = vmatpush1.msra.mxu0 0.0
  %890 = vmatprep.subr.mxu0 0.0
  %891 = vmatpush1.msra.mxu0 0.0
  %892 = vmatprep.subr.mxu0 0.0
  %893 = vmatpush1.msra.mxu0 0.0
  %894 = vmatprep.subr.mxu0 0.0
  %895 = vmatpush1.msra.mxu0 0.0
  %896 = vmatprep.subr.mxu0 0.0
  %897 = vmatpush1.msra.mxu0 0.0
  %898 = vmatprep.subr.mxu0 0.0
  %899 = vmatpush1.msra.mxu0 0.0
  %900 = vmatprep.mubr.f32.mxu0 0.0
  %901 = vmatmul.mubr.f32.gmra.mrb[0].mxu0 %v834
  %v902 = vpop.f32.mrb[0].mxu0
  %v903 = vadd.f32 %v473, %v902
  %v904 = vpop.f32.mrb[0].mxu0
  %905 = vdwg.mxu0
  %v906 = vmax.f32 %v903, 0.0
  %v908 = vsel %vm361, %v906, 0
  %910 = vmatprep.subr.mxu0 0.0
  %911 = vmatpush1.msra.mxu0 %v550
  %912 = vmatprep.subr.mxu0 0.0
  %913 = vmatpush1.msra.mxu0 0.0
  %914 = vmatprep.subr.mxu0 0.0
  %915 = vmatpush1.msra.mxu0 0.0
  %916 = vmatprep.subr.mxu0 0.0
  %917 = vmatpush1.msra.mxu0 0.0
  %918 = vmatprep.subr.mxu0 0.0
  %919 = vmatpush1.msra.mxu0 0.0
  %920 = vmatprep.subr.mxu0 0.0
  %921 = vmatpush1.msra.mxu0 0.0
  %922 = vmatprep.subr.mxu0 0.0
  %923 = vmatpush1.msra.mxu0 0.0
  %924 = vmatprep.subr.mxu0 0.0
  %925 = vmatpush1.msra.mxu0 0.0
  %926 = vmatprep.subr.mxu0 0.0
  %927 = vmatpush1.msra.mxu0 0.0
  %928 = vmatprep.subr.mxu0 0.0
  %929 = vmatpush1.msra.mxu0 0.0
  %930 = vmatprep.subr.mxu0 0.0
  %931 = vmatpush1.msra.mxu0 0.0
  %932 = vmatprep.subr.mxu0 0.0
  %933 = vmatpush1.msra.mxu0 0.0
  %934 = vmatprep.subr.mxu0 0.0
  %935 = vmatpush1.msra.mxu0 0.0
  %936 = vmatprep.subr.mxu0 0.0
  %937 = vmatpush1.msra.mxu0 0.0
  %938 = vmatprep.subr.mxu0 0.0
  %939 = vmatpush1.msra.mxu0 0.0
  %940 = vmatprep.subr.mxu0 0.0
  %941 = vmatpush1.msra.mxu0 0.0
  %942 = vmatprep.subr.mxu0 0.0
  %943 = vmatpush1.msra.mxu0 0.0
  %944 = vmatprep.subr.mxu0 0.0
  %945 = vmatpush1.msra.mxu0 0.0
  %946 = vmatprep.subr.mxu0 0.0
  %947 = vmatpush1.msra.mxu0 0.0
  %948 = vmatprep.subr.mxu0 0.0
  %949 = vmatpush1.msra.mxu0 0.0
  %950 = vmatprep.subr.mxu0 0.0
  %951 = vmatpush1.msra.mxu0 0.0
  %952 = vmatprep.subr.mxu0 0.0
  %953 = vmatpush1.msra.mxu0 0.0
  %954 = vmatprep.subr.mxu0 0.0
  %955 = vmatpush1.msra.mxu0 0.0
  %956 = vmatprep.subr.mxu0 0.0
  %957 = vmatpush1.msra.mxu0 0.0
  %958 = vmatprep.subr.mxu0 0.0
  %959 = vmatpush1.msra.mxu0 0.0
  %960 = vmatprep.subr.mxu0 0.0
  %961 = vmatpush1.msra.mxu0 0.0
  %962 = vmatprep.subr.mxu0 0.0
  %963 = vmatpush1.msra.mxu0 0.0
  %964 = vmatprep.subr.mxu0 0.0
  %965 = vmatpush1.msra.mxu0 0.0
  %966 = vmatprep.subr.mxu0 0.0
  %967 = vmatpush1.msra.mxu0 0.0
  %968 = vmatprep.subr.mxu0 0.0
  %969 = vmatpush1.msra.mxu0 0.0
  %970 = vmatprep.subr.mxu0 0.0
  %971 = vmatpush1.msra.mxu0 0.0
  %972 = vmatprep.subr.mxu0 0.0
  %973 = vmatpush1.msra.mxu0 0.0
  %974 = vmatprep.mubr.f32.mxu0 0.0
  %975 = vmatmul.mubr.f32.gmra.mrb[0].mxu0 %v908
  %v976 = vpop.f32.mrb[0].mxu0
  %v977 = vadd.f32 %v438, %v976
  %v978 = vpop.f32.mrb[0].mxu0
  %979 = vdwg.mxu0
  %981 = vrot.lane.b32.xlu0 %v903, 120
  %v982 = vpop.permute.xlu0 %981
  %v984 = vadd.f32 %v977, %v982
  %v985 = vxor.u32 %v984, 2147483648
  %v986 = vmul.f32 %v985, 1.442695
  %v987 = vpow.pop %v986
  %v988 = vadd.f32 %v987, 1.0
  %v989 = vrcp.pop %v988
  %v990 = vmul.f32 1.0, %v989
  %991 = vrot.lane.b32.xlu0 %v903, 104
  %v992 = vpop.permute.xlu0 %991
  %v994 = vmul.f32 %v990, %v992
  %996 = vrot.lane.b32.xlu0 %v994, 16
  %v997 = vpop.permute.xlu0 %996
  %v999 = vadd.f32 %v977, %v997
  %v1000 = vtanh.pop %v999
  %v1001 = vsub.f32 1.0, %v990
  %1003 = vrot.lane.b32.xlu0 %v1000, 120
  %v1004 = vpop.permute.xlu0 %1003
  %v1006 = vmul.f32 %v1001, %v1004
  %v1007 = vmul.f32 %v990, %v830
  %v1008 = vadd.f32 %v1006, %v1007
  %v1009 = vld [vmem:[%s1 + $0xc0] sm:$0xff]
  %v1010 = vld [vmem:[%s1 + $0xc8] sm:$0x1]
  %v1011 = vlaneseq
  %v1012 = vshrl.u32 %v1011, 7
  %v1013 = vsub.s32 0, %v1012
  %v1014 = vrot.slane %v1010, %v1013
  %1016 = vrot.lane.b32.xlu0 %v1008, 120
  %v1017 = vpop.permute.xlu0 %1016
  %v1018 = vsel %vm361, %v1017, 0
  %1020 = vmatprep.subr.mxu0 0.0
  %1021 = vmatpush1.msra.mxu0 %v1009
  %1022 = vmatprep.subr.mxu0 0.0
  %1023 = vmatpush1.msra.mxu0 0.0
  %1024 = vmatprep.subr.mxu0 0.0
  %1025 = vmatpush1.msra.mxu0 0.0
  %1026 = vmatprep.subr.mxu0 0.0
  %1027 = vmatpush1.msra.mxu0 0.0
  %1028 = vmatprep.subr.mxu0 0.0
  %1029 = vmatpush1.msra.mxu0 0.0
  %1030 = vmatprep.subr.mxu0 0.0
  %1031 = vmatpush1.msra.mxu0 0.0
  %1032 = vmatprep.subr.mxu0 0.0
  %1033 = vmatpush1.msra.mxu0 0.0
  %1034 = vmatprep.subr.mxu0 0.0
  %1035 = vmatpush1.msra.mxu0 0.0
  %1036 = vmatprep.subr.mxu0 0.0
  %1037 = vmatpush1.msra.mxu0 0.0
  %1038 = vmatprep.subr.mxu0 0.0
  %1039 = vmatpush1.msra.mxu0 0.0
  %1040 = vmatprep.subr.mxu0 0.0
  %1041 = vmatpush1.msra.mxu0 0.0
  %1042 = vmatprep.subr.mxu0 0.0
  %1043 = vmatpush1.msra.mxu0 0.0
  %1044 = vmatprep.subr.mxu0 0.0
  %1045 = vmatpush1.msra.mxu0 0.0
  %1046 = vmatprep.subr.mxu0 0.0
  %1047 = vmatpush1.msra.mxu0 0.0
  %1048 = vmatprep.subr.mxu0 0.0
  %1049 = vmatpush1.msra.mxu0 0.0
  %1050 = vmatprep.subr.mxu0 0.0
  %1051 = vmatpush1.msra.mxu0 0.0
  %1052 = vmatprep.subr.mxu0 0.0
  %1053 = vmatpush1.msra.mxu0 0.0
  %1054 = vmatprep.subr.mxu0 0.0
  %1055 = vmatpush1.msra.mxu0 0.0
  %1056 = vmatprep.subr.mxu0 0.0
  %1057 = vmatpush1.msra.mxu0 0.0
  %1058 = vmatprep.subr.mxu0 0.0
  %1059 = vmatpush1.msra.mxu0 0.0
  %1060 = vmatprep.subr.mxu0 0.0
  %1061 = vmatpush1.msra.mxu0 0.0
  %1062 = vmatprep.subr.mxu0 0.0
  %1063 = vmatpush1.msra.mxu0 0.0
  %1064 = vmatprep.subr.mxu0 0.0
  %1065 = vmatpush1.msra.mxu0 0.0
  %1066 = vmatprep.subr.mxu0 0.0
  %1067 = vmatpush1.msra.mxu0 0.0
  %1068 = vmatprep.subr.mxu0 0.0
  %1069 = vmatpush1.msra.mxu0 0.0
  %1070 = vmatprep.subr.mxu0 0.0
  %1071 = vmatpush1.msra.mxu0 0.0
  %1072 = vmatprep.subr.mxu0 0.0
  %1073 = vmatpush1.msra.mxu0 0.0
  %1074 = vmatprep.subr.mxu0 0.0
  %1075 = vmatpush1.msra.mxu0 0.0
  %1076 = vmatprep.subr.mxu0 0.0
  %1077 = vmatpush1.msra.mxu0 0.0
  %1078 = vmatprep.subr.mxu0 0.0
  %1079 = vmatpush1.msra.mxu0 0.0
  %1080 = vmatprep.subr.mxu0 0.0
  %1081 = vmatpush1.msra.mxu0 0.0
  %1082 = vmatprep.subr.mxu0 0.0
  %1083 = vmatpush1.msra.mxu0 0.0
  %1084 = vmatprep.mubr.f32.mxu0 0.0
  %1085 = vmatmul.mubr.f32.gmra.mrb[0].mxu0 %v477
  %v1086 = vpop.f32.mrb[0].mxu0
  %v1087 = vadd.f32 %v1014, %v1086
  %v1088 = vpop.f32.mrb[0].mxu0
  %1089 = vmatprep.mubr.f32.mxu0 0.0
  %1090 = vmatmul.mubr.f32.gmra.mrb[0].mxu0 %v656
  %v1091 = vpop.f32.mrb[0].mxu0
  %v1092 = vadd.f32 %v1014, %v1091
  %v1093 = vpop.f32.mrb[0].mxu0
  %1094 = vmatprep.mubr.f32.mxu0 0.0
  %1095 = vmatmul.mubr.f32.gmra.mrb[0].mxu0 %v834
  %v1096 = vpop.f32.mrb[0].mxu0
  %v1097 = vadd.f32 %v1014, %v1096
  %v1098 = vpop.f32.mrb[0].mxu0
  %1099 = vmatprep.mubr.f32.mxu0 0.0
  %1100 = vmatmul.mubr.f32.gmra.mrb[0].mxu0 %v1018
  %v1101 = vpop.f32.mrb[0].mxu0
  %v1102 = vadd.f32 %v1014, %v1101
  %v1103 = vpop.f32.mrb[0].mxu0
  %1104 = vdwg.mxu0
  %v1105 = vmax.f32 %v1087, 0.0
  %v1106 = vmax.f32 %v1092, 0.0
  %v1107 = vmax.f32 %v1097, 0.0
  %v1108 = vmax.f32 %v1102, 0.0
  %v1109 = vtanh.pop %v1105
  %v1110 = vtanh.pop %v1106
  %v1111 = vtanh.pop %v1107
  %v1112 = vtanh.pop %v1108
  %v1113 = vld [vmem:[%s1 + $0xd0] sm:$0xff]
  %v1114 = vld [vmem:[%s1 + $0xd8] sm:$0xff]
  %v1115 = vld [vmem:[%s1 + $0xe0] sm:$0x1]
  %v1116 = vlaneseq
  %v1117 = vshrl.u32 %v1116, 7
  %v1118 = vsub.s32 0, %v1117
  %v1119 = vrot.slane %v1115, %v1118
  %1124 = vrot.lane.b32.xlu0 %v1109, 96
  %v1125 = vpop.permute.xlu0 %1124
  %1126 = vrot.lane.b32.xlu0 %v1110, 96
  %v1127 = vpop.permute.xlu0 %1126
  %1128 = vrot.lane.b32.xlu0 %v1111, 96
  %v1129 = vpop.permute.xlu0 %1128
  %1130 = vrot.lane.b32.xlu0 %v1112, 96
  %v1131 = vpop.permute.xlu0 %1130
  %vm1132 = vcmask 130048
  %v1133 = vsel %vm1132, %v1125, 0
  %v1135 = vsel %vm1132, %v1127, 0
  %v1137 = vsel %vm1132, %v1129, 0
  %v1139 = vsel %vm1132, %v1131, 0
  %1141 = vmatprep.subr.mxu0 0.0
  %1142 = vmatpush1.msra.mxu0 %v1113
  %1143 = vmatprep.subr.mxu0 0.0
  %1144 = vmatpush1.msra.mxu0 %v1114
  %1145 = vmatprep.subr.mxu0 0.0
  %1146 = vmatpush1.msra.mxu0 0.0
  %1147 = vmatprep.subr.mxu0 0.0
  %1148 = vmatpush1.msra.mxu0 0.0
  %1149 = vmatprep.subr.mxu0 0.0
  %1150 = vmatpush1.msra.mxu0 0.0
  %1151 = vmatprep.subr.mxu0 0.0
  %1152 = vmatpush1.msra.mxu0 0.0
  %1153 = vmatprep.subr.mxu0 0.0
  %1154 = vmatpush1.msra.mxu0 0.0
  %1155 = vmatprep.subr.mxu0 0.0
  %1156 = vmatpush1.msra.mxu0 0.0
  %1157 = vmatprep.subr.mxu0 0.0
  %1158 = vmatpush1.msra.mxu0 0.0
  %1159 = vmatprep.subr.mxu0 0.0
  %1160 = vmatpush1.msra.mxu0 0.0
  %1161 = vmatprep.subr.mxu0 0.0
  %1162 = vmatpush1.msra.mxu0 0.0
  %1163 = vmatprep.subr.mxu0 0.0
  %1164 = vmatpush1.msra.mxu0 0.0
  %1165 = vmatprep.subr.mxu0 0.0
  %1166 = vmatpush1.msra.mxu0 0.0
  %1167 = vmatprep.subr.mxu0 0.0
  %1168 = vmatpush1.msra.mxu0 0.0
  %1169 = vmatprep.subr.mxu0 0.0
  %1170 = vmatpush1.msra.mxu0 0.0
  %1171 = vmatprep.subr.mxu0 0.0
  %1172 = vmatpush1.msra.mxu0 0.0
  %1173 = vmatprep.subr.mxu0 0.0
  %1174 = vmatpush1.msra.mxu0 0.0
  %1175 = vmatprep.subr.mxu0 0.0
  %1176 = vmatpush1.msra.mxu0 0.0
  %1177 = vmatprep.subr.mxu0 0.0
  %1178 = vmatpush1.msra.mxu0 0.0
  %1179 = vmatprep.subr.mxu0 0.0
  %1180 = vmatpush1.msra.mxu0 0.0
  %1181 = vmatprep.subr.mxu0 0.0
  %1182 = vmatpush1.msra.mxu0 0.0
  %1183 = vmatprep.subr.mxu0 0.0
  %1184 = vmatpush1.msra.mxu0 0.0
  %1185 = vmatprep.subr.mxu0 0.0
  %1186 = vmatpush1.msra.mxu0 0.0
  %1187 = vmatprep.subr.mxu0 0.0
  %1188 = vmatpush1.msra.mxu0 0.0
  %1189 = vmatprep.subr.mxu0 0.0
  %1190 = vmatpush1.msra.mxu0 0.0
  %1191 = vmatprep.subr.mxu0 0.0
  %1192 = vmatpush1.msra.mxu0 0.0
  %1193 = vmatprep.subr.mxu0 0.0
  %1194 = vmatpush1.msra.mxu0 0.0
  %1195 = vmatprep.subr.mxu0 0.0
  %1196 = vmatpush1.msra.mxu0 0.0
  %1197 = vmatprep.subr.mxu0 0.0
  %1198 = vmatpush1.msra.mxu0 0.0
  %1199 = vmatprep.subr.mxu0 0.0
  %1200 = vmatpush1.msra.mxu0 0.0
  %1201 = vmatprep.subr.mxu0 0.0
  %1202 = vmatpush1.msra.mxu0 0.0
  %1203 = vmatprep.subr.mxu0 0.0
  %1204 = vmatpush1.msra.mxu0 0.0
  %1205 = vmatprep.mubr.f32.mxu0 0.0
  %1206 = vmatmul.mubr.f32.gmra.mrb[0].mxu0 %v1133
  %v1207 = vpop.f32.mrb[0].mxu0
  %v1208 = vadd.f32 %v1119, %v1207
  %v1209 = vpop.f32.mrb[0].mxu0
  %1210 = vmatprep.mubr.f32.mxu0 0.0
  %1211 = vmatmul.mubr.f32.gmra.mrb[0].mxu0 %v1135
  %v1212 = vpop.f32.mrb[0].mxu0
  %v1213 = vadd.f32 %v1119, %v1212
  %v1214 = vpop.f32.mrb[0].mxu0
  %1215 = vmatprep.mubr.f32.mxu0 0.0
  %1216 = vmatmul.mubr.f32.gmra.mrb[0].mxu0 %v1137
  %v1217 = vpop.f32.mrb[0].mxu0
  %v1218 = vadd.f32 %v1119, %v1217
  %v1219 = vpop.f32.mrb[0].mxu0
  %1220 = vmatprep.mubr.f32.mxu0 0.0
  %1221 = vmatmul.mubr.f32.gmra.mrb[0].mxu0 %v1139
  %v1222 = vpop.f32.mrb[0].mxu0
  %v1223 = vadd.f32 %v1119, %v1222
  %v1224 = vpop.f32.mrb[0].mxu0
  %1225 = vdwg.mxu0
  %v1226 = vmax.f32 %v1208, 0.0
  %v1227 = vmax.f32 %v1213, 0.0
  %v1228 = vmax.f32 %v1218, 0.0
  %v1229 = vmax.f32 %v1223, 0.0
  %1230 = vst.msk [vmem:[#allocation2] sm:$0xff] %vm138, %v1105
  %1231 = vst.msk [vmem:[#allocation2 + $0x8] sm:$0xff] %vm138, %v1106
  %1232 = vst.msk [vmem:[#allocation2 + $0x10] sm:$0xff] %vm138, %v1107
  %1233 = vst.msk [vmem:[#allocation2 + $0x18] sm:$0xff] %vm138, %v1108
  %1235 = vrot.lane.b32.xlu0 %v1105, 88
  %v1236 = vpop.permute.xlu0 %1235
  %1238 = vst.msk [vmem:[#allocation3] sm:$0xff] %vm361, %v1236
  %1240 = vrot.lane.b32.xlu0 %v1226, 127
  %v1241 = vpop.permute.xlu0 %1240
  %vm1243 = vcmask 7168
  %1244 = vst.msk [vmem:[#allocation4] sm:$0xff] %vm1243, %v1241
  %1246 = vrot.lane.b32.xlu0 %v1106, 88
  %v1247 = vpop.permute.xlu0 %1246
  %1249 = vst.msk [vmem:[#allocation3 + $0x20] sm:$0xff] %vm361, %v1247
  %1251 = vrot.lane.b32.xlu0 %v1227, 127
  %v1252 = vpop.permute.xlu0 %1251
  %1254 = vst.msk [vmem:[#allocation4 + $0x20] sm:$0xff] %vm1243, %v1252
  %1256 = vrot.lane.b32.xlu0 %v1107, 88
  %v1257 = vpop.permute.xlu0 %1256
  %1259 = vst.msk [vmem:[#allocation3 + $0x40] sm:$0xff] %vm361, %v1257
  %1261 = vrot.lane.b32.xlu0 %v1228, 127
  %v1262 = vpop.permute.xlu0 %1261
  %1264 = vst.msk [vmem:[#allocation4 + $0x40] sm:$0xff] %vm1243, %v1262
  %1266 = vrot.lane.b32.xlu0 %v1108, 88
  %v1267 = vpop.permute.xlu0 %1266
  %1269 = vst.msk [vmem:[#allocation3 + $0x60] sm:$0xff] %vm361, %v1267
  %1271 = vrot.lane.b32.xlu0 %v1229, 127
  %v1272 = vpop.permute.xlu0 %1271
  %1274 = vst.msk [vmem:[#allocation4 + $0x60] sm:$0xff] %vm1243, %v1272
  %v1275 = vld [vmem:[%s1 + $0x30] sm:$0xff]
  %1276 = vrot.lane.b32.xlu0 %v1105, 96
  %v1277 = vpop.permute.xlu0 %1276
  %1278 = vrot.lane.b32.xlu0 %v1106, 96
  %v1279 = vpop.permute.xlu0 %1278
  %1280 = vrot.lane.b32.xlu0 %v1107, 96
  %v1281 = vpop.permute.xlu0 %1280
  %1282 = vrot.lane.b32.xlu0 %v1108, 96
  %v1283 = vpop.permute.xlu0 %1282
  %v1284 = vsel %vm361, %v1277, 0
  %v1286 = vsel %vm361, %v1279, 0
  %v1288 = vsel %vm361, %v1281, 0
  %v1290 = vsel %vm361, %v1283, 0
  %1292 = vmatprep.subr.mxu0 0.0
  %1293 = vmatpush1.msra.mxu0 %v1275
  %1294 = vmatprep.subr.mxu0 0.0
  %1295 = vmatpush1.msra.mxu0 0.0
  %1296 = vmatprep.subr.mxu0 0.0
  %1297 = vmatpush1.msra.mxu0 0.0
  %1298 = vmatprep.subr.mxu0 0.0
  %1299 = vmatpush1.msra.mxu0 0.0
  %1300 = vmatprep.subr.mxu0 0.0
  %1301 = vmatpush1.msra.mxu0 0.0
  %1302 = vmatprep.subr.mxu0 0.0
  %1303 = vmatpush1.msra.mxu0 0.0
  %1304 = vmatprep.subr.mxu0 0.0
  %1305 = vmatpush1.msra.mxu0 0.0
  %1306 = vmatprep.subr.mxu0 0.0
  %1307 = vmatpush1.msra.mxu0 0.0
  %1308 = vmatprep.subr.mxu0 0.0
  %1309 = vmatpush1.msra.mxu0 0.0
  %1310 = vmatprep.subr.mxu0 0.0
  %1311 = vmatpush1.msra.mxu0 0.0
  %1312 = vmatprep.subr.mxu0 0.0
  %1313 = vmatpush1.msra.mxu0 0.0
  %1314 = vmatprep.subr.mxu0 0.0
  %1315 = vmatpush1.msra.mxu0 0.0
  %1316 = vmatprep.subr.mxu0 0.0
  %1317 = vmatpush1.msra.mxu0 0.0
  %1318 = vmatprep.subr.mxu0 0.0
  %1319 = vmatpush1.msra.mxu0 0.0
  %1320 = vmatprep.subr.mxu0 0.0
  %1321 = vmatpush1.msra.mxu0 0.0
  %1322 = vmatprep.subr.mxu0 0.0
  %1323 = vmatpush1.msra.mxu0 0.0
  %1324 = vmatprep.subr.mxu0 0.0
  %1325 = vmatpush1.msra.mxu0 0.0
  %1326 = vmatprep.subr.mxu0 0.0
  %1327 = vmatpush1.msra.mxu0 0.0
  %1328 = vmatprep.subr.mxu0 0.0
  %1329 = vmatpush1.msra.mxu0 0.0
  %1330 = vmatprep.subr.mxu0 0.0
  %1331 = vmatpush1.msra.mxu0 0.0
  %1332 = vmatprep.subr.mxu0 0.0
  %1333 = vmatpush1.msra.mxu0 0.0
  %1334 = vmatprep.subr.mxu0 0.0
  %1335 = vmatpush1.msra.mxu0 0.0
  %1336 = vmatprep.subr.mxu0 0.0
  %1337 = vmatpush1.msra.mxu0 0.0
  %1338 = vmatprep.subr.mxu0 0.0
  %1339 = vmatpush1.msra.mxu0 0.0
  %1340 = vmatprep.subr.mxu0 0.0
  %1341 = vmatpush1.msra.mxu0 0.0
  %1342 = vmatprep.subr.mxu0 0.0
  %1343 = vmatpush1.msra.mxu0 0.0
  %1344 = vmatprep.subr.mxu0 0.0
  %1345 = vmatpush1.msra.mxu0 0.0
  %1346 = vmatprep.subr.mxu0 0.0
  %1347 = vmatpush1.msra.mxu0 0.0
  %1348 = vmatprep.subr.mxu0 0.0
  %1349 = vmatpush1.msra.mxu0 0.0
  %1350 = vmatprep.subr.mxu0 0.0
  %1351 = vmatpush1.msra.mxu0 0.0
  %1352 = vmatprep.subr.mxu0 0.0
  %1353 = vmatpush1.msra.mxu0 0.0
  %1354 = vmatprep.subr.mxu0 0.0
  %1355 = vmatpush1.msra.mxu0 0.0
  %1356 = vmatprep.mubr.f32.mxu0 0.0
  %1357 = vmatmul.mubr.f32.gmra.mrb[0].mxu0 %v1284
  %v1358 = vpop.f32.mrb[0].mxu0
  %v1359 = vadd.f32 0.0, %v1358
  %v1360 = vpop.f32.mrb[0].mxu0
  %1361 = vmatprep.mubr.f32.mxu0 0.0
  %1362 = vmatmul.mubr.f32.gmra.mrb[0].mxu0 %v1286
  %v1363 = vpop.f32.mrb[0].mxu0
  %v1364 = vadd.f32 0.0, %v1363
  %v1365 = vpop.f32.mrb[0].mxu0
  %1366 = vmatprep.mubr.f32.mxu0 0.0
  %1367 = vmatmul.mubr.f32.gmra.mrb[0].mxu0 %v1288
  %v1368 = vpop.f32.mrb[0].mxu0
  %v1369 = vadd.f32 0.0, %v1368
  %v1370 = vpop.f32.mrb[0].mxu0
  %1371 = vmatprep.mubr.f32.mxu0 0.0
  %1372 = vmatmul.mubr.f32.gmra.mrb[0].mxu0 %v1290
  %v1373 = vpop.f32.mrb[0].mxu0
  %v1374 = vadd.f32 0.0, %v1373
  %v1375 = vpop.f32.mrb[0].mxu0
  %1376 = vdwg.mxu0
  %v1377 = vmax.f32 %v1226, %v1227
  %v1378 = vmax.f32 %v1377, %v1228
  %v1379 = vmax.f32 %v1378, %v1229
  %v1380 = vsub.f32 %v1226, %v1379
  %v1381 = vmul.f32 %v1380, 1.442695
  %v1382 = vpow.pop %v1381
  %v1383 = vsub.f32 %v1227, %v1379
  %v1384 = vmul.f32 %v1383, 1.442695
  %v1385 = vpow.pop %v1384
  %v1386 = vsub.f32 %v1228, %v1379
  %v1387 = vmul.f32 %v1386, 1.442695
  %v1388 = vpow.pop %v1387
  %v1389 = vsub.f32 %v1229, %v1379
  %v1390 = vmul.f32 %v1389, 1.442695
  %v1391 = vpow.pop %v1390
  %1393 = vset.pattern.permute.xlu0 0
  %1394 = vperm.xlu0 %1393, %v1382
  %v1395 = vpop.permute.xlu0 %1394
  %v1397 = vmul.f32 %v1395, %v1359
  %v1398 = vadd.f32 %v1382, %v1385
  %1400 = vset.pattern.permute.xlu0 0
  %1401 = vperm.xlu0 %1400, %v1385
  %v1402 = vpop.permute.xlu0 %1401
  %v1404 = vmul.f32 %v1402, %v1364
  %v1405 = vadd.f32 %v1397, %v1404
  %v1406 = vadd.f32 %v1398, %v1388
  %1408 = vset.pattern.permute.xlu0 0
  %1409 = vperm.xlu0 %1408, %v1388
  %v1410 = vpop.permute.xlu0 %1409
  %v1412 = vmul.f32 %v1410, %v1369
  %v1413 = vadd.f32 %v1405, %v1412
  %v1414 = vadd.f32 %v1406, %v1391
  %1416 = vset.pattern.permute.xlu0 0
  %1417 = vperm.xlu0 %1416, %v1391
  %v1418 = vpop.permute.xlu0 %1417
  %v1420 = vmul.f32 %v1418, %v1374
  %v1421 = vadd.f32 %v1413, %v1420
  %1423 = vset.pattern.permute.xlu0 0
  %1424 = vperm.xlu0 %1423, %v1414
  %v1425 = vpop.permute.xlu0 %1424
  %v1427 = vrcp.pop %v1425
  %v1428 = vmul.f32 %v1421, %v1427
  %v1429 = vadd.f32 %v223, %v1428
  %v1430 = vld [vmem:[%s1 + $0x38] sm:$0xff]
  %v1431 = vld [vmem:[%s1 + $0x40] sm:$0xff]
  %v1432 = vld [vmem:[%s1 + $0x48] sm:$0xff]
  %v1433 = vld [vmem:[%s1 + $0x50] sm:$0xff]
  %v1434 = vld [vmem:[%s1 + $0x60] sm:$0x1]
  %v1435 = vlaneseq
  %v1436 = vshrl.u32 %v1435, 7
  %v1437 = vsub.s32 0, %v1436
  %v1438 = vrot.slane %v1434, %v1437
  %1439 = vmatprep.subr.mxu0 0.0
  %1440 = vmatpush1.msra.mxu0 %v1430
  %1441 = vmatprep.subr.mxu0 0.0
  %1442 = vmatpush1.msra.mxu0 %v1431
  %1443 = vmatprep.subr.mxu0 0.0
  %1444 = vmatpush1.msra.mxu0 %v1432
  %1445 = vmatprep.subr.mxu0 0.0
  %1446 = vmatpush1.msra.mxu0 %v1433
  %1447 = vmatprep.subr.mxu0 0.0
  %1448 = vmatpush1.msra.mxu0 0.0
  %1449 = vmatprep.subr.mxu0 0.0
  %1450 = vmatpush1.msra.mxu0 0.0
  %1451 = vmatprep.subr.mxu0 0.0
  %1452 = vmatpush1.msra.mxu0 0.0
  %1453 = vmatprep.subr.mxu0 0.0
  %1454 = vmatpush1.msra.mxu0 0.0
  %1455 = vmatprep.subr.mxu0 0.0
  %1456 = vmatpush1.msra.mxu0 0.0
  %1457 = vmatprep.subr.mxu0 0.0
  %1458 = vmatpush1.msra.mxu0 0.0
  %1459 = vmatprep.subr.mxu0 0.0
  %1460 = vmatpush1.msra.mxu0 0.0
  %1461 = vmatprep.subr.mxu0 0.0
  %1462 = vmatpush1.msra.mxu0 0.0
  %1463 = vmatprep.subr.mxu0 0.0
  %1464 = vmatpush1.msra.mxu0 0.0
  %1465 = vmatprep.subr.mxu0 0.0
  %1466 = vmatpush1.msra.mxu0 0.0
  %1467 = vmatprep.subr.mxu0 0.0
  %1468 = vmatpush1.msra.mxu0 0.0
  %1469 = vmatprep.subr.mxu0 0.0
  %1470 = vmatpush1.msra.mxu0 0.0
  %1471 = vmatprep.subr.mxu0 0.0
  %1472 = vmatpush1.msra.mxu0 0.0
  %1473 = vmatprep.subr.mxu0 0.0
  %1474 = vmatpush1.msra.mxu0 0.0
  %1475 = vmatprep.subr.mxu0 0.0
  %1476 = vmatpush1.msra.mxu0 0.0
  %1477 = vmatprep.subr.mxu0 0.0
  %1478 = vmatpush1.msra.mxu0 0.0
  %1479 = vmatprep.subr.mxu0 0.0
  %1480 = vmatpush1.msra.mxu0 0.0
  %1481 = vmatprep.subr.mxu0 0.0
  %1482 = vmatpush1.msra.mxu0 0.0
  %1483 = vmatprep.subr.mxu0 0.0
  %1484 = vmatpush1.msra.mxu0 0.0
  %1485 = vmatprep.subr.mxu0 0.0
  %1486 = vmatpush1.msra.mxu0 0.0
  %1487 = vmatprep.subr.mxu0 0.0
  %1488 = vmatpush1.msra.mxu0 0.0
  %1489 = vmatprep.subr.mxu0 0.0
  %1490 = vmatpush1.msra.mxu0 0.0
  %1491 = vmatprep.subr.mxu0 0.0
  %1492 = vmatpush1.msra.mxu0 0.0
  %1493 = vmatprep.subr.mxu0 0.0
  %1494 = vmatpush1.msra.mxu0 0.0
  %1495 = vmatprep.subr.mxu0 0.0
  %1496 = vmatpush1.msra.mxu0 0.0
  %1497 = vmatprep.subr.mxu0 0.0
  %1498 = vmatpush1.msra.mxu0 0.0
  %1499 = vmatprep.subr.mxu0 0.0
  %1500 = vmatpush1.msra.mxu0 0.0
  %1501 = vmatprep.subr.mxu0 0.0
  %1502 = vmatpush1.msra.mxu0 0.0
  %1503 = vmatprep.mubr.f32.mxu0 0.0
  %1504 = vmatmul.mubr.f32.gmra.mrb[0].mxu0 %v277
  %v1505 = vpop.f32.mrb[0].mxu0
  %v1506 = vadd.f32 %v1438, %v1505
  %v1507 = vpop.f32.mrb[0].mxu0
  %1508 = vdwg.mxu0
  %v1509 = vadd.f32 %v1429, %v1506
  %v1510 = vxor.u32 %v1509, 2147483648
  %v1511 = vmul.f32 %v1510, 1.442695
  %v1512 = vpow.pop %v1511
  %v1513 = vadd.f32 %v1512, 1.0
  %v1514 = vrcp.pop %v1513
  %v1515 = vmul.f32 1.0, %v1514
  %1517 = vrot.lane.b32.xlu0 %v1506, 64
  %v1518 = vpop.permute.xlu0 %1517
  %v1520 = vmul.f32 %v1515, %v1518
  %1522 = vrot.lane.b32.xlu0 %v1520, 64
  %v1523 = vpop.permute.xlu0 %1522
  %v1525 = vadd.f32 %v1429, %v1523
  %v1526 = vtanh.pop %v1525
  %v1527 = vsub.f32 1.0, %v1515
  %1529 = vrot.lane.b32.xlu0 %v1526, 96
  %v1530 = vpop.permute.xlu0 %1529
  %v1532 = vmul.f32 %v1527, %v1530
  %v1533 = vmul.f32 %v1515, %v264
  %v1534 = vadd.f32 %v1532, %v1533
  %v1535 = vld [vmem:[%s1 + $0x68] sm:$0xff]
  %v1536 = vld [vmem:[%s1 + $0x70] sm:$0xff]
  %v1537 = vld [vmem:[%s1 + $0x78] sm:$0xff]
  %v1538 = vld [vmem:[%s1 + $0x80] sm:$0xff]
  %v1539 = vld [vmem:[%s1 + $0x88] sm:$0x1]
  %v1540 = vlaneseq
  %v1541 = vshrl.u32 %v1540, 7
  %v1542 = vsub.s32 0, %v1541
  %v1543 = vrot.slane %v1539, %v1542
  %1545 = vrot.lane.b32.xlu0 %v1534, 96
  %v1546 = vpop.permute.xlu0 %1545
  %v1547 = vsel %vm138, %v1546, 0
  %1549 = vmatprep.subr.mxu0 0.0
  %1550 = vmatpush1.msra.mxu0 %v1535
  %1551 = vmatprep.subr.mxu0 0.0
  %1552 = vmatpush1.msra.mxu0 %v1536
  %1553 = vmatprep.subr.mxu0 0.0
  %1554 = vmatpush1.msra.mxu0 %v1537
  %1555 = vmatprep.subr.mxu0 0.0
  %1556 = vmatpush1.msra.mxu0 %v1538
  %1557 = vmatprep.subr.mxu0 0.0
  %1558 = vmatpush1.msra.mxu0 0.0
  %1559 = vmatprep.subr.mxu0 0.0
  %1560 = vmatpush1.msra.mxu0 0.0
  %1561 = vmatprep.subr.mxu0 0.0
  %1562 = vmatpush1.msra.mxu0 0.0
  %1563 = vmatprep.subr.mxu0 0.0
  %1564 = vmatpush1.msra.mxu0 0.0
  %1565 = vmatprep.subr.mxu0 0.0
  %1566 = vmatpush1.msra.mxu0 0.0
  %1567 = vmatprep.subr.mxu0 0.0
  %1568 = vmatpush1.msra.mxu0 0.0
  %1569 = vmatprep.subr.mxu0 0.0
  %1570 = vmatpush1.msra.mxu0 0.0
  %1571 = vmatprep.subr.mxu0 0.0
  %1572 = vmatpush1.msra.mxu0 0.0
  %1573 = vmatprep.subr.mxu0 0.0
  %1574 = vmatpush1.msra.mxu0 0.0
  %1575 = vmatprep.subr.mxu0 0.0
  %1576 = vmatpush1.msra.mxu0 0.0
  %1577 = vmatprep.subr.mxu0 0.0
  %1578 = vmatpush1.msra.mxu0 0.0
  %1579 = vmatprep.subr.mxu0 0.0
  %1580 = vmatpush1.msra.mxu0 0.0
  %1581 = vmatprep.subr.mxu0 0.0
  %1582 = vmatpush1.msra.mxu0 0.0
  %1583 = vmatprep.subr.mxu0 0.0
  %1584 = vmatpush1.msra.mxu0 0.0
  %1585 = vmatprep.subr.mxu0 0.0
  %1586 = vmatpush1.msra.mxu0 0.0
  %1587 = vmatprep.subr.mxu0 0.0
  %1588 = vmatpush1.msra.mxu0 0.0
  %1589 = vmatprep.subr.mxu0 0.0
  %1590 = vmatpush1.msra.mxu0 0.0
  %1591 = vmatprep.subr.mxu0 0.0
  %1592 = vmatpush1.msra.mxu0 0.0
  %1593 = vmatprep.subr.mxu0 0.0
  %1594 = vmatpush1.msra.mxu0 0.0
  %1595 = vmatprep.subr.mxu0 0.0
  %1596 = vmatpush1.msra.mxu0 0.0
  %1597 = vmatprep.subr.mxu0 0.0
  %1598 = vmatpush1.msra.mxu0 0.0
  %1599 = vmatprep.subr.mxu0 0.0
  %1600 = vmatpush1.msra.mxu0 0.0
  %1601 = vmatprep.subr.mxu0 0.0
  %1602 = vmatpush1.msra.mxu0 0.0
  %1603 = vmatprep.subr.mxu0 0.0
  %1604 = vmatpush1.msra.mxu0 0.0
  %1605 = vmatprep.subr.mxu0 0.0
  %1606 = vmatpush1.msra.mxu0 0.0
  %1607 = vmatprep.subr.mxu0 0.0
  %1608 = vmatpush1.msra.mxu0 0.0
  %1609 = vmatprep.subr.mxu0 0.0
  %1610 = vmatpush1.msra.mxu0 0.0
  %1611 = vmatprep.subr.mxu0 0.0
  %1612 = vmatpush1.msra.mxu0 0.0
  %1613 = vmatprep.mubr.f32.mxu0 0.0
  %1614 = vmatmul.mubr.f32.gmra.mrb[0].mxu0 %v1547
  %v1615 = vpop.f32.mrb[0].mxu0
  %v1616 = vadd.f32 %v1543, %v1615
  %v1617 = vpop.f32.mrb[0].mxu0
  %1618 = vdwg.mxu0
  %v1619 = vmax.f32 %v1616, 0.0
  %1621 = vrot.lane.b32.xlu0 %v1619, 120
  %v1622 = vpop.permute.xlu0 %1621
  %1624 = vst.msk [vmem:[#allocation5 + $0x8] sm:$0xff] %vm138, %v1622
  %v1625 = vld [vmem:[%s1 + $0xa0] sm:$0xff]
  %v1626 = vld [vmem:[%s1 + $0xa8] sm:$0x1]
  %v1627 = vlaneseq
  %v1628 = vshrl.u32 %v1627, 7
  %v1629 = vsub.s32 0, %v1628
  %v1630 = vrot.slane %v1626, %v1629
  %v1631 = vsel %vm361, %v1619, 0
  %1633 = vmatprep.subr.mxu0 0.0
  %1634 = vmatpush1.msra.mxu0 %v1625
  %1635 = vmatprep.subr.mxu0 0.0
  %1636 = vmatpush1.msra.mxu0 0.0
  %1637 = vmatprep.subr.mxu0 0.0
  %1638 = vmatpush1.msra.mxu0 0.0
  %1639 = vmatprep.subr.mxu0 0.0
  %1640 = vmatpush1.msra.mxu0 0.0
  %1641 = vmatprep.subr.mxu0 0.0
  %1642 = vmatpush1.msra.mxu0 0.0
  %1643 = vmatprep.subr.mxu0 0.0
  %1644 = vmatpush1.msra.mxu0 0.0
  %1645 = vmatprep.subr.mxu0 0.0
  %1646 = vmatpush1.msra.mxu0 0.0
  %1647 = vmatprep.subr.mxu0 0.0
  %1648 = vmatpush1.msra.mxu0 0.0
  %1649 = vmatprep.subr.mxu0 0.0
  %1650 = vmatpush1.msra.mxu0 0.0
  %1651 = vmatprep.subr.mxu0 0.0
  %1652 = vmatpush1.msra.mxu0 0.0
  %1653 = vmatprep.subr.mxu0 0.0
  %1654 = vmatpush1.msra.mxu0 0.0
  %1655 = vmatprep.subr.mxu0 0.0
  %1656 = vmatpush1.msra.mxu0 0.0
  %1657 = vmatprep.subr.mxu0 0.0
  %1658 = vmatpush1.msra.mxu0 0.0
  %1659 = vmatprep.subr.mxu0 0.0
  %1660 = vmatpush1.msra.mxu0 0.0
  %1661 = vmatprep.subr.mxu0 0.0
  %1662 = vmatpush1.msra.mxu0 0.0
  %1663 = vmatprep.subr.mxu0 0.0
  %1664 = vmatpush1.msra.mxu0 0.0
  %1665 = vmatprep.subr.mxu0 0.0
  %1666 = vmatpush1.msra.mxu0 0.0
  %1667 = vmatprep.subr.mxu0 0.0
  %1668 = vmatpush1.msra.mxu0 0.0
  %1669 = vmatprep.subr.mxu0 0.0
  %1670 = vmatpush1.msra.mxu0 0.0
  %1671 = vmatprep.subr.mxu0 0.0
  %1672 = vmatpush1.msra.mxu0 0.0
  %1673 = vmatprep.subr.mxu0 0.0
  %1674 = vmatpush1.msra.mxu0 0.0
  %1675 = vmatprep.subr.mxu0 0.0
  %1676 = vmatpush1.msra.mxu0 0.0
  %1677 = vmatprep.subr.mxu0 0.0
  %1678 = vmatpush1.msra.mxu0 0.0
  %1679 = vmatprep.subr.mxu0 0.0
  %1680 = vmatpush1.msra.mxu0 0.0
  %1681 = vmatprep.subr.mxu0 0.0
  %1682 = vmatpush1.msra.mxu0 0.0
  %1683 = vmatprep.subr.mxu0 0.0
  %1684 = vmatpush1.msra.mxu0 0.0
  %1685 = vmatprep.subr.mxu0 0.0
  %1686 = vmatpush1.msra.mxu0 0.0
  %1687 = vmatprep.subr.mxu0 0.0
  %1688 = vmatpush1.msra.mxu0 0.0
  %1689 = vmatprep.subr.mxu0 0.0
  %1690 = vmatpush1.msra.mxu0 0.0
  %1691 = vmatprep.subr.mxu0 0.0
  %1692 = vmatpush1.msra.mxu0 0.0
  %1693 = vmatprep.subr.mxu0 0.0
  %1694 = vmatpush1.msra.mxu0 0.0
  %1695 = vmatprep.subr.mxu0 0.0
  %1696 = vmatpush1.msra.mxu0 0.0
  %1697 = vmatprep.mubr.f32.mxu0 0.0
  %1698 = vmatmul.mubr.f32.gmra.mrb[0].mxu0 %v1631
  %v1699 = vpop.f32.mrb[0].mxu0
  %v1700 = vadd.f32 %v1630, %v1699
  %v1701 = vpop.f32.mrb[0].mxu0
  %1702 = vdwg.mxu0
  %v1703 = vld [vmem:[%s1 + $0x98] sm:$0x1]
  %v1704 = vlaneseq
  %v1705 = vshrl.u32 %v1704, 7
  %v1706 = vsub.s32 0, %v1705
  %v1707 = vrot.slane %v1703, %v1706
  %v1708 = vadd.f32 %v1707, %v1700
  %v1709 = vxor.u32 %v1708, 2147483648
  %v1710 = vmul.f32 %v1709, 1.442695
  %v1711 = vpow.pop %v1710
  %v1712 = vadd.f32 %v1711, 1.0
  %v1713 = vrcp.pop %v1712
  %v1714 = vmul.f32 1.0, %v1713
  %1716 = vrot.lane.b32.xlu0 %v1700, 112
  %v1717 = vpop.permute.xlu0 %1716
  %v1719 = vmul.f32 %v1714, %v1717
  %1721 = vrot.lane.b32.xlu0 %v1719, 16
  %v1722 = vpop.permute.xlu0 %1721
  %v1724 = vadd.f32 %v1707, %v1722
  %v1725 = vtanh.pop %v1724
  %v1726 = vsub.f32 1.0, %v1714
  %1728 = vrot.lane.b32.xlu0 %v1725, 120
  %v1729 = vpop.permute.xlu0 %1728
  %v1731 = vmul.f32 %v1726, %v1729
  %1732 = vrot.lane.b32.xlu0 %v1619, 8
  %v1733 = vpop.permute.xlu0 %1732
  %v1735 = vmul.f32 %v1714, %v1733
  %v1736 = vadd.f32 %v1731, %v1735
  %v1737 = vld [vmem:[%s1 + $0xb0] sm:$0xff]
  %v1738 = vld [vmem:[%s1 + $0xb8] sm:$0x1]
  %v1739 = vlaneseq
  %v1740 = vshrl.u32 %v1739, 7
  %v1741 = vsub.s32 0, %v1740
  %v1742 = vrot.slane %v1738, %v1741
  %1744 = vrot.lane.b32.xlu0 %v1736, 120
  %v1745 = vpop.permute.xlu0 %1744
  %v1746 = vsel %vm361, %v1745, 0
  %1748 = vmatprep.subr.mxu0 0.0
  %1749 = vmatpush1.msra.mxu0 %v1737
  %1750 = vmatprep.subr.mxu0 0.0
  %1751 = vmatpush1.msra.mxu0 0.0
  %1752 = vmatprep.subr.mxu0 0.0
  %1753 = vmatpush1.msra.mxu0 0.0
  %1754 = vmatprep.subr.mxu0 0.0
  %1755 = vmatpush1.msra.mxu0 0.0
  %1756 = vmatprep.subr.mxu0 0.0
  %1757 = vmatpush1.msra.mxu0 0.0
  %1758 = vmatprep.subr.mxu0 0.0
  %1759 = vmatpush1.msra.mxu0 0.0
  %1760 = vmatprep.subr.mxu0 0.0
  %1761 = vmatpush1.msra.mxu0 0.0
  %1762 = vmatprep.subr.mxu0 0.0
  %1763 = vmatpush1.msra.mxu0 0.0
  %1764 = vmatprep.subr.mxu0 0.0
  %1765 = vmatpush1.msra.mxu0 0.0
  %1766 = vmatprep.subr.mxu0 0.0
  %1767 = vmatpush1.msra.mxu0 0.0
  %1768 = vmatprep.subr.mxu0 0.0
  %1769 = vmatpush1.msra.mxu0 0.0
  %1770 = vmatprep.subr.mxu0 0.0
  %1771 = vmatpush1.msra.mxu0 0.0
  %1772 = vmatprep.subr.mxu0 0.0
  %1773 = vmatpush1.msra.mxu0 0.0
  %1774 = vmatprep.subr.mxu0 0.0
  %1775 = vmatpush1.msra.mxu0 0.0
  %1776 = vmatprep.subr.mxu0 0.0
  %1777 = vmatpush1.msra.mxu0 0.0
  %1778 = vmatprep.subr.mxu0 0.0
  %1779 = vmatpush1.msra.mxu0 0.0
  %1780 = vmatprep.subr.mxu0 0.0
  %1781 = vmatpush1.msra.mxu0 0.0
  %1782 = vmatprep.subr.mxu0 0.0
  %1783 = vmatpush1.msra.mxu0 0.0
  %1784 = vmatprep.subr.mxu0 0.0
  %1785 = vmatpush1.msra.mxu0 0.0
  %1786 = vmatprep.subr.mxu0 0.0
  %1787 = vmatpush1.msra.mxu0 0.0
  %1788 = vmatprep.subr.mxu0 0.0
  %1789 = vmatpush1.msra.mxu0 0.0
  %1790 = vmatprep.subr.mxu0 0.0
  %1791 = vmatpush1.msra.mxu0 0.0
  %1792 = vmatprep.subr.mxu0 0.0
  %1793 = vmatpush1.msra.mxu0 0.0
  %1794 = vmatprep.subr.mxu0 0.0
  %1795 = vmatpush1.msra.mxu0 0.0
  %1796 = vmatprep.subr.mxu0 0.0
  %1797 = vmatpush1.msra.mxu0 0.0
  %1798 = vmatprep.subr.mxu0 0.0
  %1799 = vmatpush1.msra.mxu0 0.0
  %1800 = vmatprep.subr.mxu0 0.0
  %1801 = vmatpush1.msra.mxu0 0.0
  %1802 = vmatprep.subr.mxu0 0.0
  %1803 = vmatpush1.msra.mxu0 0.0
  %1804 = vmatprep.subr.mxu0 0.0
  %1805 = vmatpush1.msra.mxu0 0.0
  %1806 = vmatprep.subr.mxu0 0.0
  %1807 = vmatpush1.msra.mxu0 0.0
  %1808 = vmatprep.subr.mxu0 0.0
  %1809 = vmatpush1.msra.mxu0 0.0
  %1810 = vmatprep.subr.mxu0 0.0
  %1811 = vmatpush1.msra.mxu0 0.0
  %1812 = vmatprep.mubr.f32.mxu0 0.0
  %1813 = vmatmul.mubr.f32.gmra.mrb[0].mxu0 %v1746
  %v1814 = vpop.f32.mrb[0].mxu0
  %v1815 = vadd.f32 %v1742, %v1814
  %v1816 = vpop.f32.mrb[0].mxu0
  %1817 = vdwg.mxu0
  %v1818 = vmax.f32 %v1815, 0.0
  %v1819 = vld [vmem:[%s1 + $0x90] sm:$0xff]
  %v1821 = vsel %vm361, %v1818, 0
  %1823 = vmatprep.subr.mxu0 0.0
  %1824 = vmatpush1.msra.mxu0 %v1819
  %1825 = vmatprep.subr.mxu0 0.0
  %1826 = vmatpush1.msra.mxu0 0.0
  %1827 = vmatprep.subr.mxu0 0.0
  %1828 = vmatpush1.msra.mxu0 0.0
  %1829 = vmatprep.subr.mxu0 0.0
  %1830 = vmatpush1.msra.mxu0 0.0
  %1831 = vmatprep.subr.mxu0 0.0
  %1832 = vmatpush1.msra.mxu0 0.0
  %1833 = vmatprep.subr.mxu0 0.0
  %1834 = vmatpush1.msra.mxu0 0.0
  %1835 = vmatprep.subr.mxu0 0.0
  %1836 = vmatpush1.msra.mxu0 0.0
  %1837 = vmatprep.subr.mxu0 0.0
  %1838 = vmatpush1.msra.mxu0 0.0
  %1839 = vmatprep.subr.mxu0 0.0
  %1840 = vmatpush1.msra.mxu0 0.0
  %1841 = vmatprep.subr.mxu0 0.0
  %1842 = vmatpush1.msra.mxu0 0.0
  %1843 = vmatprep.subr.mxu0 0.0
  %1844 = vmatpush1.msra.mxu0 0.0
  %1845 = vmatprep.subr.mxu0 0.0
  %1846 = vmatpush1.msra.mxu0 0.0
  %1847 = vmatprep.subr.mxu0 0.0
  %1848 = vmatpush1.msra.mxu0 0.0
  %1849 = vmatprep.subr.mxu0 0.0
  %1850 = vmatpush1.msra.mxu0 0.0
  %1851 = vmatprep.subr.mxu0 0.0
  %1852 = vmatpush1.msra.mxu0 0.0
  %1853 = vmatprep.subr.mxu0 0.0
  %1854 = vmatpush1.msra.mxu0 0.0
  %1855 = vmatprep.subr.mxu0 0.0
  %1856 = vmatpush1.msra.mxu0 0.0
  %1857 = vmatprep.subr.mxu0 0.0
  %1858 = vmatpush1.msra.mxu0 0.0
  %1859 = vmatprep.subr.mxu0 0.0
  %1860 = vmatpush1.msra.mxu0 0.0
  %1861 = vmatprep.subr.mxu0 0.0
  %1862 = vmatpush1.msra.mxu0 0.0
  %1863 = vmatprep.subr.mxu0 0.0
  %1864 = vmatpush1.msra.mxu0 0.0
  %1865 = vmatprep.subr.mxu0 0.0
  %1866 = vmatpush1.msra.mxu0 0.0
  %1867 = vmatprep.subr.mxu0 0.0
  %1868 = vmatpush1.msra.mxu0 0.0
  %1869 = vmatprep.subr.mxu0 0.0
  %1870 = vmatpush1.msra.mxu0 0.0
  %1871 = vmatprep.subr.mxu0 0.0
  %1872 = vmatpush1.msra.mxu0 0.0
  %1873 = vmatprep.subr.mxu0 0.0
  %1874 = vmatpush1.msra.mxu0 0.0
  %1875 = vmatprep.subr.mxu0 0.0
  %1876 = vmatpush1.msra.mxu0 0.0
  %1877 = vmatprep.subr.mxu0 0.0
  %1878 = vmatpush1.msra.mxu0 0.0
  %1879 = vmatprep.subr.mxu0 0.0
  %1880 = vmatpush1.msra.mxu0 0.0
  %1881 = vmatprep.subr.mxu0 0.0
  %1882 = vmatpush1.msra.mxu0 0.0
  %1883 = vmatprep.subr.mxu0 0.0
  %1884 = vmatpush1.msra.mxu0 0.0
  %1885 = vmatprep.subr.mxu0 0.0
  %1886 = vmatpush1.msra.mxu0 0.0
  %1887 = vmatprep.mubr.f32.mxu0 0.0
  %1888 = vmatmul.mubr.f32.gmra.mrb[0].mxu0 %v1821
  %v1889 = vpop.f32.mrb[0].mxu0
  %v1890 = vadd.f32 %v1707, %v1889
  %v1891 = vpop.f32.mrb[0].mxu0
  %1892 = vdwg.mxu0
  %1894 = vrot.lane.b32.xlu0 %v1815, 120
  %v1895 = vpop.permute.xlu0 %1894
  %v1897 = vadd.f32 %v1890, %v1895
  %v1898 = vxor.u32 %v1897, 2147483648
  %v1899 = vmul.f32 %v1898, 1.442695
  %v1900 = vpow.pop %v1899
  %v1901 = vadd.f32 %v1900, 1.0
  %v1902 = vrcp.pop %v1901
  %v1903 = vmul.f32 1.0, %v1902
  %1904 = vrot.lane.b32.xlu0 %v1815, 104
  %v1905 = vpop.permute.xlu0 %1904
  %v1907 = vmul.f32 %v1903, %v1905
  %1909 = vrot.lane.b32.xlu0 %v1907, 16
  %v1910 = vpop.permute.xlu0 %1909
  %v1912 = vadd.f32 %v1890, %v1910
  %v1913 = vtanh.pop %v1912
  %v1914 = vsub.f32 1.0, %v1903
  %1916 = vrot.lane.b32.xlu0 %v1913, 120
  %v1917 = vpop.permute.xlu0 %1916
  %v1919 = vmul.f32 %v1914, %v1917
  %v1920 = vmul.f32 %v1903, %v1736
  %v1921 = vadd.f32 %v1919, %v1920
  %1923 = vrot.lane.b32.xlu0 %v1921, 120
  %v1924 = vpop.permute.xlu0 %1923
  %v1925 = vsel %vm361, %v1924, 0
  %1927 = vmatprep.subr.mxu0 0.0
  %1928 = vmatpush1.msra.mxu0 %v1737
  %1929 = vmatprep.subr.mxu0 0.0
  %1930 = vmatpush1.msra.mxu0 0.0
  %1931 = vmatprep.subr.mxu0 0.0
  %1932 = vmatpush1.msra.mxu0 0.0
  %1933 = vmatprep.subr.mxu0 0.0
  %1934 = vmatpush1.msra.mxu0 0.0
  %1935 = vmatprep.subr.mxu0 0.0
  %1936 = vmatpush1.msra.mxu0 0.0
  %1937 = vmatprep.subr.mxu0 0.0
  %1938 = vmatpush1.msra.mxu0 0.0
  %1939 = vmatprep.subr.mxu0 0.0
  %1940 = vmatpush1.msra.mxu0 0.0
  %1941 = vmatprep.subr.mxu0 0.0
  %1942 = vmatpush1.msra.mxu0 0.0
  %1943 = vmatprep.subr.mxu0 0.0
  %1944 = vmatpush1.msra.mxu0 0.0
  %1945 = vmatprep.subr.mxu0 0.0
  %1946 = vmatpush1.msra.mxu0 0.0
  %1947 = vmatprep.subr.mxu0 0.0
  %1948 = vmatpush1.msra.mxu0 0.0
  %1949 = vmatprep.subr.mxu0 0.0
  %1950 = vmatpush1.msra.mxu0 0.0
  %1951 = vmatprep.subr.mxu0 0.0
  %1952 = vmatpush1.msra.mxu0 0.0
  %1953 = vmatprep.subr.mxu0 0.0
  %1954 = vmatpush1.msra.mxu0 0.0
  %1955 = vmatprep.subr.mxu0 0.0
  %1956 = vmatpush1.msra.mxu0 0.0
  %1957 = vmatprep.subr.mxu0 0.0
  %1958 = vmatpush1.msra.mxu0 0.0
  %1959 = vmatprep.subr.mxu0 0.0
  %1960 = vmatpush1.msra.mxu0 0.0
  %1961 = vmatprep.subr.mxu0 0.0
  %1962 = vmatpush1.msra.mxu0 0.0
  %1963 = vmatprep.subr.mxu0 0.0
  %1964 = vmatpush1.msra.mxu0 0.0
  %1965 = vmatprep.subr.mxu0 0.0
  %1966 = vmatpush1.msra.mxu0 0.0
  %1967 = vmatprep.subr.mxu0 0.0
  %1968 = vmatpush1.msra.mxu0 0.0
  %1969 = vmatprep.subr.mxu0 0.0
  %1970 = vmatpush1.msra.mxu0 0.0
  %1971 = vmatprep.subr.mxu0 0.0
  %1972 = vmatpush1.msra.mxu0 0.0
  %1973 = vmatprep.subr.mxu0 0.0
  %1974 = vmatpush1.msra.mxu0 0.0
  %1975 = vmatprep.subr.mxu0 0.0
  %1976 = vmatpush1.msra.mxu0 0.0
  %1977 = vmatprep.subr.mxu0 0.0
  %1978 = vmatpush1.msra.mxu0 0.0
  %1979 = vmatprep.subr.mxu0 0.0
  %1980 = vmatpush1.msra.mxu0 0.0
  %1981 = vmatprep.subr.mxu0 0.0
  %1982 = vmatpush1.msra.mxu0 0.0
  %1983 = vmatprep.subr.mxu0 0.0
  %1984 = vmatpush1.msra.mxu0 0.0
  %1985 = vmatprep.subr.mxu0 0.0
  %1986 = vmatpush1.msra.mxu0 0.0
  %1987 = vmatprep.subr.mxu0 0.0
  %1988 = vmatpush1.msra.mxu0 0.0
  %1989 = vmatprep.subr.mxu0 0.0
  %1990 = vmatpush1.msra.mxu0 0.0
  %1991 = vmatprep.mubr.f32.mxu0 0.0
  %1992 = vmatmul.mubr.f32.gmra.mrb[0].mxu0 %v1925
  %v1993 = vpop.f32.mrb[0].mxu0
  %v1994 = vadd.f32 %v1742, %v1993
  %v1995 = vpop.f32.mrb[0].mxu0
  %1996 = vdwg.mxu0
  %v1997 = vmax.f32 %v1994, 0.0
  %v1999 = vsel %vm361, %v1997, 0
  %2001 = vmatprep.subr.mxu0 0.0
  %2002 = vmatpush1.msra.mxu0 %v1819
  %2003 = vmatprep.subr.mxu0 0.0
  %2004 = vmatpush1.msra.mxu0 0.0
  %2005 = vmatprep.subr.mxu0 0.0
  %2006 = vmatpush1.msra.mxu0 0.0
  %2007 = vmatprep.subr.mxu0 0.0
  %2008 = vmatpush1.msra.mxu0 0.0
  %2009 = vmatprep.subr.mxu0 0.0
  %2010 = vmatpush1.msra.mxu0 0.0
  %2011 = vmatprep.subr.mxu0 0.0
  %2012 = vmatpush1.msra.mxu0 0.0
  %2013 = vmatprep.subr.mxu0 0.0
  %2014 = vmatpush1.msra.mxu0 0.0
  %2015 = vmatprep.subr.mxu0 0.0
  %2016 = vmatpush1.msra.mxu0 0.0
  %2017 = vmatprep.subr.mxu0 0.0
  %2018 = vmatpush1.msra.mxu0 0.0
  %2019 = vmatprep.subr.mxu0 0.0
  %2020 = vmatpush1.msra.mxu0 0.0
  %2021 = vmatprep.subr.mxu0 0.0
  %2022 = vmatpush1.msra.mxu0 0.0
  %2023 = vmatprep.subr.mxu0 0.0
  %2024 = vmatpush1.msra.mxu0 0.0
  %2025 = vmatprep.subr.mxu0 0.0
  %2026 = vmatpush1.msra.mxu0 0.0
  %2027 = vmatprep.subr.mxu0 0.0
  %2028 = vmatpush1.msra.mxu0 0.0
  %2029 = vmatprep.subr.mxu0 0.0
  %2030 = vmatpush1.msra.mxu0 0.0
  %2031 = vmatprep.subr.mxu0 0.0
  %2032 = vmatpush1.msra.mxu0 0.0
  %2033 = vmatprep.subr.mxu0 0.0
  %2034 = vmatpush1.msra.mxu0 0.0
  %2035 = vmatprep.subr.mxu0 0.0
  %2036 = vmatpush1.msra.mxu0 0.0
  %2037 = vmatprep.subr.mxu0 0.0
  %2038 = vmatpush1.msra.mxu0 0.0
  %2039 = vmatprep.subr.mxu0 0.0
  %2040 = vmatpush1.msra.mxu0 0.0
  %2041 = vmatprep.subr.mxu0 0.0
  %2042 = vmatpush1.msra.mxu0 0.0
  %2043 = vmatprep.subr.mxu0 0.0
  %2044 = vmatpush1.msra.mxu0 0.0
  %2045 = vmatprep.subr.mxu0 0.0
  %2046 = vmatpush1.msra.mxu0 0.0
  %2047 = vmatprep.subr.mxu0 0.0
  %2048 = vmatpush1.msra.mxu0 0.0
  %2049 = vmatprep.subr.mxu0 0.0
  %2050 = vmatpush1.msra.mxu0 0.0
  %2051 = vmatprep.subr.mxu0 0.0
  %2052 = vmatpush1.msra.mxu0 0.0
  %2053 = vmatprep.subr.mxu0 0.0
  %2054 = vmatpush1.msra.mxu0 0.0
  %2055 = vmatprep.subr.mxu0 0.0
  %2056 = vmatpush1.msra.mxu0 0.0
  %2057 = vmatprep.subr.mxu0 0.0
  %2058 = vmatpush1.msra.mxu0 0.0
  %2059 = vmatprep.subr.mxu0 0.0
  %2060 = vmatpush1.msra.mxu0 0.0
  %2061 = vmatprep.subr.mxu0 0.0
  %2062 = vmatpush1.msra.mxu0 0.0
  %2063 = vmatprep.subr.mxu0 0.0
  %2064 = vmatpush1.msra.mxu0 0.0
  %2065 = vmatprep.mubr.f32.mxu0 0.0
  %2066 = vmatmul.mubr.f32.gmra.mrb[0].mxu0 %v1999
  %v2067 = vpop.f32.mrb[0].mxu0
  %v2068 = vadd.f32 %v1707, %v2067
  %v2069 = vpop.f32.mrb[0].mxu0
  %2070 = vdwg.mxu0
  %2072 = vrot.lane.b32.xlu0 %v1994, 120
  %v2073 = vpop.permute.xlu0 %2072
  %v2075 = vadd.f32 %v2068, %v2073
  %v2076 = vxor.u32 %v2075, 2147483648
  %v2077 = vmul.f32 %v2076, 1.442695
  %v2078 = vpow.pop %v2077
  %v2079 = vadd.f32 %v2078, 1.0
  %v2080 = vrcp.pop %v2079
  %v2081 = vmul.f32 1.0, %v2080
  %2082 = vrot.lane.b32.xlu0 %v1994, 104
  %v2083 = vpop.permute.xlu0 %2082
  %v2085 = vmul.f32 %v2081, %v2083
  %2087 = vrot.lane.b32.xlu0 %v2085, 16
  %v2088 = vpop.permute.xlu0 %2087
  %v2090 = vadd.f32 %v2068, %v2088
  %v2091 = vtanh.pop %v2090
  %v2092 = vsub.f32 1.0, %v2081
  %2094 = vrot.lane.b32.xlu0 %v2091, 120
  %v2095 = vpop.permute.xlu0 %2094
  %v2097 = vmul.f32 %v2092, %v2095
  %v2098 = vmul.f32 %v2081, %v1921
  %v2099 = vadd.f32 %v2097, %v2098
  %2101 = vrot.lane.b32.xlu0 %v2099, 120
  %v2102 = vpop.permute.xlu0 %2101
  %v2103 = vsel %vm361, %v2102, 0
  %2105 = vmatprep.subr.mxu0 0.0
  %2106 = vmatpush1.msra.mxu0 %v1737
  %2107 = vmatprep.subr.mxu0 0.0
  %2108 = vmatpush1.msra.mxu0 0.0
  %2109 = vmatprep.subr.mxu0 0.0
  %2110 = vmatpush1.msra.mxu0 0.0
  %2111 = vmatprep.subr.mxu0 0.0
  %2112 = vmatpush1.msra.mxu0 0.0
  %2113 = vmatprep.subr.mxu0 0.0
  %2114 = vmatpush1.msra.mxu0 0.0
  %2115 = vmatprep.subr.mxu0 0.0
  %2116 = vmatpush1.msra.mxu0 0.0
  %2117 = vmatprep.subr.mxu0 0.0
  %2118 = vmatpush1.msra.mxu0 0.0
  %2119 = vmatprep.subr.mxu0 0.0
  %2120 = vmatpush1.msra.mxu0 0.0
  %2121 = vmatprep.subr.mxu0 0.0
  %2122 = vmatpush1.msra.mxu0 0.0
  %2123 = vmatprep.subr.mxu0 0.0
  %2124 = vmatpush1.msra.mxu0 0.0
  %2125 = vmatprep.subr.mxu0 0.0
  %2126 = vmatpush1.msra.mxu0 0.0
  %2127 = vmatprep.subr.mxu0 0.0
  %2128 = vmatpush1.msra.mxu0 0.0
  %2129 = vmatprep.subr.mxu0 0.0
  %2130 = vmatpush1.msra.mxu0 0.0
  %2131 = vmatprep.subr.mxu0 0.0
  %2132 = vmatpush1.msra.mxu0 0.0
  %2133 = vmatprep.subr.mxu0 0.0
  %2134 = vmatpush1.msra.mxu0 0.0
  %2135 = vmatprep.subr.mxu0 0.0
  %2136 = vmatpush1.msra.mxu0 0.0
  %2137 = vmatprep.subr.mxu0 0.0
  %2138 = vmatpush1.msra.mxu0 0.0
  %2139 = vmatprep.subr.mxu0 0.0
  %2140 = vmatpush1.msra.mxu0 0.0
  %2141 = vmatprep.subr.mxu0 0.0
  %2142 = vmatpush1.msra.mxu0 0.0
  %2143 = vmatprep.subr.mxu0 0.0
  %2144 = vmatpush1.msra.mxu0 0.0
  %2145 = vmatprep.subr.mxu0 0.0
  %2146 = vmatpush1.msra.mxu0 0.0
  %2147 = vmatprep.subr.mxu0 0.0
  %2148 = vmatpush1.msra.mxu0 0.0
  %2149 = vmatprep.subr.mxu0 0.0
  %2150 = vmatpush1.msra.mxu0 0.0
  %2151 = vmatprep.subr.mxu0 0.0
  %2152 = vmatpush1.msra.mxu0 0.0
  %2153 = vmatprep.subr.mxu0 0.0
  %2154 = vmatpush1.msra.mxu0 0.0
  %2155 = vmatprep.subr.mxu0 0.0
  %2156 = vmatpush1.msra.mxu0 0.0
  %2157 = vmatprep.subr.mxu0 0.0
  %2158 = vmatpush1.msra.mxu0 0.0
  %2159 = vmatprep.subr.mxu0 0.0
  %2160 = vmatpush1.msra.mxu0 0.0
  %2161 = vmatprep.subr.mxu0 0.0
  %2162 = vmatpush1.msra.mxu0 0.0
  %2163 = vmatprep.subr.mxu0 0.0
  %2164 = vmatpush1.msra.mxu0 0.0
  %2165 = vmatprep.subr.mxu0 0.0
  %2166 = vmatpush1.msra.mxu0 0.0
  %2167 = vmatprep.subr.mxu0 0.0
  %2168 = vmatpush1.msra.mxu0 0.0
  %2169 = vmatprep.mubr.f32.mxu0 0.0
  %2170 = vmatmul.mubr.f32.gmra.mrb[0].mxu0 %v2103
  %v2171 = vpop.f32.mrb[0].mxu0
  %v2172 = vadd.f32 %v1742, %v2171
  %v2173 = vpop.f32.mrb[0].mxu0
  %2174 = vdwg.mxu0
  %v2175 = vmax.f32 %v2172, 0.0
  %v2177 = vsel %vm361, %v2175, 0
  %2179 = vmatprep.subr.mxu0 0.0
  %2180 = vmatpush1.msra.mxu0 %v1819
  %2181 = vmatprep.subr.mxu0 0.0
  %2182 = vmatpush1.msra.mxu0 0.0
  %2183 = vmatprep.subr.mxu0 0.0
  %2184 = vmatpush1.msra.mxu0 0.0
  %2185 = vmatprep.subr.mxu0 0.0
  %2186 = vmatpush1.msra.mxu0 0.0
  %2187 = vmatprep.subr.mxu0 0.0
  %2188 = vmatpush1.msra.mxu0 0.0
  %2189 = vmatprep.subr.mxu0 0.0
  %2190 = vmatpush1.msra.mxu0 0.0
  %2191 = vmatprep.subr.mxu0 0.0
  %2192 = vmatpush1.msra.mxu0 0.0
  %2193 = vmatprep.subr.mxu0 0.0
  %2194 = vmatpush1.msra.mxu0 0.0
  %2195 = vmatprep.subr.mxu0 0.0
  %2196 = vmatpush1.msra.mxu0 0.0
  %2197 = vmatprep.subr.mxu0 0.0
  %2198 = vmatpush1.msra.mxu0 0.0
  %2199 = vmatprep.subr.mxu0 0.0
  %2200 = vmatpush1.msra.mxu0 0.0
  %2201 = vmatprep.subr.mxu0 0.0
  %2202 = vmatpush1.msra.mxu0 0.0
  %2203 = vmatprep.subr.mxu0 0.0
  %2204 = vmatpush1.msra.mxu0 0.0
  %2205 = vmatprep.subr.mxu0 0.0
  %2206 = vmatpush1.msra.mxu0 0.0
  %2207 = vmatprep.subr.mxu0 0.0
  %2208 = vmatpush1.msra.mxu0 0.0
  %2209 = vmatprep.subr.mxu0 0.0
  %2210 = vmatpush1.msra.mxu0 0.0
  %2211 = vmatprep.subr.mxu0 0.0
  %2212 = vmatpush1.msra.mxu0 0.0
  %2213 = vmatprep.subr.mxu0 0.0
  %2214 = vmatpush1.msra.mxu0 0.0
  %2215 = vmatprep.subr.mxu0 0.0
  %2216 = vmatpush1.msra.mxu0 0.0
  %2217 = vmatprep.subr.mxu0 0.0
  %2218 = vmatpush1.msra.mxu0 0.0
  %2219 = vmatprep.subr.mxu0 0.0
  %2220 = vmatpush1.msra.mxu0 0.0
  %2221 = vmatprep.subr.mxu0 0.0
  %2222 = vmatpush1.msra.mxu0 0.0
  %2223 = vmatprep.subr.mxu0 0.0
  %2224 = vmatpush1.msra.mxu0 0.0
  %2225 = vmatprep.subr.mxu0 0.0
  %2226 = vmatpush1.msra.mxu0 0.0
  %2227 = vmatprep.subr.mxu0 0.0
  %2228 = vmatpush1.msra.mxu0 0.0
  %2229 = vmatprep.subr.mxu0 0.0
  %2230 = vmatpush1.msra.mxu0 0.0
  %2231 = vmatprep.subr.mxu0 0.0
  %2232 = vmatpush1.msra.mxu0 0.0
  %2233 = vmatprep.subr.mxu0 0.0
  %2234 = vmatpush1.msra.mxu0 0.0
  %2235 = vmatprep.subr.mxu0 0.0
  %2236 = vmatpush1.msra.mxu0 0.0
  %2237 = vmatprep.subr.mxu0 0.0
  %2238 = vmatpush1.msra.mxu0 0.0
  %2239 = vmatprep.subr.mxu0 0.0
  %2240 = vmatpush1.msra.mxu0 0.0
  %2241 = vmatprep.subr.mxu0 0.0
  %2242 = vmatpush1.msra.mxu0 0.0
  %2243 = vmatprep.mubr.f32.mxu0 0.0
  %2244 = vmatmul.mubr.f32.gmra.mrb[0].mxu0 %v2177
  %v2245 = vpop.f32.mrb[0].mxu0
  %v2246 = vadd.f32 %v1707, %v2245
  %v2247 = vpop.f32.mrb[0].mxu0
  %2248 = vdwg.mxu0
  %2250 = vrot.lane.b32.xlu0 %v2172, 120
  %v2251 = vpop.permute.xlu0 %2250
  %v2253 = vadd.f32 %v2246, %v2251
  %v2254 = vxor.u32 %v2253, 2147483648
  %v2255 = vmul.f32 %v2254, 1.442695
  %v2256 = vpow.pop %v2255
  %v2257 = vadd.f32 %v2256, 1.0
  %v2258 = vrcp.pop %v2257
  %v2259 = vmul.f32 1.0, %v2258
  %2260 = vrot.lane.b32.xlu0 %v2172, 104
  %v2261 = vpop.permute.xlu0 %2260
  %v2263 = vmul.f32 %v2259, %v2261
  %2265 = vrot.lane.b32.xlu0 %v2263, 16
  %v2266 = vpop.permute.xlu0 %2265
  %v2268 = vadd.f32 %v2246, %v2266
  %v2269 = vtanh.pop %v2268
  %v2270 = vsub.f32 1.0, %v2259
  %2272 = vrot.lane.b32.xlu0 %v2269, 120
  %v2273 = vpop.permute.xlu0 %2272
  %v2275 = vmul.f32 %v2270, %v2273
  %v2276 = vmul.f32 %v2259, %v2099
  %v2277 = vadd.f32 %v2275, %v2276
  %v2278 = vld [vmem:[%s1 + $0xc0] sm:$0xff]
  %v2279 = vld [vmem:[%s1 + $0xc8] sm:$0x1]
  %v2280 = vlaneseq
  %v2281 = vshrl.u32 %v2280, 7
  %v2282 = vsub.s32 0, %v2281
  %v2283 = vrot.slane %v2279, %v2282
  %2285 = vrot.lane.b32.xlu0 %v2277, 120
  %v2286 = vpop.permute.xlu0 %2285
  %v2287 = vsel %vm361, %v2286, 0
  %2289 = vmatprep.subr.mxu0 0.0
  %2290 = vmatpush1.msra.mxu0 %v2278
  %2291 = vmatprep.subr.mxu0 0.0
  %2292 = vmatpush1.msra.mxu0 0.0
  %2293 = vmatprep.subr.mxu0 0.0
  %2294 = vmatpush1.msra.mxu0 0.0
  %2295 = vmatprep.subr.mxu0 0.0
  %2296 = vmatpush1.msra.mxu0 0.0
  %2297 = vmatprep.subr.mxu0 0.0
  %2298 = vmatpush1.msra.mxu0 0.0
  %2299 = vmatprep.subr.mxu0 0.0
  %2300 = vmatpush1.msra.mxu0 0.0
  %2301 = vmatprep.subr.mxu0 0.0
  %2302 = vmatpush1.msra.mxu0 0.0
  %2303 = vmatprep.subr.mxu0 0.0
  %2304 = vmatpush1.msra.mxu0 0.0
  %2305 = vmatprep.subr.mxu0 0.0
  %2306 = vmatpush1.msra.mxu0 0.0
  %2307 = vmatprep.subr.mxu0 0.0
  %2308 = vmatpush1.msra.mxu0 0.0
  %2309 = vmatprep.subr.mxu0 0.0
  %2310 = vmatpush1.msra.mxu0 0.0
  %2311 = vmatprep.subr.mxu0 0.0
  %2312 = vmatpush1.msra.mxu0 0.0
  %2313 = vmatprep.subr.mxu0 0.0
  %2314 = vmatpush1.msra.mxu0 0.0
  %2315 = vmatprep.subr.mxu0 0.0
  %2316 = vmatpush1.msra.mxu0 0.0
  %2317 = vmatprep.subr.mxu0 0.0
  %2318 = vmatpush1.msra.mxu0 0.0
  %2319 = vmatprep.subr.mxu0 0.0
  %2320 = vmatpush1.msra.mxu0 0.0
  %2321 = vmatprep.subr.mxu0 0.0
  %2322 = vmatpush1.msra.mxu0 0.0
  %2323 = vmatprep.subr.mxu0 0.0
  %2324 = vmatpush1.msra.mxu0 0.0
  %2325 = vmatprep.subr.mxu0 0.0
  %2326 = vmatpush1.msra.mxu0 0.0
  %2327 = vmatprep.subr.mxu0 0.0
  %2328 = vmatpush1.msra.mxu0 0.0
  %2329 = vmatprep.subr.mxu0 0.0
  %2330 = vmatpush1.msra.mxu0 0.0
  %2331 = vmatprep.subr.mxu0 0.0
  %2332 = vmatpush1.msra.mxu0 0.0
  %2333 = vmatprep.subr.mxu0 0.0
  %2334 = vmatpush1.msra.mxu0 0.0
  %2335 = vmatprep.subr.mxu0 0.0
  %2336 = vmatpush1.msra.mxu0 0.0
  %2337 = vmatprep.subr.mxu0 0.0
  %2338 = vmatpush1.msra.mxu0 0.0
  %2339 = vmatprep.subr.mxu0 0.0
  %2340 = vmatpush1.msra.mxu0 0.0
  %2341 = vmatprep.subr.mxu0 0.0
  %2342 = vmatpush1.msra.mxu0 0.0
  %2343 = vmatprep.subr.mxu0 0.0
  %2344 = vmatpush1.msra.mxu0 0.0
  %2345 = vmatprep.subr.mxu0 0.0
  %2346 = vmatpush1.msra.mxu0 0.0
  %2347 = vmatprep.subr.mxu0 0.0
  %2348 = vmatpush1.msra.mxu0 0.0
  %2349 = vmatprep.subr.mxu0 0.0
  %2350 = vmatpush1.msra.mxu0 0.0
  %2351 = vmatprep.subr.mxu0 0.0
  %2352 = vmatpush1.msra.mxu0 0.0
  %2353 = vmatprep.mubr.f32.mxu0 0.0
  %2354 = vmatmul.mubr.f32.gmra.mrb[0].mxu0 %v1746
  %v2355 = vpop.f32.mrb[0].mxu0
  %v2356 = vadd.f32 %v2283, %v2355
  %v2357 = vpop.f32.mrb[0].mxu0
  %2358 = vmatprep.mubr.f32.mxu0 0.0
  %2359 = vmatmul.mubr.f32.gmra.mrb[0].mxu0 %v1925
  %v2360 = vpop.f32.mrb[0].mxu0
  %v2361 = vadd.f32 %v2283, %v2360
  %v2362 = vpop.f32.mrb[0].mxu0
  %2363 = vmatprep.mubr.f32.mxu0 0.0
  %2364 = vmatmul.mubr.f32.gmra.mrb[0].mxu0 %v2103
  %v2365 = vpop.f32.mrb[0].mxu0
  %v2366 = vadd.f32 %v2283, %v2365
  %v2367 = vpop.f32.mrb[0].mxu0
  %2368 = vmatprep.mubr.f32.mxu0 0.0
  %2369 = vmatmul.mubr.f32.gmra.mrb[0].mxu0 %v2287
  %v2370 = vpop.f32.mrb[0].mxu0
  %v2371 = vadd.f32 %v2283, %v2370
  %v2372 = vpop.f32.mrb[0].mxu0
  %2373 = vdwg.mxu0
  %v2374 = vmax.f32 %v2356, 0.0
  %v2375 = vmax.f32 %v2361, 0.0
  %v2376 = vmax.f32 %v2366, 0.0
  %v2377 = vmax.f32 %v2371, 0.0
  %v2378 = vtanh.pop %v2374
  %v2379 = vtanh.pop %v2375
  %v2380 = vtanh.pop %v2376
  %v2381 = vtanh.pop %v2377
  %v2382 = vld [vmem:[%s1 + $0xd0] sm:$0xff]
  %v2383 = vld [vmem:[%s1 + $0xd8] sm:$0xff]
  %v2384 = vld [vmem:[%s1 + $0xe0] sm:$0x1]
  %v2385 = vlaneseq
  %v2386 = vshrl.u32 %v2385, 7
  %v2387 = vsub.s32 0, %v2386
  %v2388 = vrot.slane %v2384, %v2387
  %2393 = vrot.lane.b32.xlu0 %v2378, 96
  %v2394 = vpop.permute.xlu0 %2393
  %2395 = vrot.lane.b32.xlu0 %v2379, 96
  %v2396 = vpop.permute.xlu0 %2395
  %2397 = vrot.lane.b32.xlu0 %v2380, 96
  %v2398 = vpop.permute.xlu0 %2397
  %2399 = vrot.lane.b32.xlu0 %v2381, 96
  %v2400 = vpop.permute.xlu0 %2399
  %v2401 = vsel %vm1132, %v2394, 0
  %v2403 = vsel %vm1132, %v2396, 0
  %v2405 = vsel %vm1132, %v2398, 0
  %v2407 = vsel %vm1132, %v2400, 0
  %2409 = vmatprep.subr.mxu0 0.0
  %2410 = vmatpush1.msra.mxu0 %v2382
  %2411 = vmatprep.subr.mxu0 0.0
  %2412 = vmatpush1.msra.mxu0 %v2383
  %2413 = vmatprep.subr.mxu0 0.0
  %2414 = vmatpush1.msra.mxu0 0.0
  %2415 = vmatprep.subr.mxu0 0.0
  %2416 = vmatpush1.msra.mxu0 0.0
  %2417 = vmatprep.subr.mxu0 0.0
  %2418 = vmatpush1.msra.mxu0 0.0
  %2419 = vmatprep.subr.mxu0 0.0
  %2420 = vmatpush1.msra.mxu0 0.0
  %2421 = vmatprep.subr.mxu0 0.0
  %2422 = vmatpush1.msra.mxu0 0.0
  %2423 = vmatprep.subr.mxu0 0.0
  %2424 = vmatpush1.msra.mxu0 0.0
  %2425 = vmatprep.subr.mxu0 0.0
  %2426 = vmatpush1.msra.mxu0 0.0
  %2427 = vmatprep.subr.mxu0 0.0
  %2428 = vmatpush1.msra.mxu0 0.0
  %2429 = vmatprep.subr.mxu0 0.0
  %2430 = vmatpush1.msra.mxu0 0.0
  %2431 = vmatprep.subr.mxu0 0.0
  %2432 = vmatpush1.msra.mxu0 0.0
  %2433 = vmatprep.subr.mxu0 0.0
  %2434 = vmatpush1.msra.mxu0 0.0
  %2435 = vmatprep.subr.mxu0 0.0
  %2436 = vmatpush1.msra.mxu0 0.0
  %2437 = vmatprep.subr.mxu0 0.0
  %2438 = vmatpush1.msra.mxu0 0.0
  %2439 = vmatprep.subr.mxu0 0.0
  %2440 = vmatpush1.msra.mxu0 0.0
  %2441 = vmatprep.subr.mxu0 0.0
  %2442 = vmatpush1.msra.mxu0 0.0
  %2443 = vmatprep.subr.mxu0 0.0
  %2444 = vmatpush1.msra.mxu0 0.0
  %2445 = vmatprep.subr.mxu0 0.0
  %2446 = vmatpush1.msra.mxu0 0.0
  %2447 = vmatprep.subr.mxu0 0.0
  %2448 = vmatpush1.msra.mxu0 0.0
  %2449 = vmatprep.subr.mxu0 0.0
  %2450 = vmatpush1.msra.mxu0 0.0
  %2451 = vmatprep.subr.mxu0 0.0
  %2452 = vmatpush1.msra.mxu0 0.0
  %2453 = vmatprep.subr.mxu0 0.0
  %2454 = vmatpush1.msra.mxu0 0.0
  %2455 = vmatprep.subr.mxu0 0.0
  %2456 = vmatpush1.msra.mxu0 0.0
  %2457 = vmatprep.subr.mxu0 0.0
  %2458 = vmatpush1.msra.mxu0 0.0
  %2459 = vmatprep.subr.mxu0 0.0
  %2460 = vmatpush1.msra.mxu0 0.0
  %2461 = vmatprep.subr.mxu0 0.0
  %2462 = vmatpush1.msra.mxu0 0.0
  %2463 = vmatprep.subr.mxu0 0.0
  %2464 = vmatpush1.msra.mxu0 0.0
  %2465 = vmatprep.subr.mxu0 0.0
  %2466 = vmatpush1.msra.mxu0 0.0
  %2467 = vmatprep.subr.mxu0 0.0
  %2468 = vmatpush1.msra.mxu0 0.0
  %2469 = vmatprep.subr.mxu0 0.0
  %2470 = vmatpush1.msra.mxu0 0.0
  %2471 = vmatprep.subr.mxu0 0.0
  %2472 = vmatpush1.msra.mxu0 0.0
  %2473 = vmatprep.mubr.f32.mxu0 0.0
  %2474 = vmatmul.mubr.f32.gmra.mrb[0].mxu0 %v2401
  %v2475 = vpop.f32.mrb[0].mxu0
  %v2476 = vadd.f32 %v2388, %v2475
  %v2477 = vpop.f32.mrb[0].mxu0
  %2478 = vmatprep.mubr.f32.mxu0 0.0
  %2479 = vmatmul.mubr.f32.gmra.mrb[0].mxu0 %v2403
  %v2480 = vpop.f32.mrb[0].mxu0
  %v2481 = vadd.f32 %v2388, %v2480
  %v2482 = vpop.f32.mrb[0].mxu0
  %2483 = vmatprep.mubr.f32.mxu0 0.0
  %2484 = vmatmul.mubr.f32.gmra.mrb[0].mxu0 %v2405
  %v2485 = vpop.f32.mrb[0].mxu0
  %v2486 = vadd.f32 %v2388, %v2485
  %v2487 = vpop.f32.mrb[0].mxu0
  %2488 = vmatprep.mubr.f32.mxu0 0.0
  %2489 = vmatmul.mubr.f32.gmra.mrb[0].mxu0 %v2407
  %v2490 = vpop.f32.mrb[0].mxu0
  %v2491 = vadd.f32 %v2388, %v2490
  %v2492 = vpop.f32.mrb[0].mxu0
  %2493 = vdwg.mxu0
  %v2494 = vmax.f32 %v2476, 0.0
  %v2495 = vmax.f32 %v2481, 0.0
  %v2496 = vmax.f32 %v2486, 0.0
  %v2497 = vmax.f32 %v2491, 0.0
  %2498 = vst.msk [vmem:[#allocation2 + $0x20] sm:$0xff] %vm138, %v2374
  %2499 = vst.msk [vmem:[#allocation2 + $0x28] sm:$0xff] %vm138, %v2375
  %2500 = vst.msk [vmem:[#allocation2 + $0x30] sm:$0xff] %vm138, %v2376
  %2501 = vst.msk [vmem:[#allocation2 + $0x38] sm:$0xff] %vm138, %v2377
  %2503 = vrot.lane.b32.xlu0 %v2374, 88
  %v2504 = vpop.permute.xlu0 %2503
  %2506 = vst.msk [vmem:[#allocation3 + $0x8] sm:$0xff] %vm361, %v2504
  %2508 = vrot.lane.b32.xlu0 %v2494, 127
  %v2509 = vpop.permute.xlu0 %2508
  %2511 = vst.msk [vmem:[#allocation4 + $0x8] sm:$0xff] %vm1243, %v2509
  %2513 = vrot.lane.b32.xlu0 %v2375, 88
  %v2514 = vpop.permute.xlu0 %2513
  %2516 = vst.msk [vmem:[#allocation3 + $0x28] sm:$0xff] %vm361, %v2514
  %2518 = vrot.lane.b32.xlu0 %v2495, 127
  %v2519 = vpop.permute.xlu0 %2518
  %2521 = vst.msk [vmem:[#allocation4 + $0x28] sm:$0xff] %vm1243, %v2519
  %2523 = vrot.lane.b32.xlu0 %v2376, 88
  %v2524 = vpop.permute.xlu0 %2523
  %2526 = vst.msk [vmem:[#allocation3 + $0x48] sm:$0xff] %vm361, %v2524
  %2528 = vrot.lane.b32.xlu0 %v2496, 127
  %v2529 = vpop.permute.xlu0 %2528
  %2531 = vst.msk [vmem:[#allocation4 + $0x48] sm:$0xff] %vm1243, %v2529
  %2533 = vrot.lane.b32.xlu0 %v2377, 88
  %v2534 = vpop.permute.xlu0 %2533
  %2536 = vst.msk [vmem:[#allocation3 + $0x68] sm:$0xff] %vm361, %v2534
  %2538 = vrot.lane.b32.xlu0 %v2497, 127
  %v2539 = vpop.permute.xlu0 %2538
  %2541 = vst.msk [vmem:[#allocation4 + $0x68] sm:$0xff] %vm1243, %v2539
  %v2542 = vld [vmem:[%s1 + $0x30] sm:$0xff]
  %2543 = vrot.lane.b32.xlu0 %v2374, 96
  %v2544 = vpop.permute.xlu0 %2543
  %2545 = vrot.lane.b32.xlu0 %v2375, 96
  %v2546 = vpop.permute.xlu0 %2545
  %2547 = vrot.lane.b32.xlu0 %v2376, 96
  %v2548 = vpop.permute.xlu0 %2547
  %2549 = vrot.lane.b32.xlu0 %v2377, 96
  %v2550 = vpop.permute.xlu0 %2549
  %v2551 = vsel %vm361, %v2544, 0
  %v2553 = vsel %vm361, %v2546, 0
  %v2555 = vsel %vm361, %v2548, 0
  %v2557 = vsel %vm361, %v2550, 0
  %2559 = vmatprep.subr.mxu0 0.0
  %2560 = vmatpush1.msra.mxu0 %v2542
  %2561 = vmatprep.subr.mxu0 0.0
  %2562 = vmatpush1.msra.mxu0 0.0
  %2563 = vmatprep.subr.mxu0 0.0
  %2564 = vmatpush1.msra.mxu0 0.0
  %2565 = vmatprep.subr.mxu0 0.0
  %2566 = vmatpush1.msra.mxu0 0.0
  %2567 = vmatprep.subr.mxu0 0.0
  %2568 = vmatpush1.msra.mxu0 0.0
  %2569 = vmatprep.subr.mxu0 0.0
  %2570 = vmatpush1.msra.mxu0 0.0
  %2571 = vmatprep.subr.mxu0 0.0
  %2572 = vmatpush1.msra.mxu0 0.0
  %2573 = vmatprep.subr.mxu0 0.0
  %2574 = vmatpush1.msra.mxu0 0.0
  %2575 = vmatprep.subr.mxu0 0.0
  %2576 = vmatpush1.msra.mxu0 0.0
  %2577 = vmatprep.subr.mxu0 0.0
  %2578 = vmatpush1.msra.mxu0 0.0
  %2579 = vmatprep.subr.mxu0 0.0
  %2580 = vmatpush1.msra.mxu0 0.0
  %2581 = vmatprep.subr.mxu0 0.0
  %2582 = vmatpush1.msra.mxu0 0.0
  %2583 = vmatprep.subr.mxu0 0.0
  %2584 = vmatpush1.msra.mxu0 0.0
  %2585 = vmatprep.subr.mxu0 0.0
  %2586 = vmatpush1.msra.mxu0 0.0
  %2587 = vmatprep.subr.mxu0 0.0
  %2588 = vmatpush1.msra.mxu0 0.0
  %2589 = vmatprep.subr.mxu0 0.0
  %2590 = vmatpush1.msra.mxu0 0.0
  %2591 = vmatprep.subr.mxu0 0.0
  %2592 = vmatpush1.msra.mxu0 0.0
  %2593 = vmatprep.subr.mxu0 0.0
  %2594 = vmatpush1.msra.mxu0 0.0
  %2595 = vmatprep.subr.mxu0 0.0
  %2596 = vmatpush1.msra.mxu0 0.0
  %2597 = vmatprep.subr.mxu0 0.0
  %2598 = vmatpush1.msra.mxu0 0.0
  %2599 = vmatprep.subr.mxu0 0.0
  %2600 = vmatpush1.msra.mxu0 0.0
  %2601 = vmatprep.subr.mxu0 0.0
  %2602 = vmatpush1.msra.mxu0 0.0
  %2603 = vmatprep.subr.mxu0 0.0
  %2604 = vmatpush1.msra.mxu0 0.0
  %2605 = vmatprep.subr.mxu0 0.0
  %2606 = vmatpush1.msra.mxu0 0.0
  %2607 = vmatprep.subr.mxu0 0.0
  %2608 = vmatpush1.msra.mxu0 0.0
  %2609 = vmatprep.subr.mxu0 0.0
  %2610 = vmatpush1.msra.mxu0 0.0
  %2611 = vmatprep.subr.mxu0 0.0
  %2612 = vmatpush1.msra.mxu0 0.0
  %2613 = vmatprep.subr.mxu0 0.0
  %2614 = vmatpush1.msra.mxu0 0.0
  %2615 = vmatprep.subr.mxu0 0.0
  %2616 = vmatpush1.msra.mxu0 0.0
  %2617 = vmatprep.subr.mxu0 0.0
  %2618 = vmatpush1.msra.mxu0 0.0
  %2619 = vmatprep.subr.mxu0 0.0
  %2620 = vmatpush1.msra.mxu0 0.0
  %2621 = vmatprep.subr.mxu0 0.0
  %2622 = vmatpush1.msra.mxu0 0.0
  %2623 = vmatprep.mubr.f32.mxu0 0.0
  %2624 = vmatmul.mubr.f32.gmra.mrb[0].mxu0 %v2551
  %v2625 = vpop.f32.mrb[0].mxu0
  %v2626 = vadd.f32 0.0, %v2625
  %v2627 = vpop.f32.mrb[0].mxu0
  %2628 = vmatprep.mubr.f32.mxu0 0.0
  %2629 = vmatmul.mubr.f32.gmra.mrb[0].mxu0 %v2553
  %v2630 = vpop.f32.mrb[0].mxu0
  %v2631 = vadd.f32 0.0, %v2630
  %v2632 = vpop.f32.mrb[0].mxu0
  %2633 = vmatprep.mubr.f32.mxu0 0.0
  %2634 = vmatmul.mubr.f32.gmra.mrb[0].mxu0 %v2555
  %v2635 = vpop.f32.mrb[0].mxu0
  %v2636 = vadd.f32 0.0, %v2635
  %v2637 = vpop.f32.mrb[0].mxu0
  %2638 = vmatprep.mubr.f32.mxu0 0.0
  %2639 = vmatmul.mubr.f32.gmra.mrb[0].mxu0 %v2557
  %v2640 = vpop.f32.mrb[0].mxu0
  %v2641 = vadd.f32 0.0, %v2640
  %v2642 = vpop.f32.mrb[0].mxu0
  %2643 = vdwg.mxu0
  %v2644 = vmax.f32 %v2494, %v2495
  %v2645 = vmax.f32 %v2644, %v2496
  %v2646 = vmax.f32 %v2645, %v2497
  %v2647 = vsub.f32 %v2494, %v2646
  %v2648 = vmul.f32 %v2647, 1.442695
  %v2649 = vpow.pop %v2648
  %v2650 = vsub.f32 %v2495, %v2646
  %v2651 = vmul.f32 %v2650, 1.442695
  %v2652 = vpow.pop %v2651
  %v2653 = vsub.f32 %v2496, %v2646
  %v2654 = vmul.f32 %v2653, 1.442695
  %v2655 = vpow.pop %v2654
  %v2656 = vsub.f32 %v2497, %v2646
  %v2657 = vmul.f32 %v2656, 1.442695
  %v2658 = vpow.pop %v2657
  %2660 = vset.pattern.permute.xlu0 0
  %2661 = vperm.xlu0 %2660, %v2649
  %v2662 = vpop.permute.xlu0 %2661
  %v2664 = vmul.f32 %v2662, %v2626
  %v2665 = vadd.f32 %v2649, %v2652
  %2667 = vset.pattern.permute.xlu0 0
  %2668 = vperm.xlu0 %2667, %v2652
  %v2669 = vpop.permute.xlu0 %2668
  %v2671 = vmul.f32 %v2669, %v2631
  %v2672 = vadd.f32 %v2664, %v2671
  %v2673 = vadd.f32 %v2665, %v2655
  %2675 = vset.pattern.permute.xlu0 0
  %2676 = vperm.xlu0 %2675, %v2655
  %v2677 = vpop.permute.xlu0 %2676
  %v2679 = vmul.f32 %v2677, %v2636
  %v2680 = vadd.f32 %v2672, %v2679
  %v2681 = vadd.f32 %v2673, %v2658
  %2683 = vset.pattern.permute.xlu0 0
  %2684 = vperm.xlu0 %2683, %v2658
  %v2685 = vpop.permute.xlu0 %2684
  %v2687 = vmul.f32 %v2685, %v2641
  %v2688 = vadd.f32 %v2680, %v2687
  %2690 = vset.pattern.permute.xlu0 0
  %2691 = vperm.xlu0 %2690, %v2681
  %v2692 = vpop.permute.xlu0 %2691
  %v2694 = vrcp.pop %v2692
  %v2695 = vmul.f32 %v2688, %v2694
  %v2696 = vadd.f32 %v228, %v2695
  %v2697 = vld [vmem:[%s1 + $0x38] sm:$0xff]
  %v2698 = vld [vmem:[%s1 + $0x40] sm:$0xff]
  %v2699 = vld [vmem:[%s1 + $0x48] sm:$0xff]
  %v2700 = vld [vmem:[%s1 + $0x50] sm:$0xff]
  %v2701 = vld [vmem:[%s1 + $0x60] sm:$0x1]
  %v2702 = vlaneseq
  %v2703 = vshrl.u32 %v2702, 7
  %v2704 = vsub.s32 0, %v2703
  %v2705 = vrot.slane %v2701, %v2704
  %2706 = vmatprep.subr.mxu0 0.0
  %2707 = vmatpush1.msra.mxu0 %v2697
  %2708 = vmatprep.subr.mxu0 0.0
  %2709 = vmatpush1.msra.mxu0 %v2698
  %2710 = vmatprep.subr.mxu0 0.0
  %2711 = vmatpush1.msra.mxu0 %v2699
  %2712 = vmatprep.subr.mxu0 0.0
  %2713 = vmatpush1.msra.mxu0 %v2700
  %2714 = vmatprep.subr.mxu0 0.0
  %2715 = vmatpush1.msra.mxu0 0.0
  %2716 = vmatprep.subr.mxu0 0.0
  %2717 = vmatpush1.msra.mxu0 0.0
  %2718 = vmatprep.subr.mxu0 0.0
  %2719 = vmatpush1.msra.mxu0 0.0
  %2720 = vmatprep.subr.mxu0 0.0
  %2721 = vmatpush1.msra.mxu0 0.0
  %2722 = vmatprep.subr.mxu0 0.0
  %2723 = vmatpush1.msra.mxu0 0.0
  %2724 = vmatprep.subr.mxu0 0.0
  %2725 = vmatpush1.msra.mxu0 0.0
  %2726 = vmatprep.subr.mxu0 0.0
  %2727 = vmatpush1.msra.mxu0 0.0
  %2728 = vmatprep.subr.mxu0 0.0
  %2729 = vmatpush1.msra.mxu0 0.0
  %2730 = vmatprep.subr.mxu0 0.0
  %2731 = vmatpush1.msra.mxu0 0.0
  %2732 = vmatprep.subr.mxu0 0.0
  %2733 = vmatpush1.msra.mxu0 0.0
  %2734 = vmatprep.subr.mxu0 0.0
  %2735 = vmatpush1.msra.mxu0 0.0
  %2736 = vmatprep.subr.mxu0 0.0
  %2737 = vmatpush1.msra.mxu0 0.0
  %2738 = vmatprep.subr.mxu0 0.0
  %2739 = vmatpush1.msra.mxu0 0.0
  %2740 = vmatprep.subr.mxu0 0.0
  %2741 = vmatpush1.msra.mxu0 0.0
  %2742 = vmatprep.subr.mxu0 0.0
  %2743 = vmatpush1.msra.mxu0 0.0
  %2744 = vmatprep.subr.mxu0 0.0
  %2745 = vmatpush1.msra.mxu0 0.0
  %2746 = vmatprep.subr.mxu0 0.0
  %2747 = vmatpush1.msra.mxu0 0.0
  %2748 = vmatprep.subr.mxu0 0.0
  %2749 = vmatpush1.msra.mxu0 0.0
  %2750 = vmatprep.subr.mxu0 0.0
  %2751 = vmatpush1.msra.mxu0 0.0
  %2752 = vmatprep.subr.mxu0 0.0
  %2753 = vmatpush1.msra.mxu0 0.0
  %2754 = vmatprep.subr.mxu0 0.0
  %2755 = vmatpush1.msra.mxu0 0.0
  %2756 = vmatprep.subr.mxu0 0.0
  %2757 = vmatpush1.msra.mxu0 0.0
  %2758 = vmatprep.subr.mxu0 0.0
  %2759 = vmatpush1.msra.mxu0 0.0
  %2760 = vmatprep.subr.mxu0 0.0
  %2761 = vmatpush1.msra.mxu0 0.0
  %2762 = vmatprep.subr.mxu0 0.0
  %2763 = vmatpush1.msra.mxu0 0.0
  %2764 = vmatprep.subr.mxu0 0.0
  %2765 = vmatpush1.msra.mxu0 0.0
  %2766 = vmatprep.subr.mxu0 0.0
  %2767 = vmatpush1.msra.mxu0 0.0
  %2768 = vmatprep.subr.mxu0 0.0
  %2769 = vmatpush1.msra.mxu0 0.0
  %2770 = vmatprep.mubr.f32.mxu0 0.0
  %2771 = vmatmul.mubr.f32.gmra.mrb[0].mxu0 %v1547
  %v2772 = vpop.f32.mrb[0].mxu0
  %v2773 = vadd.f32 %v2705, %v2772
  %v2774 = vpop.f32.mrb[0].mxu0
  %2775 = vdwg.mxu0
  %v2776 = vadd.f32 %v2696, %v2773
  %v2777 = vxor.u32 %v2776, 2147483648
  %v2778 = vmul.f32 %v2777, 1.442695
  %v2779 = vpow.pop %v2778
  %v2780 = vadd.f32 %v2779, 1.0
  %v2781 = vrcp.pop %v2780
  %v2782 = vmul.f32 1.0, %v2781
  %2784 = vrot.lane.b32.xlu0 %v2773, 64
  %v2785 = vpop.permute.xlu0 %2784
  %v2787 = vmul.f32 %v2782, %v2785
  %2789 = vrot.lane.b32.xlu0 %v2787, 64
  %v2790 = vpop.permute.xlu0 %2789
  %v2792 = vadd.f32 %v2696, %v2790
  %v2793 = vtanh.pop %v2792
  %v2794 = vsub.f32 1.0, %v2782
  %2796 = vrot.lane.b32.xlu0 %v2793, 96
  %v2797 = vpop.permute.xlu0 %2796
  %v2799 = vmul.f32 %v2794, %v2797
  %v2800 = vmul.f32 %v2782, %v1534
  %v2801 = vadd.f32 %v2799, %v2800
  %v2802 = vld [vmem:[%s1 + $0x68] sm:$0xff]
  %v2803 = vld [vmem:[%s1 + $0x70] sm:$0xff]
  %v2804 = vld [vmem:[%s1 + $0x78] sm:$0xff]
  %v2805 = vld [vmem:[%s1 + $0x80] sm:$0xff]
  %v2806 = vld [vmem:[%s1 + $0x88] sm:$0x1]
  %v2807 = vlaneseq
  %v2808 = vshrl.u32 %v2807, 7
  %v2809 = vsub.s32 0, %v2808
  %v2810 = vrot.slane %v2806, %v2809
  %2812 = vrot.lane.b32.xlu0 %v2801, 96
  %v2813 = vpop.permute.xlu0 %2812
  %v2814 = vsel %vm138, %v2813, 0
  %2816 = vmatprep.subr.mxu0 0.0
  %2817 = vmatpush1.msra.mxu0 %v2802
  %2818 = vmatprep.subr.mxu0 0.0
  %2819 = vmatpush1.msra.mxu0 %v2803
  %2820 = vmatprep.subr.mxu0 0.0
  %2821 = vmatpush1.msra.mxu0 %v2804
  %2822 = vmatprep.subr.mxu0 0.0
  %2823 = vmatpush1.msra.mxu0 %v2805
  %2824 = vmatprep.subr.mxu0 0.0
  %2825 = vmatpush1.msra.mxu0 0.0
  %2826 = vmatprep.subr.mxu0 0.0
  %2827 = vmatpush1.msra.mxu0 0.0
  %2828 = vmatprep.subr.mxu0 0.0
  %2829 = vmatpush1.msra.mxu0 0.0
  %2830 = vmatprep.subr.mxu0 0.0
  %2831 = vmatpush1.msra.mxu0 0.0
  %2832 = vmatprep.subr.mxu0 0.0
  %2833 = vmatpush1.msra.mxu0 0.0
  %2834 = vmatprep.subr.mxu0 0.0
  %2835 = vmatpush1.msra.mxu0 0.0
  %2836 = vmatprep.subr.mxu0 0.0
  %2837 = vmatpush1.msra.mxu0 0.0
  %2838 = vmatprep.subr.mxu0 0.0
  %2839 = vmatpush1.msra.mxu0 0.0
  %2840 = vmatprep.subr.mxu0 0.0
  %2841 = vmatpush1.msra.mxu0 0.0
  %2842 = vmatprep.subr.mxu0 0.0
  %2843 = vmatpush1.msra.mxu0 0.0
  %2844 = vmatprep.subr.mxu0 0.0
  %2845 = vmatpush1.msra.mxu0 0.0
  %2846 = vmatprep.subr.mxu0 0.0
  %2847 = vmatpush1.msra.mxu0 0.0
  %2848 = vmatprep.subr.mxu0 0.0
  %2849 = vmatpush1.msra.mxu0 0.0
  %2850 = vmatprep.subr.mxu0 0.0
  %2851 = vmatpush1.msra.mxu0 0.0
  %2852 = vmatprep.subr.mxu0 0.0
  %2853 = vmatpush1.msra.mxu0 0.0
  %2854 = vmatprep.subr.mxu0 0.0
  %2855 = vmatpush1.msra.mxu0 0.0
  %2856 = vmatprep.subr.mxu0 0.0
  %2857 = vmatpush1.msra.mxu0 0.0
  %2858 = vmatprep.subr.mxu0 0.0
  %2859 = vmatpush1.msra.mxu0 0.0
  %2860 = vmatprep.subr.mxu0 0.0
  %2861 = vmatpush1.msra.mxu0 0.0
  %2862 = vmatprep.subr.mxu0 0.0
  %2863 = vmatpush1.msra.mxu0 0.0
  %2864 = vmatprep.subr.mxu0 0.0
  %2865 = vmatpush1.msra.mxu0 0.0
  %2866 = vmatprep.subr.mxu0 0.0
  %2867 = vmatpush1.msra.mxu0 0.0
  %2868 = vmatprep.subr.mxu0 0.0
  %2869 = vmatpush1.msra.mxu0 0.0
  %2870 = vmatprep.subr.mxu0 0.0
  %2871 = vmatpush1.msra.mxu0 0.0
  %2872 = vmatprep.subr.mxu0 0.0
  %2873 = vmatpush1.msra.mxu0 0.0
  %2874 = vmatprep.subr.mxu0 0.0
  %2875 = vmatpush1.msra.mxu0 0.0
  %2876 = vmatprep.subr.mxu0 0.0
  %2877 = vmatpush1.msra.mxu0 0.0
  %2878 = vmatprep.subr.mxu0 0.0
  %2879 = vmatpush1.msra.mxu0 0.0
  %2880 = vmatprep.mubr.f32.mxu0 0.0
  %2881 = vmatmul.mubr.f32.gmra.mrb[0].mxu0 %v2814
  %v2882 = vpop.f32.mrb[0].mxu0
  %v2883 = vadd.f32 %v2810, %v2882
  %v2884 = vpop.f32.mrb[0].mxu0
  %2885 = vdwg.mxu0
  %v2886 = vmax.f32 %v2883, 0.0
  %2888 = vrot.lane.b32.xlu0 %v2886, 120
  %v2889 = vpop.permute.xlu0 %2888
  %2891 = vst.msk [vmem:[#allocation5 + $0x10] sm:$0xff] %vm138, %v2889
  %v2892 = vld [vmem:[%s1 + $0xa0] sm:$0xff]
  %v2893 = vld [vmem:[%s1 + $0xa8] sm:$0x1]
  %v2894 = vlaneseq
  %v2895 = vshrl.u32 %v2894, 7
  %v2896 = vsub.s32 0, %v2895
  %v2897 = vrot.slane %v2893, %v2896
  %v2898 = vsel %vm361, %v2886, 0
  %2900 = vmatprep.subr.mxu0 0.0
  %2901 = vmatpush1.msra.mxu0 %v2892
  %2902 = vmatprep.subr.mxu0 0.0
  %2903 = vmatpush1.msra.mxu0 0.0
  %2904 = vmatprep.subr.mxu0 0.0
  %2905 = vmatpush1.msra.mxu0 0.0
  %2906 = vmatprep.subr.mxu0 0.0
  %2907 = vmatpush1.msra.mxu0 0.0
  %2908 = vmatprep.subr.mxu0 0.0
  %2909 = vmatpush1.msra.mxu0 0.0
  %2910 = vmatprep.subr.mxu0 0.0
  %2911 = vmatpush1.msra.mxu0 0.0
  %2912 = vmatprep.subr.mxu0 0.0
  %2913 = vmatpush1.msra.mxu0 0.0
  %2914 = vmatprep.subr.mxu0 0.0
  %2915 = vmatpush1.msra.mxu0 0.0
  %2916 = vmatprep.subr.mxu0 0.0
  %2917 = vmatpush1.msra.mxu0 0.0
  %2918 = vmatprep.subr.mxu0 0.0
  %2919 = vmatpush1.msra.mxu0 0.0
  %2920 = vmatprep.subr.mxu0 0.0
  %2921 = vmatpush1.msra.mxu0 0.0
  %2922 = vmatprep.subr.mxu0 0.0
  %2923 = vmatpush1.msra.mxu0 0.0
  %2924 = vmatprep.subr.mxu0 0.0
  %2925 = vmatpush1.msra.mxu0 0.0
  %2926 = vmatprep.subr.mxu0 0.0
  %2927 = vmatpush1.msra.mxu0 0.0
  %2928 = vmatprep.subr.mxu0 0.0
  %2929 = vmatpush1.msra.mxu0 0.0
  %2930 = vmatprep.subr.mxu0 0.0
  %2931 = vmatpush1.msra.mxu0 0.0
  %2932 = vmatprep.subr.mxu0 0.0
  %2933 = vmatpush1.msra.mxu0 0.0
  %2934 = vmatprep.subr.mxu0 0.0
  %2935 = vmatpush1.msra.mxu0 0.0
  %2936 = vmatprep.subr.mxu0 0.0
  %2937 = vmatpush1.msra.mxu0 0.0
  %2938 = vmatprep.subr.mxu0 0.0
  %2939 = vmatpush1.msra.mxu0 0.0
  %2940 = vmatprep.subr.mxu0 0.0
  %2941 = vmatpush1.msra.mxu0 0.0
  %2942 = vmatprep.subr.mxu0 0.0
  %2943 = vmatpush1.msra.mxu0 0.0
  %2944 = vmatprep.subr.mxu0 0.0
  %2945 = vmatpush1.msra.mxu0 0.0
  %2946 = vmatprep.subr.mxu0 0.0
  %2947 = vmatpush1.msra.mxu0 0.0
  %2948 = vmatprep.subr.mxu0 0.0
  %2949 = vmatpush1.msra.mxu0 0.0
  %2950 = vmatprep.subr.mxu0 0.0
  %2951 = vmatpush1.msra.mxu0 0.0
  %2952 = vmatprep.subr.mxu0 0.0
  %2953 = vmatpush1.msra.mxu0 0.0
  %2954 = vmatprep.subr.mxu0 0.0
  %2955 = vmatpush1.msra.mxu0 0.0
  %2956 = vmatprep.subr.mxu0 0.0
  %2957 = vmatpush1.msra.mxu0 0.0
  %2958 = vmatprep.subr.mxu0 0.0
  %2959 = vmatpush1.msra.mxu0 0.0
  %2960 = vmatprep.subr.mxu0 0.0
  %2961 = vmatpush1.msra.mxu0 0.0
  %2962 = vmatprep.subr.mxu0 0.0
  %2963 = vmatpush1.msra.mxu0 0.0
  %2964 = vmatprep.mubr.f32.mxu0 0.0
  %2965 = vmatmul.mubr.f32.gmra.mrb[0].mxu0 %v2898
  %v2966 = vpop.f32.mrb[0].mxu0
  %v2967 = vadd.f32 %v2897, %v2966
  %v2968 = vpop.f32.mrb[0].mxu0
  %2969 = vdwg.mxu0
  %v2970 = vld [vmem:[%s1 + $0x98] sm:$0x1]
  %v2971 = vlaneseq
  %v2972 = vshrl.u32 %v2971, 7
  %v2973 = vsub.s32 0, %v2972
  %v2974 = vrot.slane %v2970, %v2973
  %v2975 = vadd.f32 %v2974, %v2967
  %v2976 = vxor.u32 %v2975, 2147483648
  %v2977 = vmul.f32 %v2976, 1.442695
  %v2978 = vpow.pop %v2977
  %v2979 = vadd.f32 %v2978, 1.0
  %v2980 = vrcp.pop %v2979
  %v2981 = vmul.f32 1.0, %v2980
  %2983 = vrot.lane.b32.xlu0 %v2967, 112
  %v2984 = vpop.permute.xlu0 %2983
  %v2986 = vmul.f32 %v2981, %v2984
  %2988 = vrot.lane.b32.xlu0 %v2986, 16
  %v2989 = vpop.permute.xlu0 %2988
  %v2991 = vadd.f32 %v2974, %v2989
  %v2992 = vtanh.pop %v2991
  %v2993 = vsub.f32 1.0, %v2981
  %2995 = vrot.lane.b32.xlu0 %v2992, 120
  %v2996 = vpop.permute.xlu0 %2995
  %v2998 = vmul.f32 %v2993, %v2996
  %2999 = vrot.lane.b32.xlu0 %v2886, 8
  %v3000 = vpop.permute.xlu0 %2999
  %v3002 = vmul.f32 %v2981, %v3000
  %v3003 = vadd.f32 %v2998, %v3002
  %v3004 = vld [vmem:[%s1 + $0xb0] sm:$0xff]
  %v3005 = vld [vmem:[%s1 + $0xb8] sm:$0x1]
  %v3006 = vlaneseq
  %v3007 = vshrl.u32 %v3006, 7
  %v3008 = vsub.s32 0, %v3007
  %v3009 = vrot.slane %v3005, %v3008
  %3011 = vrot.lane.b32.xlu0 %v3003, 120
  %v3012 = vpop.permute.xlu0 %3011
  %v3013 = vsel %vm361, %v3012, 0
  %3015 = vmatprep.subr.mxu0 0.0
  %3016 = vmatpush1.msra.mxu0 %v3004
  %3017 = vmatprep.subr.mxu0 0.0
  %3018 = vmatpush1.msra.mxu0 0.0
  %3019 = vmatprep.subr.mxu0 0.0
  %3020 = vmatpush1.msra.mxu0 0.0
  %3021 = vmatprep.subr.mxu0 0.0
  %3022 = vmatpush1.msra.mxu0 0.0
  %3023 = vmatprep.subr.mxu0 0.0
  %3024 = vmatpush1.msra.mxu0 0.0
  %3025 = vmatprep.subr.mxu0 0.0
  %3026 = vmatpush1.msra.mxu0 0.0
  %3027 = vmatprep.subr.mxu0 0.0
  %3028 = vmatpush1.msra.mxu0 0.0
  %3029 = vmatprep.subr.mxu0 0.0
  %3030 = vmatpush1.msra.mxu0 0.0
  %3031 = vmatprep.subr.mxu0 0.0
  %3032 = vmatpush1.msra.mxu0 0.0
  %3033 = vmatprep.subr.mxu0 0.0
  %3034 = vmatpush1.msra.mxu0 0.0
  %3035 = vmatprep.subr.mxu0 0.0
  %3036 = vmatpush1.msra.mxu0 0.0
  %3037 = vmatprep.subr.mxu0 0.0
  %3038 = vmatpush1.msra.mxu0 0.0
  %3039 = vmatprep.subr.mxu0 0.0
  %3040 = vmatpush1.msra.mxu0 0.0
  %3041 = vmatprep.subr.mxu0 0.0
  %3042 = vmatpush1.msra.mxu0 0.0
  %3043 = vmatprep.subr.mxu0 0.0
  %3044 = vmatpush1.msra.mxu0 0.0
  %3045 = vmatprep.subr.mxu0 0.0
  %3046 = vmatpush1.msra.mxu0 0.0
  %3047 = vmatprep.subr.mxu0 0.0
  %3048 = vmatpush1.msra.mxu0 0.0
  %3049 = vmatprep.subr.mxu0 0.0
  %3050 = vmatpush1.msra.mxu0 0.0
  %3051 = vmatprep.subr.mxu0 0.0
  %3052 = vmatpush1.msra.mxu0 0.0
  %3053 = vmatprep.subr.mxu0 0.0
  %3054 = vmatpush1.msra.mxu0 0.0
  %3055 = vmatprep.subr.mxu0 0.0
  %3056 = vmatpush1.msra.mxu0 0.0
  %3057 = vmatprep.subr.mxu0 0.0
  %3058 = vmatpush1.msra.mxu0 0.0
  %3059 = vmatprep.subr.mxu0 0.0
  %3060 = vmatpush1.msra.mxu0 0.0
  %3061 = vmatprep.subr.mxu0 0.0
  %3062 = vmatpush1.msra.mxu0 0.0
  %3063 = vmatprep.subr.mxu0 0.0
  %3064 = vmatpush1.msra.mxu0 0.0
  %3065 = vmatprep.subr.mxu0 0.0
  %3066 = vmatpush1.msra.mxu0 0.0
  %3067 = vmatprep.subr.mxu0 0.0
  %3068 = vmatpush1.msra.mxu0 0.0
  %3069 = vmatprep.subr.mxu0 0.0
  %3070 = vmatpush1.msra.mxu0 0.0
  %3071 = vmatprep.subr.mxu0 0.0
  %3072 = vmatpush1.msra.mxu0 0.0
  %3073 = vmatprep.subr.mxu0 0.0
  %3074 = vmatpush1.msra.mxu0 0.0
  %3075 = vmatprep.subr.mxu0 0.0
  %3076 = vmatpush1.msra.mxu0 0.0
  %3077 = vmatprep.subr.mxu0 0.0
  %3078 = vmatpush1.msra.mxu0 0.0
  %3079 = vmatprep.mubr.f32.mxu0 0.0
  %3080 = vmatmul.mubr.f32.gmra.mrb[0].mxu0 %v3013
  %v3081 = vpop.f32.mrb[0].mxu0
  %v3082 = vadd.f32 %v3009, %v3081
  %v3083 = vpop.f32.mrb[0].mxu0
  %3084 = vdwg.mxu0
  %v3085 = vmax.f32 %v3082, 0.0
  %v3086 = vld [vmem:[%s1 + $0x90] sm:$0xff]
  %v3088 = vsel %vm361, %v3085, 0
  %3090 = vmatprep.subr.mxu0 0.0
  %3091 = vmatpush1.msra.mxu0 %v3086
  %3092 = vmatprep.subr.mxu0 0.0
  %3093 = vmatpush1.msra.mxu0 0.0
  %3094 = vmatprep.subr.mxu0 0.0
  %3095 = vmatpush1.msra.mxu0 0.0
  %3096 = vmatprep.subr.mxu0 0.0
  %3097 = vmatpush1.msra.mxu0 0.0
  %3098 = vmatprep.subr.mxu0 0.0
  %3099 = vmatpush1.msra.mxu0 0.0
  %3100 = vmatprep.subr.mxu0 0.0
  %3101 = vmatpush1.msra.mxu0 0.0
  %3102 = vmatprep.subr.mxu0 0.0
  %3103 = vmatpush1.msra.mxu0 0.0
  %3104 = vmatprep.subr.mxu0 0.0
  %3105 = vmatpush1.msra.mxu0 0.0
  %3106 = vmatprep.subr.mxu0 0.0
  %3107 = vmatpush1.msra.mxu0 0.0
  %3108 = vmatprep.subr.mxu0 0.0
  %3109 = vmatpush1.msra.mxu0 0.0
  %3110 = vmatprep.subr.mxu0 0.0
  %3111 = vmatpush1.msra.mxu0 0.0
  %3112 = vmatprep.subr.mxu0 0.0
  %3113 = vmatpush1.msra.mxu0 0.0
  %3114 = vmatprep.subr.mxu0 0.0
  %3115 = vmatpush1.msra.mxu0 0.0
  %3116 = vmatprep.subr.mxu0 0.0
  %3117 = vmatpush1.msra.mxu0 0.0
  %3118 = vmatprep.subr.mxu0 0.0
  %3119 = vmatpush1.msra.mxu0 0.0
  %3120 = vmatprep.subr.mxu0 0.0
  %3121 = vmatpush1.msra.mxu0 0.0
  %3122 = vmatprep.subr.mxu0 0.0
  %3123 = vmatpush1.msra.mxu0 0.0
  %3124 = vmatprep.subr.mxu0 0.0
  %3125 = vmatpush1.msra.mxu0 0.0
  %3126 = vmatprep.subr.mxu0 0.0
  %3127 = vmatpush1.msra.mxu0 0.0
  %3128 = vmatprep.subr.mxu0 0.0
  %3129 = vmatpush1.msra.mxu0 0.0
  %3130 = vmatprep.subr.mxu0 0.0
  %3131 = vmatpush1.msra.mxu0 0.0
  %3132 = vmatprep.subr.mxu0 0.0
  %3133 = vmatpush1.msra.mxu0 0.0
  %3134 = vmatprep.subr.mxu0 0.0
  %3135 = vmatpush1.msra.mxu0 0.0
  %3136 = vmatprep.subr.mxu0 0.0
  %3137 = vmatpush1.msra.mxu0 0.0
  %3138 = vmatprep.subr.mxu0 0.0
  %3139 = vmatpush1.msra.mxu0 0.0
  %3140 = vmatprep.subr.mxu0 0.0
  %3141 = vmatpush1.msra.mxu0 0.0
  %3142 = vmatprep.subr.mxu0 0.0
  %3143 = vmatpush1.msra.mxu0 0.0
  %3144 = vmatprep.subr.mxu0 0.0
  %3145 = vmatpush1.msra.mxu0 0.0
  %3146 = vmatprep.subr.mxu0 0.0
  %3147 = vmatpush1.msra.mxu0 0.0
  %3148 = vmatprep.subr.mxu0 0.0
  %3149 = vmatpush1.msra.mxu0 0.0
  %3150 = vmatprep.subr.mxu0 0.0
  %3151 = vmatpush1.msra.mxu0 0.0
  %3152 = vmatprep.subr.mxu0 0.0
  %3153 = vmatpush1.msra.mxu0 0.0
  %3154 = vmatprep.mubr.f32.mxu0 0.0
  %3155 = vmatmul.mubr.f32.gmra.mrb[0].mxu0 %v3088
  %v3156 = vpop.f32.mrb[0].mxu0
  %v3157 = vadd.f32 %v2974, %v3156
  %v3158 = vpop.f32.mrb[0].mxu0
  %3159 = vdwg.mxu0
  %3161 = vrot.lane.b32.xlu0 %v3082, 120
  %v3162 = vpop.permute.xlu0 %3161
  %v3164 = vadd.f32 %v3157, %v3162
  %v3165 = vxor.u32 %v3164, 2147483648
  %v3166 = vmul.f32 %v3165, 1.442695
  %v3167 = vpow.pop %v3166
  %v3168 = vadd.f32 %v3167, 1.0
  %v3169 = vrcp.pop %v3168
  %v3170 = vmul.f32 1.0, %v3169
  %3171 = vrot.lane.b32.xlu0 %v3082, 104
  %v3172 = vpop.permute.xlu0 %3171
  %v3174 = vmul.f32 %v3170, %v3172
  %3176 = vrot.lane.b32.xlu0 %v3174, 16
  %v3177 = vpop.permute.xlu0 %3176
  %v3179 = vadd.f32 %v3157, %v3177
  %v3180 = vtanh.pop %v3179
  %v3181 = vsub.f32 1.0, %v3170
  %3183 = vrot.lane.b32.xlu0 %v3180, 120
  %v3184 = vpop.permute.xlu0 %3183
  %v3186 = vmul.f32 %v3181, %v3184
  %v3187 = vmul.f32 %v3170, %v3003
  %v3188 = vadd.f32 %v3186, %v3187
  %3190 = vrot.lane.b32.xlu0 %v3188, 120
  %v3191 = vpop.permute.xlu0 %3190
  %v3192 = vsel %vm361, %v3191, 0
  %3194 = vmatprep.subr.mxu0 0.0
  %3195 = vmatpush1.msra.mxu0 %v3004
  %3196 = vmatprep.subr.mxu0 0.0
  %3197 = vmatpush1.msra.mxu0 0.0
  %3198 = vmatprep.subr.mxu0 0.0
  %3199 = vmatpush1.msra.mxu0 0.0
  %3200 = vmatprep.subr.mxu0 0.0
  %3201 = vmatpush1.msra.mxu0 0.0
  %3202 = vmatprep.subr.mxu0 0.0
  %3203 = vmatpush1.msra.mxu0 0.0
  %3204 = vmatprep.subr.mxu0 0.0
  %3205 = vmatpush1.msra.mxu0 0.0
  %3206 = vmatprep.subr.mxu0 0.0
  %3207 = vmatpush1.msra.mxu0 0.0
  %3208 = vmatprep.subr.mxu0 0.0
  %3209 = vmatpush1.msra.mxu0 0.0
  %3210 = vmatprep.subr.mxu0 0.0
  %3211 = vmatpush1.msra.mxu0 0.0
  %3212 = vmatprep.subr.mxu0 0.0
  %3213 = vmatpush1.msra.mxu0 0.0
  %3214 = vmatprep.subr.mxu0 0.0
  %3215 = vmatpush1.msra.mxu0 0.0
  %3216 = vmatprep.subr.mxu0 0.0
  %3217 = vmatpush1.msra.mxu0 0.0
  %3218 = vmatprep.subr.mxu0 0.0
  %3219 = vmatpush1.msra.mxu0 0.0
  %3220 = vmatprep.subr.mxu0 0.0
  %3221 = vmatpush1.msra.mxu0 0.0
  %3222 = vmatprep.subr.mxu0 0.0
  %3223 = vmatpush1.msra.mxu0 0.0
  %3224 = vmatprep.subr.mxu0 0.0
  %3225 = vmatpush1.msra.mxu0 0.0
  %3226 = vmatprep.subr.mxu0 0.0
  %3227 = vmatpush1.msra.mxu0 0.0
  %3228 = vmatprep.subr.mxu0 0.0
  %3229 = vmatpush1.msra.mxu0 0.0
  %3230 = vmatprep.subr.mxu0 0.0
  %3231 = vmatpush1.msra.mxu0 0.0
  %3232 = vmatprep.subr.mxu0 0.0
  %3233 = vmatpush1.msra.mxu0 0.0
  %3234 = vmatprep.subr.mxu0 0.0
  %3235 = vmatpush1.msra.mxu0 0.0
  %3236 = vmatprep.subr.mxu0 0.0
  %3237 = vmatpush1.msra.mxu0 0.0
  %3238 = vmatprep.subr.mxu0 0.0
  %3239 = vmatpush1.msra.mxu0 0.0
  %3240 = vmatprep.subr.mxu0 0.0
  %3241 = vmatpush1.msra.mxu0 0.0
  %3242 = vmatprep.subr.mxu0 0.0
  %3243 = vmatpush1.msra.mxu0 0.0
  %3244 = vmatprep.subr.mxu0 0.0
  %3245 = vmatpush1.msra.mxu0 0.0
  %3246 = vmatprep.subr.mxu0 0.0
  %3247 = vmatpush1.msra.mxu0 0.0
  %3248 = vmatprep.subr.mxu0 0.0
  %3249 = vmatpush1.msra.mxu0 0.0
  %3250 = vmatprep.subr.mxu0 0.0
  %3251 = vmatpush1.msra.mxu0 0.0
  %3252 = vmatprep.subr.mxu0 0.0
  %3253 = vmatpush1.msra.mxu0 0.0
  %3254 = vmatprep.subr.mxu0 0.0
  %3255 = vmatpush1.msra.mxu0 0.0
  %3256 = vmatprep.subr.mxu0 0.0
  %3257 = vmatpush1.msra.mxu0 0.0
  %3258 = vmatprep.mubr.f32.mxu0 0.0
  %3259 = vmatmul.mubr.f32.gmra.mrb[0].mxu0 %v3192
  %v3260 = vpop.f32.mrb[0].mxu0
  %v3261 = vadd.f32 %v3009, %v3260
  %v3262 = vpop.f32.mrb[0].mxu0
  %3263 = vdwg.mxu0
  %v3264 = vmax.f32 %v3261, 0.0
  %v3266 = vsel %vm361, %v3264, 0
  %3268 = vmatprep.subr.mxu0 0.0
  %3269 = vmatpush1.msra.mxu0 %v3086
  %3270 = vmatprep.subr.mxu0 0.0
  %3271 = vmatpush1.msra.mxu0 0.0
  %3272 = vmatprep.subr.mxu0 0.0
  %3273 = vmatpush1.msra.mxu0 0.0
  %3274 = vmatprep.subr.mxu0 0.0
  %3275 = vmatpush1.msra.mxu0 0.0
  %3276 = vmatprep.subr.mxu0 0.0
  %3277 = vmatpush1.msra.mxu0 0.0
  %3278 = vmatprep.subr.mxu0 0.0
  %3279 = vmatpush1.msra.mxu0 0.0
  %3280 = vmatprep.subr.mxu0 0.0
  %3281 = vmatpush1.msra.mxu0 0.0
  %3282 = vmatprep.subr.mxu0 0.0
  %3283 = vmatpush1.msra.mxu0 0.0
  %3284 = vmatprep.subr.mxu0 0.0
  %3285 = vmatpush1.msra.mxu0 0.0
  %3286 = vmatprep.subr.mxu0 0.0
  %3287 = vmatpush1.msra.mxu0 0.0
  %3288 = vmatprep.subr.mxu0 0.0
  %3289 = vmatpush1.msra.mxu0 0.0
  %3290 = vmatprep.subr.mxu0 0.0
  %3291 = vmatpush1.msra.mxu0 0.0
  %3292 = vmatprep.subr.mxu0 0.0
  %3293 = vmatpush1.msra.mxu0 0.0
  %3294 = vmatprep.subr.mxu0 0.0
  %3295 = vmatpush1.msra.mxu0 0.0
  %3296 = vmatprep.subr.mxu0 0.0
  %3297 = vmatpush1.msra.mxu0 0.0
  %3298 = vmatprep.subr.mxu0 0.0
  %3299 = vmatpush1.msra.mxu0 0.0
  %3300 = vmatprep.subr.mxu0 0.0
  %3301 = vmatpush1.msra.mxu0 0.0
  %3302 = vmatprep.subr.mxu0 0.0
  %3303 = vmatpush1.msra.mxu0 0.0
  %3304 = vmatprep.subr.mxu0 0.0
  %3305 = vmatpush1.msra.mxu0 0.0
  %3306 = vmatprep.subr.mxu0 0.0
  %3307 = vmatpush1.msra.mxu0 0.0
  %3308 = vmatprep.subr.mxu0 0.0
  %3309 = vmatpush1.msra.mxu0 0.0
  %3310 = vmatprep.subr.mxu0 0.0
  %3311 = vmatpush1.msra.mxu0 0.0
  %3312 = vmatprep.subr.mxu0 0.0
  %3313 = vmatpush1.msra.mxu0 0.0
  %3314 = vmatprep.subr.mxu0 0.0
  %3315 = vmatpush1.msra.mxu0 0.0
  %3316 = vmatprep.subr.mxu0 0.0
  %3317 = vmatpush1.msra.mxu0 0.0
  %3318 = vmatprep.subr.mxu0 0.0
  %3319 = vmatpush1.msra.mxu0 0.0
  %3320 = vmatprep.subr.mxu0 0.0
  %3321 = vmatpush1.msra.mxu0 0.0
  %3322 = vmatprep.subr.mxu0 0.0
  %3323 = vmatpush1.msra.mxu0 0.0
  %3324 = vmatprep.subr.mxu0 0.0
  %3325 = vmatpush1.msra.mxu0 0.0
  %3326 = vmatprep.subr.mxu0 0.0
  %3327 = vmatpush1.msra.mxu0 0.0
  %3328 = vmatprep.subr.mxu0 0.0
  %3329 = vmatpush1.msra.mxu0 0.0
  %3330 = vmatprep.subr.mxu0 0.0
  %3331 = vmatpush1.msra.mxu0 0.0
  %3332 = vmatprep.mubr.f32.mxu0 0.0
  %3333 = vmatmul.mubr.f32.gmra.mrb[0].mxu0 %v3266
  %v3334 = vpop.f32.mrb[0].mxu0
  %v3335 = vadd.f32 %v2974, %v3334
  %v3336 = vpop.f32.mrb[0].mxu0
  %3337 = vdwg.mxu0
  %3339 = vrot.lane.b32.xlu0 %v3261, 120
  %v3340 = vpop.permute.xlu0 %3339
  %v3342 = vadd.f32 %v3335, %v3340
  %v3343 = vxor.u32 %v3342, 2147483648
  %v3344 = vmul.f32 %v3343, 1.442695
  %v3345 = vpow.pop %v3344
  %v3346 = vadd.f32 %v3345, 1.0
  %v3347 = vrcp.pop %v3346
  %v3348 = vmul.f32 1.0, %v3347
  %3349 = vrot.lane.b32.xlu0 %v3261, 104
  %v3350 = vpop.permute.xlu0 %3349
  %v3352 = vmul.f32 %v3348, %v3350
  %3354 = vrot.lane.b32.xlu0 %v3352, 16
  %v3355 = vpop.permute.xlu0 %3354
  %v3357 = vadd.f32 %v3335, %v3355
  %v3358 = vtanh.pop %v3357
  %v3359 = vsub.f32 1.0, %v3348
  %3361 = vrot.lane.b32.xlu0 %v3358, 120
  %v3362 = vpop.permute.xlu0 %3361
  %v3364 = vmul.f32 %v3359, %v3362
  %v3365 = vmul.f32 %v3348, %v3188
  %v3366 = vadd.f32 %v3364, %v3365
  %3368 = vrot.lane.b32.xlu0 %v3366, 120
  %v3369 = vpop.permute.xlu0 %3368
  %v3370 = vsel %vm361, %v3369, 0
  %3372 = vmatprep.subr.mxu0 0.0
  %3373 = vmatpush1.msra.mxu0 %v3004
  %3374 = vmatprep.subr.mxu0 0.0
  %3375 = vmatpush1.msra.mxu0 0.0
  %3376 = vmatprep.subr.mxu0 0.0
  %3377 = vmatpush1.msra.mxu0 0.0
  %3378 = vmatprep.subr.mxu0 0.0
  %3379 = vmatpush1.msra.mxu0 0.0
  %3380 = vmatprep.subr.mxu0 0.0
  %3381 = vmatpush1.msra.mxu0 0.0
  %3382 = vmatprep.subr.mxu0 0.0
  %3383 = vmatpush1.msra.mxu0 0.0
  %3384 = vmatprep.subr.mxu0 0.0
  %3385 = vmatpush1.msra.mxu0 0.0
  %3386 = vmatprep.subr.mxu0 0.0
  %3387 = vmatpush1.msra.mxu0 0.0
  %3388 = vmatprep.subr.mxu0 0.0
  %3389 = vmatpush1.msra.mxu0 0.0
  %3390 = vmatprep.subr.mxu0 0.0
  %3391 = vmatpush1.msra.mxu0 0.0
  %3392 = vmatprep.subr.mxu0 0.0
  %3393 = vmatpush1.msra.mxu0 0.0
  %3394 = vmatprep.subr.mxu0 0.0
  %3395 = vmatpush1.msra.mxu0 0.0
  %3396 = vmatprep.subr.mxu0 0.0
  %3397 = vmatpush1.msra.mxu0 0.0
  %3398 = vmatprep.subr.mxu0 0.0
  %3399 = vmatpush1.msra.mxu0 0.0
  %3400 = vmatprep.subr.mxu0 0.0
  %3401 = vmatpush1.msra.mxu0 0.0
  %3402 = vmatprep.subr.mxu0 0.0
  %3403 = vmatpush1.msra.mxu0 0.0
  %3404 = vmatprep.subr.mxu0 0.0
  %3405 = vmatpush1.msra.mxu0 0.0
  %3406 = vmatprep.subr.mxu0 0.0
  %3407 = vmatpush1.msra.mxu0 0.0
  %3408 = vmatprep.subr.mxu0 0.0
  %3409 = vmatpush1.msra.mxu0 0.0
  %3410 = vmatprep.subr.mxu0 0.0
  %3411 = vmatpush1.msra.mxu0 0.0
  %3412 = vmatprep.subr.mxu0 0.0
  %3413 = vmatpush1.msra.mxu0 0.0
  %3414 = vmatprep.subr.mxu0 0.0
  %3415 = vmatpush1.msra.mxu0 0.0
  %3416 = vmatprep.subr.mxu0 0.0
  %3417 = vmatpush1.msra.mxu0 0.0
  %3418 = vmatprep.subr.mxu0 0.0
  %3419 = vmatpush1.msra.mxu0 0.0
  %3420 = vmatprep.subr.mxu0 0.0
  %3421 = vmatpush1.msra.mxu0 0.0
  %3422 = vmatprep.subr.mxu0 0.0
  %3423 = vmatpush1.msra.mxu0 0.0
  %3424 = vmatprep.subr.mxu0 0.0
  %3425 = vmatpush1.msra.mxu0 0.0
  %3426 = vmatprep.subr.mxu0 0.0
  %3427 = vmatpush1.msra.mxu0 0.0
  %3428 = vmatprep.subr.mxu0 0.0
  %3429 = vmatpush1.msra.mxu0 0.0
  %3430 = vmatprep.subr.mxu0 0.0
  %3431 = vmatpush1.msra.mxu0 0.0
  %3432 = vmatprep.subr.mxu0 0.0
  %3433 = vmatpush1.msra.mxu0 0.0
  %3434 = vmatprep.subr.mxu0 0.0
  %3435 = vmatpush1.msra.mxu0 0.0
  %3436 = vmatprep.mubr.f32.mxu0 0.0
  %3437 = vmatmul.mubr.f32.gmra.mrb[0].mxu0 %v3370
  %v3438 = vpop.f32.mrb[0].mxu0
  %v3439 = vadd.f32 %v3009, %v3438
  %v3440 = vpop.f32.mrb[0].mxu0
  %3441 = vdwg.mxu0
  %v3442 = vmax.f32 %v3439, 0.0
  %v3444 = vsel %vm361, %v3442, 0
  %3446 = vmatprep.subr.mxu0 0.0
  %3447 = vmatpush1.msra.mxu0 %v3086
  %3448 = vmatprep.subr.mxu0 0.0
  %3449 = vmatpush1.msra.mxu0 0.0
  %3450 = vmatprep.subr.mxu0 0.0
  %3451 = vmatpush1.msra.mxu0 0.0
  %3452 = vmatprep.subr.mxu0 0.0
  %3453 = vmatpush1.msra.mxu0 0.0
  %3454 = vmatprep.subr.mxu0 0.0
  %3455 = vmatpush1.msra.mxu0 0.0
  %3456 = vmatprep.subr.mxu0 0.0
  %3457 = vmatpush1.msra.mxu0 0.0
  %3458 = vmatprep.subr.mxu0 0.0
  %3459 = vmatpush1.msra.mxu0 0.0
  %3460 = vmatprep.subr.mxu0 0.0
  %3461 = vmatpush1.msra.mxu0 0.0
  %3462 = vmatprep.subr.mxu0 0.0
  %3463 = vmatpush1.msra.mxu0 0.0
  %3464 = vmatprep.subr.mxu0 0.0
  %3465 = vmatpush1.msra.mxu0 0.0
  %3466 = vmatprep.subr.mxu0 0.0
  %3467 = vmatpush1.msra.mxu0 0.0
  %3468 = vmatprep.subr.mxu0 0.0
  %3469 = vmatpush1.msra.mxu0 0.0
  %3470 = vmatprep.subr.mxu0 0.0
  %3471 = vmatpush1.msra.mxu0 0.0
  %3472 = vmatprep.subr.mxu0 0.0
  %3473 = vmatpush1.msra.mxu0 0.0
  %3474 = vmatprep.subr.mxu0 0.0
  %3475 = vmatpush1.msra.mxu0 0.0
  %3476 = vmatprep.subr.mxu0 0.0
  %3477 = vmatpush1.msra.mxu0 0.0
  %3478 = vmatprep.subr.mxu0 0.0
  %3479 = vmatpush1.msra.mxu0 0.0
  %3480 = vmatprep.subr.mxu0 0.0
  %3481 = vmatpush1.msra.mxu0 0.0
  %3482 = vmatprep.subr.mxu0 0.0
  %3483 = vmatpush1.msra.mxu0 0.0
  %3484 = vmatprep.subr.mxu0 0.0
  %3485 = vmatpush1.msra.mxu0 0.0
  %3486 = vmatprep.subr.mxu0 0.0
  %3487 = vmatpush1.msra.mxu0 0.0
  %3488 = vmatprep.subr.mxu0 0.0
  %3489 = vmatpush1.msra.mxu0 0.0
  %3490 = vmatprep.subr.mxu0 0.0
  %3491 = vmatpush1.msra.mxu0 0.0
  %3492 = vmatprep.subr.mxu0 0.0
  %3493 = vmatpush1.msra.mxu0 0.0
  %3494 = vmatprep.subr.mxu0 0.0
  %3495 = vmatpush1.msra.mxu0 0.0
  %3496 = vmatprep.subr.mxu0 0.0
  %3497 = vmatpush1.msra.mxu0 0.0
  %3498 = vmatprep.subr.mxu0 0.0
  %3499 = vmatpush1.msra.mxu0 0.0
  %3500 = vmatprep.subr.mxu0 0.0
  %3501 = vmatpush1.msra.mxu0 0.0
  %3502 = vmatprep.subr.mxu0 0.0
  %3503 = vmatpush1.msra.mxu0 0.0
  %3504 = vmatprep.subr.mxu0 0.0
  %3505 = vmatpush1.msra.mxu0 0.0
  %3506 = vmatprep.subr.mxu0 0.0
  %3507 = vmatpush1.msra.mxu0 0.0
  %3508 = vmatprep.subr.mxu0 0.0
  %3509 = vmatpush1.msra.mxu0 0.0
  %3510 = vmatprep.mubr.f32.mxu0 0.0
  %3511 = vmatmul.mubr.f32.gmra.mrb[0].mxu0 %v3444
  %v3512 = vpop.f32.mrb[0].mxu0
  %v3513 = vadd.f32 %v2974, %v3512
  %v3514 = vpop.f32.mrb[0].mxu0
  %3515 = vdwg.mxu0
  %3517 = vrot.lane.b32.xlu0 %v3439, 120
  %v3518 = vpop.permute.xlu0 %3517
  %v3520 = vadd.f32 %v3513, %v3518
  %v3521 = vxor.u32 %v3520, 2147483648
  %v3522 = vmul.f32 %v3521, 1.442695
  %v3523 = vpow.pop %v3522
  %v3524 = vadd.f32 %v3523, 1.0
  %v3525 = vrcp.pop %v3524
  %v3526 = vmul.f32 1.0, %v3525
  %3527 = vrot.lane.b32.xlu0 %v3439, 104
  %v3528 = vpop.permute.xlu0 %3527
  %v3530 = vmul.f32 %v3526, %v3528
  %3532 = vrot.lane.b32.xlu0 %v3530, 16
  %v3533 = vpop.permute.xlu0 %3532
  %v3535 = vadd.f32 %v3513, %v3533
  %v3536 = vtanh.pop %v3535
  %v3537 = vsub.f32 1.0, %v3526
  %3539 = vrot.lane.b32.xlu0 %v3536, 120
  %v3540 = vpop.permute.xlu0 %3539
  %v3542 = vmul.f32 %v3537, %v3540
  %v3543 = vmul.f32 %v3526, %v3366
  %v3544 = vadd.f32 %v3542, %v3543
  %v3545 = vld [vmem:[%s1 + $0xc0] sm:$0xff]
  %v3546 = vld [vmem:[%s1 + $0xc8] sm:$0x1]
  %v3547 = vlaneseq
  %v3548 = vshrl.u32 %v3547, 7
  %v3549 = vsub.s32 0, %v3548
  %v3550 = vrot.slane %v3546, %v3549
  %3552 = vrot.lane.b32.xlu0 %v3544, 120
  %v3553 = vpop.permute.xlu0 %3552
  %v3554 = vsel %vm361, %v3553, 0
  %3556 = vmatprep.subr.mxu0 0.0
  %3557 = vmatpush1.msra.mxu0 %v3545
  %3558 = vmatprep.subr.mxu0 0.0
  %3559 = vmatpush1.msra.mxu0 0.0
  %3560 = vmatprep.subr.mxu0 0.0
  %3561 = vmatpush1.msra.mxu0 0.0
  %3562 = vmatprep.subr.mxu0 0.0
  %3563 = vmatpush1.msra.mxu0 0.0
  %3564 = vmatprep.subr.mxu0 0.0
  %3565 = vmatpush1.msra.mxu0 0.0
  %3566 = vmatprep.subr.mxu0 0.0
  %3567 = vmatpush1.msra.mxu0 0.0
  %3568 = vmatprep.subr.mxu0 0.0
  %3569 = vmatpush1.msra.mxu0 0.0
  %3570 = vmatprep.subr.mxu0 0.0
  %3571 = vmatpush1.msra.mxu0 0.0
  %3572 = vmatprep.subr.mxu0 0.0
  %3573 = vmatpush1.msra.mxu0 0.0
  %3574 = vmatprep.subr.mxu0 0.0
  %3575 = vmatpush1.msra.mxu0 0.0
  %3576 = vmatprep.subr.mxu0 0.0
  %3577 = vmatpush1.msra.mxu0 0.0
  %3578 = vmatprep.subr.mxu0 0.0
  %3579 = vmatpush1.msra.mxu0 0.0
  %3580 = vmatprep.subr.mxu0 0.0
  %3581 = vmatpush1.msra.mxu0 0.0
  %3582 = vmatprep.subr.mxu0 0.0
  %3583 = vmatpush1.msra.mxu0 0.0
  %3584 = vmatprep.subr.mxu0 0.0
  %3585 = vmatpush1.msra.mxu0 0.0
  %3586 = vmatprep.subr.mxu0 0.0
  %3587 = vmatpush1.msra.mxu0 0.0
  %3588 = vmatprep.subr.mxu0 0.0
  %3589 = vmatpush1.msra.mxu0 0.0
  %3590 = vmatprep.subr.mxu0 0.0
  %3591 = vmatpush1.msra.mxu0 0.0
  %3592 = vmatprep.subr.mxu0 0.0
  %3593 = vmatpush1.msra.mxu0 0.0
  %3594 = vmatprep.subr.mxu0 0.0
  %3595 = vmatpush1.msra.mxu0 0.0
  %3596 = vmatprep.subr.mxu0 0.0
  %3597 = vmatpush1.msra.mxu0 0.0
  %3598 = vmatprep.subr.mxu0 0.0
  %3599 = vmatpush1.msra.mxu0 0.0
  %3600 = vmatprep.subr.mxu0 0.0
  %3601 = vmatpush1.msra.mxu0 0.0
  %3602 = vmatprep.subr.mxu0 0.0
  %3603 = vmatpush1.msra.mxu0 0.0
  %3604 = vmatprep.subr.mxu0 0.0
  %3605 = vmatpush1.msra.mxu0 0.0
  %3606 = vmatprep.subr.mxu0 0.0
  %3607 = vmatpush1.msra.mxu0 0.0
  %3608 = vmatprep.subr.mxu0 0.0
  %3609 = vmatpush1.msra.mxu0 0.0
  %3610 = vmatprep.subr.mxu0 0.0
  %3611 = vmatpush1.msra.mxu0 0.0
  %3612 = vmatprep.subr.mxu0 0.0
  %3613 = vmatpush1.msra.mxu0 0.0
  %3614 = vmatprep.subr.mxu0 0.0
  %3615 = vmatpush1.msra.mxu0 0.0
  %3616 = vmatprep.subr.mxu0 0.0
  %3617 = vmatpush1.msra.mxu0 0.0
  %3618 = vmatprep.subr.mxu0 0.0
  %3619 = vmatpush1.msra.mxu0 0.0
  %3620 = vmatprep.mubr.f32.mxu0 0.0
  %3621 = vmatmul.mubr.f32.gmra.mrb[0].mxu0 %v3013
  %v3622 = vpop.f32.mrb[0].mxu0
  %v3623 = vadd.f32 %v3550, %v3622
  %v3624 = vpop.f32.mrb[0].mxu0
  %3625 = vmatprep.mubr.f32.mxu0 0.0
  %3626 = vmatmul.mubr.f32.gmra.mrb[0].mxu0 %v3192
  %v3627 = vpop.f32.mrb[0].mxu0
  %v3628 = vadd.f32 %v3550, %v3627
  %v3629 = vpop.f32.mrb[0].mxu0
  %3630 = vmatprep.mubr.f32.mxu0 0.0
  %3631 = vmatmul.mubr.f32.gmra.mrb[0].mxu0 %v3370
  %v3632 = vpop.f32.mrb[0].mxu0
  %v3633 = vadd.f32 %v3550, %v3632
  %v3634 = vpop.f32.mrb[0].mxu0
  %3635 = vmatprep.mubr.f32.mxu0 0.0
  %3636 = vmatmul.mubr.f32.gmra.mrb[0].mxu0 %v3554
  %v3637 = vpop.f32.mrb[0].mxu0
  %v3638 = vadd.f32 %v3550, %v3637
  %v3639 = vpop.f32.mrb[0].mxu0
  %3640 = vdwg.mxu0
  %v3641 = vmax.f32 %v3623, 0.0
  %v3642 = vmax.f32 %v3628, 0.0
  %v3643 = vmax.f32 %v3633, 0.0
  %v3644 = vmax.f32 %v3638, 0.0
  %v3645 = vtanh.pop %v3641
  %v3646 = vtanh.pop %v3642
  %v3647 = vtanh.pop %v3643
  %v3648 = vtanh.pop %v3644
  %v3649 = vld [vmem:[%s1 + $0xd0] sm:$0xff]
  %v3650 = vld [vmem:[%s1 + $0xd8] sm:$0xff]
  %v3651 = vld [vmem:[%s1 + $0xe0] sm:$0x1]
  %v3652 = vlaneseq
  %v3653 = vshrl.u32 %v3652, 7
  %v3654 = vsub.s32 0, %v3653
  %v3655 = vrot.slane %v3651, %v3654
  %3660 = vrot.lane.b32.xlu0 %v3645, 96
  %v3661 = vpop.permute.xlu0 %3660
  %3662 = vrot.lane.b32.xlu0 %v3646, 96
  %v3663 = vpop.permute.xlu0 %3662
  %3664 = vrot.lane.b32.xlu0 %v3647, 96
  %v3665 = vpop.permute.xlu0 %3664
  %3666 = vrot.lane.b32.xlu0 %v3648, 96
  %v3667 = vpop.permute.xlu0 %3666
  %v3668 = vsel %vm1132, %v3661, 0
  %v3670 = vsel %vm1132, %v3663, 0
  %v3672 = vsel %vm1132, %v3665, 0
  %v3674 = vsel %vm1132, %v3667, 0
  %3676 = vmatprep.subr.mxu0 0.0
  %3677 = vmatpush1.msra.mxu0 %v3649
  %3678 = vmatprep.subr.mxu0 0.0
  %3679 = vmatpush1.msra.mxu0 %v3650
  %3680 = vmatprep.subr.mxu0 0.0
  %3681 = vmatpush1.msra.mxu0 0.0
  %3682 = vmatprep.subr.mxu0 0.0
  %3683 = vmatpush1.msra.mxu0 0.0
  %3684 = vmatprep.subr.mxu0 0.0
  %3685 = vmatpush1.msra.mxu0 0.0
  %3686 = vmatprep.subr.mxu0 0.0
  %3687 = vmatpush1.msra.mxu0 0.0
  %3688 = vmatprep.subr.mxu0 0.0
  %3689 = vmatpush1.msra.mxu0 0.0
  %3690 = vmatprep.subr.mxu0 0.0
  %3691 = vmatpush1.msra.mxu0 0.0
  %3692 = vmatprep.subr.mxu0 0.0
  %3693 = vmatpush1.msra.mxu0 0.0
  %3694 = vmatprep.subr.mxu0 0.0
  %3695 = vmatpush1.msra.mxu0 0.0
  %3696 = vmatprep.subr.mxu0 0.0
  %3697 = vmatpush1.msra.mxu0 0.0
  %3698 = vmatprep.subr.mxu0 0.0
  %3699 = vmatpush1.msra.mxu0 0.0
  %3700 = vmatprep.subr.mxu0 0.0
  %3701 = vmatpush1.msra.mxu0 0.0
  %3702 = vmatprep.subr.mxu0 0.0
  %3703 = vmatpush1.msra.mxu0 0.0
  %3704 = vmatprep.subr.mxu0 0.0
  %3705 = vmatpush1.msra.mxu0 0.0
  %3706 = vmatprep.subr.mxu0 0.0
  %3707 = vmatpush1.msra.mxu0 0.0
  %3708 = vmatprep.subr.mxu0 0.0
  %3709 = vmatpush1.msra.mxu0 0.0
  %3710 = vmatprep.subr.mxu0 0.0
  %3711 = vmatpush1.msra.mxu0 0.0
  %3712 = vmatprep.subr.mxu0 0.0
  %3713 = vmatpush1.msra.mxu0 0.0
  %3714 = vmatprep.subr.mxu0 0.0
  %3715 = vmatpush1.msra.mxu0 0.0
  %3716 = vmatprep.subr.mxu0 0.0
  %3717 = vmatpush1.msra.mxu0 0.0
  %3718 = vmatprep.subr.mxu0 0.0
  %3719 = vmatpush1.msra.mxu0 0.0
  %3720 = vmatprep.subr.mxu0 0.0
  %3721 = vmatpush1.msra.mxu0 0.0
  %3722 = vmatprep.subr.mxu0 0.0
  %3723 = vmatpush1.msra.mxu0 0.0
  %3724 = vmatprep.subr.mxu0 0.0
  %3725 = vmatpush1.msra.mxu0 0.0
  %3726 = vmatprep.subr.mxu0 0.0
  %3727 = vmatpush1.msra.mxu0 0.0
  %3728 = vmatprep.subr.mxu0 0.0
  %3729 = vmatpush1.msra.mxu0 0.0
  %3730 = vmatprep.subr.mxu0 0.0
  %3731 = vmatpush1.msra.mxu0 0.0
  %3732 = vmatprep.subr.mxu0 0.0
  %3733 = vmatpush1.msra.mxu0 0.0
  %3734 = vmatprep.subr.mxu0 0.0
  %3735 = vmatpush1.msra.mxu0 0.0
  %3736 = vmatprep.subr.mxu0 0.0
  %3737 = vmatpush1.msra.mxu0 0.0
  %3738 = vmatprep.subr.mxu0 0.0
  %3739 = vmatpush1.msra.mxu0 0.0
  %3740 = vmatprep.mubr.f32.mxu0 0.0
  %3741 = vmatmul.mubr.f32.gmra.mrb[0].mxu0 %v3668
  %v3742 = vpop.f32.mrb[0].mxu0
  %v3743 = vadd.f32 %v3655, %v3742
  %v3744 = vpop.f32.mrb[0].mxu0
  %3745 = vmatprep.mubr.f32.mxu0 0.0
  %3746 = vmatmul.mubr.f32.gmra.mrb[0].mxu0 %v3670
  %v3747 = vpop.f32.mrb[0].mxu0
  %v3748 = vadd.f32 %v3655, %v3747
  %v3749 = vpop.f32.mrb[0].mxu0
  %3750 = vmatprep.mubr.f32.mxu0 0.0
  %3751 = vmatmul.mubr.f32.gmra.mrb[0].mxu0 %v3672
  %v3752 = vpop.f32.mrb[0].mxu0
  %v3753 = vadd.f32 %v3655, %v3752
  %v3754 = vpop.f32.mrb[0].mxu0
  %3755 = vmatprep.mubr.f32.mxu0 0.0
  %3756 = vmatmul.mubr.f32.gmra.mrb[0].mxu0 %v3674
  %v3757 = vpop.f32.mrb[0].mxu0
  %v3758 = vadd.f32 %v3655, %v3757
  %v3759 = vpop.f32.mrb[0].mxu0
  %3760 = vdwg.mxu0
  %v3761 = vmax.f32 %v3743, 0.0
  %v3762 = vmax.f32 %v3748, 0.0
  %v3763 = vmax.f32 %v3753, 0.0
  %v3764 = vmax.f32 %v3758, 0.0
  %3765 = vst.msk [vmem:[#allocation2 + $0x40] sm:$0xff] %vm138, %v3641
  %3766 = vst.msk [vmem:[#allocation2 + $0x48] sm:$0xff] %vm138, %v3642
  %3767 = vst.msk [vmem:[#allocation2 + $0x50] sm:$0xff] %vm138, %v3643
  %3768 = vst.msk [vmem:[#allocation2 + $0x58] sm:$0xff] %vm138, %v3644
  %3770 = vrot.lane.b32.xlu0 %v3641, 88
  %v3771 = vpop.permute.xlu0 %3770
  %3773 = vst.msk [vmem:[#allocation3 + $0x10] sm:$0xff] %vm361, %v3771
  %3775 = vrot.lane.b32.xlu0 %v3761, 127
  %v3776 = vpop.permute.xlu0 %3775
  %3778 = vst.msk [vmem:[#allocation4 + $0x10] sm:$0xff] %vm1243, %v3776
  %3780 = vrot.lane.b32.xlu0 %v3642, 88
  %v3781 = vpop.permute.xlu0 %3780
  %3783 = vst.msk [vmem:[#allocation3 + $0x30] sm:$0xff] %vm361, %v3781
  %3785 = vrot.lane.b32.xlu0 %v3762, 127
  %v3786 = vpop.permute.xlu0 %3785
  %3788 = vst.msk [vmem:[#allocation4 + $0x30] sm:$0xff] %vm1243, %v3786
  %3790 = vrot.lane.b32.xlu0 %v3643, 88
  %v3791 = vpop.permute.xlu0 %3790
  %3793 = vst.msk [vmem:[#allocation3 + $0x50] sm:$0xff] %vm361, %v3791
  %3795 = vrot.lane.b32.xlu0 %v3763, 127
  %v3796 = vpop.permute.xlu0 %3795
  %3798 = vst.msk [vmem:[#allocation4 + $0x50] sm:$0xff] %vm1243, %v3796
  %3800 = vrot.lane.b32.xlu0 %v3644, 88
  %v3801 = vpop.permute.xlu0 %3800
  %3803 = vst.msk [vmem:[#allocation3 + $0x70] sm:$0xff] %vm361, %v3801
  %3805 = vrot.lane.b32.xlu0 %v3764, 127
  %v3806 = vpop.permute.xlu0 %3805
  %3808 = vst.msk [vmem:[#allocation4 + $0x70] sm:$0xff] %vm1243, %v3806
  %v3809 = vld [vmem:[%s1 + $0x30] sm:$0xff]
  %3810 = vrot.lane.b32.xlu0 %v3641, 96
  %v3811 = vpop.permute.xlu0 %3810
  %3812 = vrot.lane.b32.xlu0 %v3642, 96
  %v3813 = vpop.permute.xlu0 %3812
  %3814 = vrot.lane.b32.xlu0 %v3643, 96
  %v3815 = vpop.permute.xlu0 %3814
  %3816 = vrot.lane.b32.xlu0 %v3644, 96
  %v3817 = vpop.permute.xlu0 %3816
  %v3818 = vsel %vm361, %v3811, 0
  %v3820 = vsel %vm361, %v3813, 0
  %v3822 = vsel %vm361, %v3815, 0
  %v3824 = vsel %vm361, %v3817, 0
  %3826 = vmatprep.subr.mxu0 0.0
  %3827 = vmatpush1.msra.mxu0 %v3809
  %3828 = vmatprep.subr.mxu0 0.0
  %3829 = vmatpush1.msra.mxu0 0.0
  %3830 = vmatprep.subr.mxu0 0.0
  %3831 = vmatpush1.msra.mxu0 0.0
  %3832 = vmatprep.subr.mxu0 0.0
  %3833 = vmatpush1.msra.mxu0 0.0
  %3834 = vmatprep.subr.mxu0 0.0
  %3835 = vmatpush1.msra.mxu0 0.0
  %3836 = vmatprep.subr.mxu0 0.0
  %3837 = vmatpush1.msra.mxu0 0.0
  %3838 = vmatprep.subr.mxu0 0.0
  %3839 = vmatpush1.msra.mxu0 0.0
  %3840 = vmatprep.subr.mxu0 0.0
  %3841 = vmatpush1.msra.mxu0 0.0
  %3842 = vmatprep.subr.mxu0 0.0
  %3843 = vmatpush1.msra.mxu0 0.0
  %3844 = vmatprep.subr.mxu0 0.0
  %3845 = vmatpush1.msra.mxu0 0.0
  %3846 = vmatprep.subr.mxu0 0.0
  %3847 = vmatpush1.msra.mxu0 0.0
  %3848 = vmatprep.subr.mxu0 0.0
  %3849 = vmatpush1.msra.mxu0 0.0
  %3850 = vmatprep.subr.mxu0 0.0
  %3851 = vmatpush1.msra.mxu0 0.0
  %3852 = vmatprep.subr.mxu0 0.0
  %3853 = vmatpush1.msra.mxu0 0.0
  %3854 = vmatprep.subr.mxu0 0.0
  %3855 = vmatpush1.msra.mxu0 0.0
  %3856 = vmatprep.subr.mxu0 0.0
  %3857 = vmatpush1.msra.mxu0 0.0
  %3858 = vmatprep.subr.mxu0 0.0
  %3859 = vmatpush1.msra.mxu0 0.0
  %3860 = vmatprep.subr.mxu0 0.0
  %3861 = vmatpush1.msra.mxu0 0.0
  %3862 = vmatprep.subr.mxu0 0.0
  %3863 = vmatpush1.msra.mxu0 0.0
  %3864 = vmatprep.subr.mxu0 0.0
  %3865 = vmatpush1.msra.mxu0 0.0
  %3866 = vmatprep.subr.mxu0 0.0
  %3867 = vmatpush1.msra.mxu0 0.0
  %3868 = vmatprep.subr.mxu0 0.0
  %3869 = vmatpush1.msra.mxu0 0.0
  %3870 = vmatprep.subr.mxu0 0.0
  %3871 = vmatpush1.msra.mxu0 0.0
  %3872 = vmatprep.subr.mxu0 0.0
  %3873 = vmatpush1.msra.mxu0 0.0
  %3874 = vmatprep.subr.mxu0 0.0
  %3875 = vmatpush1.msra.mxu0 0.0
  %3876 = vmatprep.subr.mxu0 0.0
  %3877 = vmatpush1.msra.mxu0 0.0
  %3878 = vmatprep.subr.mxu0 0.0
  %3879 = vmatpush1.msra.mxu0 0.0
  %3880 = vmatprep.subr.mxu0 0.0
  %3881 = vmatpush1.msra.mxu0 0.0
  %3882 = vmatprep.subr.mxu0 0.0
  %3883 = vmatpush1.msra.mxu0 0.0
  %3884 = vmatprep.subr.mxu0 0.0
  %3885 = vmatpush1.msra.mxu0 0.0
  %3886 = vmatprep.subr.mxu0 0.0
  %3887 = vmatpush1.msra.mxu0 0.0
  %3888 = vmatprep.subr.mxu0 0.0
  %3889 = vmatpush1.msra.mxu0 0.0
  %3890 = vmatprep.mubr.f32.mxu0 0.0
  %3891 = vmatmul.mubr.f32.gmra.mrb[0].mxu0 %v3818
  %v3892 = vpop.f32.mrb[0].mxu0
  %v3893 = vadd.f32 0.0, %v3892
  %v3894 = vpop.f32.mrb[0].mxu0
  %3895 = vmatprep.mubr.f32.mxu0 0.0
  %3896 = vmatmul.mubr.f32.gmra.mrb[0].mxu0 %v3820
  %v3897 = vpop.f32.mrb[0].mxu0
  %v3898 = vadd.f32 0.0, %v3897
  %v3899 = vpop.f32.mrb[0].mxu0
  %3900 = vmatprep.mubr.f32.mxu0 0.0
  %3901 = vmatmul.mubr.f32.gmra.mrb[0].mxu0 %v3822
  %v3902 = vpop.f32.mrb[0].mxu0
  %v3903 = vadd.f32 0.0, %v3902
  %v3904 = vpop.f32.mrb[0].mxu0
  %3905 = vmatprep.mubr.f32.mxu0 0.0
  %3906 = vmatmul.mubr.f32.gmra.mrb[0].mxu0 %v3824
  %v3907 = vpop.f32.mrb[0].mxu0
  %v3908 = vadd.f32 0.0, %v3907
  %v3909 = vpop.f32.mrb[0].mxu0
  %3910 = vdwg.mxu0
  %v3911 = vmax.f32 %v3761, %v3762
  %v3912 = vmax.f32 %v3911, %v3763
  %v3913 = vmax.f32 %v3912, %v3764
  %v3914 = vsub.f32 %v3761, %v3913
  %v3915 = vmul.f32 %v3914, 1.442695
  %v3916 = vpow.pop %v3915
  %v3917 = vsub.f32 %v3762, %v3913
  %v3918 = vmul.f32 %v3917, 1.442695
  %v3919 = vpow.pop %v3918
  %v3920 = vsub.f32 %v3763, %v3913
  %v3921 = vmul.f32 %v3920, 1.442695
  %v3922 = vpow.pop %v3921
  %v3923 = vsub.f32 %v3764, %v3913
  %v3924 = vmul.f32 %v3923, 1.442695
  %v3925 = vpow.pop %v3924
  %3927 = vset.pattern.permute.xlu0 0
  %3928 = vperm.xlu0 %3927, %v3916
  %v3929 = vpop.permute.xlu0 %3928
  %v3931 = vmul.f32 %v3929, %v3893
  %v3932 = vadd.f32 %v3916, %v3919
  %3934 = vset.pattern.permute.xlu0 0
  %3935 = vperm.xlu0 %3934, %v3919
  %v3936 = vpop.permute.xlu0 %3935
  %v3938 = vmul.f32 %v3936, %v3898
  %v3939 = vadd.f32 %v3931, %v3938
  %v3940 = vadd.f32 %v3932, %v3922
  %3942 = vset.pattern.permute.xlu0 0
  %3943 = vperm.xlu0 %3942, %v3922
  %v3944 = vpop.permute.xlu0 %3943
  %v3946 = vmul.f32 %v3944, %v3903
  %v3947 = vadd.f32 %v3939, %v3946
  %v3948 = vadd.f32 %v3940, %v3925
  %3950 = vset.pattern.permute.xlu0 0
  %3951 = vperm.xlu0 %3950, %v3925
  %v3952 = vpop.permute.xlu0 %3951
  %v3954 = vmul.f32 %v3952, %v3908
  %v3955 = vadd.f32 %v3947, %v3954
  %3957 = vset.pattern.permute.xlu0 0
  %3958 = vperm.xlu0 %3957, %v3948
  %v3959 = vpop.permute.xlu0 %3958
  %v3961 = vrcp.pop %v3959
  %v3962 = vmul.f32 %v3955, %v3961
  %v3963 = vadd.f32 %v233, %v3962
  %v3964 = vld [vmem:[%s1 + $0x38] sm:$0xff]
  %v3965 = vld [vmem:[%s1 + $0x40] sm:$0xff]
  %v3966 = vld [vmem:[%s1 + $0x48] sm:$0xff]
  %v3967 = vld [vmem:[%s1 + $0x50] sm:$0xff]
  %v3968 = vld [vmem:[%s1 + $0x60] sm:$0x1]
  %v3969 = vlaneseq
  %v3970 = vshrl.u32 %v3969, 7
  %v3971 = vsub.s32 0, %v3970
  %v3972 = vrot.slane %v3968, %v3971
  %3973 = vmatprep.subr.mxu0 0.0
  %3974 = vmatpush1.msra.mxu0 %v3964
  %3975 = vmatprep.subr.mxu0 0.0
  %3976 = vmatpush1.msra.mxu0 %v3965
  %3977 = vmatprep.subr.mxu0 0.0
  %3978 = vmatpush1.msra.mxu0 %v3966
  %3979 = vmatprep.subr.mxu0 0.0
  %3980 = vmatpush1.msra.mxu0 %v3967
  %3981 = vmatprep.subr.mxu0 0.0
  %3982 = vmatpush1.msra.mxu0 0.0
  %3983 = vmatprep.subr.mxu0 0.0
  %3984 = vmatpush1.msra.mxu0 0.0
  %3985 = vmatprep.subr.mxu0 0.0
  %3986 = vmatpush1.msra.mxu0 0.0
  %3987 = vmatprep.subr.mxu0 0.0
  %3988 = vmatpush1.msra.mxu0 0.0
  %3989 = vmatprep.subr.mxu0 0.0
  %3990 = vmatpush1.msra.mxu0 0.0
  %3991 = vmatprep.subr.mxu0 0.0
  %3992 = vmatpush1.msra.mxu0 0.0
  %3993 = vmatprep.subr.mxu0 0.0
  %3994 = vmatpush1.msra.mxu0 0.0
  %3995 = vmatprep.subr.mxu0 0.0
  %3996 = vmatpush1.msra.mxu0 0.0
  %3997 = vmatprep.subr.mxu0 0.0
  %3998 = vmatpush1.msra.mxu0 0.0
  %3999 = vmatprep.subr.mxu0 0.0
  %4000 = vmatpush1.msra.mxu0 0.0
  %4001 = vmatprep.subr.mxu0 0.0
  %4002 = vmatpush1.msra.mxu0 0.0
  %4003 = vmatprep.subr.mxu0 0.0
  %4004 = vmatpush1.msra.mxu0 0.0
  %4005 = vmatprep.subr.mxu0 0.0
  %4006 = vmatpush1.msra.mxu0 0.0
  %4007 = vmatprep.subr.mxu0 0.0
  %4008 = vmatpush1.msra.mxu0 0.0
  %4009 = vmatprep.subr.mxu0 0.0
  %4010 = vmatpush1.msra.mxu0 0.0
  %4011 = vmatprep.subr.mxu0 0.0
  %4012 = vmatpush1.msra.mxu0 0.0
  %4013 = vmatprep.subr.mxu0 0.0
  %4014 = vmatpush1.msra.mxu0 0.0
  %4015 = vmatprep.subr.mxu0 0.0
  %4016 = vmatpush1.msra.mxu0 0.0
  %4017 = vmatprep.subr.mxu0 0.0
  %4018 = vmatpush1.msra.mxu0 0.0
  %4019 = vmatprep.subr.mxu0 0.0
  %4020 = vmatpush1.msra.mxu0 0.0
  %4021 = vmatprep.subr.mxu0 0.0
  %4022 = vmatpush1.msra.mxu0 0.0
  %4023 = vmatprep.subr.mxu0 0.0
  %4024 = vmatpush1.msra.mxu0 0.0
  %4025 = vmatprep.subr.mxu0 0.0
  %4026 = vmatpush1.msra.mxu0 0.0
  %4027 = vmatprep.subr.mxu0 0.0
  %4028 = vmatpush1.msra.mxu0 0.0
  %4029 = vmatprep.subr.mxu0 0.0
  %4030 = vmatpush1.msra.mxu0 0.0
  %4031 = vmatprep.subr.mxu0 0.0
  %4032 = vmatpush1.msra.mxu0 0.0
  %4033 = vmatprep.subr.mxu0 0.0
  %4034 = vmatpush1.msra.mxu0 0.0
  %4035 = vmatprep.subr.mxu0 0.0
  %4036 = vmatpush1.msra.mxu0 0.0
  %4037 = vmatprep.mubr.f32.mxu0 0.0
  %4038 = vmatmul.mubr.f32.gmra.mrb[0].mxu0 %v2814
  %v4039 = vpop.f32.mrb[0].mxu0
  %v4040 = vadd.f32 %v3972, %v4039
  %v4041 = vpop.f32.mrb[0].mxu0
  %4042 = vdwg.mxu0
  %v4043 = vadd.f32 %v3963, %v4040
  %v4044 = vxor.u32 %v4043, 2147483648
  %v4045 = vmul.f32 %v4044, 1.442695
  %v4046 = vpow.pop %v4045
  %v4047 = vadd.f32 %v4046, 1.0
  %v4048 = vrcp.pop %v4047
  %v4049 = vmul.f32 1.0, %v4048
  %4051 = vrot.lane.b32.xlu0 %v4040, 64
  %v4052 = vpop.permute.xlu0 %4051
  %v4054 = vmul.f32 %v4049, %v4052
  %4056 = vrot.lane.b32.xlu0 %v4054, 64
  %v4057 = vpop.permute.xlu0 %4056
  %v4059 = vadd.f32 %v3963, %v4057
  %v4060 = vtanh.pop %v4059
  %v4061 = vsub.f32 1.0, %v4049
  %4063 = vrot.lane.b32.xlu0 %v4060, 96
  %v4064 = vpop.permute.xlu0 %4063
  %v4066 = vmul.f32 %v4061, %v4064
  %v4067 = vmul.f32 %v4049, %v2801
  %v4068 = vadd.f32 %v4066, %v4067
  %v4069 = vld [vmem:[%s1 + $0x68] sm:$0xff]
  %v4070 = vld [vmem:[%s1 + $0x70] sm:$0xff]
  %v4071 = vld [vmem:[%s1 + $0x78] sm:$0xff]
  %v4072 = vld [vmem:[%s1 + $0x80] sm:$0xff]
  %v4073 = vld [vmem:[%s1 + $0x88] sm:$0x1]
  %v4074 = vlaneseq
  %v4075 = vshrl.u32 %v4074, 7
  %v4076 = vsub.s32 0, %v4075
  %v4077 = vrot.slane %v4073, %v4076
  %4079 = vrot.lane.b32.xlu0 %v4068, 96
  %v4080 = vpop.permute.xlu0 %4079
  %v4081 = vsel %vm138, %v4080, 0
  %4083 = vmatprep.subr.mxu0 0.0
  %4084 = vmatpush1.msra.mxu0 %v4069
  %4085 = vmatprep.subr.mxu0 0.0
  %4086 = vmatpush1.msra.mxu0 %v4070
  %4087 = vmatprep.subr.mxu0 0.0
  %4088 = vmatpush1.msra.mxu0 %v4071
  %4089 = vmatprep.subr.mxu0 0.0
  %4090 = vmatpush1.msra.mxu0 %v4072
  %4091 = vmatprep.subr.mxu0 0.0
  %4092 = vmatpush1.msra.mxu0 0.0
  %4093 = vmatprep.subr.mxu0 0.0
  %4094 = vmatpush1.msra.mxu0 0.0
  %4095 = vmatprep.subr.mxu0 0.0
  %4096 = vmatpush1.msra.mxu0 0.0
  %4097 = vmatprep.subr.mxu0 0.0
  %4098 = vmatpush1.msra.mxu0 0.0
  %4099 = vmatprep.subr.mxu0 0.0
  %4100 = vmatpush1.msra.mxu0 0.0
  %4101 = vmatprep.subr.mxu0 0.0
  %4102 = vmatpush1.msra.mxu0 0.0
  %4103 = vmatprep.subr.mxu0 0.0
  %4104 = vmatpush1.msra.mxu0 0.0
  %4105 = vmatprep.subr.mxu0 0.0
  %4106 = vmatpush1.msra.mxu0 0.0
  %4107 = vmatprep.subr.mxu0 0.0
  %4108 = vmatpush1.msra.mxu0 0.0
  %4109 = vmatprep.subr.mxu0 0.0
  %4110 = vmatpush1.msra.mxu0 0.0
  %4111 = vmatprep.subr.mxu0 0.0
  %4112 = vmatpush1.msra.mxu0 0.0
  %4113 = vmatprep.subr.mxu0 0.0
  %4114 = vmatpush1.msra.mxu0 0.0
  %4115 = vmatprep.subr.mxu0 0.0
  %4116 = vmatpush1.msra.mxu0 0.0
  %4117 = vmatprep.subr.mxu0 0.0
  %4118 = vmatpush1.msra.mxu0 0.0
  %4119 = vmatprep.subr.mxu0 0.0
  %4120 = vmatpush1.msra.mxu0 0.0
  %4121 = vmatprep.subr.mxu0 0.0
  %4122 = vmatpush1.msra.mxu0 0.0
  %4123 = vmatprep.subr.mxu0 0.0
  %4124 = vmatpush1.msra.mxu0 0.0
  %4125 = vmatprep.subr.mxu0 0.0
  %4126 = vmatpush1.msra.mxu0 0.0
  %4127 = vmatprep.subr.mxu0 0.0
  %4128 = vmatpush1.msra.mxu0 0.0
  %4129 = vmatprep.subr.mxu0 0.0
  %4130 = vmatpush1.msra.mxu0 0.0
  %4131 = vmatprep.subr.mxu0 0.0
  %4132 = vmatpush1.msra.mxu0 0.0
  %4133 = vmatprep.subr.mxu0 0.0
  %4134 = vmatpush1.msra.mxu0 0.0
  %4135 = vmatprep.subr.mxu0 0.0
  %4136 = vmatpush1.msra.mxu0 0.0
  %4137 = vmatprep.subr.mxu0 0.0
  %4138 = vmatpush1.msra.mxu0 0.0
  %4139 = vmatprep.subr.mxu0 0.0
  %4140 = vmatpush1.msra.mxu0 0.0
  %4141 = vmatprep.subr.mxu0 0.0
  %4142 = vmatpush1.msra.mxu0 0.0
  %4143 = vmatprep.subr.mxu0 0.0
  %4144 = vmatpush1.msra.mxu0 0.0
  %4145 = vmatprep.subr.mxu0 0.0
  %4146 = vmatpush1.msra.mxu0 0.0
  %4147 = vmatprep.mubr.f32.mxu0 0.0
  %4148 = vmatmul.mubr.f32.gmra.mrb[0].mxu0 %v4081
  %v4149 = vpop.f32.mrb[0].mxu0
  %v4150 = vadd.f32 %v4077, %v4149
  %v4151 = vpop.f32.mrb[0].mxu0
  %4152 = vdwg.mxu0
  %v4153 = vmax.f32 %v4150, 0.0
  %4155 = vrot.lane.b32.xlu0 %v4153, 120
  %v4156 = vpop.permute.xlu0 %4155
  %4158 = vst.msk [vmem:[#allocation5 + $0x18] sm:$0xff] %vm138, %v4156
  %v4159 = vld [vmem:[%s1 + $0xa0] sm:$0xff]
  %v4160 = vld [vmem:[%s1 + $0xa8] sm:$0x1]
  %v4161 = vlaneseq
  %v4162 = vshrl.u32 %v4161, 7
  %v4163 = vsub.s32 0, %v4162
  %v4164 = vrot.slane %v4160, %v4163
  %v4165 = vsel %vm361, %v4153, 0
  %4167 = vmatprep.subr.mxu0 0.0
  %4168 = vmatpush1.msra.mxu0 %v4159
  %4169 = vmatprep.subr.mxu0 0.0
  %4170 = vmatpush1.msra.mxu0 0.0
  %4171 = vmatprep.subr.mxu0 0.0
  %4172 = vmatpush1.msra.mxu0 0.0
  %4173 = vmatprep.subr.mxu0 0.0
  %4174 = vmatpush1.msra.mxu0 0.0
  %4175 = vmatprep.subr.mxu0 0.0
  %4176 = vmatpush1.msra.mxu0 0.0
  %4177 = vmatprep.subr.mxu0 0.0
  %4178 = vmatpush1.msra.mxu0 0.0
  %4179 = vmatprep.subr.mxu0 0.0
  %4180 = vmatpush1.msra.mxu0 0.0
  %4181 = vmatprep.subr.mxu0 0.0
  %4182 = vmatpush1.msra.mxu0 0.0
  %4183 = vmatprep.subr.mxu0 0.0
  %4184 = vmatpush1.msra.mxu0 0.0
  %4185 = vmatprep.subr.mxu0 0.0
  %4186 = vmatpush1.msra.mxu0 0.0
  %4187 = vmatprep.subr.mxu0 0.0
  %4188 = vmatpush1.msra.mxu0 0.0
  %4189 = vmatprep.subr.mxu0 0.0
  %4190 = vmatpush1.msra.mxu0 0.0
  %4191 = vmatprep.subr.mxu0 0.0
  %4192 = vmatpush1.msra.mxu0 0.0
  %4193 = vmatprep.subr.mxu0 0.0
  %4194 = vmatpush1.msra.mxu0 0.0
  %4195 = vmatprep.subr.mxu0 0.0
  %4196 = vmatpush1.msra.mxu0 0.0
  %4197 = vmatprep.subr.mxu0 0.0
  %4198 = vmatpush1.msra.mxu0 0.0
  %4199 = vmatprep.subr.mxu0 0.0
  %4200 = vmatpush1.msra.mxu0 0.0
  %4201 = vmatprep.subr.mxu0 0.0
  %4202 = vmatpush1.msra.mxu0 0.0
  %4203 = vmatprep.subr.mxu0 0.0
  %4204 = vmatpush1.msra.mxu0 0.0
  %4205 = vmatprep.subr.mxu0 0.0
  %4206 = vmatpush1.msra.mxu0 0.0
  %4207 = vmatprep.subr.mxu0 0.0
  %4208 = vmatpush1.msra.mxu0 0.0
  %4209 = vmatprep.subr.mxu0 0.0
  %4210 = vmatpush1.msra.mxu0 0.0
  %4211 = vmatprep.subr.mxu0 0.0
  %4212 = vmatpush1.msra.mxu0 0.0
  %4213 = vmatprep.subr.mxu0 0.0
  %4214 = vmatpush1.msra.mxu0 0.0
  %4215 = vmatprep.subr.mxu0 0.0
  %4216 = vmatpush1.msra.mxu0 0.0
  %4217 = vmatprep.subr.mxu0 0.0
  %4218 = vmatpush1.msra.mxu0 0.0
  %4219 = vmatprep.subr.mxu0 0.0
  %4220 = vmatpush1.msra.mxu0 0.0
  %4221 = vmatprep.subr.mxu0 0.0
  %4222 = vmatpush1.msra.mxu0 0.0
  %4223 = vmatprep.subr.mxu0 0.0
  %4224 = vmatpush1.msra.mxu0 0.0
  %4225 = vmatprep.subr.mxu0 0.0
  %4226 = vmatpush1.msra.mxu0 0.0
  %4227 = vmatprep.subr.mxu0 0.0
  %4228 = vmatpush1.msra.mxu0 0.0
  %4229 = vmatprep.subr.mxu0 0.0
  %4230 = vmatpush1.msra.mxu0 0.0
  %4231 = vmatprep.mubr.f32.mxu0 0.0
  %4232 = vmatmul.mubr.f32.gmra.mrb[0].mxu0 %v4165
  %v4233 = vpop.f32.mrb[0].mxu0
  %v4234 = vadd.f32 %v4164, %v4233
  %v4235 = vpop.f32.mrb[0].mxu0
  %4236 = vdwg.mxu0
  %v4237 = vld [vmem:[%s1 + $0x98] sm:$0x1]
  %v4238 = vlaneseq
  %v4239 = vshrl.u32 %v4238, 7
  %v4240 = vsub.s32 0, %v4239
  %v4241 = vrot.slane %v4237, %v4240
  %v4242 = vadd.f32 %v4241, %v4234
  %v4243 = vxor.u32 %v4242, 2147483648
  %v4244 = vmul.f32 %v4243, 1.442695
  %v4245 = vpow.pop %v4244
  %v4246 = vadd.f32 %v4245, 1.0
  %v4247 = vrcp.pop %v4246
  %v4248 = vmul.f32 1.0, %v4247
  %4250 = vrot.lane.b32.xlu0 %v4234, 112
  %v4251 = vpop.permute.xlu0 %4250
  %v4253 = vmul.f32 %v4248, %v4251
  %4255 = vrot.lane.b32.xlu0 %v4253, 16
  %v4256 = vpop.permute.xlu0 %4255
  %v4258 = vadd.f32 %v4241, %v4256
  %v4259 = vtanh.pop %v4258
  %v4260 = vsub.f32 1.0, %v4248
  %4262 = vrot.lane.b32.xlu0 %v4259, 120
  %v4263 = vpop.permute.xlu0 %4262
  %v4265 = vmul.f32 %v4260, %v4263
  %4266 = vrot.lane.b32.xlu0 %v4153, 8
  %v4267 = vpop.permute.xlu0 %4266
  %v4269 = vmul.f32 %v4248, %v4267
  %v4270 = vadd.f32 %v4265, %v4269
  %v4271 = vld [vmem:[%s1 + $0xb0] sm:$0xff]
  %v4272 = vld [vmem:[%s1 + $0xb8] sm:$0x1]
  %v4273 = vlaneseq
  %v4274 = vshrl.u32 %v4273, 7
  %v4275 = vsub.s32 0, %v4274
  %v4276 = vrot.slane %v4272, %v4275
  %4278 = vrot.lane.b32.xlu0 %v4270, 120
  %v4279 = vpop.permute.xlu0 %4278
  %v4280 = vsel %vm361, %v4279, 0
  %4282 = vmatprep.subr.mxu0 0.0
  %4283 = vmatpush1.msra.mxu0 %v4271
  %4284 = vmatprep.subr.mxu0 0.0
  %4285 = vmatpush1.msra.mxu0 0.0
  %4286 = vmatprep.subr.mxu0 0.0
  %4287 = vmatpush1.msra.mxu0 0.0
  %4288 = vmatprep.subr.mxu0 0.0
  %4289 = vmatpush1.msra.mxu0 0.0
  %4290 = vmatprep.subr.mxu0 0.0
  %4291 = vmatpush1.msra.mxu0 0.0
  %4292 = vmatprep.subr.mxu0 0.0
  %4293 = vmatpush1.msra.mxu0 0.0
  %4294 = vmatprep.subr.mxu0 0.0
  %4295 = vmatpush1.msra.mxu0 0.0
  %4296 = vmatprep.subr.mxu0 0.0
  %4297 = vmatpush1.msra.mxu0 0.0
  %4298 = vmatprep.subr.mxu0 0.0
  %4299 = vmatpush1.msra.mxu0 0.0
  %4300 = vmatprep.subr.mxu0 0.0
  %4301 = vmatpush1.msra.mxu0 0.0
  %4302 = vmatprep.subr.mxu0 0.0
  %4303 = vmatpush1.msra.mxu0 0.0
  %4304 = vmatprep.subr.mxu0 0.0
  %4305 = vmatpush1.msra.mxu0 0.0
  %4306 = vmatprep.subr.mxu0 0.0
  %4307 = vmatpush1.msra.mxu0 0.0
  %4308 = vmatprep.subr.mxu0 0.0
  %4309 = vmatpush1.msra.mxu0 0.0
  %4310 = vmatprep.subr.mxu0 0.0
  %4311 = vmatpush1.msra.mxu0 0.0
  %4312 = vmatprep.subr.mxu0 0.0
  %4313 = vmatpush1.msra.mxu0 0.0
  %4314 = vmatprep.subr.mxu0 0.0
  %4315 = vmatpush1.msra.mxu0 0.0
  %4316 = vmatprep.subr.mxu0 0.0
  %4317 = vmatpush1.msra.mxu0 0.0
  %4318 = vmatprep.subr.mxu0 0.0
  %4319 = vmatpush1.msra.mxu0 0.0
  %4320 = vmatprep.subr.mxu0 0.0
  %4321 = vmatpush1.msra.mxu0 0.0
  %4322 = vmatprep.subr.mxu0 0.0
  %4323 = vmatpush1.msra.mxu0 0.0
  %4324 = vmatprep.subr.mxu0 0.0
  %4325 = vmatpush1.msra.mxu0 0.0
  %4326 = vmatprep.subr.mxu0 0.0
  %4327 = vmatpush1.msra.mxu0 0.0
  %4328 = vmatprep.subr.mxu0 0.0
  %4329 = vmatpush1.msra.mxu0 0.0
  %4330 = vmatprep.subr.mxu0 0.0
  %4331 = vmatpush1.msra.mxu0 0.0
  %4332 = vmatprep.subr.mxu0 0.0
  %4333 = vmatpush1.msra.mxu0 0.0
  %4334 = vmatprep.subr.mxu0 0.0
  %4335 = vmatpush1.msra.mxu0 0.0
  %4336 = vmatprep.subr.mxu0 0.0
  %4337 = vmatpush1.msra.mxu0 0.0
  %4338 = vmatprep.subr.mxu0 0.0
  %4339 = vmatpush1.msra.mxu0 0.0
  %4340 = vmatprep.subr.mxu0 0.0
  %4341 = vmatpush1.msra.mxu0 0.0
  %4342 = vmatprep.subr.mxu0 0.0
  %4343 = vmatpush1.msra.mxu0 0.0
  %4344 = vmatprep.subr.mxu0 0.0
  %4345 = vmatpush1.msra.mxu0 0.0
  %4346 = vmatprep.mubr.f32.mxu0 0.0
  %4347 = vmatmul.mubr.f32.gmra.mrb[0].mxu0 %v4280
  %v4348 = vpop.f32.mrb[0].mxu0
  %v4349 = vadd.f32 %v4276, %v4348
  %v4350 = vpop.f32.mrb[0].mxu0
  %4351 = vdwg.mxu0
  %v4352 = vmax.f32 %v4349, 0.0
  %v4353 = vld [vmem:[%s1 + $0x90] sm:$0xff]
  %v4355 = vsel %vm361, %v4352, 0
  %4357 = vmatprep.subr.mxu0 0.0
  %4358 = vmatpush1.msra.mxu0 %v4353
  %4359 = vmatprep.subr.mxu0 0.0
  %4360 = vmatpush1.msra.mxu0 0.0
  %4361 = vmatprep.subr.mxu0 0.0
  %4362 = vmatpush1.msra.mxu0 0.0
  %4363 = vmatprep.subr.mxu0 0.0
  %4364 = vmatpush1.msra.mxu0 0.0
  %4365 = vmatprep.subr.mxu0 0.0
  %4366 = vmatpush1.msra.mxu0 0.0
  %4367 = vmatprep.subr.mxu0 0.0
  %4368 = vmatpush1.msra.mxu0 0.0
  %4369 = vmatprep.subr.mxu0 0.0
  %4370 = vmatpush1.msra.mxu0 0.0
  %4371 = vmatprep.subr.mxu0 0.0
  %4372 = vmatpush1.msra.mxu0 0.0
  %4373 = vmatprep.subr.mxu0 0.0
  %4374 = vmatpush1.msra.mxu0 0.0
  %4375 = vmatprep.subr.mxu0 0.0
  %4376 = vmatpush1.msra.mxu0 0.0
  %4377 = vmatprep.subr.mxu0 0.0
  %4378 = vmatpush1.msra.mxu0 0.0
  %4379 = vmatprep.subr.mxu0 0.0
  %4380 = vmatpush1.msra.mxu0 0.0
  %4381 = vmatprep.subr.mxu0 0.0
  %4382 = vmatpush1.msra.mxu0 0.0
  %4383 = vmatprep.subr.mxu0 0.0
  %4384 = vmatpush1.msra.mxu0 0.0
  %4385 = vmatprep.subr.mxu0 0.0
  %4386 = vmatpush1.msra.mxu0 0.0
  %4387 = vmatprep.subr.mxu0 0.0
  %4388 = vmatpush1.msra.mxu0 0.0
  %4389 = vmatprep.subr.mxu0 0.0
  %4390 = vmatpush1.msra.mxu0 0.0
  %4391 = vmatprep.subr.mxu0 0.0
  %4392 = vmatpush1.msra.mxu0 0.0
  %4393 = vmatprep.subr.mxu0 0.0
  %4394 = vmatpush1.msra.mxu0 0.0
  %4395 = vmatprep.subr.mxu0 0.0
  %4396 = vmatpush1.msra.mxu0 0.0
  %4397 = vmatprep.subr.mxu0 0.0
  %4398 = vmatpush1.msra.mxu0 0.0
  %4399 = vmatprep.subr.mxu0 0.0
  %4400 = vmatpush1.msra.mxu0 0.0
  %4401 = vmatprep.subr.mxu0 0.0
  %4402 = vmatpush1.msra.mxu0 0.0
  %4403 = vmatprep.subr.mxu0 0.0
  %4404 = vmatpush1.msra.mxu0 0.0
  %4405 = vmatprep.subr.mxu0 0.0
  %4406 = vmatpush1.msra.mxu0 0.0
  %4407 = vmatprep.subr.mxu0 0.0
  %4408 = vmatpush1.msra.mxu0 0.0
  %4409 = vmatprep.subr.mxu0 0.0
  %4410 = vmatpush1.msra.mxu0 0.0
  %4411 = vmatprep.subr.mxu0 0.0
  %4412 = vmatpush1.msra.mxu0 0.0
  %4413 = vmatprep.subr.mxu0 0.0
  %4414 = vmatpush1.msra.mxu0 0.0
  %4415 = vmatprep.subr.mxu0 0.0
  %4416 = vmatpush1.msra.mxu0 0.0
  %4417 = vmatprep.subr.mxu0 0.0
  %4418 = vmatpush1.msra.mxu0 0.0
  %4419 = vmatprep.subr.mxu0 0.0
  %4420 = vmatpush1.msra.mxu0 0.0
  %4421 = vmatprep.mubr.f32.mxu0 0.0
  %4422 = vmatmul.mubr.f32.gmra.mrb[0].mxu0 %v4355
  %v4423 = vpop.f32.mrb[0].mxu0
  %v4424 = vadd.f32 %v4241, %v4423
  %v4425 = vpop.f32.mrb[0].mxu0
  %4426 = vdwg.mxu0
  %4428 = vrot.lane.b32.xlu0 %v4349, 120
  %v4429 = vpop.permute.xlu0 %4428
  %v4431 = vadd.f32 %v4424, %v4429
  %v4432 = vxor.u32 %v4431, 2147483648
  %v4433 = vmul.f32 %v4432, 1.442695
  %v4434 = vpow.pop %v4433
  %v4435 = vadd.f32 %v4434, 1.0
  %v4436 = vrcp.pop %v4435
  %v4437 = vmul.f32 1.0, %v4436
  %4438 = vrot.lane.b32.xlu0 %v4349, 104
  %v4439 = vpop.permute.xlu0 %4438
  %v4441 = vmul.f32 %v4437, %v4439
  %4443 = vrot.lane.b32.xlu0 %v4441, 16
  %v4444 = vpop.permute.xlu0 %4443
  %v4446 = vadd.f32 %v4424, %v4444
  %v4447 = vtanh.pop %v4446
  %v4448 = vsub.f32 1.0, %v4437
  %4450 = vrot.lane.b32.xlu0 %v4447, 120
  %v4451 = vpop.permute.xlu0 %4450
  %v4453 = vmul.f32 %v4448, %v4451
  %v4454 = vmul.f32 %v4437, %v4270
  %v4455 = vadd.f32 %v4453, %v4454
  %4457 = vrot.lane.b32.xlu0 %v4455, 120
  %v4458 = vpop.permute.xlu0 %4457
  %v4459 = vsel %vm361, %v4458, 0
  %4461 = vmatprep.subr.mxu0 0.0
  %4462 = vmatpush1.msra.mxu0 %v4271
  %4463 = vmatprep.subr.mxu0 0.0
  %4464 = vmatpush1.msra.mxu0 0.0
  %4465 = vmatprep.subr.mxu0 0.0
  %4466 = vmatpush1.msra.mxu0 0.0
  %4467 = vmatprep.subr.mxu0 0.0
  %4468 = vmatpush1.msra.mxu0 0.0
  %4469 = vmatprep.subr.mxu0 0.0
  %4470 = vmatpush1.msra.mxu0 0.0
  %4471 = vmatprep.subr.mxu0 0.0
  %4472 = vmatpush1.msra.mxu0 0.0
  %4473 = vmatprep.subr.mxu0 0.0
  %4474 = vmatpush1.msra.mxu0 0.0
  %4475 = vmatprep.subr.mxu0 0.0
  %4476 = vmatpush1.msra.mxu0 0.0
  %4477 = vmatprep.subr.mxu0 0.0
  %4478 = vmatpush1.msra.mxu0 0.0
  %4479 = vmatprep.subr.mxu0 0.0
  %4480 = vmatpush1.msra.mxu0 0.0
  %4481 = vmatprep.subr.mxu0 0.0
  %4482 = vmatpush1.msra.mxu0 0.0
  %4483 = vmatprep.subr.mxu0 0.0
  %4484 = vmatpush1.msra.mxu0 0.0
  %4485 = vmatprep.subr.mxu0 0.0
  %4486 = vmatpush1.msra.mxu0 0.0
  %4487 = vmatprep.subr.mxu0 0.0
  %4488 = vmatpush1.msra.mxu0 0.0
  %4489 = vmatprep.subr.mxu0 0.0
  %4490 = vmatpush1.msra.mxu0 0.0
  %4491 = vmatprep.subr.mxu0 0.0
  %4492 = vmatpush1.msra.mxu0 0.0
  %4493 = vmatprep.subr.mxu0 0.0
  %4494 = vmatpush1.msra.mxu0 0.0
  %4495 = vmatprep.subr.mxu0 0.0
  %4496 = vmatpush1.msra.mxu0 0.0
  %4497 = vmatprep.subr.mxu0 0.0
  %4498 = vmatpush1.msra.mxu0 0.0
  %4499 = vmatprep.subr.mxu0 0.0
  %4500 = vmatpush1.msra.mxu0 0.0
  %4501 = vmatprep.subr.mxu0 0.0
  %4502 = vmatpush1.msra.mxu0 0.0
  %4503 = vmatprep.subr.mxu0 0.0
  %4504 = vmatpush1.msra.mxu0 0.0
  %4505 = vmatprep.subr.mxu0 0.0
  %4506 = vmatpush1.msra.mxu0 0.0
  %4507 = vmatprep.subr.mxu0 0.0
  %4508 = vmatpush1.msra.mxu0 0.0
  %4509 = vmatprep.subr.mxu0 0.0
  %4510 = vmatpush1.msra.mxu0 0.0
  %4511 = vmatprep.subr.mxu0 0.0
  %4512 = vmatpush1.msra.mxu0 0.0
  %4513 = vmatprep.subr.mxu0 0.0
  %4514 = vmatpush1.msra.mxu0 0.0
  %4515 = vmatprep.subr.mxu0 0.0
  %4516 = vmatpush1.msra.mxu0 0.0
  %4517 = vmatprep.subr.mxu0 0.0
  %4518 = vmatpush1.msra.mxu0 0.0
  %4519 = vmatprep.subr.mxu0 0.0
  %4520 = vmatpush1.msra.mxu0 0.0
  %4521 = vmatprep.subr.mxu0 0.0
  %4522 = vmatpush1.msra.mxu0 0.0
  %4523 = vmatprep.subr.mxu0 0.0
  %4524 = vmatpush1.msra.mxu0 0.0
  %4525 = vmatprep.mubr.f32.mxu0 0.0
  %4526 = vmatmul.mubr.f32.gmra.mrb[0].mxu0 %v4459
  %v4527 = vpop.f32.mrb[0].mxu0
  %v4528 = vadd.f32 %v4276, %v4527
  %v4529 = vpop.f32.mrb[0].mxu0
  %4530 = vdwg.mxu0
  %v4531 = vmax.f32 %v4528, 0.0
  %v4533 = vsel %vm361, %v4531, 0
  %4535 = vmatprep.subr.mxu0 0.0
  %4536 = vmatpush1.msra.mxu0 %v4353
  %4537 = vmatprep.subr.mxu0 0.0
  %4538 = vmatpush1.msra.mxu0 0.0
  %4539 = vmatprep.subr.mxu0 0.0
  %4540 = vmatpush1.msra.mxu0 0.0
  %4541 = vmatprep.subr.mxu0 0.0
  %4542 = vmatpush1.msra.mxu0 0.0
  %4543 = vmatprep.subr.mxu0 0.0
  %4544 = vmatpush1.msra.mxu0 0.0
  %4545 = vmatprep.subr.mxu0 0.0
  %4546 = vmatpush1.msra.mxu0 0.0
  %4547 = vmatprep.subr.mxu0 0.0
  %4548 = vmatpush1.msra.mxu0 0.0
  %4549 = vmatprep.subr.mxu0 0.0
  %4550 = vmatpush1.msra.mxu0 0.0
  %4551 = vmatprep.subr.mxu0 0.0
  %4552 = vmatpush1.msra.mxu0 0.0
  %4553 = vmatprep.subr.mxu0 0.0
  %4554 = vmatpush1.msra.mxu0 0.0
  %4555 = vmatprep.subr.mxu0 0.0
  %4556 = vmatpush1.msra.mxu0 0.0
  %4557 = vmatprep.subr.mxu0 0.0
  %4558 = vmatpush1.msra.mxu0 0.0
  %4559 = vmatprep.subr.mxu0 0.0
  %4560 = vmatpush1.msra.mxu0 0.0
  %4561 = vmatprep.subr.mxu0 0.0
  %4562 = vmatpush1.msra.mxu0 0.0
  %4563 = vmatprep.subr.mxu0 0.0
  %4564 = vmatpush1.msra.mxu0 0.0
  %4565 = vmatprep.subr.mxu0 0.0
  %4566 = vmatpush1.msra.mxu0 0.0
  %4567 = vmatprep.subr.mxu0 0.0
  %4568 = vmatpush1.msra.mxu0 0.0
  %4569 = vmatprep.subr.mxu0 0.0
  %4570 = vmatpush1.msra.mxu0 0.0
  %4571 = vmatprep.subr.mxu0 0.0
  %4572 = vmatpush1.msra.mxu0 0.0
  %4573 = vmatprep.subr.mxu0 0.0
  %4574 = vmatpush1.msra.mxu0 0.0
  %4575 = vmatprep.subr.mxu0 0.0
  %4576 = vmatpush1.msra.mxu0 0.0
  %4577 = vmatprep.subr.mxu0 0.0
  %4578 = vmatpush1.msra.mxu0 0.0
  %4579 = vmatprep.subr.mxu0 0.0
  %4580 = vmatpush1.msra.mxu0 0.0
  %4581 = vmatprep.subr.mxu0 0.0
  %4582 = vmatpush1.msra.mxu0 0.0
  %4583 = vmatprep.subr.mxu0 0.0
  %4584 = vmatpush1.msra.mxu0 0.0
  %4585 = vmatprep.subr.mxu0 0.0
  %4586 = vmatpush1.msra.mxu0 0.0
  %4587 = vmatprep.subr.mxu0 0.0
  %4588 = vmatpush1.msra.mxu0 0.0
  %4589 = vmatprep.subr.mxu0 0.0
  %4590 = vmatpush1.msra.mxu0 0.0
  %4591 = vmatprep.subr.mxu0 0.0
  %4592 = vmatpush1.msra.mxu0 0.0
  %4593 = vmatprep.subr.mxu0 0.0
  %4594 = vmatpush1.msra.mxu0 0.0
  %4595 = vmatprep.subr.mxu0 0.0
  %4596 = vmatpush1.msra.mxu0 0.0
  %4597 = vmatprep.subr.mxu0 0.0
  %4598 = vmatpush1.msra.mxu0 0.0
  %4599 = vmatprep.mubr.f32.mxu0 0.0
  %4600 = vmatmul.mubr.f32.gmra.mrb[0].mxu0 %v4533
  %v4601 = vpop.f32.mrb[0].mxu0
  %v4602 = vadd.f32 %v4241, %v4601
  %v4603 = vpop.f32.mrb[0].mxu0
  %4604 = vdwg.mxu0
  %4606 = vrot.lane.b32.xlu0 %v4528, 120
  %v4607 = vpop.permute.xlu0 %4606
  %v4609 = vadd.f32 %v4602, %v4607
  %v4610 = vxor.u32 %v4609, 2147483648
  %v4611 = vmul.f32 %v4610, 1.442695
  %v4612 = vpow.pop %v4611
  %v4613 = vadd.f32 %v4612, 1.0
  %v4614 = vrcp.pop %v4613
  %v4615 = vmul.f32 1.0, %v4614
  %4616 = vrot.lane.b32.xlu0 %v4528, 104
  %v4617 = vpop.permute.xlu0 %4616
  %v4619 = vmul.f32 %v4615, %v4617
  %4621 = vrot.lane.b32.xlu0 %v4619, 16
  %v4622 = vpop.permute.xlu0 %4621
  %v4624 = vadd.f32 %v4602, %v4622
  %v4625 = vtanh.pop %v4624
  %v4626 = vsub.f32 1.0, %v4615
  %4628 = vrot.lane.b32.xlu0 %v4625, 120
  %v4629 = vpop.permute.xlu0 %4628
  %v4631 = vmul.f32 %v4626, %v4629
  %v4632 = vmul.f32 %v4615, %v4455
  %v4633 = vadd.f32 %v4631, %v4632
  %4635 = vrot.lane.b32.xlu0 %v4633, 120
  %v4636 = vpop.permute.xlu0 %4635
  %v4637 = vsel %vm361, %v4636, 0
  %4639 = vmatprep.subr.mxu0 0.0
  %4640 = vmatpush1.msra.mxu0 %v4271
  %4641 = vmatprep.subr.mxu0 0.0
  %4642 = vmatpush1.msra.mxu0 0.0
  %4643 = vmatprep.subr.mxu0 0.0
  %4644 = vmatpush1.msra.mxu0 0.0
  %4645 = vmatprep.subr.mxu0 0.0
  %4646 = vmatpush1.msra.mxu0 0.0
  %4647 = vmatprep.subr.mxu0 0.0
  %4648 = vmatpush1.msra.mxu0 0.0
  %4649 = vmatprep.subr.mxu0 0.0
  %4650 = vmatpush1.msra.mxu0 0.0
  %4651 = vmatprep.subr.mxu0 0.0
  %4652 = vmatpush1.msra.mxu0 0.0
  %4653 = vmatprep.subr.mxu0 0.0
  %4654 = vmatpush1.msra.mxu0 0.0
  %4655 = vmatprep.subr.mxu0 0.0
  %4656 = vmatpush1.msra.mxu0 0.0
  %4657 = vmatprep.subr.mxu0 0.0
  %4658 = vmatpush1.msra.mxu0 0.0
  %4659 = vmatprep.subr.mxu0 0.0
  %4660 = vmatpush1.msra.mxu0 0.0
  %4661 = vmatprep.subr.mxu0 0.0
  %4662 = vmatpush1.msra.mxu0 0.0
  %4663 = vmatprep.subr.mxu0 0.0
  %4664 = vmatpush1.msra.mxu0 0.0
  %4665 = vmatprep.subr.mxu0 0.0
  %4666 = vmatpush1.msra.mxu0 0.0
  %4667 = vmatprep.subr.mxu0 0.0
  %4668 = vmatpush1.msra.mxu0 0.0
  %4669 = vmatprep.subr.mxu0 0.0
  %4670 = vmatpush1.msra.mxu0 0.0
  %4671 = vmatprep.subr.mxu0 0.0
  %4672 = vmatpush1.msra.mxu0 0.0
  %4673 = vmatprep.subr.mxu0 0.0
  %4674 = vmatpush1.msra.mxu0 0.0
  %4675 = vmatprep.subr.mxu0 0.0
  %4676 = vmatpush1.msra.mxu0 0.0
  %4677 = vmatprep.subr.mxu0 0.0
  %4678 = vmatpush1.msra.mxu0 0.0
  %4679 = vmatprep.subr.mxu0 0.0
  %4680 = vmatpush1.msra.mxu0 0.0
  %4681 = vmatprep.subr.mxu0 0.0
  %4682 = vmatpush1.msra.mxu0 0.0
  %4683 = vmatprep.subr.mxu0 0.0
  %4684 = vmatpush1.msra.mxu0 0.0
  %4685 = vmatprep.subr.mxu0 0.0
  %4686 = vmatpush1.msra.mxu0 0.0
  %4687 = vmatprep.subr.mxu0 0.0
  %4688 = vmatpush1.msra.mxu0 0.0
  %4689 = vmatprep.subr.mxu0 0.0
  %4690 = vmatpush1.msra.mxu0 0.0
  %4691 = vmatprep.subr.mxu0 0.0
  %4692 = vmatpush1.msra.mxu0 0.0
  %4693 = vmatprep.subr.mxu0 0.0
  %4694 = vmatpush1.msra.mxu0 0.0
  %4695 = vmatprep.subr.mxu0 0.0
  %4696 = vmatpush1.msra.mxu0 0.0
  %4697 = vmatprep.subr.mxu0 0.0
  %4698 = vmatpush1.msra.mxu0 0.0
  %4699 = vmatprep.subr.mxu0 0.0
  %4700 = vmatpush1.msra.mxu0 0.0
  %4701 = vmatprep.subr.mxu0 0.0
  %4702 = vmatpush1.msra.mxu0 0.0
  %4703 = vmatprep.mubr.f32.mxu0 0.0
  %4704 = vmatmul.mubr.f32.gmra.mrb[0].mxu0 %v4637
  %v4705 = vpop.f32.mrb[0].mxu0
  %v4706 = vadd.f32 %v4276, %v4705
  %v4707 = vpop.f32.mrb[0].mxu0
  %4708 = vdwg.mxu0
  %v4709 = vmax.f32 %v4706, 0.0
  %v4711 = vsel %vm361, %v4709, 0
  %4713 = vmatprep.subr.mxu0 0.0
  %4714 = vmatpush1.msra.mxu0 %v4353
  %4715 = vmatprep.subr.mxu0 0.0
  %4716 = vmatpush1.msra.mxu0 0.0
  %4717 = vmatprep.subr.mxu0 0.0
  %4718 = vmatpush1.msra.mxu0 0.0
  %4719 = vmatprep.subr.mxu0 0.0
  %4720 = vmatpush1.msra.mxu0 0.0
  %4721 = vmatprep.subr.mxu0 0.0
  %4722 = vmatpush1.msra.mxu0 0.0
  %4723 = vmatprep.subr.mxu0 0.0
  %4724 = vmatpush1.msra.mxu0 0.0
  %4725 = vmatprep.subr.mxu0 0.0
  %4726 = vmatpush1.msra.mxu0 0.0
  %4727 = vmatprep.subr.mxu0 0.0
  %4728 = vmatpush1.msra.mxu0 0.0
  %4729 = vmatprep.subr.mxu0 0.0
  %4730 = vmatpush1.msra.mxu0 0.0
  %4731 = vmatprep.subr.mxu0 0.0
  %4732 = vmatpush1.msra.mxu0 0.0
  %4733 = vmatprep.subr.mxu0 0.0
  %4734 = vmatpush1.msra.mxu0 0.0
  %4735 = vmatprep.subr.mxu0 0.0
  %4736 = vmatpush1.msra.mxu0 0.0
  %4737 = vmatprep.subr.mxu0 0.0
  %4738 = vmatpush1.msra.mxu0 0.0
  %4739 = vmatprep.subr.mxu0 0.0
  %4740 = vmatpush1.msra.mxu0 0.0
  %4741 = vmatprep.subr.mxu0 0.0
  %4742 = vmatpush1.msra.mxu0 0.0
  %4743 = vmatprep.subr.mxu0 0.0
  %4744 = vmatpush1.msra.mxu0 0.0
  %4745 = vmatprep.subr.mxu0 0.0
  %4746 = vmatpush1.msra.mxu0 0.0
  %4747 = vmatprep.subr.mxu0 0.0
  %4748 = vmatpush1.msra.mxu0 0.0
  %4749 = vmatprep.subr.mxu0 0.0
  %4750 = vmatpush1.msra.mxu0 0.0
  %4751 = vmatprep.subr.mxu0 0.0
  %4752 = vmatpush1.msra.mxu0 0.0
  %4753 = vmatprep.subr.mxu0 0.0
  %4754 = vmatpush1.msra.mxu0 0.0
  %4755 = vmatprep.subr.mxu0 0.0
  %4756 = vmatpush1.msra.mxu0 0.0
  %4757 = vmatprep.subr.mxu0 0.0
  %4758 = vmatpush1.msra.mxu0 0.0
  %4759 = vmatprep.subr.mxu0 0.0
  %4760 = vmatpush1.msra.mxu0 0.0
  %4761 = vmatprep.subr.mxu0 0.0
  %4762 = vmatpush1.msra.mxu0 0.0
  %4763 = vmatprep.subr.mxu0 0.0
  %4764 = vmatpush1.msra.mxu0 0.0
  %4765 = vmatprep.subr.mxu0 0.0
  %4766 = vmatpush1.msra.mxu0 0.0
  %4767 = vmatprep.subr.mxu0 0.0
  %4768 = vmatpush1.msra.mxu0 0.0
  %4769 = vmatprep.subr.mxu0 0.0
  %4770 = vmatpush1.msra.mxu0 0.0
  %4771 = vmatprep.subr.mxu0 0.0
  %4772 = vmatpush1.msra.mxu0 0.0
  %4773 = vmatprep.subr.mxu0 0.0
  %4774 = vmatpush1.msra.mxu0 0.0
  %4775 = vmatprep.subr.mxu0 0.0
  %4776 = vmatpush1.msra.mxu0 0.0
  %4777 = vmatprep.mubr.f32.mxu0 0.0
  %4778 = vmatmul.mubr.f32.gmra.mrb[0].mxu0 %v4711
  %v4779 = vpop.f32.mrb[0].mxu0
  %v4780 = vadd.f32 %v4241, %v4779
  %v4781 = vpop.f32.mrb[0].mxu0
  %4782 = vdwg.mxu0
  %4784 = vrot.lane.b32.xlu0 %v4706, 120
  %v4785 = vpop.permute.xlu0 %4784
  %v4787 = vadd.f32 %v4780, %v4785
  %v4788 = vxor.u32 %v4787, 2147483648
  %v4789 = vmul.f32 %v4788, 1.442695
  %v4790 = vpow.pop %v4789
  %v4791 = vadd.f32 %v4790, 1.0
  %v4792 = vrcp.pop %v4791
  %v4793 = vmul.f32 1.0, %v4792
  %4794 = vrot.lane.b32.xlu0 %v4706, 104
  %v4795 = vpop.permute.xlu0 %4794
  %v4797 = vmul.f32 %v4793, %v4795
  %4799 = vrot.lane.b32.xlu0 %v4797, 16
  %v4800 = vpop.permute.xlu0 %4799
  %v4802 = vadd.f32 %v4780, %v4800
  %v4803 = vtanh.pop %v4802
  %v4804 = vsub.f32 1.0, %v4793
  %4806 = vrot.lane.b32.xlu0 %v4803, 120
  %v4807 = vpop.permute.xlu0 %4806
  %v4809 = vmul.f32 %v4804, %v4807
  %v4810 = vmul.f32 %v4793, %v4633
  %v4811 = vadd.f32 %v4809, %v4810
  %v4812 = vld [vmem:[%s1 + $0xc0] sm:$0xff]
  %v4813 = vld [vmem:[%s1 + $0xc8] sm:$0x1]
  %v4814 = vlaneseq
  %v4815 = vshrl.u32 %v4814, 7
  %v4816 = vsub.s32 0, %v4815
  %v4817 = vrot.slane %v4813, %v4816
  %4819 = vrot.lane.b32.xlu0 %v4811, 120
  %v4820 = vpop.permute.xlu0 %4819
  %v4821 = vsel %vm361, %v4820, 0
  %4823 = vmatprep.subr.mxu0 0.0
  %4824 = vmatpush1.msra.mxu0 %v4812
  %4825 = vmatprep.subr.mxu0 0.0
  %4826 = vmatpush1.msra.mxu0 0.0
  %4827 = vmatprep.subr.mxu0 0.0
  %4828 = vmatpush1.msra.mxu0 0.0
  %4829 = vmatprep.subr.mxu0 0.0
  %4830 = vmatpush1.msra.mxu0 0.0
  %4831 = vmatprep.subr.mxu0 0.0
  %4832 = vmatpush1.msra.mxu0 0.0
  %4833 = vmatprep.subr.mxu0 0.0
  %4834 = vmatpush1.msra.mxu0 0.0
  %4835 = vmatprep.subr.mxu0 0.0
  %4836 = vmatpush1.msra.mxu0 0.0
  %4837 = vmatprep.subr.mxu0 0.0
  %4838 = vmatpush1.msra.mxu0 0.0
  %4839 = vmatprep.subr.mxu0 0.0
  %4840 = vmatpush1.msra.mxu0 0.0
  %4841 = vmatprep.subr.mxu0 0.0
  %4842 = vmatpush1.msra.mxu0 0.0
  %4843 = vmatprep.subr.mxu0 0.0
  %4844 = vmatpush1.msra.mxu0 0.0
  %4845 = vmatprep.subr.mxu0 0.0
  %4846 = vmatpush1.msra.mxu0 0.0
  %4847 = vmatprep.subr.mxu0 0.0
  %4848 = vmatpush1.msra.mxu0 0.0
  %4849 = vmatprep.subr.mxu0 0.0
  %4850 = vmatpush1.msra.mxu0 0.0
  %4851 = vmatprep.subr.mxu0 0.0
  %4852 = vmatpush1.msra.mxu0 0.0
  %4853 = vmatprep.subr.mxu0 0.0
  %4854 = vmatpush1.msra.mxu0 0.0
  %4855 = vmatprep.subr.mxu0 0.0
  %4856 = vmatpush1.msra.mxu0 0.0
  %4857 = vmatprep.subr.mxu0 0.0
  %4858 = vmatpush1.msra.mxu0 0.0
  %4859 = vmatprep.subr.mxu0 0.0
  %4860 = vmatpush1.msra.mxu0 0.0
  %4861 = vmatprep.subr.mxu0 0.0
  %4862 = vmatpush1.msra.mxu0 0.0
  %4863 = vmatprep.subr.mxu0 0.0
  %4864 = vmatpush1.msra.mxu0 0.0
  %4865 = vmatprep.subr.mxu0 0.0
  %4866 = vmatpush1.msra.mxu0 0.0
  %4867 = vmatprep.subr.mxu0 0.0
  %4868 = vmatpush1.msra.mxu0 0.0
  %4869 = vmatprep.subr.mxu0 0.0
  %4870 = vmatpush1.msra.mxu0 0.0
  %4871 = vmatprep.subr.mxu0 0.0
  %4872 = vmatpush1.msra.mxu0 0.0
  %4873 = vmatprep.subr.mxu0 0.0
  %4874 = vmatpush1.msra.mxu0 0.0
  %4875 = vmatprep.subr.mxu0 0.0
  %4876 = vmatpush1.msra.mxu0 0.0
  %4877 = vmatprep.subr.mxu0 0.0
  %4878 = vmatpush1.msra.mxu0 0.0
  %4879 = vmatprep.subr.mxu0 0.0
  %4880 = vmatpush1.msra.mxu0 0.0
  %4881 = vmatprep.subr.mxu0 0.0
  %4882 = vmatpush1.msra.mxu0 0.0
  %4883 = vmatprep.subr.mxu0 0.0
  %4884 = vmatpush1.msra.mxu0 0.0
  %4885 = vmatprep.subr.mxu0 0.0
  %4886 = vmatpush1.msra.mxu0 0.0
  %4887 = vmatprep.mubr.f32.mxu0 0.0
  %4888 = vmatmul.mubr.f32.gmra.mrb[0].mxu0 %v4280
  %v4889 = vpop.f32.mrb[0].mxu0
  %v4890 = vadd.f32 %v4817, %v4889
  %v4891 = vpop.f32.mrb[0].mxu0
  %4892 = vmatprep.mubr.f32.mxu0 0.0
  %4893 = vmatmul.mubr.f32.gmra.mrb[0].mxu0 %v4459
  %v4894 = vpop.f32.mrb[0].mxu0
  %v4895 = vadd.f32 %v4817, %v4894
  %v4896 = vpop.f32.mrb[0].mxu0
  %4897 = vmatprep.mubr.f32.mxu0 0.0
  %4898 = vmatmul.mubr.f32.gmra.mrb[0].mxu0 %v4637
  %v4899 = vpop.f32.mrb[0].mxu0
  %v4900 = vadd.f32 %v4817, %v4899
  %v4901 = vpop.f32.mrb[0].mxu0
  %4902 = vmatprep.mubr.f32.mxu0 0.0
  %4903 = vmatmul.mubr.f32.gmra.mrb[0].mxu0 %v4821
  %v4904 = vpop.f32.mrb[0].mxu0
  %v4905 = vadd.f32 %v4817, %v4904
  %v4906 = vpop.f32.mrb[0].mxu0
  %4907 = vdwg.mxu0
  %v4908 = vmax.f32 %v4890, 0.0
  %v4909 = vmax.f32 %v4895, 0.0
  %v4910 = vmax.f32 %v4900, 0.0
  %v4911 = vmax.f32 %v4905, 0.0
  %v4912 = vtanh.pop %v4908
  %v4913 = vtanh.pop %v4909
  %v4914 = vtanh.pop %v4910
  %v4915 = vtanh.pop %v4911
  %v4916 = vld [vmem:[%s1 + $0xd0] sm:$0xff]
  %v4917 = vld [vmem:[%s1 + $0xd8] sm:$0xff]
  %v4918 = vld [vmem:[%s1 + $0xe0] sm:$0x1]
  %v4919 = vlaneseq
  %v4920 = vshrl.u32 %v4919, 7
  %v4921 = vsub.s32 0, %v4920
  %v4922 = vrot.slane %v4918, %v4921
  %4927 = vrot.lane.b32.xlu0 %v4912, 96
  %v4928 = vpop.permute.xlu0 %4927
  %4929 = vrot.lane.b32.xlu0 %v4913, 96
  %v4930 = vpop.permute.xlu0 %4929
  %4931 = vrot.lane.b32.xlu0 %v4914, 96
  %v4932 = vpop.permute.xlu0 %4931
  %4933 = vrot.lane.b32.xlu0 %v4915, 96
  %v4934 = vpop.permute.xlu0 %4933
  %v4935 = vsel %vm1132, %v4928, 0
  %v4937 = vsel %vm1132, %v4930, 0
  %v4939 = vsel %vm1132, %v4932, 0
  %v4941 = vsel %vm1132, %v4934, 0
  %4943 = vmatprep.subr.mxu0 0.0
  %4944 = vmatpush1.msra.mxu0 %v4916
  %4945 = vmatprep.subr.mxu0 0.0
  %4946 = vmatpush1.msra.mxu0 %v4917
  %4947 = vmatprep.subr.mxu0 0.0
  %4948 = vmatpush1.msra.mxu0 0.0
  %4949 = vmatprep.subr.mxu0 0.0
  %4950 = vmatpush1.msra.mxu0 0.0
  %4951 = vmatprep.subr.mxu0 0.0
  %4952 = vmatpush1.msra.mxu0 0.0
  %4953 = vmatprep.subr.mxu0 0.0
  %4954 = vmatpush1.msra.mxu0 0.0
  %4955 = vmatprep.subr.mxu0 0.0
  %4956 = vmatpush1.msra.mxu0 0.0
  %4957 = vmatprep.subr.mxu0 0.0
  %4958 = vmatpush1.msra.mxu0 0.0
  %4959 = vmatprep.subr.mxu0 0.0
  %4960 = vmatpush1.msra.mxu0 0.0
  %4961 = vmatprep.subr.mxu0 0.0
  %4962 = vmatpush1.msra.mxu0 0.0
  %4963 = vmatprep.subr.mxu0 0.0
  %4964 = vmatpush1.msra.mxu0 0.0
  %4965 = vmatprep.subr.mxu0 0.0
  %4966 = vmatpush1.msra.mxu0 0.0
  %4967 = vmatprep.subr.mxu0 0.0
  %4968 = vmatpush1.msra.mxu0 0.0
  %4969 = vmatprep.subr.mxu0 0.0
  %4970 = vmatpush1.msra.mxu0 0.0
  %4971 = vmatprep.subr.mxu0 0.0
  %4972 = vmatpush1.msra.mxu0 0.0
  %4973 = vmatprep.subr.mxu0 0.0
  %4974 = vmatpush1.msra.mxu0 0.0
  %4975 = vmatprep.subr.mxu0 0.0
  %4976 = vmatpush1.msra.mxu0 0.0
  %4977 = vmatprep.subr.mxu0 0.0
  %4978 = vmatpush1.msra.mxu0 0.0
  %4979 = vmatprep.subr.mxu0 0.0
  %4980 = vmatpush1.msra.mxu0 0.0
  %4981 = vmatprep.subr.mxu0 0.0
  %4982 = vmatpush1.msra.mxu0 0.0
  %4983 = vmatprep.subr.mxu0 0.0
  %4984 = vmatpush1.msra.mxu0 0.0
  %4985 = vmatprep.subr.mxu0 0.0
  %4986 = vmatpush1.msra.mxu0 0.0
  %4987 = vmatprep.subr.mxu0 0.0
  %4988 = vmatpush1.msra.mxu0 0.0
  %4989 = vmatprep.subr.mxu0 0.0
  %4990 = vmatpush1.msra.mxu0 0.0
  %4991 = vmatprep.subr.mxu0 0.0
  %4992 = vmatpush1.msra.mxu0 0.0
  %4993 = vmatprep.subr.mxu0 0.0
  %4994 = vmatpush1.msra.mxu0 0.0
  %4995 = vmatprep.subr.mxu0 0.0
  %4996 = vmatpush1.msra.mxu0 0.0
  %4997 = vmatprep.subr.mxu0 0.0
  %4998 = vmatpush1.msra.mxu0 0.0
  %4999 = vmatprep.subr.mxu0 0.0
  %5000 = vmatpush1.msra.mxu0 0.0
  %5001 = vmatprep.subr.mxu0 0.0
  %5002 = vmatpush1.msra.mxu0 0.0
  %5003 = vmatprep.subr.mxu0 0.0
  %5004 = vmatpush1.msra.mxu0 0.0
  %5005 = vmatprep.subr.mxu0 0.0
  %5006 = vmatpush1.msra.mxu0 0.0
  %5007 = vmatprep.mubr.f32.mxu0 0.0
  %5008 = vmatmul.mubr.f32.gmra.mrb[0].mxu0 %v4935
  %v5009 = vpop.f32.mrb[0].mxu0
  %v5010 = vadd.f32 %v4922, %v5009
  %v5011 = vpop.f32.mrb[0].mxu0
  %5012 = vmatprep.mubr.f32.mxu0 0.0
  %5013 = vmatmul.mubr.f32.gmra.mrb[0].mxu0 %v4937
  %v5014 = vpop.f32.mrb[0].mxu0
  %v5015 = vadd.f32 %v4922, %v5014
  %v5016 = vpop.f32.mrb[0].mxu0
  %5017 = vmatprep.mubr.f32.mxu0 0.0
  %5018 = vmatmul.mubr.f32.gmra.mrb[0].mxu0 %v4939
  %v5019 = vpop.f32.mrb[0].mxu0
  %v5020 = vadd.f32 %v4922, %v5019
  %v5021 = vpop.f32.mrb[0].mxu0
  %5022 = vmatprep.mubr.f32.mxu0 0.0
  %5023 = vmatmul.mubr.f32.gmra.mrb[0].mxu0 %v4941
  %v5024 = vpop.f32.mrb[0].mxu0
  %v5025 = vadd.f32 %v4922, %v5024
  %v5026 = vpop.f32.mrb[0].mxu0
  %5027 = vdwg.mxu0
  %v5028 = vmax.f32 %v5010, 0.0
  %v5029 = vmax.f32 %v5015, 0.0
  %v5030 = vmax.f32 %v5020, 0.0
  %v5031 = vmax.f32 %v5025, 0.0
  %5032 = vst.msk [vmem:[#allocation2 + $0x60] sm:$0xff] %vm138, %v4908
  %5033 = vst.msk [vmem:[#allocation2 + $0x68] sm:$0xff] %vm138, %v4909
  %5034 = vst.msk [vmem:[#allocation2 + $0x70] sm:$0xff] %vm138, %v4910
  %5035 = vst.msk [vmem:[#allocation2 + $0x78] sm:$0xff] %vm138, %v4911
  %5037 = vrot.lane.b32.xlu0 %v4908, 88
  %v5038 = vpop.permute.xlu0 %5037
  %5040 = vst.msk [vmem:[#allocation3 + $0x18] sm:$0xff] %vm361, %v5038
  %5042 = vrot.lane.b32.xlu0 %v5028, 127
  %v5043 = vpop.permute.xlu0 %5042
  %5045 = vst.msk [vmem:[#allocation4 + $0x18] sm:$0xff] %vm1243, %v5043
  %5047 = vrot.lane.b32.xlu0 %v4909, 88
  %v5048 = vpop.permute.xlu0 %5047
  %5050 = vst.msk [vmem:[#allocation3 + $0x38] sm:$0xff] %vm361, %v5048
  %5052 = vrot.lane.b32.xlu0 %v5029, 127
  %v5053 = vpop.permute.xlu0 %5052
  %5055 = vst.msk [vmem:[#allocation4 + $0x38] sm:$0xff] %vm1243, %v5053
  %5057 = vrot.lane.b32.xlu0 %v4910, 88
  %v5058 = vpop.permute.xlu0 %5057
  %5060 = vst.msk [vmem:[#allocation3 + $0x58] sm:$0xff] %vm361, %v5058
  %5062 = vrot.lane.b32.xlu0 %v5030, 127
  %v5063 = vpop.permute.xlu0 %5062
  %5065 = vst.msk [vmem:[#allocation4 + $0x58] sm:$0xff] %vm1243, %v5063
  %5067 = vrot.lane.b32.xlu0 %v4911, 88
  %v5068 = vpop.permute.xlu0 %5067
  %5070 = vst.msk [vmem:[#allocation3 + $0x78] sm:$0xff] %vm361, %v5068
  %5072 = vrot.lane.b32.xlu0 %v5031, 127
  %v5073 = vpop.permute.xlu0 %5072
  %5075 = vst.msk [vmem:[#allocation4 + $0x78] sm:$0xff] %vm1243, %v5073
  %v5076 = vld [vmem:[#allocation2] sm:$0xff]
  %v5077 = vld [vmem:[#allocation2 + $0x8] sm:$0xff]
  %v5078 = vld [vmem:[#allocation2 + $0x10] sm:$0xff]
  %v5079 = vld [vmem:[#allocation2 + $0x18] sm:$0xff]
  %v5080 = vld [vmem:[#allocation2 + $0x20] sm:$0xff]
  %v5081 = vld [vmem:[#allocation2 + $0x28] sm:$0xff]
  %v5082 = vld [vmem:[#allocation2 + $0x30] sm:$0xff]
  %v5083 = vld [vmem:[#allocation2 + $0x38] sm:$0xff]
  %v5084 = vld [vmem:[#allocation2 + $0x40] sm:$0xff]
  %v5085 = vld [vmem:[#allocation2 + $0x48] sm:$0xff]
  %v5086 = vld [vmem:[#allocation2 + $0x50] sm:$0xff]
  %v5087 = vld [vmem:[#allocation2 + $0x58] sm:$0xff]
  %v5088 = vld [vmem:[#allocation2 + $0x60] sm:$0xff]
  %v5089 = vld [vmem:[#allocation2 + $0x68] sm:$0xff]
  %v5090 = vld [vmem:[#allocation2 + $0x70] sm:$0xff]
  %v5091 = vld [vmem:[#allocation2 + $0x78] sm:$0xff]
  %v5092 = vld [vmem:[%s1 + $0xe8] sm:$0xff]
  %v5093 = vld [vmem:[%s1 + $0xf0] sm:$0xff]
  %v5094 = vld [vmem:[%s1 + $0xf8] sm:$0xff]
  %v5095 = vld [vmem:[%s1 + $0x100] sm:$0xff]
  %v5096 = vld [vmem:[%s1 + $0x108] sm:$0x1]
  %v5097 = vlaneseq
  %v5098 = vshrl.u32 %v5097, 7
  %v5099 = vsub.s32 0, %v5098
  %v5100 = vrot.slane %v5096, %v5099
  %v5102 = vsel %vm138, %v5076, 0
  %v5105 = vsel %vm138, %v5077, 0
  %v5108 = vsel %vm138, %v5078, 0
  %v5111 = vsel %vm138, %v5079, 0
  %v5114 = vsel %vm138, %v5080, 0
  %v5117 = vsel %vm138, %v5081, 0
  %v5120 = vsel %vm138, %v5082, 0
  %v5123 = vsel %vm138, %v5083, 0
  %v5126 = vsel %vm138, %v5084, 0
  %v5129 = vsel %vm138, %v5085, 0
  %v5132 = vsel %vm138, %v5086, 0
  %v5135 = vsel %vm138, %v5087, 0
  %v5138 = vsel %vm138, %v5088, 0
  %v5141 = vsel %vm138, %v5089, 0
  %v5144 = vsel %vm138, %v5090, 0
  %v5147 = vsel %vm138, %v5091, 0
  %5149 = vmatprep.subr.mxu0 0.0
  %5150 = vmatpush1.msra.mxu0 %v5092
  %5151 = vmatprep.subr.mxu0 0.0
  %5152 = vmatpush1.msra.mxu0 %v5093
  %5153 = vmatprep.subr.mxu0 0.0
  %5154 = vmatpush1.msra.mxu0 %v5094
  %5155 = vmatprep.subr.mxu0 0.0
  %5156 = vmatpush1.msra.mxu0 %v5095
  %5157 = vmatprep.subr.mxu0 0.0
  %5158 = vmatpush1.msra.mxu0 0.0
  %5159 = vmatprep.subr.mxu0 0.0
  %5160 = vmatpush1.msra.mxu0 0.0
  %5161 = vmatprep.subr.mxu0 0.0
  %5162 = vmatpush1.msra.mxu0 0.0
  %5163 = vmatprep.subr.mxu0 0.0
  %5164 = vmatpush1.msra.mxu0 0.0
  %5165 = vmatprep.subr.mxu0 0.0
  %5166 = vmatpush1.msra.mxu0 0.0
  %5167 = vmatprep.subr.mxu0 0.0
  %5168 = vmatpush1.msra.mxu0 0.0
  %5169 = vmatprep.subr.mxu0 0.0
  %5170 = vmatpush1.msra.mxu0 0.0
  %5171 = vmatprep.subr.mxu0 0.0
  %5172 = vmatpush1.msra.mxu0 0.0
  %5173 = vmatprep.subr.mxu0 0.0
  %5174 = vmatpush1.msra.mxu0 0.0
  %5175 = vmatprep.subr.mxu0 0.0
  %5176 = vmatpush1.msra.mxu0 0.0
  %5177 = vmatprep.subr.mxu0 0.0
  %5178 = vmatpush1.msra.mxu0 0.0
  %5179 = vmatprep.subr.mxu0 0.0
  %5180 = vmatpush1.msra.mxu0 0.0
  %5181 = vmatprep.subr.mxu0 0.0
  %5182 = vmatpush1.msra.mxu0 0.0
  %5183 = vmatprep.subr.mxu0 0.0
  %5184 = vmatpush1.msra.mxu0 0.0
  %5185 = vmatprep.subr.mxu0 0.0
  %5186 = vmatpush1.msra.mxu0 0.0
  %5187 = vmatprep.subr.mxu0 0.0
  %5188 = vmatpush1.msra.mxu0 0.0
  %5189 = vmatprep.subr.mxu0 0.0
  %5190 = vmatpush1.msra.mxu0 0.0
  %5191 = vmatprep.subr.mxu0 0.0
  %5192 = vmatpush1.msra.mxu0 0.0
  %5193 = vmatprep.subr.mxu0 0.0
  %5194 = vmatpush1.msra.mxu0 0.0
  %5195 = vmatprep.subr.mxu0 0.0
  %5196 = vmatpush1.msra.mxu0 0.0
  %5197 = vmatprep.subr.mxu0 0.0
  %5198 = vmatpush1.msra.mxu0 0.0
  %5199 = vmatprep.subr.mxu0 0.0
  %5200 = vmatpush1.msra.mxu0 0.0
  %5201 = vmatprep.subr.mxu0 0.0
  %5202 = vmatpush1.msra.mxu0 0.0
  %5203 = vmatprep.subr.mxu0 0.0
  %5204 = vmatpush1.msra.mxu0 0.0
  %5205 = vmatprep.subr.mxu0 0.0
  %5206 = vmatpush1.msra.mxu0 0.0
  %5207 = vmatprep.subr.mxu0 0.0
  %5208 = vmatpush1.msra.mxu0 0.0
  %5209 = vmatprep.subr.mxu0 0.0
  %5210 = vmatpush1.msra.mxu0 0.0
  %5211 = vmatprep.subr.mxu0 0.0
  %5212 = vmatpush1.msra.mxu0 0.0
  %5213 = vmatprep.mubr.f32.mxu0 0.0
  %5214 = vmatmul.mubr.f32.gmra.mrb[0].mxu0 %v5102
  %v5215 = vpop.f32.mrb[0].mxu0
  %v5216 = vadd.f32 %v5100, %v5215
  %v5217 = vpop.f32.mrb[0].mxu0
  %5218 = vmatprep.mubr.f32.mxu0 0.0
  %5219 = vmatmul.mubr.f32.gmra.mrb[0].mxu0 %v5105
  %v5220 = vpop.f32.mrb[0].mxu0
  %v5221 = vadd.f32 %v5100, %v5220
  %v5222 = vpop.f32.mrb[0].mxu0
  %5223 = vmatprep.mubr.f32.mxu0 0.0
  %5224 = vmatmul.mubr.f32.gmra.mrb[0].mxu0 %v5108
  %v5225 = vpop.f32.mrb[0].mxu0
  %v5226 = vadd.f32 %v5100, %v5225
  %v5227 = vpop.f32.mrb[0].mxu0
  %5228 = vmatprep.mubr.f32.mxu0 0.0
  %5229 = vmatmul.mubr.f32.gmra.mrb[0].mxu0 %v5111
  %v5230 = vpop.f32.mrb[0].mxu0
  %v5231 = vadd.f32 %v5100, %v5230
  %v5232 = vpop.f32.mrb[0].mxu0
  %5233 = vmatprep.mubr.f32.mxu0 0.0
  %5234 = vmatmul.mubr.f32.gmra.mrb[0].mxu0 %v5114
  %v5235 = vpop.f32.mrb[0].mxu0
  %v5236 = vadd.f32 %v5100, %v5235
  %v5237 = vpop.f32.mrb[0].mxu0
  %5238 = vmatprep.mubr.f32.mxu0 0.0
  %5239 = vmatmul.mubr.f32.gmra.mrb[0].mxu0 %v5117
  %v5240 = vpop.f32.mrb[0].mxu0
  %v5241 = vadd.f32 %v5100, %v5240
  %v5242 = vpop.f32.mrb[0].mxu0
  %5243 = vmatprep.mubr.f32.mxu0 0.0
  %5244 = vmatmul.mubr.f32.gmra.mrb[0].mxu0 %v5120
  %v5245 = vpop.f32.mrb[0].mxu0
  %v5246 = vadd.f32 %v5100, %v5245
  %v5247 = vpop.f32.mrb[0].mxu0
  %5248 = vmatprep.mubr.f32.mxu0 0.0
  %5249 = vmatmul.mubr.f32.gmra.mrb[0].mxu0 %v5123
  %v5250 = vpop.f32.mrb[0].mxu0
  %v5251 = vadd.f32 %v5100, %v5250
  %v5252 = vpop.f32.mrb[0].mxu0
  %5253 = vmatprep.mubr.f32.mxu0 0.0
  %5254 = vmatmul.mubr.f32.gmra.mrb[0].mxu0 %v5126
  %v5255 = vpop.f32.mrb[0].mxu0
  %v5256 = vadd.f32 %v5100, %v5255
  %v5257 = vpop.f32.mrb[0].mxu0
  %5258 = vmatprep.mubr.f32.mxu0 0.0
  %5259 = vmatmul.mubr.f32.gmra.mrb[0].mxu0 %v5129
  %v5260 = vpop.f32.mrb[0].mxu0
  %v5261 = vadd.f32 %v5100, %v5260
  %v5262 = vpop.f32.mrb[0].mxu0
  %5263 = vmatprep.mubr.f32.mxu0 0.0
  %5264 = vmatmul.mubr.f32.gmra.mrb[0].mxu0 %v5132
  %v5265 = vpop.f32.mrb[0].mxu0
  %v5266 = vadd.f32 %v5100, %v5265
  %v5267 = vpop.f32.mrb[0].mxu0
  %5268 = vmatprep.mubr.f32.mxu0 0.0
  %5269 = vmatmul.mubr.f32.gmra.mrb[0].mxu0 %v5135
  %v5270 = vpop.f32.mrb[0].mxu0
  %v5271 = vadd.f32 %v5100, %v5270
  %v5272 = vpop.f32.mrb[0].mxu0
  %5273 = vmatprep.mubr.f32.mxu0 0.0
  %5274 = vmatmul.mubr.f32.gmra.mrb[0].mxu0 %v5138
  %v5275 = vpop.f32.mrb[0].mxu0
  %v5276 = vadd.f32 %v5100, %v5275
  %v5277 = vpop.f32.mrb[0].mxu0
  %5278 = vmatprep.mubr.f32.mxu0 0.0
  %5279 = vmatmul.mubr.f32.gmra.mrb[0].mxu0 %v5141
  %v5280 = vpop.f32.mrb[0].mxu0
  %v5281 = vadd.f32 %v5100, %v5280
  %v5282 = vpop.f32.mrb[0].mxu0
  %5283 = vmatprep.mubr.f32.mxu0 0.0
  %5284 = vmatmul.mubr.f32.gmra.mrb[0].mxu0 %v5144
  %v5285 = vpop.f32.mrb[0].mxu0
  %v5286 = vadd.f32 %v5100, %v5285
  %v5287 = vpop.f32.mrb[0].mxu0
  %5288 = vmatprep.mubr.f32.mxu0 0.0
  %5289 = vmatmul.mubr.f32.gmra.mrb[0].mxu0 %v5147
  %v5290 = vpop.f32.mrb[0].mxu0
  %v5291 = vadd.f32 %v5100, %v5290
  %v5292 = vpop.f32.mrb[0].mxu0
  %5293 = vdwg.mxu0
  %vm5294 = vcmask 15360
  %5295 = vst.msk [vmem:[%s2] sm:$0xff] %vm5294, %v5216
  %5296 = vst.msk [vmem:[%s2 + $0x8] sm:$0xff] %vm5294, %v5221
  %5297 = vst.msk [vmem:[%s2 + $0x10] sm:$0xff] %vm5294, %v5226
  %5298 = vst.msk [vmem:[%s2 + $0x18] sm:$0xff] %vm5294, %v5231
  %5299 = vst.msk [vmem:[%s2 + $0x20] sm:$0xff] %vm5294, %v5236
  %5300 = vst.msk [vmem:[%s2 + $0x28] sm:$0xff] %vm5294, %v5241
  %5301 = vst.msk [vmem:[%s2 + $0x30] sm:$0xff] %vm5294, %v5246
  %5302 = vst.msk [vmem:[%s2 + $0x38] sm:$0xff] %vm5294, %v5251
  %5303 = vst.msk [vmem:[%s2 + $0x40] sm:$0xff] %vm5294, %v5256
  %5304 = vst.msk [vmem:[%s2 + $0x48] sm:$0xff] %vm5294, %v5261
  %5305 = vst.msk [vmem:[%s2 + $0x50] sm:$0xff] %vm5294, %v5266
  %5306 = vst.msk [vmem:[%s2 + $0x58] sm:$0xff] %vm5294, %v5271
  %5307 = vst.msk [vmem:[%s2 + $0x60] sm:$0xff] %vm5294, %v5276
  %5308 = vst.msk [vmem:[%s2 + $0x68] sm:$0xff] %vm5294, %v5281
  %5309 = vst.msk [vmem:[%s2 + $0x70] sm:$0xff] %vm5294, %v5286
  %5310 = vst.msk [vmem:[%s2 + $0x78] sm:$0xff] %vm5294, %v5291
  %v5311 = vld [vmem:[%s1 + $0xe0] sm:$0x1]
  %v5312 = vmax.f32 %v5311, 0.0
  %v5313 = vld [vmem:[#allocation3] sm:$0xff]
  %v5314 = vld [vmem:[#allocation3 + $0x8] sm:$0xff]
  %v5315 = vld [vmem:[#allocation3 + $0x10] sm:$0xff]
  %v5316 = vld [vmem:[#allocation3 + $0x18] sm:$0xff]
  %v5317 = vld [vmem:[#allocation3 + $0x20] sm:$0xff]
  %v5318 = vld [vmem:[#allocation3 + $0x28] sm:$0xff]
  %v5319 = vld [vmem:[#allocation3 + $0x30] sm:$0xff]
  %v5320 = vld [vmem:[#allocation3 + $0x38] sm:$0xff]
  %v5321 = vld [vmem:[#allocation3 + $0x40] sm:$0xff]
  %v5322 = vld [vmem:[#allocation3 + $0x48] sm:$0xff]
  %v5323 = vld [vmem:[#allocation3 + $0x50] sm:$0xff]
  %v5324 = vld [vmem:[#allocation3 + $0x58] sm:$0xff]
  %v5325 = vld [vmem:[#allocation3 + $0x60] sm:$0xff]
  %v5326 = vld [vmem:[#allocation3 + $0x68] sm:$0xff]
  %v5327 = vld [vmem:[#allocation3 + $0x70] sm:$0xff]
  %v5328 = vld [vmem:[#allocation3 + $0x78] sm:$0xff]
  %v5329 = vld [vmem:[#allocation4] sm:$0xff]
  %v5330 = vld [vmem:[#allocation4 + $0x8] sm:$0xff]
  %v5331 = vld [vmem:[#allocation4 + $0x10] sm:$0xff]
  %v5332 = vld [vmem:[#allocation4 + $0x18] sm:$0xff]
  %v5333 = vld [vmem:[#allocation4 + $0x20] sm:$0xff]
  %v5334 = vld [vmem:[#allocation4 + $0x28] sm:$0xff]
  %v5335 = vld [vmem:[#allocation4 + $0x30] sm:$0xff]
  %v5336 = vld [vmem:[#allocation4 + $0x38] sm:$0xff]
  %v5337 = vld [vmem:[#allocation4 + $0x40] sm:$0xff]
  %v5338 = vld [vmem:[#allocation4 + $0x48] sm:$0xff]
  %v5339 = vld [vmem:[#allocation4 + $0x50] sm:$0xff]
  %v5340 = vld [vmem:[#allocation4 + $0x58] sm:$0xff]
  %v5341 = vld [vmem:[#allocation4 + $0x60] sm:$0xff]
  %v5342 = vld [vmem:[#allocation4 + $0x68] sm:$0xff]
  %v5343 = vld [vmem:[#allocation4 + $0x70] sm:$0xff]
  %v5344 = vld [vmem:[#allocation4 + $0x78] sm:$0xff]
  %v5345 = vmax.f32 %v5329, %v5333
  %v5346 = vmax.f32 %v5330, %v5334
  %v5347 = vmax.f32 %v5331, %v5335
  %v5348 = vmax.f32 %v5332, %v5336
  %v5349 = vmax.f32 %v5345, %v5337
  %v5350 = vmax.f32 %v5346, %v5338
  %v5351 = vmax.f32 %v5347, %v5339
  %v5352 = vmax.f32 %v5348, %v5340
  %v5353 = vmax.f32 %v5349, %v5341
  %v5354 = vmax.f32 %v5350, %v5342
  %v5355 = vmax.f32 %v5351, %v5343
  %v5356 = vmax.f32 %v5352, %v5344
  %v5357 = vsub.f32 %v5329, %v5353
  %v5358 = vsub.f32 %v5330, %v5354
  %v5359 = vsub.f32 %v5331, %v5355
  %v5360 = vsub.f32 %v5332, %v5356
  %v5361 = vmul.f32 %v5357, 1.442695
  %v5362 = vpow.pop %v5361
  %v5363 = vmul.f32 %v5358, 1.442695
  %v5364 = vpow.pop %v5363
  %v5365 = vmul.f32 %v5359, 1.442695
  %v5366 = vpow.pop %v5365
  %v5367 = vmul.f32 %v5360, 1.442695
  %v5368 = vpow.pop %v5367
  %v5369 = vsub.f32 %v5333, %v5353
  %v5370 = vsub.f32 %v5334, %v5354
  %v5371 = vsub.f32 %v5335, %v5355
  %v5372 = vsub.f32 %v5336, %v5356
  %v5373 = vmul.f32 %v5369, 1.442695
  %v5374 = vpow.pop %v5373
  %v5375 = vmul.f32 %v5370, 1.442695
  %v5376 = vpow.pop %v5375
  %v5377 = vmul.f32 %v5371, 1.442695
  %v5378 = vpow.pop %v5377
  %v5379 = vmul.f32 %v5372, 1.442695
  %v5380 = vpow.pop %v5379
  %v5381 = vsub.f32 %v5337, %v5353
  %v5382 = vsub.f32 %v5338, %v5354
  %v5383 = vsub.f32 %v5339, %v5355
  %v5384 = vsub.f32 %v5340, %v5356
  %v5385 = vmul.f32 %v5381, 1.442695
  %v5386 = vpow.pop %v5385
  %v5387 = vmul.f32 %v5382, 1.442695
  %v5388 = vpow.pop %v5387
  %v5389 = vmul.f32 %v5383, 1.442695
  %v5390 = vpow.pop %v5389
  %v5391 = vmul.f32 %v5384, 1.442695
  %v5392 = vpow.pop %v5391
  %v5393 = vsub.f32 %v5341, %v5353
  %v5394 = vsub.f32 %v5342, %v5354
  %v5395 = vsub.f32 %v5343, %v5355
  %v5396 = vsub.f32 %v5344, %v5356
  %v5397 = vmul.f32 %v5393, 1.442695
  %v5398 = vpow.pop %v5397
  %v5399 = vmul.f32 %v5394, 1.442695
  %v5400 = vpow.pop %v5399
  %v5401 = vmul.f32 %v5395, 1.442695
  %v5402 = vpow.pop %v5401
  %v5403 = vmul.f32 %v5396, 1.442695
  %v5404 = vpow.pop %v5403
  %5406 = vset.pattern.permute.xlu0 0
  %5407 = vperm.xlu0 %5406, %v5362
  %v5408 = vpop.permute.xlu0 %5407
  %5411 = vset.pattern.permute.xlu0 0
  %5412 = vperm.xlu0 %5411, %v5364
  %v5413 = vpop.permute.xlu0 %5412
  %5416 = vset.pattern.permute.xlu0 0
  %5417 = vperm.xlu0 %5416, %v5366
  %v5418 = vpop.permute.xlu0 %5417
  %5421 = vset.pattern.permute.xlu0 0
  %5422 = vperm.xlu0 %5421, %v5368
  %v5423 = vpop.permute.xlu0 %5422
  %v5425 = vmul.f32 %v5408, %v5313
  %v5426 = vmul.f32 %v5413, %v5314
  %v5427 = vmul.f32 %v5418, %v5315
  %v5428 = vmul.f32 %v5423, %v5316
  %v5429 = vadd.f32 %v5362, %v5374
  %v5430 = vadd.f32 %v5364, %v5376
  %v5431 = vadd.f32 %v5366, %v5378
  %v5432 = vadd.f32 %v5368, %v5380
  %5434 = vset.pattern.permute.xlu0 0
  %5435 = vperm.xlu0 %5434, %v5374
  %v5436 = vpop.permute.xlu0 %5435
  %5439 = vset.pattern.permute.xlu0 0
  %5440 = vperm.xlu0 %5439, %v5376
  %v5441 = vpop.permute.xlu0 %5440
  %5444 = vset.pattern.permute.xlu0 0
  %5445 = vperm.xlu0 %5444, %v5378
  %v5446 = vpop.permute.xlu0 %5445
  %5449 = vset.pattern.permute.xlu0 0
  %5450 = vperm.xlu0 %5449, %v5380
  %v5451 = vpop.permute.xlu0 %5450
  %v5453 = vmul.f32 %v5436, %v5317
  %v5454 = vmul.f32 %v5441, %v5318
  %v5455 = vmul.f32 %v5446, %v5319
  %v5456 = vmul.f32 %v5451, %v5320
  %v5457 = vadd.f32 %v5425, %v5453
  %v5458 = vadd.f32 %v5426, %v5454
  %v5459 = vadd.f32 %v5427, %v5455
  %v5460 = vadd.f32 %v5428, %v5456
  %v5461 = vadd.f32 %v5429, %v5386
  %v5462 = vadd.f32 %v5430, %v5388
  %v5463 = vadd.f32 %v5431, %v5390
  %v5464 = vadd.f32 %v5432, %v5392
  %5466 = vset.pattern.permute.xlu0 0
  %5467 = vperm.xlu0 %5466, %v5386
  %v5468 = vpop.permute.xlu0 %5467
  %5471 = vset.pattern.permute.xlu0 0
  %5472 = vperm.xlu0 %5471, %v5388
  %v5473 = vpop.permute.xlu0 %5472
  %5476 = vset.pattern.permute.xlu0 0
  %5477 = vperm.xlu0 %5476, %v5390
  %v5478 = vpop.permute.xlu0 %5477
  %5481 = vset.pattern.permute.xlu0 0
  %5482 = vperm.xlu0 %5481, %v5392
  %v5483 = vpop.permute.xlu0 %5482
  %v5485 = vmul.f32 %v5468, %v5321
  %v5486 = vmul.f32 %v5473, %v5322
  %v5487 = vmul.f32 %v5478, %v5323
  %v5488 = vmul.f32 %v5483, %v5324
  %v5489 = vadd.f32 %v5457, %v5485
  %v5490 = vadd.f32 %v5458, %v5486
  %v5491 = vadd.f32 %v5459, %v5487
  %v5492 = vadd.f32 %v5460, %v5488
  %v5493 = vadd.f32 %v5461, %v5398
  %v5494 = vadd.f32 %v5462, %v5400
  %v5495 = vadd.f32 %v5463, %v5402
  %v5496 = vadd.f32 %v5464, %v5404
  %5498 = vset.pattern.permute.xlu0 0
  %5499 = vperm.xlu0 %5498, %v5398
  %v5500 = vpop.permute.xlu0 %5499
  %5503 = vset.pattern.permute.xlu0 0
  %5504 = vperm.xlu0 %5503, %v5400
  %v5505 = vpop.permute.xlu0 %5504
  %5508 = vset.pattern.permute.xlu0 0
  %5509 = vperm.xlu0 %5508, %v5402
  %v5510 = vpop.permute.xlu0 %5509
  %5513 = vset.pattern.permute.xlu0 0
  %5514 = vperm.xlu0 %5513, %v5404
  %v5515 = vpop.permute.xlu0 %5514
  %v5517 = vmul.f32 %v5500, %v5325
  %v5518 = vmul.f32 %v5505, %v5326
  %v5519 = vmul.f32 %v5510, %v5327
  %v5520 = vmul.f32 %v5515, %v5328
  %v5521 = vadd.f32 %v5489, %v5517
  %v5522 = vadd.f32 %v5490, %v5518
  %v5523 = vadd.f32 %v5491, %v5519
  %v5524 = vadd.f32 %v5492, %v5520
  %5526 = vset.pattern.permute.xlu0 0
  %5527 = vperm.xlu0 %5526, %v5493
  %v5528 = vpop.permute.xlu0 %5527
  %5531 = vset.pattern.permute.xlu0 0
  %5532 = vperm.xlu0 %5531, %v5494
  %v5533 = vpop.permute.xlu0 %5532
  %5536 = vset.pattern.permute.xlu0 0
  %5537 = vperm.xlu0 %5536, %v5495
  %v5538 = vpop.permute.xlu0 %5537
  %5541 = vset.pattern.permute.xlu0 0
  %5542 = vperm.xlu0 %5541, %v5496
  %v5543 = vpop.permute.xlu0 %5542
  %v5545 = vrcp.pop %v5528
  %v5546 = vmul.f32 %v5521, %v5545
  %v5547 = vrcp.pop %v5533
  %v5548 = vmul.f32 %v5522, %v5547
  %v5549 = vrcp.pop %v5538
  %v5550 = vmul.f32 %v5523, %v5549
  %v5551 = vrcp.pop %v5543
  %v5552 = vmul.f32 %v5524, %v5551
  %v5553 = vmax.f32 %v5333, %v5337
  %v5554 = vmax.f32 %v5334, %v5338
  %v5555 = vmax.f32 %v5335, %v5339
  %v5556 = vmax.f32 %v5336, %v5340
  %v5557 = vmax.f32 %v5553, %v5341
  %v5558 = vmax.f32 %v5554, %v5342
  %v5559 = vmax.f32 %v5555, %v5343
  %v5560 = vmax.f32 %v5556, %v5344
  %v5561 = vlaneseq
  %v5562 = vshrl.u32 %v5561, 7
  %v5563 = vsub.s32 0, %v5562
  %v5564 = vrot.slane %v5312, %v5563
  %5566 = vrot.lane.b32.xlu0 %v5564, 127
  %v5567 = vpop.permute.xlu0 %5566
  %v5569 = vmax.f32 %v5557, %v5567
  %v5570 = vmax.f32 %v5558, %v5567
  %v5571 = vmax.f32 %v5559, %v5567
  %v5572 = vmax.f32 %v5560, %v5567
  %v5573 = vsub.f32 %v5333, %v5569
  %v5574 = vsub.f32 %v5334, %v5570
  %v5575 = vsub.f32 %v5335, %v5571
  %v5576 = vsub.f32 %v5336, %v5572
  %v5577 = vmul.f32 %v5573, 1.442695
  %v5578 = vpow.pop %v5577
  %v5579 = vmul.f32 %v5574, 1.442695
  %v5580 = vpow.pop %v5579
  %v5581 = vmul.f32 %v5575, 1.442695
  %v5582 = vpow.pop %v5581
  %v5583 = vmul.f32 %v5576, 1.442695
  %v5584 = vpow.pop %v5583
  %v5585 = vsub.f32 %v5337, %v5569
  %v5586 = vsub.f32 %v5338, %v5570
  %v5587 = vsub.f32 %v5339, %v5571
  %v5588 = vsub.f32 %v5340, %v5572
  %v5589 = vmul.f32 %v5585, 1.442695
  %v5590 = vpow.pop %v5589
  %v5591 = vmul.f32 %v5586, 1.442695
  %v5592 = vpow.pop %v5591
  %v5593 = vmul.f32 %v5587, 1.442695
  %v5594 = vpow.pop %v5593
  %v5595 = vmul.f32 %v5588, 1.442695
  %v5596 = vpow.pop %v5595
  %v5597 = vsub.f32 %v5341, %v5569
  %v5598 = vsub.f32 %v5342, %v5570
  %v5599 = vsub.f32 %v5343, %v5571
  %v5600 = vsub.f32 %v5344, %v5572
  %v5601 = vmul.f32 %v5597, 1.442695
  %v5602 = vpow.pop %v5601
  %v5603 = vmul.f32 %v5598, 1.442695
  %v5604 = vpow.pop %v5603
  %v5605 = vmul.f32 %v5599, 1.442695
  %v5606 = vpow.pop %v5605
  %v5607 = vmul.f32 %v5600, 1.442695
  %v5608 = vpow.pop %v5607
  %5610 = vset.pattern.permute.xlu0 0
  %5611 = vperm.xlu0 %5610, %v5578
  %v5612 = vpop.permute.xlu0 %5611
  %5615 = vset.pattern.permute.xlu0 0
  %5616 = vperm.xlu0 %5615, %v5580
  %v5617 = vpop.permute.xlu0 %5616
  %5620 = vset.pattern.permute.xlu0 0
  %5621 = vperm.xlu0 %5620, %v5582
  %v5622 = vpop.permute.xlu0 %5621
  %5625 = vset.pattern.permute.xlu0 0
  %5626 = vperm.xlu0 %5625, %v5584
  %v5627 = vpop.permute.xlu0 %5626
  %v5629 = vmul.f32 %v5612, %v5317
  %v5630 = vmul.f32 %v5617, %v5318
  %v5631 = vmul.f32 %v5622, %v5319
  %v5632 = vmul.f32 %v5627, %v5320
  %v5633 = vadd.f32 %v5578, %v5590
  %v5634 = vadd.f32 %v5580, %v5592
  %v5635 = vadd.f32 %v5582, %v5594
  %v5636 = vadd.f32 %v5584, %v5596
  %5638 = vset.pattern.permute.xlu0 0
  %5639 = vperm.xlu0 %5638, %v5590
  %v5640 = vpop.permute.xlu0 %5639
  %5643 = vset.pattern.permute.xlu0 0
  %5644 = vperm.xlu0 %5643, %v5592
  %v5645 = vpop.permute.xlu0 %5644
  %5648 = vset.pattern.permute.xlu0 0
  %5649 = vperm.xlu0 %5648, %v5594
  %v5650 = vpop.permute.xlu0 %5649
  %5653 = vset.pattern.permute.xlu0 0
  %5654 = vperm.xlu0 %5653, %v5596
  %v5655 = vpop.permute.xlu0 %5654
  %v5657 = vmul.f32 %v5640, %v5321
  %v5658 = vmul.f32 %v5645, %v5322
  %v5659 = vmul.f32 %v5650, %v5323
  %v5660 = vmul.f32 %v5655, %v5324
  %v5661 = vadd.f32 %v5629, %v5657
  %v5662 = vadd.f32 %v5630, %v5658
  %v5663 = vadd.f32 %v5631, %v5659
  %v5664 = vadd.f32 %v5632, %v5660
  %v5665 = vadd.f32 %v5633, %v5602
  %v5666 = vadd.f32 %v5634, %v5604
  %v5667 = vadd.f32 %v5635, %v5606
  %v5668 = vadd.f32 %v5636, %v5608
  %5670 = vset.pattern.permute.xlu0 0
  %5671 = vperm.xlu0 %5670, %v5602
  %v5672 = vpop.permute.xlu0 %5671
  %5675 = vset.pattern.permute.xlu0 0
  %5676 = vperm.xlu0 %5675, %v5604
  %v5677 = vpop.permute.xlu0 %5676
  %5680 = vset.pattern.permute.xlu0 0
  %5681 = vperm.xlu0 %5680, %v5606
  %v5682 = vpop.permute.xlu0 %5681
  %5685 = vset.pattern.permute.xlu0 0
  %5686 = vperm.xlu0 %5685, %v5608
  %v5687 = vpop.permute.xlu0 %5686
  %v5689 = vmul.f32 %v5672, %v5325
  %v5690 = vmul.f32 %v5677, %v5326
  %v5691 = vmul.f32 %v5682, %v5327
  %v5692 = vmul.f32 %v5687, %v5328
  %v5693 = vadd.f32 %v5661, %v5689
  %v5694 = vadd.f32 %v5662, %v5690
  %v5695 = vadd.f32 %v5663, %v5691
  %v5696 = vadd.f32 %v5664, %v5692
  %5701 = vrot.lane.b32.xlu0 %v5569, 1
  %v5702 = vpop.permute.xlu0 %5701
  %5703 = vrot.lane.b32.xlu0 %v5570, 1
  %v5704 = vpop.permute.xlu0 %5703
  %5705 = vrot.lane.b32.xlu0 %v5571, 1
  %v5706 = vpop.permute.xlu0 %5705
  %5707 = vrot.lane.b32.xlu0 %v5572, 1
  %v5708 = vpop.permute.xlu0 %5707
  %v5713 = vsub.f32 %v5564, %v5702
  %v5714 = vsub.f32 %v5564, %v5704
  %v5715 = vsub.f32 %v5564, %v5706
  %v5716 = vsub.f32 %v5564, %v5708
  %v5717 = vmul.f32 %v5713, 1.442695
  %v5718 = vpow.pop %v5717
  %v5719 = vmul.f32 %v5714, 1.442695
  %v5720 = vpow.pop %v5719
  %v5721 = vmul.f32 %v5715, 1.442695
  %v5722 = vpow.pop %v5721
  %v5723 = vmul.f32 %v5716, 1.442695
  %v5724 = vpow.pop %v5723
  %5729 = vrot.lane.b32.xlu0 %v5718, 127
  %v5730 = vpop.permute.xlu0 %5729
  %5731 = vrot.lane.b32.xlu0 %v5720, 127
  %v5732 = vpop.permute.xlu0 %5731
  %5733 = vrot.lane.b32.xlu0 %v5722, 127
  %v5734 = vpop.permute.xlu0 %5733
  %5735 = vrot.lane.b32.xlu0 %v5724, 127
  %v5736 = vpop.permute.xlu0 %5735
  %v5741 = vadd.f32 %v5665, %v5730
  %v5742 = vadd.f32 %v5666, %v5732
  %v5743 = vadd.f32 %v5667, %v5734
  %v5744 = vadd.f32 %v5668, %v5736
  %5746 = vset.pattern.permute.xlu0 0
  %5747 = vperm.xlu0 %5746, %v5741
  %v5748 = vpop.permute.xlu0 %5747
  %5751 = vset.pattern.permute.xlu0 0
  %5752 = vperm.xlu0 %5751, %v5742
  %v5753 = vpop.permute.xlu0 %5752
  %5756 = vset.pattern.permute.xlu0 0
  %5757 = vperm.xlu0 %5756, %v5743
  %v5758 = vpop.permute.xlu0 %5757
  %5761 = vset.pattern.permute.xlu0 0
  %5762 = vperm.xlu0 %5761, %v5744
  %v5763 = vpop.permute.xlu0 %5762
  %v5765 = vrcp.pop %v5748
  %v5766 = vmul.f32 %v5693, %v5765
  %v5767 = vrcp.pop %v5753
  %v5768 = vmul.f32 %v5694, %v5767
  %v5769 = vrcp.pop %v5758
  %v5770 = vmul.f32 %v5695, %v5769
  %v5771 = vrcp.pop %v5763
  %v5772 = vmul.f32 %v5696, %v5771
  %v5773 = vmax.f32 %v5337, %v5341
  %v5774 = vmax.f32 %v5338, %v5342
  %v5775 = vmax.f32 %v5339, %v5343
  %v5776 = vmax.f32 %v5340, %v5344
  %v5777 = vmax.f32 %v5773, %v5567
  %v5778 = vmax.f32 %v5774, %v5567
  %v5779 = vmax.f32 %v5775, %v5567
  %v5780 = vmax.f32 %v5776, %v5567
  %v5781 = vsub.f32 %v5337, %v5777
  %v5782 = vsub.f32 %v5338, %v5778
  %v5783 = vsub.f32 %v5339, %v5779
  %v5784 = vsub.f32 %v5340, %v5780
  %v5785 = vmul.f32 %v5781, 1.442695
  %v5786 = vpow.pop %v5785
  %v5787 = vmul.f32 %v5782, 1.442695
  %v5788 = vpow.pop %v5787
  %v5789 = vmul.f32 %v5783, 1.442695
  %v5790 = vpow.pop %v5789
  %v5791 = vmul.f32 %v5784, 1.442695
  %v5792 = vpow.pop %v5791
  %v5793 = vsub.f32 %v5341, %v5777
  %v5794 = vsub.f32 %v5342, %v5778
  %v5795 = vsub.f32 %v5343, %v5779
  %v5796 = vsub.f32 %v5344, %v5780
  %v5797 = vmul.f32 %v5793, 1.442695
  %v5798 = vpow.pop %v5797
  %v5799 = vmul.f32 %v5794, 1.442695
  %v5800 = vpow.pop %v5799
  %v5801 = vmul.f32 %v5795, 1.442695
  %v5802 = vpow.pop %v5801
  %v5803 = vmul.f32 %v5796, 1.442695
  %v5804 = vpow.pop %v5803
  %5806 = vset.pattern.permute.xlu0 0
  %5807 = vperm.xlu0 %5806, %v5786
  %v5808 = vpop.permute.xlu0 %5807
  %5811 = vset.pattern.permute.xlu0 0
  %5812 = vperm.xlu0 %5811, %v5788
  %v5813 = vpop.permute.xlu0 %5812
  %5816 = vset.pattern.permute.xlu0 0
  %5817 = vperm.xlu0 %5816, %v5790
  %v5818 = vpop.permute.xlu0 %5817
  %5821 = vset.pattern.permute.xlu0 0
  %5822 = vperm.xlu0 %5821, %v5792
  %v5823 = vpop.permute.xlu0 %5822
  %v5825 = vmul.f32 %v5808, %v5321
  %v5826 = vmul.f32 %v5813, %v5322
  %v5827 = vmul.f32 %v5818, %v5323
  %v5828 = vmul.f32 %v5823, %v5324
  %v5829 = vadd.f32 %v5786, %v5798
  %v5830 = vadd.f32 %v5788, %v5800
  %v5831 = vadd.f32 %v5790, %v5802
  %v5832 = vadd.f32 %v5792, %v5804
  %5834 = vset.pattern.permute.xlu0 0
  %5835 = vperm.xlu0 %5834, %v5798
  %v5836 = vpop.permute.xlu0 %5835
  %5839 = vset.pattern.permute.xlu0 0
  %5840 = vperm.xlu0 %5839, %v5800
  %v5841 = vpop.permute.xlu0 %5840
  %5844 = vset.pattern.permute.xlu0 0
  %5845 = vperm.xlu0 %5844, %v5802
  %v5846 = vpop.permute.xlu0 %5845
  %5849 = vset.pattern.permute.xlu0 0
  %5850 = vperm.xlu0 %5849, %v5804
  %v5851 = vpop.permute.xlu0 %5850
  %v5853 = vmul.f32 %v5836, %v5325
  %v5854 = vmul.f32 %v5841, %v5326
  %v5855 = vmul.f32 %v5846, %v5327
  %v5856 = vmul.f32 %v5851, %v5328
  %v5857 = vadd.f32 %v5825, %v5853
  %v5858 = vadd.f32 %v5826, %v5854
  %v5859 = vadd.f32 %v5827, %v5855
  %v5860 = vadd.f32 %v5828, %v5856
  %5865 = vrot.lane.b32.xlu0 %v5777, 1
  %v5866 = vpop.permute.xlu0 %5865
  %5867 = vrot.lane.b32.xlu0 %v5778, 1
  %v5868 = vpop.permute.xlu0 %5867
  %5869 = vrot.lane.b32.xlu0 %v5779, 1
  %v5870 = vpop.permute.xlu0 %5869
  %5871 = vrot.lane.b32.xlu0 %v5780, 1
  %v5872 = vpop.permute.xlu0 %5871
  %v5877 = vsub.f32 %v5564, %v5866
  %v5878 = vsub.f32 %v5564, %v5868
  %v5879 = vsub.f32 %v5564, %v5870
  %v5880 = vsub.f32 %v5564, %v5872
  %v5881 = vmul.f32 %v5877, 1.442695
  %v5882 = vpow.pop %v5881
  %v5883 = vmul.f32 %v5878, 1.442695
  %v5884 = vpow.pop %v5883
  %v5885 = vmul.f32 %v5879, 1.442695
  %v5886 = vpow.pop %v5885
  %v5887 = vmul.f32 %v5880, 1.442695
  %v5888 = vpow.pop %v5887
  %v5889 = vmul.f32 %v5882, 2.0
  %v5890 = vmul.f32 %v5884, 2.0
  %v5891 = vmul.f32 %v5886, 2.0
  %v5892 = vmul.f32 %v5888, 2.0
  %5897 = vrot.lane.b32.xlu0 %v5889, 127
  %v5898 = vpop.permute.xlu0 %5897
  %5899 = vrot.lane.b32.xlu0 %v5890, 127
  %v5900 = vpop.permute.xlu0 %5899
  %5901 = vrot.lane.b32.xlu0 %v5891, 127
  %v5902 = vpop.permute.xlu0 %5901
  %5903 = vrot.lane.b32.xlu0 %v5892, 127
  %v5904 = vpop.permute.xlu0 %5903
  %v5909 = vadd.f32 %v5829, %v5898
  %v5910 = vadd.f32 %v5830, %v5900
  %v5911 = vadd.f32 %v5831, %v5902
  %v5912 = vadd.f32 %v5832, %v5904
  %5914 = vset.pattern.permute.xlu0 0
  %5915 = vperm.xlu0 %5914, %v5909
  %v5916 = vpop.permute.xlu0 %5915
  %5919 = vset.pattern.permute.xlu0 0
  %5920 = vperm.xlu0 %5919, %v5910
  %v5921 = vpop.permute.xlu0 %5920
  %5924 = vset.pattern.permute.xlu0 0
  %5925 = vperm.xlu0 %5924, %v5911
  %v5926 = vpop.permute.xlu0 %5925
  %5929 = vset.pattern.permute.xlu0 0
  %5930 = vperm.xlu0 %5929, %v5912
  %v5931 = vpop.permute.xlu0 %5930
  %v5933 = vrcp.pop %v5916
  %v5934 = vmul.f32 %v5857, %v5933
  %v5935 = vrcp.pop %v5921
  %v5936 = vmul.f32 %v5858, %v5935
  %v5937 = vrcp.pop %v5926
  %v5938 = vmul.f32 %v5859, %v5937
  %v5939 = vrcp.pop %v5931
  %v5940 = vmul.f32 %v5860, %v5939
  %v5941 = vmax.f32 %v5341, %v5567
  %v5942 = vmax.f32 %v5342, %v5567
  %v5943 = vmax.f32 %v5343, %v5567
  %v5944 = vmax.f32 %v5344, %v5567
  %v5945 = vsub.f32 %v5341, %v5941
  %v5946 = vsub.f32 %v5342, %v5942
  %v5947 = vsub.f32 %v5343, %v5943
  %v5948 = vsub.f32 %v5344, %v5944
  %v5949 = vmul.f32 %v5945, 1.442695
  %v5950 = vpow.pop %v5949
  %v5951 = vmul.f32 %v5946, 1.442695
  %v5952 = vpow.pop %v5951
  %v5953 = vmul.f32 %v5947, 1.442695
  %v5954 = vpow.pop %v5953
  %v5955 = vmul.f32 %v5948, 1.442695
  %v5956 = vpow.pop %v5955
  %5958 = vset.pattern.permute.xlu0 0
  %5959 = vperm.xlu0 %5958, %v5950
  %v5960 = vpop.permute.xlu0 %5959
  %5963 = vset.pattern.permute.xlu0 0
  %5964 = vperm.xlu0 %5963, %v5952
  %v5965 = vpop.permute.xlu0 %5964
  %5968 = vset.pattern.permute.xlu0 0
  %5969 = vperm.xlu0 %5968, %v5954
  %v5970 = vpop.permute.xlu0 %5969
  %5973 = vset.pattern.permute.xlu0 0
  %5974 = vperm.xlu0 %5973, %v5956
  %v5975 = vpop.permute.xlu0 %5974
  %v5977 = vmul.f32 %v5960, %v5325
  %v5978 = vmul.f32 %v5965, %v5326
  %v5979 = vmul.f32 %v5970, %v5327
  %v5980 = vmul.f32 %v5975, %v5328
  %5985 = vrot.lane.b32.xlu0 %v5941, 1
  %v5986 = vpop.permute.xlu0 %5985
  %5987 = vrot.lane.b32.xlu0 %v5942, 1
  %v5988 = vpop.permute.xlu0 %5987
  %5989 = vrot.lane.b32.xlu0 %v5943, 1
  %v5990 = vpop.permute.xlu0 %5989
  %5991 = vrot.lane.b32.xlu0 %v5944, 1
  %v5992 = vpop.permute.xlu0 %5991
  %v5997 = vsub.f32 %v5564, %v5986
  %v5998 = vsub.f32 %v5564, %v5988
  %v5999 = vsub.f32 %v5564, %v5990
  %v6000 = vsub.f32 %v5564, %v5992
  %v6001 = vmul.f32 %v5997, 1.442695
  %v6002 = vpow.pop %v6001
  %v6003 = vmul.f32 %v5998, 1.442695
  %v6004 = vpow.pop %v6003
  %v6005 = vmul.f32 %v5999, 1.442695
  %v6006 = vpow.pop %v6005
  %v6007 = vmul.f32 %v6000, 1.442695
  %v6008 = vpow.pop %v6007
  %v6009 = vmul.f32 %v6002, 3.0
  %v6010 = vmul.f32 %v6004, 3.0
  %v6011 = vmul.f32 %v6006, 3.0
  %v6012 = vmul.f32 %v6008, 3.0
  %6017 = vrot.lane.b32.xlu0 %v6009, 127
  %v6018 = vpop.permute.xlu0 %6017
  %6019 = vrot.lane.b32.xlu0 %v6010, 127
  %v6020 = vpop.permute.xlu0 %6019
  %6021 = vrot.lane.b32.xlu0 %v6011, 127
  %v6022 = vpop.permute.xlu0 %6021
  %6023 = vrot.lane.b32.xlu0 %v6012, 127
  %v6024 = vpop.permute.xlu0 %6023
  %v6029 = vadd.f32 %v5950, %v6018
  %v6030 = vadd.f32 %v5952, %v6020
  %v6031 = vadd.f32 %v5954, %v6022
  %v6032 = vadd.f32 %v5956, %v6024
  %6034 = vset.pattern.permute.xlu0 0
  %6035 = vperm.xlu0 %6034, %v6029
  %v6036 = vpop.permute.xlu0 %6035
  %6039 = vset.pattern.permute.xlu0 0
  %6040 = vperm.xlu0 %6039, %v6030
  %v6041 = vpop.permute.xlu0 %6040
  %6044 = vset.pattern.permute.xlu0 0
  %6045 = vperm.xlu0 %6044, %v6031
  %v6046 = vpop.permute.xlu0 %6045
  %6049 = vset.pattern.permute.xlu0 0
  %6050 = vperm.xlu0 %6049, %v6032
  %v6051 = vpop.permute.xlu0 %6050
  %v6053 = vrcp.pop %v6036
  %v6054 = vmul.f32 %v5977, %v6053
  %v6055 = vrcp.pop %v6041
  %v6056 = vmul.f32 %v5978, %v6055
  %v6057 = vrcp.pop %v6046
  %v6058 = vmul.f32 %v5979, %v6057
  %v6059 = vrcp.pop %v6051
  %v6060 = vmul.f32 %v5980, %v6059
  %v6061 = vld [vmem:[%s1 + $0x138] sm:$0xff]
  %v6062 = vld [vmem:[%s1 + $0x160] sm:$0x1]
  %v6063 = vlaneseq
  %v6064 = vshrl.u32 %v6063, 7
  %v6065 = vsub.s32 0, %v6064
  %v6066 = vrot.slane %v6062, %v6065
  %v6068 = vsel %vm361, %v5546, 0
  %v6071 = vsel %vm361, %v5548, 0
  %v6074 = vsel %vm361, %v5550, 0
  %v6077 = vsel %vm361, %v5552, 0
  %v6080 = vsel %vm361, %v5766, 0
  %v6083 = vsel %vm361, %v5768, 0
  %v6086 = vsel %vm361, %v5770, 0
  %v6089 = vsel %vm361, %v5772, 0
  %v6092 = vsel %vm361, %v5934, 0
  %v6095 = vsel %vm361, %v5936, 0
  %v6098 = vsel %vm361, %v5938, 0
  %v6101 = vsel %vm361, %v5940, 0
  %v6104 = vsel %vm361, %v6054, 0
  %v6107 = vsel %vm361, %v6056, 0
  %v6110 = vsel %vm361, %v6058, 0
  %v6113 = vsel %vm361, %v6060, 0
  %6115 = vmatprep.subr.mxu0 0.0
  %6116 = vmatpush1.msra.mxu0 %v6061
  %6117 = vmatprep.subr.mxu0 0.0
  %6118 = vmatpush1.msra.mxu0 0.0
  %6119 = vmatprep.subr.mxu0 0.0
  %6120 = vmatpush1.msra.mxu0 0.0
  %6121 = vmatprep.subr.mxu0 0.0
  %6122 = vmatpush1.msra.mxu0 0.0
  %6123 = vmatprep.subr.mxu0 0.0
  %6124 = vmatpush1.msra.mxu0 0.0
  %6125 = vmatprep.subr.mxu0 0.0
  %6126 = vmatpush1.msra.mxu0 0.0
  %6127 = vmatprep.subr.mxu0 0.0
  %6128 = vmatpush1.msra.mxu0 0.0
  %6129 = vmatprep.subr.mxu0 0.0
  %6130 = vmatpush1.msra.mxu0 0.0
  %6131 = vmatprep.subr.mxu0 0.0
  %6132 = vmatpush1.msra.mxu0 0.0
  %6133 = vmatprep.subr.mxu0 0.0
  %6134 = vmatpush1.msra.mxu0 0.0
  %6135 = vmatprep.subr.mxu0 0.0
  %6136 = vmatpush1.msra.mxu0 0.0
  %6137 = vmatprep.subr.mxu0 0.0
  %6138 = vmatpush1.msra.mxu0 0.0
  %6139 = vmatprep.subr.mxu0 0.0
  %6140 = vmatpush1.msra.mxu0 0.0
  %6141 = vmatprep.subr.mxu0 0.0
  %6142 = vmatpush1.msra.mxu0 0.0
  %6143 = vmatprep.subr.mxu0 0.0
  %6144 = vmatpush1.msra.mxu0 0.0
  %6145 = vmatprep.subr.mxu0 0.0
  %6146 = vmatpush1.msra.mxu0 0.0
  %6147 = vmatprep.subr.mxu0 0.0
  %6148 = vmatpush1.msra.mxu0 0.0
  %6149 = vmatprep.subr.mxu0 0.0
  %6150 = vmatpush1.msra.mxu0 0.0
  %6151 = vmatprep.subr.mxu0 0.0
  %6152 = vmatpush1.msra.mxu0 0.0
  %6153 = vmatprep.subr.mxu0 0.0
  %6154 = vmatpush1.msra.mxu0 0.0
  %6155 = vmatprep.subr.mxu0 0.0
  %6156 = vmatpush1.msra.mxu0 0.0
  %6157 = vmatprep.subr.mxu0 0.0
  %6158 = vmatpush1.msra.mxu0 0.0
  %6159 = vmatprep.subr.mxu0 0.0
  %6160 = vmatpush1.msra.mxu0 0.0
  %6161 = vmatprep.subr.mxu0 0.0
  %6162 = vmatpush1.msra.mxu0 0.0
  %6163 = vmatprep.subr.mxu0 0.0
  %6164 = vmatpush1.msra.mxu0 0.0
  %6165 = vmatprep.subr.mxu0 0.0
  %6166 = vmatpush1.msra.mxu0 0.0
  %6167 = vmatprep.subr.mxu0 0.0
  %6168 = vmatpush1.msra.mxu0 0.0
  %6169 = vmatprep.subr.mxu0 0.0
  %6170 = vmatpush1.msra.mxu0 0.0
  %6171 = vmatprep.subr.mxu0 0.0
  %6172 = vmatpush1.msra.mxu0 0.0
  %6173 = vmatprep.subr.mxu0 0.0
  %6174 = vmatpush1.msra.mxu0 0.0
  %6175 = vmatprep.subr.mxu0 0.0
  %6176 = vmatpush1.msra.mxu0 0.0
  %6177 = vmatprep.subr.mxu0 0.0
  %6178 = vmatpush1.msra.mxu0 0.0
  %6179 = vmatprep.mubr.f32.mxu0 0.0
  %6180 = vmatmul.mubr.f32.gmra.mrb[0].mxu0 %v6068
  %v6181 = vpop.f32.mrb[0].mxu0
  %v6182 = vadd.f32 %v6066, %v6181
  %v6183 = vpop.f32.mrb[0].mxu0
  %6184 = vmatprep.mubr.f32.mxu0 0.0
  %6185 = vmatmul.mubr.f32.gmra.mrb[0].mxu0 %v6071
  %v6186 = vpop.f32.mrb[0].mxu0
  %v6187 = vadd.f32 %v6066, %v6186
  %v6188 = vpop.f32.mrb[0].mxu0
  %6189 = vmatprep.mubr.f32.mxu0 0.0
  %6190 = vmatmul.mubr.f32.gmra.mrb[0].mxu0 %v6074
  %v6191 = vpop.f32.mrb[0].mxu0
  %v6192 = vadd.f32 %v6066, %v6191
  %v6193 = vpop.f32.mrb[0].mxu0
  %6194 = vmatprep.mubr.f32.mxu0 0.0
  %6195 = vmatmul.mubr.f32.gmra.mrb[0].mxu0 %v6077
  %v6196 = vpop.f32.mrb[0].mxu0
  %v6197 = vadd.f32 %v6066, %v6196
  %v6198 = vpop.f32.mrb[0].mxu0
  %6199 = vmatprep.mubr.f32.mxu0 0.0
  %6200 = vmatmul.mubr.f32.gmra.mrb[0].mxu0 %v6080
  %v6201 = vpop.f32.mrb[0].mxu0
  %v6202 = vadd.f32 %v6066, %v6201
  %v6203 = vpop.f32.mrb[0].mxu0
  %6204 = vmatprep.mubr.f32.mxu0 0.0
  %6205 = vmatmul.mubr.f32.gmra.mrb[0].mxu0 %v6083
  %v6206 = vpop.f32.mrb[0].mxu0
  %v6207 = vadd.f32 %v6066, %v6206
  %v6208 = vpop.f32.mrb[0].mxu0
  %6209 = vmatprep.mubr.f32.mxu0 0.0
  %6210 = vmatmul.mubr.f32.gmra.mrb[0].mxu0 %v6086
  %v6211 = vpop.f32.mrb[0].mxu0
  %v6212 = vadd.f32 %v6066, %v6211
  %v6213 = vpop.f32.mrb[0].mxu0
  %6214 = vmatprep.mubr.f32.mxu0 0.0
  %6215 = vmatmul.mubr.f32.gmra.mrb[0].mxu0 %v6089
  %v6216 = vpop.f32.mrb[0].mxu0
  %v6217 = vadd.f32 %v6066, %v6216
  %v6218 = vpop.f32.mrb[0].mxu0
  %6219 = vmatprep.mubr.f32.mxu0 0.0
  %6220 = vmatmul.mubr.f32.gmra.mrb[0].mxu0 %v6092
  %v6221 = vpop.f32.mrb[0].mxu0
  %v6222 = vadd.f32 %v6066, %v6221
  %v6223 = vpop.f32.mrb[0].mxu0
  %6224 = vmatprep.mubr.f32.mxu0 0.0
  %6225 = vmatmul.mubr.f32.gmra.mrb[0].mxu0 %v6095
  %v6226 = vpop.f32.mrb[0].mxu0
  %v6227 = vadd.f32 %v6066, %v6226
  %v6228 = vpop.f32.mrb[0].mxu0
  %6229 = vmatprep.mubr.f32.mxu0 0.0
  %6230 = vmatmul.mubr.f32.gmra.mrb[0].mxu0 %v6098
  %v6231 = vpop.f32.mrb[0].mxu0
  %v6232 = vadd.f32 %v6066, %v6231
  %v6233 = vpop.f32.mrb[0].mxu0
  %6234 = vmatprep.mubr.f32.mxu0 0.0
  %6235 = vmatmul.mubr.f32.gmra.mrb[0].mxu0 %v6101
  %v6236 = vpop.f32.mrb[0].mxu0
  %v6237 = vadd.f32 %v6066, %v6236
  %v6238 = vpop.f32.mrb[0].mxu0
  %6239 = vmatprep.mubr.f32.mxu0 0.0
  %6240 = vmatmul.mubr.f32.gmra.mrb[0].mxu0 %v6104
  %v6241 = vpop.f32.mrb[0].mxu0
  %v6242 = vadd.f32 %v6066, %v6241
  %v6243 = vpop.f32.mrb[0].mxu0
  %6244 = vmatprep.mubr.f32.mxu0 0.0
  %6245 = vmatmul.mubr.f32.gmra.mrb[0].mxu0 %v6107
  %v6246 = vpop.f32.mrb[0].mxu0
  %v6247 = vadd.f32 %v6066, %v6246
  %v6248 = vpop.f32.mrb[0].mxu0
  %6249 = vmatprep.mubr.f32.mxu0 0.0
  %6250 = vmatmul.mubr.f32.gmra.mrb[0].mxu0 %v6110
  %v6251 = vpop.f32.mrb[0].mxu0
  %v6252 = vadd.f32 %v6066, %v6251
  %v6253 = vpop.f32.mrb[0].mxu0
  %6254 = vmatprep.mubr.f32.mxu0 0.0
  %6255 = vmatmul.mubr.f32.gmra.mrb[0].mxu0 %v6113
  %v6256 = vpop.f32.mrb[0].mxu0
  %v6257 = vadd.f32 %v6066, %v6256
  %v6258 = vpop.f32.mrb[0].mxu0
  %6259 = vdwg.mxu0
  %v6260 = vld [vmem:[#allocation5] sm:$0xff]
  %v6261 = vld [vmem:[#allocation5 + $0x8] sm:$0xff]
  %v6262 = vld [vmem:[#allocation5 + $0x10] sm:$0xff]
  %v6263 = vld [vmem:[#allocation5 + $0x18] sm:$0xff]
  %v6264 = vld [vmem:[%s1 + $0x110] sm:$0xff]
  %v6265 = vld [vmem:[%s1 + $0x118] sm:$0xff]
  %v6266 = vld [vmem:[%s1 + $0x120] sm:$0xff]
  %v6267 = vld [vmem:[%s1 + $0x128] sm:$0xff]
  %v6268 = vld [vmem:[%s1 + $0x130] sm:$0x1]
  %v6269 = vlaneseq
  %v6270 = vshrl.u32 %v6269, 7
  %v6271 = vsub.s32 0, %v6270
  %v6272 = vrot.slane %v6268, %v6271
  %v6274 = vsel %vm138, %v6260, 0
  %v6277 = vsel %vm138, %v6261, 0
  %v6280 = vsel %vm138, %v6262, 0
  %v6283 = vsel %vm138, %v6263, 0
  %6285 = vmatprep.subr.mxu0 0.0
  %6286 = vmatpush1.msra.mxu0 %v6264
  %6287 = vmatprep.subr.mxu0 0.0
  %6288 = vmatpush1.msra.mxu0 %v6265
  %6289 = vmatprep.subr.mxu0 0.0
  %6290 = vmatpush1.msra.mxu0 %v6266
  %6291 = vmatprep.subr.mxu0 0.0
  %6292 = vmatpush1.msra.mxu0 %v6267
  %6293 = vmatprep.subr.mxu0 0.0
  %6294 = vmatpush1.msra.mxu0 0.0
  %6295 = vmatprep.subr.mxu0 0.0
  %6296 = vmatpush1.msra.mxu0 0.0
  %6297 = vmatprep.subr.mxu0 0.0
  %6298 = vmatpush1.msra.mxu0 0.0
  %6299 = vmatprep.subr.mxu0 0.0
  %6300 = vmatpush1.msra.mxu0 0.0
  %6301 = vmatprep.subr.mxu0 0.0
  %6302 = vmatpush1.msra.mxu0 0.0
  %6303 = vmatprep.subr.mxu0 0.0
  %6304 = vmatpush1.msra.mxu0 0.0
  %6305 = vmatprep.subr.mxu0 0.0
  %6306 = vmatpush1.msra.mxu0 0.0
  %6307 = vmatprep.subr.mxu0 0.0
  %6308 = vmatpush1.msra.mxu0 0.0
  %6309 = vmatprep.subr.mxu0 0.0
  %6310 = vmatpush1.msra.mxu0 0.0
  %6311 = vmatprep.subr.mxu0 0.0
  %6312 = vmatpush1.msra.mxu0 0.0
  %6313 = vmatprep.subr.mxu0 0.0
  %6314 = vmatpush1.msra.mxu0 0.0
  %6315 = vmatprep.subr.mxu0 0.0
  %6316 = vmatpush1.msra.mxu0 0.0
  %6317 = vmatprep.subr.mxu0 0.0
  %6318 = vmatpush1.msra.mxu0 0.0
  %6319 = vmatprep.subr.mxu0 0.0
  %6320 = vmatpush1.msra.mxu0 0.0
  %6321 = vmatprep.subr.mxu0 0.0
  %6322 = vmatpush1.msra.mxu0 0.0
  %6323 = vmatprep.subr.mxu0 0.0
  %6324 = vmatpush1.msra.mxu0 0.0
  %6325 = vmatprep.subr.mxu0 0.0
  %6326 = vmatpush1.msra.mxu0 0.0
  %6327 = vmatprep.subr.mxu0 0.0
  %6328 = vmatpush1.msra.mxu0 0.0
  %6329 = vmatprep.subr.mxu0 0.0
  %6330 = vmatpush1.msra.mxu0 0.0
  %6331 = vmatprep.subr.mxu0 0.0
  %6332 = vmatpush1.msra.mxu0 0.0
  %6333 = vmatprep.subr.mxu0 0.0
  %6334 = vmatpush1.msra.mxu0 0.0
  %6335 = vmatprep.subr.mxu0 0.0
  %6336 = vmatpush1.msra.mxu0 0.0
  %6337 = vmatprep.subr.mxu0 0.0
  %6338 = vmatpush1.msra.mxu0 0.0
  %6339 = vmatprep.subr.mxu0 0.0
  %6340 = vmatpush1.msra.mxu0 0.0
  %6341 = vmatprep.subr.mxu0 0.0
  %6342 = vmatpush1.msra.mxu0 0.0
  %6343 = vmatprep.subr.mxu0 0.0
  %6344 = vmatpush1.msra.mxu0 0.0
  %6345 = vmatprep.subr.mxu0 0.0
  %6346 = vmatpush1.msra.mxu0 0.0
  %6347 = vmatprep.subr.mxu0 0.0
  %6348 = vmatpush1.msra.mxu0 0.0
  %6349 = vmatprep.mubr.f32.mxu0 0.0
  %6350 = vmatmul.mubr.f32.gmra.mrb[0].mxu0 %v6274
  %v6351 = vpop.f32.mrb[0].mxu0
  %v6352 = vadd.f32 %v6272, %v6351
  %v6353 = vpop.f32.mrb[0].mxu0
  %6354 = vmatprep.mubr.f32.mxu0 0.0
  %6355 = vmatmul.mubr.f32.gmra.mrb[0].mxu0 %v6277
  %v6356 = vpop.f32.mrb[0].mxu0
  %v6357 = vadd.f32 %v6272, %v6356
  %v6358 = vpop.f32.mrb[0].mxu0
  %6359 = vmatprep.mubr.f32.mxu0 0.0
  %6360 = vmatmul.mubr.f32.gmra.mrb[0].mxu0 %v6280
  %v6361 = vpop.f32.mrb[0].mxu0
  %v6362 = vadd.f32 %v6272, %v6361
  %v6363 = vpop.f32.mrb[0].mxu0
  %6364 = vmatprep.mubr.f32.mxu0 0.0
  %6365 = vmatmul.mubr.f32.gmra.mrb[0].mxu0 %v6283
  %v6366 = vpop.f32.mrb[0].mxu0
  %v6367 = vadd.f32 %v6272, %v6366
  %v6368 = vpop.f32.mrb[0].mxu0
  %6369 = vdwg.mxu0
  %v6370 = vmax.f32 %v6352, 0.0
  %v6371 = vmax.f32 %v6357, 0.0
  %v6372 = vmax.f32 %v6362, 0.0
  %v6373 = vmax.f32 %v6367, 0.0
  %v6374 = vld [vmem:[%s1 + $0x140] sm:$0xff]
  %v6375 = vld [vmem:[%s1 + $0x148] sm:$0xff]
  %v6376 = vld [vmem:[%s1 + $0x150] sm:$0xff]
  %v6377 = vld [vmem:[%s1 + $0x158] sm:$0xff]
  %v6379 = vsel %vm138, %v6370, 0
  %v6382 = vsel %vm138, %v6371, 0
  %v6385 = vsel %vm138, %v6372, 0
  %v6388 = vsel %vm138, %v6373, 0
  %6390 = vmatprep.subr.mxu0 0.0
  %6391 = vmatpush1.msra.mxu0 %v6374
  %6392 = vmatprep.subr.mxu0 0.0
  %6393 = vmatpush1.msra.mxu0 %v6375
  %6394 = vmatprep.subr.mxu0 0.0
  %6395 = vmatpush1.msra.mxu0 %v6376
  %6396 = vmatprep.subr.mxu0 0.0
  %6397 = vmatpush1.msra.mxu0 %v6377
  %6398 = vmatprep.subr.mxu0 0.0
  %6399 = vmatpush1.msra.mxu0 0.0
  %6400 = vmatprep.subr.mxu0 0.0
  %6401 = vmatpush1.msra.mxu0 0.0
  %6402 = vmatprep.subr.mxu0 0.0
  %6403 = vmatpush1.msra.mxu0 0.0
  %6404 = vmatprep.subr.mxu0 0.0
  %6405 = vmatpush1.msra.mxu0 0.0
  %6406 = vmatprep.subr.mxu0 0.0
  %6407 = vmatpush1.msra.mxu0 0.0
  %6408 = vmatprep.subr.mxu0 0.0
  %6409 = vmatpush1.msra.mxu0 0.0
  %6410 = vmatprep.subr.mxu0 0.0
  %6411 = vmatpush1.msra.mxu0 0.0
  %6412 = vmatprep.subr.mxu0 0.0
  %6413 = vmatpush1.msra.mxu0 0.0
  %6414 = vmatprep.subr.mxu0 0.0
  %6415 = vmatpush1.msra.mxu0 0.0
  %6416 = vmatprep.subr.mxu0 0.0
  %6417 = vmatpush1.msra.mxu0 0.0
  %6418 = vmatprep.subr.mxu0 0.0
  %6419 = vmatpush1.msra.mxu0 0.0
  %6420 = vmatprep.subr.mxu0 0.0
  %6421 = vmatpush1.msra.mxu0 0.0
  %6422 = vmatprep.subr.mxu0 0.0
  %6423 = vmatpush1.msra.mxu0 0.0
  %6424 = vmatprep.subr.mxu0 0.0
  %6425 = vmatpush1.msra.mxu0 0.0
  %6426 = vmatprep.subr.mxu0 0.0
  %6427 = vmatpush1.msra.mxu0 0.0
  %6428 = vmatprep.subr.mxu0 0.0
  %6429 = vmatpush1.msra.mxu0 0.0
  %6430 = vmatprep.subr.mxu0 0.0
  %6431 = vmatpush1.msra.mxu0 0.0
  %6432 = vmatprep.subr.mxu0 0.0
  %6433 = vmatpush1.msra.mxu0 0.0
  %6434 = vmatprep.subr.mxu0 0.0
  %6435 = vmatpush1.msra.mxu0 0.0
  %6436 = vmatprep.subr.mxu0 0.0
  %6437 = vmatpush1.msra.mxu0 0.0
  %6438 = vmatprep.subr.mxu0 0.0
  %6439 = vmatpush1.msra.mxu0 0.0
  %6440 = vmatprep.subr.mxu0 0.0
  %6441 = vmatpush1.msra.mxu0 0.0
  %6442 = vmatprep.subr.mxu0 0.0
  %6443 = vmatpush1.msra.mxu0 0.0
  %6444 = vmatprep.subr.mxu0 0.0
  %6445 = vmatpush1.msra.mxu0 0.0
  %6446 = vmatprep.subr.mxu0 0.0
  %6447 = vmatpush1.msra.mxu0 0.0
  %6448 = vmatprep.subr.mxu0 0.0
  %6449 = vmatpush1.msra.mxu0 0.0
  %6450 = vmatprep.subr.mxu0 0.0
  %6451 = vmatpush1.msra.mxu0 0.0
  %6452 = vmatprep.subr.mxu0 0.0
  %6453 = vmatpush1.msra.mxu0 0.0
  %6454 = vmatprep.mubr.f32.mxu0 0.0
  %6455 = vmatmul.mubr.f32.gmra.mrb[0].mxu0 %v6379
  %v6456 = vpop.f32.mrb[0].mxu0
  %v6457 = vadd.f32 0.0, %v6456
  %v6458 = vpop.f32.mrb[0].mxu0
  %6459 = vmatprep.mubr.f32.mxu0 0.0
  %6460 = vmatmul.mubr.f32.gmra.mrb[0].mxu0 %v6382
  %v6461 = vpop.f32.mrb[0].mxu0
  %v6462 = vadd.f32 0.0, %v6461
  %v6463 = vpop.f32.mrb[0].mxu0
  %6464 = vmatprep.mubr.f32.mxu0 0.0
  %6465 = vmatmul.mubr.f32.gmra.mrb[0].mxu0 %v6385
  %v6466 = vpop.f32.mrb[0].mxu0
  %v6467 = vadd.f32 0.0, %v6466
  %v6468 = vpop.f32.mrb[0].mxu0
  %6469 = vmatprep.mubr.f32.mxu0 0.0
  %6470 = vmatmul.mubr.f32.gmra.mrb[0].mxu0 %v6388
  %v6471 = vpop.f32.mrb[0].mxu0
  %v6472 = vadd.f32 0.0, %v6471
  %v6473 = vpop.f32.mrb[0].mxu0
  %6474 = vdwg.mxu0
  %v6475 = vadd.f32 %v6182, %v6457
  %v6476 = vadd.f32 %v6187, %v6462
  %v6477 = vadd.f32 %v6192, %v6467
  %v6478 = vadd.f32 %v6197, %v6472
  %6483 = vrot.lane.b32.xlu0 %v6352, 96
  %v6484 = vpop.permute.xlu0 %6483
  %6485 = vrot.lane.b32.xlu0 %v6357, 96
  %v6486 = vpop.permute.xlu0 %6485
  %6487 = vrot.lane.b32.xlu0 %v6362, 96
  %v6488 = vpop.permute.xlu0 %6487
  %6489 = vrot.lane.b32.xlu0 %v6367, 96
  %v6490 = vpop.permute.xlu0 %6489
  %v6495 = vadd.f32 %v6475, %v6484
  %v6496 = vadd.f32 %v6476, %v6486
  %v6497 = vadd.f32 %v6477, %v6488
  %v6498 = vadd.f32 %v6478, %v6490
  %v6499 = vxor.u32 %v6495, 2147483648
  %v6500 = vxor.u32 %v6496, 2147483648
  %v6501 = vxor.u32 %v6497, 2147483648
  %v6502 = vxor.u32 %v6498, 2147483648
  %v6503 = vmul.f32 %v6499, 1.442695
  %v6504 = vpow.pop %v6503
  %v6505 = vmul.f32 %v6500, 1.442695
  %v6506 = vpow.pop %v6505
  %v6507 = vmul.f32 %v6501, 1.442695
  %v6508 = vpow.pop %v6507
  %v6509 = vmul.f32 %v6502, 1.442695
  %v6510 = vpow.pop %v6509
  %v6511 = vadd.f32 %v6504, 1.0
  %v6512 = vadd.f32 %v6506, 1.0
  %v6513 = vadd.f32 %v6508, 1.0
  %v6514 = vadd.f32 %v6510, 1.0
  %v6515 = vrcp.pop %v6511
  %v6516 = vmul.f32 1.0, %v6515
  %v6517 = vrcp.pop %v6512
  %v6518 = vmul.f32 1.0, %v6517
  %v6519 = vrcp.pop %v6513
  %v6520 = vmul.f32 1.0, %v6519
  %v6521 = vrcp.pop %v6514
  %v6522 = vmul.f32 1.0, %v6521
  %6523 = vrot.lane.b32.xlu0 %v6352, 32
  %v6524 = vpop.permute.xlu0 %6523
  %6525 = vrot.lane.b32.xlu0 %v6357, 32
  %v6526 = vpop.permute.xlu0 %6525
  %6527 = vrot.lane.b32.xlu0 %v6362, 32
  %v6528 = vpop.permute.xlu0 %6527
  %6529 = vrot.lane.b32.xlu0 %v6367, 32
  %v6530 = vpop.permute.xlu0 %6529
  %v6535 = vmul.f32 %v6516, %v6524
  %v6536 = vmul.f32 %v6518, %v6526
  %v6537 = vmul.f32 %v6520, %v6528
  %v6538 = vmul.f32 %v6522, %v6530
  %6543 = vrot.lane.b32.xlu0 %v6535, 64
  %v6544 = vpop.permute.xlu0 %6543
  %6545 = vrot.lane.b32.xlu0 %v6536, 64
  %v6546 = vpop.permute.xlu0 %6545
  %6547 = vrot.lane.b32.xlu0 %v6537, 64
  %v6548 = vpop.permute.xlu0 %6547
  %6549 = vrot.lane.b32.xlu0 %v6538, 64
  %v6550 = vpop.permute.xlu0 %6549
  %v6555 = vadd.f32 %v6475, %v6544
  %v6556 = vadd.f32 %v6476, %v6546
  %v6557 = vadd.f32 %v6477, %v6548
  %v6558 = vadd.f32 %v6478, %v6550
  %v6559 = vtanh.pop %v6555
  %v6560 = vtanh.pop %v6556
  %v6561 = vtanh.pop %v6557
  %v6562 = vtanh.pop %v6558
  %v6563 = vsub.f32 1.0, %v6516
  %v6564 = vsub.f32 1.0, %v6518
  %v6565 = vsub.f32 1.0, %v6520
  %v6566 = vsub.f32 1.0, %v6522
  %6571 = vrot.lane.b32.xlu0 %v6559, 96
  %v6572 = vpop.permute.xlu0 %6571
  %6573 = vrot.lane.b32.xlu0 %v6560, 96
  %v6574 = vpop.permute.xlu0 %6573
  %6575 = vrot.lane.b32.xlu0 %v6561, 96
  %v6576 = vpop.permute.xlu0 %6575
  %6577 = vrot.lane.b32.xlu0 %v6562, 96
  %v6578 = vpop.permute.xlu0 %6577
  %v6583 = vmul.f32 %v6563, %v6572
  %v6584 = vmul.f32 %v6564, %v6574
  %v6585 = vmul.f32 %v6565, %v6576
  %v6586 = vmul.f32 %v6566, %v6578
  %6587 = vrot.lane.b32.xlu0 %v6260, 32
  %v6588 = vpop.permute.xlu0 %6587
  %6589 = vrot.lane.b32.xlu0 %v6261, 32
  %v6590 = vpop.permute.xlu0 %6589
  %6591 = vrot.lane.b32.xlu0 %v6262, 32
  %v6592 = vpop.permute.xlu0 %6591
  %6593 = vrot.lane.b32.xlu0 %v6263, 32
  %v6594 = vpop.permute.xlu0 %6593
  %v6599 = vmul.f32 %v6516, %v6588
  %v6600 = vmul.f32 %v6518, %v6590
  %v6601 = vmul.f32 %v6520, %v6592
  %v6602 = vmul.f32 %v6522, %v6594
  %v6603 = vadd.f32 %v6583, %v6599
  %v6604 = vadd.f32 %v6584, %v6600
  %v6605 = vadd.f32 %v6585, %v6601
  %v6606 = vadd.f32 %v6586, %v6602
  %6611 = vrot.lane.b32.xlu0 %v6603, 96
  %v6612 = vpop.permute.xlu0 %6611
  %6613 = vrot.lane.b32.xlu0 %v6604, 96
  %v6614 = vpop.permute.xlu0 %6613
  %6615 = vrot.lane.b32.xlu0 %v6605, 96
  %v6616 = vpop.permute.xlu0 %6615
  %6617 = vrot.lane.b32.xlu0 %v6606, 96
  %v6618 = vpop.permute.xlu0 %6617
  %v6619 = vsel %vm138, %v6612, 0
  %v6621 = vsel %vm138, %v6614, 0
  %v6623 = vsel %vm138, %v6616, 0
  %v6625 = vsel %vm138, %v6618, 0
  %6627 = vmatprep.subr.mxu0 0.0
  %6628 = vmatpush1.msra.mxu0 %v6264
  %6629 = vmatprep.subr.mxu0 0.0
  %6630 = vmatpush1.msra.mxu0 %v6265
  %6631 = vmatprep.subr.mxu0 0.0
  %6632 = vmatpush1.msra.mxu0 %v6266
  %6633 = vmatprep.subr.mxu0 0.0
  %6634 = vmatpush1.msra.mxu0 %v6267
  %6635 = vmatprep.subr.mxu0 0.0
  %6636 = vmatpush1.msra.mxu0 0.0
  %6637 = vmatprep.subr.mxu0 0.0
  %6638 = vmatpush1.msra.mxu0 0.0
  %6639 = vmatprep.subr.mxu0 0.0
  %6640 = vmatpush1.msra.mxu0 0.0
  %6641 = vmatprep.subr.mxu0 0.0
  %6642 = vmatpush1.msra.mxu0 0.0
  %6643 = vmatprep.subr.mxu0 0.0
  %6644 = vmatpush1.msra.mxu0 0.0
  %6645 = vmatprep.subr.mxu0 0.0
  %6646 = vmatpush1.msra.mxu0 0.0
  %6647 = vmatprep.subr.mxu0 0.0
  %6648 = vmatpush1.msra.mxu0 0.0
  %6649 = vmatprep.subr.mxu0 0.0
  %6650 = vmatpush1.msra.mxu0 0.0
  %6651 = vmatprep.subr.mxu0 0.0
  %6652 = vmatpush1.msra.mxu0 0.0
  %6653 = vmatprep.subr.mxu0 0.0
  %6654 = vmatpush1.msra.mxu0 0.0
  %6655 = vmatprep.subr.mxu0 0.0
  %6656 = vmatpush1.msra.mxu0 0.0
  %6657 = vmatprep.subr.mxu0 0.0
  %6658 = vmatpush1.msra.mxu0 0.0
  %6659 = vmatprep.subr.mxu0 0.0
  %6660 = vmatpush1.msra.mxu0 0.0
  %6661 = vmatprep.subr.mxu0 0.0
  %6662 = vmatpush1.msra.mxu0 0.0
  %6663 = vmatprep.subr.mxu0 0.0
  %6664 = vmatpush1.msra.mxu0 0.0
  %6665 = vmatprep.subr.mxu0 0.0
  %6666 = vmatpush1.msra.mxu0 0.0
  %6667 = vmatprep.subr.mxu0 0.0
  %6668 = vmatpush1.msra.mxu0 0.0
  %6669 = vmatprep.subr.mxu0 0.0
  %6670 = vmatpush1.msra.mxu0 0.0
  %6671 = vmatprep.subr.mxu0 0.0
  %6672 = vmatpush1.msra.mxu0 0.0
  %6673 = vmatprep.subr.mxu0 0.0
  %6674 = vmatpush1.msra.mxu0 0.0
  %6675 = vmatprep.subr.mxu0 0.0
  %6676 = vmatpush1.msra.mxu0 0.0
  %6677 = vmatprep.subr.mxu0 0.0
  %6678 = vmatpush1.msra.mxu0 0.0
  %6679 = vmatprep.subr.mxu0 0.0
  %6680 = vmatpush1.msra.mxu0 0.0
  %6681 = vmatprep.subr.mxu0 0.0
  %6682 = vmatpush1.msra.mxu0 0.0
  %6683 = vmatprep.subr.mxu0 0.0
  %6684 = vmatpush1.msra.mxu0 0.0
  %6685 = vmatprep.subr.mxu0 0.0
  %6686 = vmatpush1.msra.mxu0 0.0
  %6687 = vmatprep.subr.mxu0 0.0
  %6688 = vmatpush1.msra.mxu0 0.0
  %6689 = vmatprep.subr.mxu0 0.0
  %6690 = vmatpush1.msra.mxu0 0.0
  %6691 = vmatprep.mubr.f32.mxu0 0.0
  %6692 = vmatmul.mubr.f32.gmra.mrb[0].mxu0 %v6619
  %v6693 = vpop.f32.mrb[0].mxu0
  %v6694 = vadd.f32 %v6272, %v6693
  %v6695 = vpop.f32.mrb[0].mxu0
  %6696 = vmatprep.mubr.f32.mxu0 0.0
  %6697 = vmatmul.mubr.f32.gmra.mrb[0].mxu0 %v6621
  %v6698 = vpop.f32.mrb[0].mxu0
  %v6699 = vadd.f32 %v6272, %v6698
  %v6700 = vpop.f32.mrb[0].mxu0
  %6701 = vmatprep.mubr.f32.mxu0 0.0
  %6702 = vmatmul.mubr.f32.gmra.mrb[0].mxu0 %v6623
  %v6703 = vpop.f32.mrb[0].mxu0
  %v6704 = vadd.f32 %v6272, %v6703
  %v6705 = vpop.f32.mrb[0].mxu0
  %6706 = vmatprep.mubr.f32.mxu0 0.0
  %6707 = vmatmul.mubr.f32.gmra.mrb[0].mxu0 %v6625
  %v6708 = vpop.f32.mrb[0].mxu0
  %v6709 = vadd.f32 %v6272, %v6708
  %v6710 = vpop.f32.mrb[0].mxu0
  %6711 = vdwg.mxu0
  %v6712 = vmax.f32 %v6694, 0.0
  %v6713 = vmax.f32 %v6699, 0.0
  %v6714 = vmax.f32 %v6704, 0.0
  %v6715 = vmax.f32 %v6709, 0.0
  %v6717 = vsel %vm138, %v6712, 0
  %v6720 = vsel %vm138, %v6713, 0
  %v6723 = vsel %vm138, %v6714, 0
  %v6726 = vsel %vm138, %v6715, 0
  %6728 = vmatprep.subr.mxu0 0.0
  %6729 = vmatpush1.msra.mxu0 %v6374
  %6730 = vmatprep.subr.mxu0 0.0
  %6731 = vmatpush1.msra.mxu0 %v6375
  %6732 = vmatprep.subr.mxu0 0.0
  %6733 = vmatpush1.msra.mxu0 %v6376
  %6734 = vmatprep.subr.mxu0 0.0
  %6735 = vmatpush1.msra.mxu0 %v6377
  %6736 = vmatprep.subr.mxu0 0.0
  %6737 = vmatpush1.msra.mxu0 0.0
  %6738 = vmatprep.subr.mxu0 0.0
  %6739 = vmatpush1.msra.mxu0 0.0
  %6740 = vmatprep.subr.mxu0 0.0
  %6741 = vmatpush1.msra.mxu0 0.0
  %6742 = vmatprep.subr.mxu0 0.0
  %6743 = vmatpush1.msra.mxu0 0.0
  %6744 = vmatprep.subr.mxu0 0.0
  %6745 = vmatpush1.msra.mxu0 0.0
  %6746 = vmatprep.subr.mxu0 0.0
  %6747 = vmatpush1.msra.mxu0 0.0
  %6748 = vmatprep.subr.mxu0 0.0
  %6749 = vmatpush1.msra.mxu0 0.0
  %6750 = vmatprep.subr.mxu0 0.0
  %6751 = vmatpush1.msra.mxu0 0.0
  %6752 = vmatprep.subr.mxu0 0.0
  %6753 = vmatpush1.msra.mxu0 0.0
  %6754 = vmatprep.subr.mxu0 0.0
  %6755 = vmatpush1.msra.mxu0 0.0
  %6756 = vmatprep.subr.mxu0 0.0
  %6757 = vmatpush1.msra.mxu0 0.0
  %6758 = vmatprep.subr.mxu0 0.0
  %6759 = vmatpush1.msra.mxu0 0.0
  %6760 = vmatprep.subr.mxu0 0.0
  %6761 = vmatpush1.msra.mxu0 0.0
  %6762 = vmatprep.subr.mxu0 0.0
  %6763 = vmatpush1.msra.mxu0 0.0
  %6764 = vmatprep.subr.mxu0 0.0
  %6765 = vmatpush1.msra.mxu0 0.0
  %6766 = vmatprep.subr.mxu0 0.0
  %6767 = vmatpush1.msra.mxu0 0.0
  %6768 = vmatprep.subr.mxu0 0.0
  %6769 = vmatpush1.msra.mxu0 0.0
  %6770 = vmatprep.subr.mxu0 0.0
  %6771 = vmatpush1.msra.mxu0 0.0
  %6772 = vmatprep.subr.mxu0 0.0
  %6773 = vmatpush1.msra.mxu0 0.0
  %6774 = vmatprep.subr.mxu0 0.0
  %6775 = vmatpush1.msra.mxu0 0.0
  %6776 = vmatprep.subr.mxu0 0.0
  %6777 = vmatpush1.msra.mxu0 0.0
  %6778 = vmatprep.subr.mxu0 0.0
  %6779 = vmatpush1.msra.mxu0 0.0
  %6780 = vmatprep.subr.mxu0 0.0
  %6781 = vmatpush1.msra.mxu0 0.0
  %6782 = vmatprep.subr.mxu0 0.0
  %6783 = vmatpush1.msra.mxu0 0.0
  %6784 = vmatprep.subr.mxu0 0.0
  %6785 = vmatpush1.msra.mxu0 0.0
  %6786 = vmatprep.subr.mxu0 0.0
  %6787 = vmatpush1.msra.mxu0 0.0
  %6788 = vmatprep.subr.mxu0 0.0
  %6789 = vmatpush1.msra.mxu0 0.0
  %6790 = vmatprep.subr.mxu0 0.0
  %6791 = vmatpush1.msra.mxu0 0.0
  %6792 = vmatprep.mubr.f32.mxu0 0.0
  %6793 = vmatmul.mubr.f32.gmra.mrb[0].mxu0 %v6717
  %v6794 = vpop.f32.mrb[0].mxu0
  %v6795 = vadd.f32 0.0, %v6794
  %v6796 = vpop.f32.mrb[0].mxu0
  %6797 = vmatprep.mubr.f32.mxu0 0.0
  %6798 = vmatmul.mubr.f32.gmra.mrb[0].mxu0 %v6720
  %v6799 = vpop.f32.mrb[0].mxu0
  %v6800 = vadd.f32 0.0, %v6799
  %v6801 = vpop.f32.mrb[0].mxu0
  %6802 = vmatprep.mubr.f32.mxu0 0.0
  %6803 = vmatmul.mubr.f32.gmra.mrb[0].mxu0 %v6723
  %v6804 = vpop.f32.mrb[0].mxu0
  %v6805 = vadd.f32 0.0, %v6804
  %v6806 = vpop.f32.mrb[0].mxu0
  %6807 = vmatprep.mubr.f32.mxu0 0.0
  %6808 = vmatmul.mubr.f32.gmra.mrb[0].mxu0 %v6726
  %v6809 = vpop.f32.mrb[0].mxu0
  %v6810 = vadd.f32 0.0, %v6809
  %v6811 = vpop.f32.mrb[0].mxu0
  %6812 = vdwg.mxu0
  %v6813 = vadd.f32 %v6202, %v6795
  %v6814 = vadd.f32 %v6207, %v6800
  %v6815 = vadd.f32 %v6212, %v6805
  %v6816 = vadd.f32 %v6217, %v6810
  %6821 = vrot.lane.b32.xlu0 %v6694, 96
  %v6822 = vpop.permute.xlu0 %6821
  %6823 = vrot.lane.b32.xlu0 %v6699, 96
  %v6824 = vpop.permute.xlu0 %6823
  %6825 = vrot.lane.b32.xlu0 %v6704, 96
  %v6826 = vpop.permute.xlu0 %6825
  %6827 = vrot.lane.b32.xlu0 %v6709, 96
  %v6828 = vpop.permute.xlu0 %6827
  %v6833 = vadd.f32 %v6813, %v6822
  %v6834 = vadd.f32 %v6814, %v6824
  %v6835 = vadd.f32 %v6815, %v6826
  %v6836 = vadd.f32 %v6816, %v6828
  %v6837 = vxor.u32 %v6833, 2147483648
  %v6838 = vxor.u32 %v6834, 2147483648
  %v6839 = vxor.u32 %v6835, 2147483648
  %v6840 = vxor.u32 %v6836, 2147483648
  %v6841 = vmul.f32 %v6837, 1.442695
  %v6842 = vpow.pop %v6841
  %v6843 = vmul.f32 %v6838, 1.442695
  %v6844 = vpow.pop %v6843
  %v6845 = vmul.f32 %v6839, 1.442695
  %v6846 = vpow.pop %v6845
  %v6847 = vmul.f32 %v6840, 1.442695
  %v6848 = vpow.pop %v6847
  %v6849 = vadd.f32 %v6842, 1.0
  %v6850 = vadd.f32 %v6844, 1.0
  %v6851 = vadd.f32 %v6846, 1.0
  %v6852 = vadd.f32 %v6848, 1.0
  %v6853 = vrcp.pop %v6849
  %v6854 = vmul.f32 1.0, %v6853
  %v6855 = vrcp.pop %v6850
  %v6856 = vmul.f32 1.0, %v6855
  %v6857 = vrcp.pop %v6851
  %v6858 = vmul.f32 1.0, %v6857
  %v6859 = vrcp.pop %v6852
  %v6860 = vmul.f32 1.0, %v6859
  %6861 = vrot.lane.b32.xlu0 %v6694, 32
  %v6862 = vpop.permute.xlu0 %6861
  %6863 = vrot.lane.b32.xlu0 %v6699, 32
  %v6864 = vpop.permute.xlu0 %6863
  %6865 = vrot.lane.b32.xlu0 %v6704, 32
  %v6866 = vpop.permute.xlu0 %6865
  %6867 = vrot.lane.b32.xlu0 %v6709, 32
  %v6868 = vpop.permute.xlu0 %6867
  %v6873 = vmul.f32 %v6854, %v6862
  %v6874 = vmul.f32 %v6856, %v6864
  %v6875 = vmul.f32 %v6858, %v6866
  %v6876 = vmul.f32 %v6860, %v6868
  %6881 = vrot.lane.b32.xlu0 %v6873, 64
  %v6882 = vpop.permute.xlu0 %6881
  %6883 = vrot.lane.b32.xlu0 %v6874, 64
  %v6884 = vpop.permute.xlu0 %6883
  %6885 = vrot.lane.b32.xlu0 %v6875, 64
  %v6886 = vpop.permute.xlu0 %6885
  %6887 = vrot.lane.b32.xlu0 %v6876, 64
  %v6888 = vpop.permute.xlu0 %6887
  %v6893 = vadd.f32 %v6813, %v6882
  %v6894 = vadd.f32 %v6814, %v6884
  %v6895 = vadd.f32 %v6815, %v6886
  %v6896 = vadd.f32 %v6816, %v6888
  %v6897 = vtanh.pop %v6893
  %v6898 = vtanh.pop %v6894
  %v6899 = vtanh.pop %v6895
  %v6900 = vtanh.pop %v6896
  %v6901 = vsub.f32 1.0, %v6854
  %v6902 = vsub.f32 1.0, %v6856
  %v6903 = vsub.f32 1.0, %v6858
  %v6904 = vsub.f32 1.0, %v6860
  %6909 = vrot.lane.b32.xlu0 %v6897, 96
  %v6910 = vpop.permute.xlu0 %6909
  %6911 = vrot.lane.b32.xlu0 %v6898, 96
  %v6912 = vpop.permute.xlu0 %6911
  %6913 = vrot.lane.b32.xlu0 %v6899, 96
  %v6914 = vpop.permute.xlu0 %6913
  %6915 = vrot.lane.b32.xlu0 %v6900, 96
  %v6916 = vpop.permute.xlu0 %6915
  %v6921 = vmul.f32 %v6901, %v6910
  %v6922 = vmul.f32 %v6902, %v6912
  %v6923 = vmul.f32 %v6903, %v6914
  %v6924 = vmul.f32 %v6904, %v6916
  %v6925 = vmul.f32 %v6854, %v6603
  %v6926 = vmul.f32 %v6856, %v6604
  %v6927 = vmul.f32 %v6858, %v6605
  %v6928 = vmul.f32 %v6860, %v6606
  %v6929 = vadd.f32 %v6921, %v6925
  %v6930 = vadd.f32 %v6922, %v6926
  %v6931 = vadd.f32 %v6923, %v6927
  %v6932 = vadd.f32 %v6924, %v6928
  %6937 = vrot.lane.b32.xlu0 %v6929, 96
  %v6938 = vpop.permute.xlu0 %6937
  %6939 = vrot.lane.b32.xlu0 %v6930, 96
  %v6940 = vpop.permute.xlu0 %6939
  %6941 = vrot.lane.b32.xlu0 %v6931, 96
  %v6942 = vpop.permute.xlu0 %6941
  %6943 = vrot.lane.b32.xlu0 %v6932, 96
  %v6944 = vpop.permute.xlu0 %6943
  %v6945 = vsel %vm138, %v6938, 0
  %v6947 = vsel %vm138, %v6940, 0
  %v6949 = vsel %vm138, %v6942, 0
  %v6951 = vsel %vm138, %v6944, 0
  %6953 = vmatprep.subr.mxu0 0.0
  %6954 = vmatpush1.msra.mxu0 %v6264
  %6955 = vmatprep.subr.mxu0 0.0
  %6956 = vmatpush1.msra.mxu0 %v6265
  %6957 = vmatprep.subr.mxu0 0.0
  %6958 = vmatpush1.msra.mxu0 %v6266
  %6959 = vmatprep.subr.mxu0 0.0
  %6960 = vmatpush1.msra.mxu0 %v6267
  %6961 = vmatprep.subr.mxu0 0.0
  %6962 = vmatpush1.msra.mxu0 0.0
  %6963 = vmatprep.subr.mxu0 0.0
  %6964 = vmatpush1.msra.mxu0 0.0
  %6965 = vmatprep.subr.mxu0 0.0
  %6966 = vmatpush1.msra.mxu0 0.0
  %6967 = vmatprep.subr.mxu0 0.0
  %6968 = vmatpush1.msra.mxu0 0.0
  %6969 = vmatprep.subr.mxu0 0.0
  %6970 = vmatpush1.msra.mxu0 0.0
  %6971 = vmatprep.subr.mxu0 0.0
  %6972 = vmatpush1.msra.mxu0 0.0
  %6973 = vmatprep.subr.mxu0 0.0
  %6974 = vmatpush1.msra.mxu0 0.0
  %6975 = vmatprep.subr.mxu0 0.0
  %6976 = vmatpush1.msra.mxu0 0.0
  %6977 = vmatprep.subr.mxu0 0.0
  %6978 = vmatpush1.msra.mxu0 0.0
  %6979 = vmatprep.subr.mxu0 0.0
  %6980 = vmatpush1.msra.mxu0 0.0
  %6981 = vmatprep.subr.mxu0 0.0
  %6982 = vmatpush1.msra.mxu0 0.0
  %6983 = vmatprep.subr.mxu0 0.0
  %6984 = vmatpush1.msra.mxu0 0.0
  %6985 = vmatprep.subr.mxu0 0.0
  %6986 = vmatpush1.msra.mxu0 0.0
  %6987 = vmatprep.subr.mxu0 0.0
  %6988 = vmatpush1.msra.mxu0 0.0
  %6989 = vmatprep.subr.mxu0 0.0
  %6990 = vmatpush1.msra.mxu0 0.0
  %6991 = vmatprep.subr.mxu0 0.0
  %6992 = vmatpush1.msra.mxu0 0.0
  %6993 = vmatprep.subr.mxu0 0.0
  %6994 = vmatpush1.msra.mxu0 0.0
  %6995 = vmatprep.subr.mxu0 0.0
  %6996 = vmatpush1.msra.mxu0 0.0
  %6997 = vmatprep.subr.mxu0 0.0
  %6998 = vmatpush1.msra.mxu0 0.0
  %6999 = vmatprep.subr.mxu0 0.0
  %7000 = vmatpush1.msra.mxu0 0.0
  %7001 = vmatprep.subr.mxu0 0.0
  %7002 = vmatpush1.msra.mxu0 0.0
  %7003 = vmatprep.subr.mxu0 0.0
  %7004 = vmatpush1.msra.mxu0 0.0
  %7005 = vmatprep.subr.mxu0 0.0
  %7006 = vmatpush1.msra.mxu0 0.0
  %7007 = vmatprep.subr.mxu0 0.0
  %7008 = vmatpush1.msra.mxu0 0.0
  %7009 = vmatprep.subr.mxu0 0.0
  %7010 = vmatpush1.msra.mxu0 0.0
  %7011 = vmatprep.subr.mxu0 0.0
  %7012 = vmatpush1.msra.mxu0 0.0
  %7013 = vmatprep.subr.mxu0 0.0
  %7014 = vmatpush1.msra.mxu0 0.0
  %7015 = vmatprep.subr.mxu0 0.0
  %7016 = vmatpush1.msra.mxu0 0.0
  %7017 = vmatprep.mubr.f32.mxu0 0.0
  %7018 = vmatmul.mubr.f32.gmra.mrb[0].mxu0 %v6945
  %v7019 = vpop.f32.mrb[0].mxu0
  %v7020 = vadd.f32 %v6272, %v7019
  %v7021 = vpop.f32.mrb[0].mxu0
  %7022 = vmatprep.mubr.f32.mxu0 0.0
  %7023 = vmatmul.mubr.f32.gmra.mrb[0].mxu0 %v6947
  %v7024 = vpop.f32.mrb[0].mxu0
  %v7025 = vadd.f32 %v6272, %v7024
  %v7026 = vpop.f32.mrb[0].mxu0
  %7027 = vmatprep.mubr.f32.mxu0 0.0
  %7028 = vmatmul.mubr.f32.gmra.mrb[0].mxu0 %v6949
  %v7029 = vpop.f32.mrb[0].mxu0
  %v7030 = vadd.f32 %v6272, %v7029
  %v7031 = vpop.f32.mrb[0].mxu0
  %7032 = vmatprep.mubr.f32.mxu0 0.0
  %7033 = vmatmul.mubr.f32.gmra.mrb[0].mxu0 %v6951
  %v7034 = vpop.f32.mrb[0].mxu0
  %v7035 = vadd.f32 %v6272, %v7034
  %v7036 = vpop.f32.mrb[0].mxu0
  %7037 = vdwg.mxu0
  %v7038 = vmax.f32 %v7020, 0.0
  %v7039 = vmax.f32 %v7025, 0.0
  %v7040 = vmax.f32 %v7030, 0.0
  %v7041 = vmax.f32 %v7035, 0.0
  %v7043 = vsel %vm138, %v7038, 0
  %v7046 = vsel %vm138, %v7039, 0
  %v7049 = vsel %vm138, %v7040, 0
  %v7052 = vsel %vm138, %v7041, 0
  %7054 = vmatprep.subr.mxu0 0.0
  %7055 = vmatpush1.msra.mxu0 %v6374
  %7056 = vmatprep.subr.mxu0 0.0
  %7057 = vmatpush1.msra.mxu0 %v6375
  %7058 = vmatprep.subr.mxu0 0.0
  %7059 = vmatpush1.msra.mxu0 %v6376
  %7060 = vmatprep.subr.mxu0 0.0
  %7061 = vmatpush1.msra.mxu0 %v6377
  %7062 = vmatprep.subr.mxu0 0.0
  %7063 = vmatpush1.msra.mxu0 0.0
  %7064 = vmatprep.subr.mxu0 0.0
  %7065 = vmatpush1.msra.mxu0 0.0
  %7066 = vmatprep.subr.mxu0 0.0
  %7067 = vmatpush1.msra.mxu0 0.0
  %7068 = vmatprep.subr.mxu0 0.0
  %7069 = vmatpush1.msra.mxu0 0.0
  %7070 = vmatprep.subr.mxu0 0.0
  %7071 = vmatpush1.msra.mxu0 0.0
  %7072 = vmatprep.subr.mxu0 0.0
  %7073 = vmatpush1.msra.mxu0 0.0
  %7074 = vmatprep.subr.mxu0 0.0
  %7075 = vmatpush1.msra.mxu0 0.0
  %7076 = vmatprep.subr.mxu0 0.0
  %7077 = vmatpush1.msra.mxu0 0.0
  %7078 = vmatprep.subr.mxu0 0.0
  %7079 = vmatpush1.msra.mxu0 0.0
  %7080 = vmatprep.subr.mxu0 0.0
  %7081 = vmatpush1.msra.mxu0 0.0
  %7082 = vmatprep.subr.mxu0 0.0
  %7083 = vmatpush1.msra.mxu0 0.0
  %7084 = vmatprep.subr.mxu0 0.0
  %7085 = vmatpush1.msra.mxu0 0.0
  %7086 = vmatprep.subr.mxu0 0.0
  %7087 = vmatpush1.msra.mxu0 0.0
  %7088 = vmatprep.subr.mxu0 0.0
  %7089 = vmatpush1.msra.mxu0 0.0
  %7090 = vmatprep.subr.mxu0 0.0
  %7091 = vmatpush1.msra.mxu0 0.0
  %7092 = vmatprep.subr.mxu0 0.0
  %7093 = vmatpush1.msra.mxu0 0.0
  %7094 = vmatprep.subr.mxu0 0.0
  %7095 = vmatpush1.msra.mxu0 0.0
  %7096 = vmatprep.subr.mxu0 0.0
  %7097 = vmatpush1.msra.mxu0 0.0
  %7098 = vmatprep.subr.mxu0 0.0
  %7099 = vmatpush1.msra.mxu0 0.0
  %7100 = vmatprep.subr.mxu0 0.0
  %7101 = vmatpush1.msra.mxu0 0.0
  %7102 = vmatprep.subr.mxu0 0.0
  %7103 = vmatpush1.msra.mxu0 0.0
  %7104 = vmatprep.subr.mxu0 0.0
  %7105 = vmatpush1.msra.mxu0 0.0
  %7106 = vmatprep.subr.mxu0 0.0
  %7107 = vmatpush1.msra.mxu0 0.0
  %7108 = vmatprep.subr.mxu0 0.0
  %7109 = vmatpush1.msra.mxu0 0.0
  %7110 = vmatprep.subr.mxu0 0.0
  %7111 = vmatpush1.msra.mxu0 0.0
  %7112 = vmatprep.subr.mxu0 0.0
  %7113 = vmatpush1.msra.mxu0 0.0
  %7114 = vmatprep.subr.mxu0 0.0
  %7115 = vmatpush1.msra.mxu0 0.0
  %7116 = vmatprep.subr.mxu0 0.0
  %7117 = vmatpush1.msra.mxu0 0.0
  %7118 = vmatprep.mubr.f32.mxu0 0.0
  %7119 = vmatmul.mubr.f32.gmra.mrb[0].mxu0 %v7043
  %v7120 = vpop.f32.mrb[0].mxu0
  %v7121 = vadd.f32 0.0, %v7120
  %v7122 = vpop.f32.mrb[0].mxu0
  %7123 = vmatprep.mubr.f32.mxu0 0.0
  %7124 = vmatmul.mubr.f32.gmra.mrb[0].mxu0 %v7046
  %v7125 = vpop.f32.mrb[0].mxu0
  %v7126 = vadd.f32 0.0, %v7125
  %v7127 = vpop.f32.mrb[0].mxu0
  %7128 = vmatprep.mubr.f32.mxu0 0.0
  %7129 = vmatmul.mubr.f32.gmra.mrb[0].mxu0 %v7049
  %v7130 = vpop.f32.mrb[0].mxu0
  %v7131 = vadd.f32 0.0, %v7130
  %v7132 = vpop.f32.mrb[0].mxu0
  %7133 = vmatprep.mubr.f32.mxu0 0.0
  %7134 = vmatmul.mubr.f32.gmra.mrb[0].mxu0 %v7052
  %v7135 = vpop.f32.mrb[0].mxu0
  %v7136 = vadd.f32 0.0, %v7135
  %v7137 = vpop.f32.mrb[0].mxu0
  %7138 = vdwg.mxu0
  %v7139 = vadd.f32 %v6222, %v7121
  %v7140 = vadd.f32 %v6227, %v7126
  %v7141 = vadd.f32 %v6232, %v7131
  %v7142 = vadd.f32 %v6237, %v7136
  %7147 = vrot.lane.b32.xlu0 %v7020, 96
  %v7148 = vpop.permute.xlu0 %7147
  %7149 = vrot.lane.b32.xlu0 %v7025, 96
  %v7150 = vpop.permute.xlu0 %7149
  %7151 = vrot.lane.b32.xlu0 %v7030, 96
  %v7152 = vpop.permute.xlu0 %7151
  %7153 = vrot.lane.b32.xlu0 %v7035, 96
  %v7154 = vpop.permute.xlu0 %7153
  %v7159 = vadd.f32 %v7139, %v7148
  %v7160 = vadd.f32 %v7140, %v7150
  %v7161 = vadd.f32 %v7141, %v7152
  %v7162 = vadd.f32 %v7142, %v7154
  %v7163 = vxor.u32 %v7159, 2147483648
  %v7164 = vxor.u32 %v7160, 2147483648
  %v7165 = vxor.u32 %v7161, 2147483648
  %v7166 = vxor.u32 %v7162, 2147483648
  %v7167 = vmul.f32 %v7163, 1.442695
  %v7168 = vpow.pop %v7167
  %v7169 = vmul.f32 %v7164, 1.442695
  %v7170 = vpow.pop %v7169
  %v7171 = vmul.f32 %v7165, 1.442695
  %v7172 = vpow.pop %v7171
  %v7173 = vmul.f32 %v7166, 1.442695
  %v7174 = vpow.pop %v7173
  %v7175 = vadd.f32 %v7168, 1.0
  %v7176 = vadd.f32 %v7170, 1.0
  %v7177 = vadd.f32 %v7172, 1.0
  %v7178 = vadd.f32 %v7174, 1.0
  %v7179 = vrcp.pop %v7175
  %v7180 = vmul.f32 1.0, %v7179
  %v7181 = vrcp.pop %v7176
  %v7182 = vmul.f32 1.0, %v7181
  %v7183 = vrcp.pop %v7177
  %v7184 = vmul.f32 1.0, %v7183
  %v7185 = vrcp.pop %v7178
  %v7186 = vmul.f32 1.0, %v7185
  %7187 = vrot.lane.b32.xlu0 %v7020, 32
  %v7188 = vpop.permute.xlu0 %7187
  %7189 = vrot.lane.b32.xlu0 %v7025, 32
  %v7190 = vpop.permute.xlu0 %7189
  %7191 = vrot.lane.b32.xlu0 %v7030, 32
  %v7192 = vpop.permute.xlu0 %7191
  %7193 = vrot.lane.b32.xlu0 %v7035, 32
  %v7194 = vpop.permute.xlu0 %7193
  %v7199 = vmul.f32 %v7180, %v7188
  %v7200 = vmul.f32 %v7182, %v7190
  %v7201 = vmul.f32 %v7184, %v7192
  %v7202 = vmul.f32 %v7186, %v7194
  %7207 = vrot.lane.b32.xlu0 %v7199, 64
  %v7208 = vpop.permute.xlu0 %7207
  %7209 = vrot.lane.b32.xlu0 %v7200, 64
  %v7210 = vpop.permute.xlu0 %7209
  %7211 = vrot.lane.b32.xlu0 %v7201, 64
  %v7212 = vpop.permute.xlu0 %7211
  %7213 = vrot.lane.b32.xlu0 %v7202, 64
  %v7214 = vpop.permute.xlu0 %7213
  %v7219 = vadd.f32 %v7139, %v7208
  %v7220 = vadd.f32 %v7140, %v7210
  %v7221 = vadd.f32 %v7141, %v7212
  %v7222 = vadd.f32 %v7142, %v7214
  %v7223 = vtanh.pop %v7219
  %v7224 = vtanh.pop %v7220
  %v7225 = vtanh.pop %v7221
  %v7226 = vtanh.pop %v7222
  %v7227 = vsub.f32 1.0, %v7180
  %v7228 = vsub.f32 1.0, %v7182
  %v7229 = vsub.f32 1.0, %v7184
  %v7230 = vsub.f32 1.0, %v7186
  %7235 = vrot.lane.b32.xlu0 %v7223, 96
  %v7236 = vpop.permute.xlu0 %7235
  %7237 = vrot.lane.b32.xlu0 %v7224, 96
  %v7238 = vpop.permute.xlu0 %7237
  %7239 = vrot.lane.b32.xlu0 %v7225, 96
  %v7240 = vpop.permute.xlu0 %7239
  %7241 = vrot.lane.b32.xlu0 %v7226, 96
  %v7242 = vpop.permute.xlu0 %7241
  %v7247 = vmul.f32 %v7227, %v7236
  %v7248 = vmul.f32 %v7228, %v7238
  %v7249 = vmul.f32 %v7229, %v7240
  %v7250 = vmul.f32 %v7230, %v7242
  %v7251 = vmul.f32 %v7180, %v6929
  %v7252 = vmul.f32 %v7182, %v6930
  %v7253 = vmul.f32 %v7184, %v6931
  %v7254 = vmul.f32 %v7186, %v6932
  %v7255 = vadd.f32 %v7247, %v7251
  %v7256 = vadd.f32 %v7248, %v7252
  %v7257 = vadd.f32 %v7249, %v7253
  %v7258 = vadd.f32 %v7250, %v7254
  %7263 = vrot.lane.b32.xlu0 %v7255, 96
  %v7264 = vpop.permute.xlu0 %7263
  %7265 = vrot.lane.b32.xlu0 %v7256, 96
  %v7266 = vpop.permute.xlu0 %7265
  %7267 = vrot.lane.b32.xlu0 %v7257, 96
  %v7268 = vpop.permute.xlu0 %7267
  %7269 = vrot.lane.b32.xlu0 %v7258, 96
  %v7270 = vpop.permute.xlu0 %7269
  %v7271 = vsel %vm138, %v7264, 0
  %v7273 = vsel %vm138, %v7266, 0
  %v7275 = vsel %vm138, %v7268, 0
  %v7277 = vsel %vm138, %v7270, 0
  %7279 = vmatprep.subr.mxu0 0.0
  %7280 = vmatpush1.msra.mxu0 %v6264
  %7281 = vmatprep.subr.mxu0 0.0
  %7282 = vmatpush1.msra.mxu0 %v6265
  %7283 = vmatprep.subr.mxu0 0.0
  %7284 = vmatpush1.msra.mxu0 %v6266
  %7285 = vmatprep.subr.mxu0 0.0
  %7286 = vmatpush1.msra.mxu0 %v6267
  %7287 = vmatprep.subr.mxu0 0.0
  %7288 = vmatpush1.msra.mxu0 0.0
  %7289 = vmatprep.subr.mxu0 0.0
  %7290 = vmatpush1.msra.mxu0 0.0
  %7291 = vmatprep.subr.mxu0 0.0
  %7292 = vmatpush1.msra.mxu0 0.0
  %7293 = vmatprep.subr.mxu0 0.0
  %7294 = vmatpush1.msra.mxu0 0.0
  %7295 = vmatprep.subr.mxu0 0.0
  %7296 = vmatpush1.msra.mxu0 0.0
  %7297 = vmatprep.subr.mxu0 0.0
  %7298 = vmatpush1.msra.mxu0 0.0
  %7299 = vmatprep.subr.mxu0 0.0
  %7300 = vmatpush1.msra.mxu0 0.0
  %7301 = vmatprep.subr.mxu0 0.0
  %7302 = vmatpush1.msra.mxu0 0.0
  %7303 = vmatprep.subr.mxu0 0.0
  %7304 = vmatpush1.msra.mxu0 0.0
  %7305 = vmatprep.subr.mxu0 0.0
  %7306 = vmatpush1.msra.mxu0 0.0
  %7307 = vmatprep.subr.mxu0 0.0
  %7308 = vmatpush1.msra.mxu0 0.0
  %7309 = vmatprep.subr.mxu0 0.0
  %7310 = vmatpush1.msra.mxu0 0.0
  %7311 = vmatprep.subr.mxu0 0.0
  %7312 = vmatpush1.msra.mxu0 0.0
  %7313 = vmatprep.subr.mxu0 0.0
  %7314 = vmatpush1.msra.mxu0 0.0
  %7315 = vmatprep.subr.mxu0 0.0
  %7316 = vmatpush1.msra.mxu0 0.0
  %7317 = vmatprep.subr.mxu0 0.0
  %7318 = vmatpush1.msra.mxu0 0.0
  %7319 = vmatprep.subr.mxu0 0.0
  %7320 = vmatpush1.msra.mxu0 0.0
  %7321 = vmatprep.subr.mxu0 0.0
  %7322 = vmatpush1.msra.mxu0 0.0
  %7323 = vmatprep.subr.mxu0 0.0
  %7324 = vmatpush1.msra.mxu0 0.0
  %7325 = vmatprep.subr.mxu0 0.0
  %7326 = vmatpush1.msra.mxu0 0.0
  %7327 = vmatprep.subr.mxu0 0.0
  %7328 = vmatpush1.msra.mxu0 0.0
  %7329 = vmatprep.subr.mxu0 0.0
  %7330 = vmatpush1.msra.mxu0 0.0
  %7331 = vmatprep.subr.mxu0 0.0
  %7332 = vmatpush1.msra.mxu0 0.0
  %7333 = vmatprep.subr.mxu0 0.0
  %7334 = vmatpush1.msra.mxu0 0.0
  %7335 = vmatprep.subr.mxu0 0.0
  %7336 = vmatpush1.msra.mxu0 0.0
  %7337 = vmatprep.subr.mxu0 0.0
  %7338 = vmatpush1.msra.mxu0 0.0
  %7339 = vmatprep.subr.mxu0 0.0
  %7340 = vmatpush1.msra.mxu0 0.0
  %7341 = vmatprep.subr.mxu0 0.0
  %7342 = vmatpush1.msra.mxu0 0.0
  %7343 = vmatprep.mubr.f32.mxu0 0.0
  %7344 = vmatmul.mubr.f32.gmra.mrb[0].mxu0 %v7271
  %v7345 = vpop.f32.mrb[0].mxu0
  %v7346 = vadd.f32 %v6272, %v7345
  %v7347 = vpop.f32.mrb[0].mxu0
  %7348 = vmatprep.mubr.f32.mxu0 0.0
  %7349 = vmatmul.mubr.f32.gmra.mrb[0].mxu0 %v7273
  %v7350 = vpop.f32.mrb[0].mxu0
  %v7351 = vadd.f32 %v6272, %v7350
  %v7352 = vpop.f32.mrb[0].mxu0
  %7353 = vmatprep.mubr.f32.mxu0 0.0
  %7354 = vmatmul.mubr.f32.gmra.mrb[0].mxu0 %v7275
  %v7355 = vpop.f32.mrb[0].mxu0
  %v7356 = vadd.f32 %v6272, %v7355
  %v7357 = vpop.f32.mrb[0].mxu0
  %7358 = vmatprep.mubr.f32.mxu0 0.0
  %7359 = vmatmul.mubr.f32.gmra.mrb[0].mxu0 %v7277
  %v7360 = vpop.f32.mrb[0].mxu0
  %v7361 = vadd.f32 %v6272, %v7360
  %v7362 = vpop.f32.mrb[0].mxu0
  %7363 = vdwg.mxu0
  %v7364 = vmax.f32 %v7346, 0.0
  %v7365 = vmax.f32 %v7351, 0.0
  %v7366 = vmax.f32 %v7356, 0.0
  %v7367 = vmax.f32 %v7361, 0.0
  %v7369 = vsel %vm138, %v7364, 0
  %v7372 = vsel %vm138, %v7365, 0
  %v7375 = vsel %vm138, %v7366, 0
  %v7378 = vsel %vm138, %v7367, 0
  %7380 = vmatprep.subr.mxu0 0.0
  %7381 = vmatpush1.msra.mxu0 %v6374
  %7382 = vmatprep.subr.mxu0 0.0
  %7383 = vmatpush1.msra.mxu0 %v6375
  %7384 = vmatprep.subr.mxu0 0.0
  %7385 = vmatpush1.msra.mxu0 %v6376
  %7386 = vmatprep.subr.mxu0 0.0
  %7387 = vmatpush1.msra.mxu0 %v6377
  %7388 = vmatprep.subr.mxu0 0.0
  %7389 = vmatpush1.msra.mxu0 0.0
  %7390 = vmatprep.subr.mxu0 0.0
  %7391 = vmatpush1.msra.mxu0 0.0
  %7392 = vmatprep.subr.mxu0 0.0
  %7393 = vmatpush1.msra.mxu0 0.0
  %7394 = vmatprep.subr.mxu0 0.0
  %7395 = vmatpush1.msra.mxu0 0.0
  %7396 = vmatprep.subr.mxu0 0.0
  %7397 = vmatpush1.msra.mxu0 0.0
  %7398 = vmatprep.subr.mxu0 0.0
  %7399 = vmatpush1.msra.mxu0 0.0
  %7400 = vmatprep.subr.mxu0 0.0
  %7401 = vmatpush1.msra.mxu0 0.0
  %7402 = vmatprep.subr.mxu0 0.0
  %7403 = vmatpush1.msra.mxu0 0.0
  %7404 = vmatprep.subr.mxu0 0.0
  %7405 = vmatpush1.msra.mxu0 0.0
  %7406 = vmatprep.subr.mxu0 0.0
  %7407 = vmatpush1.msra.mxu0 0.0
  %7408 = vmatprep.subr.mxu0 0.0
  %7409 = vmatpush1.msra.mxu0 0.0
  %7410 = vmatprep.subr.mxu0 0.0
  %7411 = vmatpush1.msra.mxu0 0.0
  %7412 = vmatprep.subr.mxu0 0.0
  %7413 = vmatpush1.msra.mxu0 0.0
  %7414 = vmatprep.subr.mxu0 0.0
  %7415 = vmatpush1.msra.mxu0 0.0
  %7416 = vmatprep.subr.mxu0 0.0
  %7417 = vmatpush1.msra.mxu0 0.0
  %7418 = vmatprep.subr.mxu0 0.0
  %7419 = vmatpush1.msra.mxu0 0.0
  %7420 = vmatprep.subr.mxu0 0.0
  %7421 = vmatpush1.msra.mxu0 0.0
  %7422 = vmatprep.subr.mxu0 0.0
  %7423 = vmatpush1.msra.mxu0 0.0
  %7424 = vmatprep.subr.mxu0 0.0
  %7425 = vmatpush1.msra.mxu0 0.0
  %7426 = vmatprep.subr.mxu0 0.0
  %7427 = vmatpush1.msra.mxu0 0.0
  %7428 = vmatprep.subr.mxu0 0.0
  %7429 = vmatpush1.msra.mxu0 0.0
  %7430 = vmatprep.subr.mxu0 0.0
  %7431 = vmatpush1.msra.mxu0 0.0
  %7432 = vmatprep.subr.mxu0 0.0
  %7433 = vmatpush1.msra.mxu0 0.0
  %7434 = vmatprep.subr.mxu0 0.0
  %7435 = vmatpush1.msra.mxu0 0.0
  %7436 = vmatprep.subr.mxu0 0.0
  %7437 = vmatpush1.msra.mxu0 0.0
  %7438 = vmatprep.subr.mxu0 0.0
  %7439 = vmatpush1.msra.mxu0 0.0
  %7440 = vmatprep.subr.mxu0 0.0
  %7441 = vmatpush1.msra.mxu0 0.0
  %7442 = vmatprep.subr.mxu0 0.0
  %7443 = vmatpush1.msra.mxu0 0.0
  %7444 = vmatprep.mubr.f32.mxu0 0.0
  %7445 = vmatmul.mubr.f32.gmra.mrb[0].mxu0 %v7369
  %v7446 = vpop.f32.mrb[0].mxu0
  %v7447 = vadd.f32 0.0, %v7446
  %v7448 = vpop.f32.mrb[0].mxu0
  %7449 = vmatprep.mubr.f32.mxu0 0.0
  %7450 = vmatmul.mubr.f32.gmra.mrb[0].mxu0 %v7372
  %v7451 = vpop.f32.mrb[0].mxu0
  %v7452 = vadd.f32 0.0, %v7451
  %v7453 = vpop.f32.mrb[0].mxu0
  %7454 = vmatprep.mubr.f32.mxu0 0.0
  %7455 = vmatmul.mubr.f32.gmra.mrb[0].mxu0 %v7375
  %v7456 = vpop.f32.mrb[0].mxu0
  %v7457 = vadd.f32 0.0, %v7456
  %v7458 = vpop.f32.mrb[0].mxu0
  %7459 = vmatprep.mubr.f32.mxu0 0.0
  %7460 = vmatmul.mubr.f32.gmra.mrb[0].mxu0 %v7378
  %v7461 = vpop.f32.mrb[0].mxu0
  %v7462 = vadd.f32 0.0, %v7461
  %v7463 = vpop.f32.mrb[0].mxu0
  %7464 = vdwg.mxu0
  %v7465 = vadd.f32 %v6242, %v7447
  %v7466 = vadd.f32 %v6247, %v7452
  %v7467 = vadd.f32 %v6252, %v7457
  %v7468 = vadd.f32 %v6257, %v7462
  %7473 = vrot.lane.b32.xlu0 %v7346, 96
  %v7474 = vpop.permute.xlu0 %7473
  %7475 = vrot.lane.b32.xlu0 %v7351, 96
  %v7476 = vpop.permute.xlu0 %7475
  %7477 = vrot.lane.b32.xlu0 %v7356, 96
  %v7478 = vpop.permute.xlu0 %7477
  %7479 = vrot.lane.b32.xlu0 %v7361, 96
  %v7480 = vpop.permute.xlu0 %7479
  %v7485 = vadd.f32 %v7465, %v7474
  %v7486 = vadd.f32 %v7466, %v7476
  %v7487 = vadd.f32 %v7467, %v7478
  %v7488 = vadd.f32 %v7468, %v7480
  %v7489 = vxor.u32 %v7485, 2147483648
  %v7490 = vxor.u32 %v7486, 2147483648
  %v7491 = vxor.u32 %v7487, 2147483648
  %v7492 = vxor.u32 %v7488, 2147483648
  %v7493 = vmul.f32 %v7489, 1.442695
  %v7494 = vpow.pop %v7493
  %v7495 = vmul.f32 %v7490, 1.442695
  %v7496 = vpow.pop %v7495
  %v7497 = vmul.f32 %v7491, 1.442695
  %v7498 = vpow.pop %v7497
  %v7499 = vmul.f32 %v7492, 1.442695
  %v7500 = vpow.pop %v7499
  %v7501 = vadd.f32 %v7494, 1.0
  %v7502 = vadd.f32 %v7496, 1.0
  %v7503 = vadd.f32 %v7498, 1.0
  %v7504 = vadd.f32 %v7500, 1.0
  %v7505 = vrcp.pop %v7501
  %v7506 = vmul.f32 1.0, %v7505
  %v7507 = vrcp.pop %v7502
  %v7508 = vmul.f32 1.0, %v7507
  %v7509 = vrcp.pop %v7503
  %v7510 = vmul.f32 1.0, %v7509
  %v7511 = vrcp.pop %v7504
  %v7512 = vmul.f32 1.0, %v7511
  %7513 = vrot.lane.b32.xlu0 %v7346, 32
  %v7514 = vpop.permute.xlu0 %7513
  %7515 = vrot.lane.b32.xlu0 %v7351, 32
  %v7516 = vpop.permute.xlu0 %7515
  %7517 = vrot.lane.b32.xlu0 %v7356, 32
  %v7518 = vpop.permute.xlu0 %7517
  %7519 = vrot.lane.b32.xlu0 %v7361, 32
  %v7520 = vpop.permute.xlu0 %7519
  %v7525 = vmul.f32 %v7506, %v7514
  %v7526 = vmul.f32 %v7508, %v7516
  %v7527 = vmul.f32 %v7510, %v7518
  %v7528 = vmul.f32 %v7512, %v7520
  %7533 = vrot.lane.b32.xlu0 %v7525, 64
  %v7534 = vpop.permute.xlu0 %7533
  %7535 = vrot.lane.b32.xlu0 %v7526, 64
  %v7536 = vpop.permute.xlu0 %7535
  %7537 = vrot.lane.b32.xlu0 %v7527, 64
  %v7538 = vpop.permute.xlu0 %7537
  %7539 = vrot.lane.b32.xlu0 %v7528, 64
  %v7540 = vpop.permute.xlu0 %7539
  %v7545 = vadd.f32 %v7465, %v7534
  %v7546 = vadd.f32 %v7466, %v7536
  %v7547 = vadd.f32 %v7467, %v7538
  %v7548 = vadd.f32 %v7468, %v7540
  %v7549 = vtanh.pop %v7545
  %v7550 = vtanh.pop %v7546
  %v7551 = vtanh.pop %v7547
  %v7552 = vtanh.pop %v7548
  %v7553 = vsub.f32 1.0, %v7506
  %v7554 = vsub.f32 1.0, %v7508
  %v7555 = vsub.f32 1.0, %v7510
  %v7556 = vsub.f32 1.0, %v7512
  %7561 = vrot.lane.b32.xlu0 %v7549, 96
  %v7562 = vpop.permute.xlu0 %7561
  %7563 = vrot.lane.b32.xlu0 %v7550, 96
  %v7564 = vpop.permute.xlu0 %7563
  %7565 = vrot.lane.b32.xlu0 %v7551, 96
  %v7566 = vpop.permute.xlu0 %7565
  %7567 = vrot.lane.b32.xlu0 %v7552, 96
  %v7568 = vpop.permute.xlu0 %7567
  %v7573 = vmul.f32 %v7553, %v7562
  %v7574 = vmul.f32 %v7554, %v7564
  %v7575 = vmul.f32 %v7555, %v7566
  %v7576 = vmul.f32 %v7556, %v7568
  %v7577 = vmul.f32 %v7506, %v7255
  %v7578 = vmul.f32 %v7508, %v7256
  %v7579 = vmul.f32 %v7510, %v7257
  %v7580 = vmul.f32 %v7512, %v7258
  %v7581 = vadd.f32 %v7573, %v7577
  %v7582 = vadd.f32 %v7574, %v7578
  %v7583 = vadd.f32 %v7575, %v7579
  %v7584 = vadd.f32 %v7576, %v7580
  %v7585 = vld [vmem:[%s1 + $0xe8] sm:$0xff]
  %v7586 = vld [vmem:[%s1 + $0xf0] sm:$0xff]
  %v7587 = vld [vmem:[%s1 + $0xf8] sm:$0xff]
  %v7588 = vld [vmem:[%s1 + $0x100] sm:$0xff]
  %v7589 = vld [vmem:[%s1 + $0x108] sm:$0x1]
  %v7590 = vlaneseq
  %v7591 = vshrl.u32 %v7590, 7
  %v7592 = vsub.s32 0, %v7591
  %v7593 = vrot.slane %v7589, %v7592
  %7598 = vrot.lane.b32.xlu0 %v7581, 96
  %v7599 = vpop.permute.xlu0 %7598
  %7600 = vrot.lane.b32.xlu0 %v7582, 96
  %v7601 = vpop.permute.xlu0 %7600
  %7602 = vrot.lane.b32.xlu0 %v7583, 96
  %v7603 = vpop.permute.xlu0 %7602
  %7604 = vrot.lane.b32.xlu0 %v7584, 96
  %v7605 = vpop.permute.xlu0 %7604
  %v7606 = vsel %vm138, %v7599, 0
  %v7608 = vsel %vm138, %v7601, 0
  %v7610 = vsel %vm138, %v7603, 0
  %v7612 = vsel %vm138, %v7605, 0
  %7614 = vmatprep.subr.mxu0 0.0
  %7615 = vmatpush1.msra.mxu0 %v7585
  %7616 = vmatprep.subr.mxu0 0.0
  %7617 = vmatpush1.msra.mxu0 %v7586
  %7618 = vmatprep.subr.mxu0 0.0
  %7619 = vmatpush1.msra.mxu0 %v7587
  %7620 = vmatprep.subr.mxu0 0.0
  %7621 = vmatpush1.msra.mxu0 %v7588
  %7622 = vmatprep.subr.mxu0 0.0
  %7623 = vmatpush1.msra.mxu0 0.0
  %7624 = vmatprep.subr.mxu0 0.0
  %7625 = vmatpush1.msra.mxu0 0.0
  %7626 = vmatprep.subr.mxu0 0.0
  %7627 = vmatpush1.msra.mxu0 0.0
  %7628 = vmatprep.subr.mxu0 0.0
  %7629 = vmatpush1.msra.mxu0 0.0
  %7630 = vmatprep.subr.mxu0 0.0
  %7631 = vmatpush1.msra.mxu0 0.0
  %7632 = vmatprep.subr.mxu0 0.0
  %7633 = vmatpush1.msra.mxu0 0.0
  %7634 = vmatprep.subr.mxu0 0.0
  %7635 = vmatpush1.msra.mxu0 0.0
  %7636 = vmatprep.subr.mxu0 0.0
  %7637 = vmatpush1.msra.mxu0 0.0
  %7638 = vmatprep.subr.mxu0 0.0
  %7639 = vmatpush1.msra.mxu0 0.0
  %7640 = vmatprep.subr.mxu0 0.0
  %7641 = vmatpush1.msra.mxu0 0.0
  %7642 = vmatprep.subr.mxu0 0.0
  %7643 = vmatpush1.msra.mxu0 0.0
  %7644 = vmatprep.subr.mxu0 0.0
  %7645 = vmatpush1.msra.mxu0 0.0
  %7646 = vmatprep.subr.mxu0 0.0
  %7647 = vmatpush1.msra.mxu0 0.0
  %7648 = vmatprep.subr.mxu0 0.0
  %7649 = vmatpush1.msra.mxu0 0.0
  %7650 = vmatprep.subr.mxu0 0.0
  %7651 = vmatpush1.msra.mxu0 0.0
  %7652 = vmatprep.subr.mxu0 0.0
  %7653 = vmatpush1.msra.mxu0 0.0
  %7654 = vmatprep.subr.mxu0 0.0
  %7655 = vmatpush1.msra.mxu0 0.0
  %7656 = vmatprep.subr.mxu0 0.0
  %7657 = vmatpush1.msra.mxu0 0.0
  %7658 = vmatprep.subr.mxu0 0.0
  %7659 = vmatpush1.msra.mxu0 0.0
  %7660 = vmatprep.subr.mxu0 0.0
  %7661 = vmatpush1.msra.mxu0 0.0
  %7662 = vmatprep.subr.mxu0 0.0
  %7663 = vmatpush1.msra.mxu0 0.0
  %7664 = vmatprep.subr.mxu0 0.0
  %7665 = vmatpush1.msra.mxu0 0.0
  %7666 = vmatprep.subr.mxu0 0.0
  %7667 = vmatpush1.msra.mxu0 0.0
  %7668 = vmatprep.subr.mxu0 0.0
  %7669 = vmatpush1.msra.mxu0 0.0
  %7670 = vmatprep.subr.mxu0 0.0
  %7671 = vmatpush1.msra.mxu0 0.0
  %7672 = vmatprep.subr.mxu0 0.0
  %7673 = vmatpush1.msra.mxu0 0.0
  %7674 = vmatprep.subr.mxu0 0.0
  %7675 = vmatpush1.msra.mxu0 0.0
  %7676 = vmatprep.subr.mxu0 0.0
  %7677 = vmatpush1.msra.mxu0 0.0
  %7678 = vmatprep.mubr.f32.mxu0 0.0
  %7679 = vmatmul.mubr.f32.gmra.mrb[0].mxu0 %v6619
  %v7680 = vpop.f32.mrb[0].mxu0
  %v7681 = vadd.f32 %v7593, %v7680
  %v7682 = vpop.f32.mrb[0].mxu0
  %7683 = vmatprep.mubr.f32.mxu0 0.0
  %7684 = vmatmul.mubr.f32.gmra.mrb[0].mxu0 %v6621
  %v7685 = vpop.f32.mrb[0].mxu0
  %v7686 = vadd.f32 %v7593, %v7685
  %v7687 = vpop.f32.mrb[0].mxu0
  %7688 = vmatprep.mubr.f32.mxu0 0.0
  %7689 = vmatmul.mubr.f32.gmra.mrb[0].mxu0 %v6623
  %v7690 = vpop.f32.mrb[0].mxu0
  %v7691 = vadd.f32 %v7593, %v7690
  %v7692 = vpop.f32.mrb[0].mxu0
  %7693 = vmatprep.mubr.f32.mxu0 0.0
  %7694 = vmatmul.mubr.f32.gmra.mrb[0].mxu0 %v6625
  %v7695 = vpop.f32.mrb[0].mxu0
  %v7696 = vadd.f32 %v7593, %v7695
  %v7697 = vpop.f32.mrb[0].mxu0
  %7698 = vmatprep.mubr.f32.mxu0 0.0
  %7699 = vmatmul.mubr.f32.gmra.mrb[0].mxu0 %v6945
  %v7700 = vpop.f32.mrb[0].mxu0
  %v7701 = vadd.f32 %v7593, %v7700
  %v7702 = vpop.f32.mrb[0].mxu0
  %7703 = vmatprep.mubr.f32.mxu0 0.0
  %7704 = vmatmul.mubr.f32.gmra.mrb[0].mxu0 %v6947
  %v7705 = vpop.f32.mrb[0].mxu0
  %v7706 = vadd.f32 %v7593, %v7705
  %v7707 = vpop.f32.mrb[0].mxu0
  %7708 = vmatprep.mubr.f32.mxu0 0.0
  %7709 = vmatmul.mubr.f32.gmra.mrb[0].mxu0 %v6949
  %v7710 = vpop.f32.mrb[0].mxu0
  %v7711 = vadd.f32 %v7593, %v7710
  %v7712 = vpop.f32.mrb[0].mxu0
  %7713 = vmatprep.mubr.f32.mxu0 0.0
  %7714 = vmatmul.mubr.f32.gmra.mrb[0].mxu0 %v6951
  %v7715 = vpop.f32.mrb[0].mxu0
  %v7716 = vadd.f32 %v7593, %v7715
  %v7717 = vpop.f32.mrb[0].mxu0
  %7718 = vmatprep.mubr.f32.mxu0 0.0
  %7719 = vmatmul.mubr.f32.gmra.mrb[0].mxu0 %v7271
  %v7720 = vpop.f32.mrb[0].mxu0
  %v7721 = vadd.f32 %v7593, %v7720
  %v7722 = vpop.f32.mrb[0].mxu0
  %7723 = vmatprep.mubr.f32.mxu0 0.0
  %7724 = vmatmul.mubr.f32.gmra.mrb[0].mxu0 %v7273
  %v7725 = vpop.f32.mrb[0].mxu0
  %v7726 = vadd.f32 %v7593, %v7725
  %v7727 = vpop.f32.mrb[0].mxu0
  %7728 = vmatprep.mubr.f32.mxu0 0.0
  %7729 = vmatmul.mubr.f32.gmra.mrb[0].mxu0 %v7275
  %v7730 = vpop.f32.mrb[0].mxu0
  %v7731 = vadd.f32 %v7593, %v7730
  %v7732 = vpop.f32.mrb[0].mxu0
  %7733 = vmatprep.mubr.f32.mxu0 0.0
  %7734 = vmatmul.mubr.f32.gmra.mrb[0].mxu0 %v7277
  %v7735 = vpop.f32.mrb[0].mxu0
  %v7736 = vadd.f32 %v7593, %v7735
  %v7737 = vpop.f32.mrb[0].mxu0
  %7738 = vmatprep.mubr.f32.mxu0 0.0
  %7739 = vmatmul.mubr.f32.gmra.mrb[0].mxu0 %v7606
  %v7740 = vpop.f32.mrb[0].mxu0
  %v7741 = vadd.f32 %v7593, %v7740
  %v7742 = vpop.f32.mrb[0].mxu0
  %7743 = vmatprep.mubr.f32.mxu0 0.0
  %7744 = vmatmul.mubr.f32.gmra.mrb[0].mxu0 %v7608
  %v7745 = vpop.f32.mrb[0].mxu0
  %v7746 = vadd.f32 %v7593, %v7745
  %v7747 = vpop.f32.mrb[0].mxu0
  %7748 = vmatprep.mubr.f32.mxu0 0.0
  %7749 = vmatmul.mubr.f32.gmra.mrb[0].mxu0 %v7610
  %v7750 = vpop.f32.mrb[0].mxu0
  %v7751 = vadd.f32 %v7593, %v7750
  %v7752 = vpop.f32.mrb[0].mxu0
  %7753 = vmatprep.mubr.f32.mxu0 0.0
  %7754 = vmatmul.mubr.f32.gmra.mrb[0].mxu0 %v7612
  %v7755 = vpop.f32.mrb[0].mxu0
  %v7756 = vadd.f32 %v7593, %v7755
  %v7757 = vpop.f32.mrb[0].mxu0
  %7758 = vdwg.mxu0
  %7759 = vst.msk [vmem:[%s3] sm:$0xff] %vm5294, %v7681
  %7760 = vst.msk [vmem:[%s3 + $0x8] sm:$0xff] %vm5294, %v7686
  %7761 = vst.msk [vmem:[%s3 + $0x10] sm:$0xff] %vm5294, %v7691
  %7762 = vst.msk [vmem:[%s3 + $0x18] sm:$0xff] %vm5294, %v7696
  %7763 = vst.msk [vmem:[%s3 + $0x20] sm:$0xff] %vm5294, %v7701
  %7764 = vst.msk [vmem:[%s3 + $0x28] sm:$0xff] %vm5294, %v7706
  %7765 = vst.msk [vmem:[%s3 + $0x30] sm:$0xff] %vm5294, %v7711
  %7766 = vst.msk [vmem:[%s3 + $0x38] sm:$0xff] %vm5294, %v7716
  %7767 = vst.msk [vmem:[%s3 + $0x40] sm:$0xff] %vm5294, %v7721
  %7768 = vst.msk [vmem:[%s3 + $0x48] sm:$0xff] %vm5294, %v7726
  %7769 = vst.msk [vmem:[%s3 + $0x50] sm:$0xff] %vm5294, %v7731
  %7770 = vst.msk [vmem:[%s3 + $0x58] sm:$0xff] %vm5294, %v7736
  %7771 = vst.msk [vmem:[%s3 + $0x60] sm:$0xff] %vm5294, %v7741
  %7772 = vst.msk [vmem:[%s3 + $0x68] sm:$0xff] %vm5294, %v7746
  %7773 = vst.msk [vmem:[%s3 + $0x70] sm:$0xff] %vm5294, %v7751
  %7774 = vst.msk [vmem:[%s3 + $0x78] sm:$0xff] %vm5294, %v7756
  // Predicated region
  $region10: #{sgnet_forward.1} parent=0 // pred_check
    _
  $region11: #{sgnet_forward.1} parent=0 // pred_check_branch
    %7776 = sbr.rel (0) target = $region13
  $region12: #{sgnet_forward.1} parent=0 // pred_region
    _
  $region13: #{sgnet_forward.1} parent=0 // pred_fallthru
    _
  // Predicated region
  $region14: #{sgnet_forward.1} parent=0 // pred_check
    _
  $region15: #{sgnet_forward.1} parent=0 // pred_check_branch
    %7778 = sbr.rel (0) target = $region17
  $region16: #{sgnet_forward.1} parent=0 // pred_region
    _
  $region17: #{sgnet_forward.1} parent=0 // pred_fallthru
    _
  // Predicated region
  $region18: #{sgnet_forward.1} parent=0 // pred_check
    _
  $region19: #{sgnet_forward.1} parent=0 // pred_check_branch
    %7780 = sbr.rel (0) target = $region21
  $region20: #{sgnet_forward.1} parent=0 // pred_region
    _
  $region21: #{sgnet_forward.1} parent=0 // pred_fallthru
    _
  // Predicated region
  $region22: #{sgnet_forward.1} parent=0 // pred_check
    _
  $region23: #{sgnet_forward.1} parent=0 // pred_check_branch
    %7782 = sbr.rel (0) target = $region25
  $region24: #{sgnet_forward.1} parent=0 // pred_region
    _
  $region25: #{sgnet_forward.1} parent=0 // pred_fallthru
    _

</llo_original>
